<compile_context>
chip_gen: v6e
topology: v6e:2x2x1
jax: 0.10.0
libtpu: 0.0.40
codegen_flags: <defaults>
</compile_context>

<pallas_src>
import functools

import jax
import jax.numpy as jnp
from jax.experimental import pallas as pl
from jax.experimental.pallas import tpu as pltpu


CONV_OPAD = 128          # conv output channels padded to one full lane width


# ----------------------------------------------------------------------------
# Pallas kernels
# ----------------------------------------------------------------------------
def _conv_s2d_kernel(x_ref, w_ref, b_ref, o_ref, *, m, oh, ow):
    """Conv (stride-1 after space-to-depth) + bias + ReLU for ONE image.

    x_ref: (1, hs, ws, ks)     bf16  space-to-depth'd input
    w_ref: (m*m, ks, opad)     bf16  per-tap weight matrices (VMEM-resident)
    b_ref: (1, opad)           f32
    o_ref: (1, oh, ow, opad)   bf16
    """
    opad = o_ref.shape[-1]
    bias = b_ref[...]                                        # (1, opad) f32
    for oy in range(oh):
        acc = jnp.zeros((ow, opad), jnp.float32)
        for ky in range(m):
            for kx in range(m):
                tap = x_ref[0, oy + ky, kx:kx + ow, :]       # (ow, ks) bf16
                acc = acc + jnp.dot(tap, w_ref[ky * m + kx],
                                    preferred_element_type=jnp.float32)
        o_ref[0, oy] = jnp.maximum(acc + bias, 0.0).astype(o_ref.dtype)


def _tail_kernel(x_ref, w1_ref, b1_ref, w2_ref, b2_ref, o_ref, *,
                 num_actions, atoms, atoms_pad):
    """Fused tail: fc1 + ReLU + fc2 + per-action softmax over atoms.

    x_ref : (B, Dpad)           bf16   flattened conv features (padded channels)
    w1_ref: (Dpad, 512)         bf16
    b1_ref: (1, 512)            f32
    w2_ref: (512, A*atoms_pad)  bf16
    b2_ref: (1, A*atoms_pad)    f32
    o_ref : (B, A*atoms_pad)    f32    softmax probs (padded atoms are 0)
    """
    h = jnp.dot(x_ref[...], w1_ref[...], preferred_element_type=jnp.float32)
    h = jnp.maximum(h + b1_ref[...], 0.0).astype(jnp.bfloat16)
    logits = jnp.dot(h, w2_ref[...], preferred_element_type=jnp.float32)
    logits = logits + b2_ref[...]

    atom_idx = jax.lax.broadcasted_iota(jnp.int32, (1, atoms_pad), 1)
    valid = atom_idx < atoms
    blocks = []
    for a in range(num_actions):
        blk = logits[:, a * atoms_pad:(a + 1) * atoms_pad]   # (B, atoms_pad)
        blk = jnp.where(valid, blk, jnp.float32(-1e30))      # mask padded atoms
        mx = jnp.max(blk, axis=-1, keepdims=True)
        e = jnp.exp(blk - mx)
        s = jnp.sum(e, axis=-1, keepdims=True)
        blocks.append(e * pl.reciprocal(s, approx=True))
    o_ref[...] = jnp.concatenate(blocks, axis=-1)            # lane-dense store


# ----------------------------------------------------------------------------
# Wrappers (pure-layout XLA glue + pallas_call plumbing)
# ----------------------------------------------------------------------------
def space_to_depth(x, s):
    """(B, H, W, C) -> (B, H//s, W//s, s*s*C); pure layout transform."""
    if s == 1:
        return x
    n, h, w, c = x.shape
    x = x.reshape(n, h // s, s, w // s, s, c)
    x = jnp.transpose(x, (0, 1, 3, 2, 4, 5))
    return x.reshape(n, h // s, w // s, s * s * c)


def conv2d_relu(x_nhwc, w_s2d, b_pad, stride):
    n, h, w, _ = x_nhwc.shape
    assert h % stride == 0 and w % stride == 0
    xs = space_to_depth(x_nhwc, stride)
    _, hs, ws, ks = xs.shape
    taps, ks_w, opad = w_s2d.shape
    assert ks == ks_w
    m = int(round(taps ** 0.5))
    oh, ow = hs - m + 1, ws - m + 1
    kernel = functools.partial(_conv_s2d_kernel, m=m, oh=oh, ow=ow)
    return pl.pallas_call(
        kernel,
        out_shape=jax.ShapeDtypeStruct((n, oh, ow, opad), jnp.bfloat16),
        grid=(n,),
        in_specs=[
            pl.BlockSpec((1, hs, ws, ks), lambda i: (i, 0, 0, 0)),
            pl.BlockSpec((taps, ks, opad), lambda i: (0, 0, 0)),   # weights resident
            pl.BlockSpec((1, opad), lambda i: (0, 0)),             # bias resident
        ],
        out_specs=pl.BlockSpec((1, oh, ow, opad), lambda i: (i, 0, 0, 0)),
        compiler_params=pltpu.CompilerParams(
            dimension_semantics=("parallel",)),   # v7x: split batch across 2 TCs
    )(xs, w_s2d, b_pad)


def c51_tail(x_flat, w1, b1, w2, b2, *, num_actions, atoms, atoms_pad):
    """Single fused pallas_call for fc1 + ReLU + fc2 + per-action softmax."""
    bsz = x_flat.shape[0]
    npad = w2.shape[1]
    kernel = functools.partial(_tail_kernel, num_actions=num_actions,
                               atoms=atoms, atoms_pad=atoms_pad)
    # Tiny problem: single block, no grid.  Everything fits comfortably in VMEM
    # (x: B x 128, w1: 128x512, w2: 512x 6*64, all bf16/f32).
    return pl.pallas_call(
        kernel,
        out_shape=jax.ShapeDtypeStruct((bsz, npad), jnp.float32),
    )(x_flat, w1, b1, w2, b2)


# ----------------------------------------------------------------------------
# Parameter preparation (host-side, one-time): layout permutes + zero padding
# ----------------------------------------------------------------------------
def _prep_conv_weight(w_oihw, stride, in_pad, out_pad):
    o, i, kh, kw = w_oihw.shape
    assert kh == kw and kh % stride == 0
    m = kh // stride
    w = jnp.transpose(w_oihw, (2, 3, 1, 0))                       # (kh, kw, I, O)
    w = jnp.pad(w, ((0, 0), (0, 0), (0, in_pad - i), (0, out_pad - o)))
    w = w.reshape(m, stride, m, stride, in_pad, out_pad)          # (a, di, b, dj, I, O)
    w = jnp.transpose(w, (0, 2, 1, 3, 4, 5))                      # (a, b, di, dj, I, O)
    return w.reshape(m * m, stride * stride * in_pad, out_pad).astype(jnp.bfloat16)


def _prep_conv_bias(b, out_pad):
    return jnp.pad(b, (0, out_pad - b.shape[0])).reshape(1, out_pad).astype(jnp.float32)


def _prep_fc1_weight(w, h3, w3, c, c_pad):
    # w: (c*h3*w3, 512), rows in torch NCHW-flatten order -> permute to the
    # NHWC (padded-channel) flatten order produced by the conv kernels.
    n_out = w.shape[1]
    w = w.reshape(c, h3, w3, n_out)
    w = jnp.transpose(w, (1, 2, 0, 3))                            # (h3, w3, c, 512)
    w = jnp.pad(w, ((0, 0), (0, 0), (0, c_pad - c), (0, 0)))
    return w.reshape(h3 * w3 * c_pad, n_out).astype(jnp.bfloat16)


def _prep_fc2_weight(w, num_actions, atoms, atoms_pad):
    k = w.shape[0]
    w = w.reshape(k, num_actions, atoms)
    w = jnp.pad(w, ((0, 0), (0, 0), (0, atoms_pad - atoms)))
    return w.reshape(k, num_actions * atoms_pad).astype(jnp.bfloat16)


def _prep_fc2_bias(b, num_actions, atoms, atoms_pad):
    b = b.reshape(num_actions, atoms)
    b = jnp.pad(b, ((0, 0), (0, atoms_pad - atoms)))
    return b.reshape(1, num_actions * atoms_pad).astype(jnp.float32)


def init_c51_params(key, c, h, w, action_num, num_atoms, atoms_pad):
    """Deterministic synthetic parameters.

    Returns (raw, prepped):
      raw     -- torch-layout f32 weights (bf16-rounded) for the pure-JAX reference
      prepped -- kernel-ready padded / permuted bf16 weights
    """
    h1, w1 = (h - 8) // 4 + 1, (w - 8) // 4 + 1
    h2, w2 = (h1 - 4) // 2 + 1, (w1 - 4) // 2 + 1
    h3, w3 = (h2 - 3) // 1 + 1, (w2 - 3) // 1 + 1
    flat_dim = 64 * h3 * w3

    ks = jax.random.split(key, 10)
    std = 0.05

    # TODO(synk): torch orthogonal_ layer_init not reproduced (init-time only,
    # not part of the forward); bf16-rounded Gaussian weights used instead.
    def rnd(k, shape):
        w_ = std * jax.random.normal(k, shape, jnp.float32)
        return w_.astype(jnp.bfloat16).astype(jnp.float32)   # shared quantization

    raw = {
        "conv1_w": rnd(ks[0], (32, c, 8, 8)),
        "conv1_b": 0.01 * jax.random.normal(ks[5], (32,), jnp.float32),
        "conv2_w": rnd(ks[1], (64, 32, 4, 4)),
        "conv2_b": 0.01 * jax.random.normal(ks[6], (64,), jnp.float32),
        "conv3_w": rnd(ks[2], (64, 64, 3, 3)),
        "conv3_b": 0.01 * jax.random.normal(ks[7], (64,), jnp.float32),
        "fc1_w": rnd(ks[3], (flat_dim, 512)),
        "fc1_b": 0.01 * jax.random.normal(ks[8], (512,), jnp.float32),
        "fc2_w": rnd(ks[4], (512, action_num * num_atoms)),
        "fc2_b": 0.01 * jax.random.normal(ks[9], (action_num * num_atoms,), jnp.float32),
    }

    prepped = {
        "conv1_w": _prep_conv_weight(raw["conv1_w"], 4, in_pad=c, out_pad=CONV_OPAD),
        "conv1_b": _prep_conv_bias(raw["conv1_b"], CONV_OPAD),
        "conv2_w": _prep_conv_weight(raw["conv2_w"], 2, in_pad=CONV_OPAD, out_pad=CONV_OPAD),
        "conv2_b": _prep_conv_bias(raw["conv2_b"], CONV_OPAD),
        "conv3_w": _prep_conv_weight(raw["conv3_w"], 1, in_pad=CONV_OPAD, out_pad=CONV_OPAD),
        "conv3_b": _prep_conv_bias(raw["conv3_b"], CONV_OPAD),
        "fc1_w": _prep_fc1_weight(raw["fc1_w"], h3, w3, 64, CONV_OPAD),
        "fc1_b": raw["fc1_b"].reshape(1, 512).astype(jnp.float32),
        "fc2_w": _prep_fc2_weight(raw["fc2_w"], action_num, num_atoms, atoms_pad),
        "fc2_b": _prep_fc2_bias(raw["fc2_b"], action_num, num_atoms, atoms_pad),
    }
    return raw, prepped


# ----------------------------------------------------------------------------
# C51 forward (Pallas) + pure-JAX f32 reference
# ----------------------------------------------------------------------------
def c51_forward(params, obs_nchw, *, action_num, num_atoms, atoms_pad):
    """obs: (B, C, H, W) f32 -> (B, action_num, num_atoms) softmax probs."""
    x = jnp.asarray(obs_nchw, jnp.float32)
    x = jnp.transpose(x, (0, 2, 3, 1)).astype(jnp.bfloat16)      # NCHW -> NHWC, bf16

    x = conv2d_relu(x, params["conv1_w"], params["conv1_b"], stride=4)
    x = conv2d_relu(x, params["conv2_w"], params["conv2_b"], stride=2)
    x = conv2d_relu(x, params["conv3_w"], params["conv3_b"], stride=1)

    b = x.shape[0]
    x = x.reshape(b, -1)   # NHWC flatten (padded channels); fc1_w pre-permuted to match

    probs = c51_tail(x, params["fc1_w"], params["fc1_b"],
                     params["fc2_w"], params["fc2_b"],
                     num_actions=action_num, atoms=num_atoms, atoms_pad=atoms_pad)
    return probs.reshape(b, action_num, atoms_pad)[:, :, :num_atoms]


def c51_reference(raw, obs_nchw, *, action_num, num_atoms):
    """Pure-JAX f32 reference of the original torch C51 forward."""
    x = jnp.asarray(obs_nchw, jnp.float32)

    def conv_relu(x, w, b, stride):
        y = jax.lax.conv_general_dilated(
            x, w, window_strides=(stride, stride), padding="VALID",
            dimension_numbers=("NCHW", "OIHW", "NCHW"))
        return jnp.maximum(y + b.reshape(1, -1, 1, 1), 0.0)

    x = conv_relu(x, raw["conv1_w"], raw["conv1_b"], 4)
    x = conv_relu(x, raw["conv2_w"], raw["conv2_b"], 2)
    x = conv_relu(x, raw["conv3_w"], raw["conv3_b"], 1)
    x = x.reshape(x.shape[0], -1)                                # torch NCHW flatten
    h = jnp.maximum(x @ raw["fc1_w"] + raw["fc1_b"], 0.0)
    logits = h @ raw["fc2_w"] + raw["fc2_b"]
    probs = jax.nn.softmax(logits.reshape(-1, num_atoms), axis=-1)
    return probs.reshape(-1, action_num, num_atoms)


# ----------------------------------------------------------------------------
# Main
# ----------------------------------------------------------------------------
if __name__ == "__main__":
    # Small Atari-ish config: 4 stacked frames, 36x36 input (smallest the conv
    # stack accepts), 6 actions, 51 atoms.
    B, C, H, W = 2, 4, 36, 36
    ACTION_NUM, NUM_ATOMS = 6, 51
    ATOMS_PAD = 64 * ((NUM_ATOMS + 63) // 64)    # per-action atom block -> 64 lanes

    key = jax.random.PRNGKey(0)
    k_param, k_obs = jax.random.split(key)

    raw, params = init_c51_params(k_param, C, H, W, ACTION_NUM, NUM_ATOMS, ATOMS_PAD)
    obs = jax.random.normal(k_obs, (B, C, H, W), jnp.float32)

    fwd = jax.jit(functools.partial(
        c51_forward, action_num=ACTION_NUM, num_atoms=NUM_ATOMS, atoms_pad=ATOMS_PAD))
    out = jax.block_until_ready(fwd(params, obs))

    ref_fn = jax.jit(functools.partial(
        c51_reference, action_num=ACTION_NUM, num_atoms=NUM_ATOMS))
    ref = jax.block_until_ready(ref_fn(raw, obs))

    assert out.shape == (B, ACTION_NUM, NUM_ATOMS)
    # per-(batch, action) distribution sums to ~1 and is non-negative
    assert bool(jnp.allclose(jnp.sum(out, axis=-1), 1.0, atol=1e-2))
    assert bool(jnp.all(out >= 0.0))
    # end-to-end match against the pure-JAX f32 reference (bf16 kernel path)
    err = float(jnp.max(jnp.abs(out - ref)))
    assert err < 5e-3, f"max |kernel - reference| = {err}"
    print("KERNEL_OK")
</pallas_src>

<mosaic_0001>
module attributes {stable_mosaic.version = 11 : i64} {
  func.func @_conv_s2d_kernel(%arg0: i32, %arg1: memref<1x9x9x64xbf16, #tpu.memory_space<vmem>>, %arg2: memref<4x64x128xbf16, #tpu.memory_space<vmem>>, %arg3: memref<1x128xf32, #tpu.memory_space<vmem>>, %arg4: memref<1x8x8x128xbf16, #tpu.memory_space<vmem>>) attributes {dimension_semantics = [#tpu.dimension_semantics<parallel>], iteration_bounds = array<i64: 2>, scalar_prefetch = 0 : i64, scratch_operands = 0 : i64, tpu.core_type = #tpu.core_type<tc>, window_params = [{transform_indices = @transform_0, window_bounds = array<i64: 1, 9, 9, 64>}, {pipeline_mode = #tpu.pipeline_mode<synchronous>, transform_indices = @transform_1, window_bounds = array<i64: 4, 64, 128>}, {pipeline_mode = #tpu.pipeline_mode<synchronous>, transform_indices = @transform_2, window_bounds = array<i64: 1, 128>}, {transform_indices = @transform_3, window_bounds = array<i64: 1, 8, 8, 128>}]} {
    %c0 = arith.constant 0 : index
    %c0_0 = arith.constant 0 : index
    %0 = vector.load %arg3[%c0, %c0_0] : memref<1x128xf32, #tpu.memory_space<vmem>>, vector<1x128xf32>
    %cst = arith.constant 0.000000e+00 : f32
    %1 = vector.broadcast %cst : f32 to vector<8x128xf32>
    %c0_1 = arith.constant 0 : index
    %c0_2 = arith.constant 0 : index
    %c0_3 = arith.constant 0 : index
    %c0_4 = arith.constant 0 : index
    %2 = vector.load %arg1[%c0_1, %c0_2, %c0_3, %c0_4] : memref<1x9x9x64xbf16, #tpu.memory_space<vmem>>, vector<1x1x8x64xbf16>
    %3 = vector.shape_cast %2 : vector<1x1x8x64xbf16> to vector<8x64xbf16>
    %c0_5 = arith.constant 0 : index
    %c0_6 = arith.constant 0 : index
    %c0_7 = arith.constant 0 : index
    %4 = vector.load %arg2[%c0_5, %c0_6, %c0_7] : memref<4x64x128xbf16, #tpu.memory_space<vmem>>, vector<1x64x128xbf16>
    %5 = vector.shape_cast %4 : vector<1x64x128xbf16> to vector<64x128xbf16>
    %cst_8 = arith.constant dense<0.000000e+00> : vector<8x128xf32>
    %6 = tpu.matmul %3, %5, %cst_8 {dimension_numbers = #tpu.dot_dimension_numbers<[1], [0], [0], [1], [0, 0, 1, 1], [], []>} : vector<8x64xbf16>, vector<64x128xbf16>, vector<8x128xf32> -> vector<8x128xf32>
    %7 = arith.addf %1, %6 : vector<8x128xf32>
    %c0_9 = arith.constant 0 : index
    %c0_10 = arith.constant 0 : index
    %c1 = arith.constant 1 : index
    %c0_11 = arith.constant 0 : index
    %8 = vector.load %arg1[%c0_9, %c0_10, %c1, %c0_11] : memref<1x9x9x64xbf16, #tpu.memory_space<vmem>>, vector<1x1x8x64xbf16>
    %9 = vector.shape_cast %8 : vector<1x1x8x64xbf16> to vector<8x64xbf16>
    %c1_12 = arith.constant 1 : index
    %c0_13 = arith.constant 0 : index
    %c0_14 = arith.constant 0 : index
    %10 = vector.load %arg2[%c1_12, %c0_13, %c0_14] : memref<4x64x128xbf16, #tpu.memory_space<vmem>>, vector<1x64x128xbf16>
    %11 = vector.shape_cast %10 : vector<1x64x128xbf16> to vector<64x128xbf16>
    %cst_15 = arith.constant dense<0.000000e+00> : vector<8x128xf32>
    %12 = tpu.matmul %9, %11, %cst_15 {dimension_numbers = #tpu.dot_dimension_numbers<[1], [0], [0], [1], [0, 0, 1, 1], [], []>} : vector<8x64xbf16>, vector<64x128xbf16>, vector<8x128xf32> -> vector<8x128xf32>
    %13 = arith.addf %7, %12 : vector<8x128xf32>
    %c0_16 = arith.constant 0 : index
    %c1_17 = arith.constant 1 : index
    %c0_18 = arith.constant 0 : index
    %c0_19 = arith.constant 0 : index
    %14 = vector.load %arg1[%c0_16, %c1_17, %c0_18, %c0_19] : memref<1x9x9x64xbf16, #tpu.memory_space<vmem>>, vector<1x1x8x64xbf16>
    %15 = vector.shape_cast %14 : vector<1x1x8x64xbf16> to vector<8x64xbf16>
    %c2 = arith.constant 2 : index
    %c0_20 = arith.constant 0 : index
    %c0_21 = arith.constant 0 : index
    %16 = vector.load %arg2[%c2, %c0_20, %c0_21] : memref<4x64x128xbf16, #tpu.memory_space<vmem>>, vector<1x64x128xbf16>
    %17 = vector.shape_cast %16 : vector<1x64x128xbf16> to vector<64x128xbf16>
    %cst_22 = arith.constant dense<0.000000e+00> : vector<8x128xf32>
    %18 = tpu.matmul %15, %17, %cst_22 {dimension_numbers = #tpu.dot_dimension_numbers<[1], [0], [0], [1], [0, 0, 1, 1], [], []>} : vector<8x64xbf16>, vector<64x128xbf16>, vector<8x128xf32> -> vector<8x128xf32>
    %19 = arith.addf %13, %18 : vector<8x128xf32>
    %c0_23 = arith.constant 0 : index
    %c1_24 = arith.constant 1 : index
    %c1_25 = arith.constant 1 : index
    %c0_26 = arith.constant 0 : index
    %20 = vector.load %arg1[%c0_23, %c1_24, %c1_25, %c0_26] : memref<1x9x9x64xbf16, #tpu.memory_space<vmem>>, vector<1x1x8x64xbf16>
    %21 = vector.shape_cast %20 : vector<1x1x8x64xbf16> to vector<8x64xbf16>
    %c3 = arith.constant 3 : index
    %c0_27 = arith.constant 0 : index
    %c0_28 = arith.constant 0 : index
    %22 = vector.load %arg2[%c3, %c0_27, %c0_28] : memref<4x64x128xbf16, #tpu.memory_space<vmem>>, vector<1x64x128xbf16>
    %23 = vector.shape_cast %22 : vector<1x64x128xbf16> to vector<64x128xbf16>
    %cst_29 = arith.constant dense<0.000000e+00> : vector<8x128xf32>
    %24 = tpu.matmul %21, %23, %cst_29 {dimension_numbers = #tpu.dot_dimension_numbers<[1], [0], [0], [1], [0, 0, 1, 1], [], []>} : vector<8x64xbf16>, vector<64x128xbf16>, vector<8x128xf32> -> vector<8x128xf32>
    %25 = arith.addf %19, %24 : vector<8x128xf32>
    %26 = vector.broadcast %0 : vector<1x128xf32> to vector<8x128xf32>
    %27 = arith.addf %25, %26 : vector<8x128xf32>
    %cst_30 = arith.constant 0.000000e+00 : f32
    %28 = vector.broadcast %cst_30 : f32 to vector<8x128xf32>
    %29 = arith.maximumf %27, %28 : vector<8x128xf32>
    %30 = arith.truncf %29 : vector<8x128xf32> to vector<8x128xbf16>
    %c0_31 = arith.constant 0 : index
    %c0_32 = arith.constant 0 : index
    %c0_33 = arith.constant 0 : index
    %c0_34 = arith.constant 0 : index
    %31 = vector.load %arg4[%c0_31, %c0_32, %c0_33, %c0_34] : memref<1x8x8x128xbf16, #tpu.memory_space<vmem>>, vector<1x1x8x128xbf16>
    %32 = vector.shape_cast %31 : vector<1x1x8x128xbf16> to vector<8x128xbf16>
    %33 = vector.shape_cast %30 : vector<8x128xbf16> to vector<1x1x8x128xbf16>
    tpu.vector_store %arg4[%c0_31, %c0_32, %c0_33, %c0_34], %33 {strides = array<i32>} : memref<1x8x8x128xbf16, #tpu.memory_space<vmem>>, vector<1x1x8x128xbf16>,
    %cst_35 = arith.constant 0.000000e+00 : f32
    %34 = vector.broadcast %cst_35 : f32 to vector<8x128xf32>
    %c0_36 = arith.constant 0 : index
    %c1_37 = arith.constant 1 : index
    %c0_38 = arith.constant 0 : index
    %c0_39 = arith.constant 0 : index
    %35 = vector.load %arg1[%c0_36, %c1_37, %c0_38, %c0_39] : memref<1x9x9x64xbf16, #tpu.memory_space<vmem>>, vector<1x1x8x64xbf16>
    %36 = vector.shape_cast %35 : vector<1x1x8x64xbf16> to vector<8x64xbf16>
    %c0_40 = arith.constant 0 : index
    %c0_41 = arith.constant 0 : index
    %c0_42 = arith.constant 0 : index
    %37 = vector.load %arg2[%c0_40, %c0_41, %c0_42] : memref<4x64x128xbf16, #tpu.memory_space<vmem>>, vector<1x64x128xbf16>
    %38 = vector.shape_cast %37 : vector<1x64x128xbf16> to vector<64x128xbf16>
    %cst_43 = arith.constant dense<0.000000e+00> : vector<8x128xf32>
    %39 = tpu.matmul %36, %38, %cst_43 {dimension_numbers = #tpu.dot_dimension_numbers<[1], [0], [0], [1], [0, 0, 1, 1], [], []>} : vector<8x64xbf16>, vector<64x128xbf16>, vector<8x128xf32> -> vector<8x128xf32>
    %40 = arith.addf %34, %39 : vector<8x128xf32>
    %c0_44 = arith.constant 0 : index
    %c1_45 = arith.constant 1 : index
    %c1_46 = arith.constant 1 : index
    %c0_47 = arith.constant 0 : index
    %41 = vector.load %arg1[%c0_44, %c1_45, %c1_46, %c0_47] : memref<1x9x9x64xbf16, #tpu.memory_space<vmem>>, vector<1x1x8x64xbf16>
    %42 = vector.shape_cast %41 : vector<1x1x8x64xbf16> to vector<8x64xbf16>
    %c1_48 = arith.constant 1 : index
    %c0_49 = arith.constant 0 : index
    %c0_50 = arith.constant 0 : index
    %43 = vector.load %arg2[%c1_48, %c0_49, %c0_50] : memref<4x64x128xbf16, #tpu.memory_space<vmem>>, vector<1x64x128xbf16>
    %44 = vector.shape_cast %43 : vector<1x64x128xbf16> to vector<64x128xbf16>
    %cst_51 = arith.constant dense<0.000000e+00> : vector<8x128xf32>
    %45 = tpu.matmul %42, %44, %cst_51 {dimension_numbers = #tpu.dot_dimension_numbers<[1], [0], [0], [1], [0, 0, 1, 1], [], []>} : vector<8x64xbf16>, vector<64x128xbf16>, vector<8x128xf32> -> vector<8x128xf32>
    %46 = arith.addf %40, %45 : vector<8x128xf32>
    %c0_52 = arith.constant 0 : index
    %c2_53 = arith.constant 2 : index
    %c0_54 = arith.constant 0 : index
    %c0_55 = arith.constant 0 : index
    %47 = vector.load %arg1[%c0_52, %c2_53, %c0_54, %c0_55] : memref<1x9x9x64xbf16, #tpu.memory_space<vmem>>, vector<1x1x8x64xbf16>
    %48 = vector.shape_cast %47 : vector<1x1x8x64xbf16> to vector<8x64xbf16>
    %c2_56 = arith.constant 2 : index
    %c0_57 = arith.constant 0 : index
    %c0_58 = arith.constant 0 : index
    %49 = vector.load %arg2[%c2_56, %c0_57, %c0_58] : memref<4x64x128xbf16, #tpu.memory_space<vmem>>, vector<1x64x128xbf16>
    %50 = vector.shape_cast %49 : vector<1x64x128xbf16> to vector<64x128xbf16>
    %cst_59 = arith.constant dense<0.000000e+00> : vector<8x128xf32>
    %51 = tpu.matmul %48, %50, %cst_59 {dimension_numbers = #tpu.dot_dimension_numbers<[1], [0], [0], [1], [0, 0, 1, 1], [], []>} : vector<8x64xbf16>, vector<64x128xbf16>, vector<8x128xf32> -> vector<8x128xf32>
    %52 = arith.addf %46, %51 : vector<8x128xf32>
    %c0_60 = arith.constant 0 : index
    %c2_61 = arith.constant 2 : index
    %c1_62 = arith.constant 1 : index
    %c0_63 = arith.constant 0 : index
    %53 = vector.load %arg1[%c0_60, %c2_61, %c1_62, %c0_63] : memref<1x9x9x64xbf16, #tpu.memory_space<vmem>>, vector<1x1x8x64xbf16>
    %54 = vector.shape_cast %53 : vector<1x1x8x64xbf16> to vector<8x64xbf16>
    %c3_64 = arith.constant 3 : index
    %c0_65 = arith.constant 0 : index
    %c0_66 = arith.constant 0 : index
    %55 = vector.load %arg2[%c3_64, %c0_65, %c0_66] : memref<4x64x128xbf16, #tpu.memory_space<vmem>>, vector<1x64x128xbf16>
    %56 = vector.shape_cast %55 : vector<1x64x128xbf16> to vector<64x128xbf16>
    %cst_67 = arith.constant dense<0.000000e+00> : vector<8x128xf32>
    %57 = tpu.matmul %54, %56, %cst_67 {dimension_numbers = #tpu.dot_dimension_numbers<[1], [0], [0], [1], [0, 0, 1, 1], [], []>} : vector<8x64xbf16>, vector<64x128xbf16>, vector<8x128xf32> -> vector<8x128xf32>
    %58 = arith.addf %52, %57 : vector<8x128xf32>
    %59 = vector.broadcast %0 : vector<1x128xf32> to vector<8x128xf32>
    %60 = arith.addf %58, %59 : vector<8x128xf32>
    %cst_68 = arith.constant 0.000000e+00 : f32
    %61 = vector.broadcast %cst_68 : f32 to vector<8x128xf32>
    %62 = arith.maximumf %60, %61 : vector<8x128xf32>
    %63 = arith.truncf %62 : vector<8x128xf32> to vector<8x128xbf16>
    %c0_69 = arith.constant 0 : index
    %c1_70 = arith.constant 1 : index
    %c0_71 = arith.constant 0 : index
    %c0_72 = arith.constant 0 : index
    %64 = vector.load %arg4[%c0_69, %c1_70, %c0_71, %c0_72] : memref<1x8x8x128xbf16, #tpu.memory_space<vmem>>, vector<1x1x8x128xbf16>
    %65 = vector.shape_cast %64 : vector<1x1x8x128xbf16> to vector<8x128xbf16>
    %66 = vector.shape_cast %63 : vector<8x128xbf16> to vector<1x1x8x128xbf16>
    tpu.vector_store %arg4[%c0_69, %c1_70, %c0_71, %c0_72], %66 {strides = array<i32>} : memref<1x8x8x128xbf16, #tpu.memory_space<vmem>>, vector<1x1x8x128xbf16>,
    %cst_73 = arith.constant 0.000000e+00 : f32
    %67 = vector.broadcast %cst_73 : f32 to vector<8x128xf32>
    %c0_74 = arith.constant 0 : index
    %c2_75 = arith.constant 2 : index
    %c0_76 = arith.constant 0 : index
    %c0_77 = arith.constant 0 : index
    %68 = vector.load %arg1[%c0_74, %c2_75, %c0_76, %c0_77] : memref<1x9x9x64xbf16, #tpu.memory_space<vmem>>, vector<1x1x8x64xbf16>
    %69 = vector.shape_cast %68 : vector<1x1x8x64xbf16> to vector<8x64xbf16>
    %c0_78 = arith.constant 0 : index
    %c0_79 = arith.constant 0 : index
    %c0_80 = arith.constant 0 : index
    %70 = vector.load %arg2[%c0_78, %c0_79, %c0_80] : memref<4x64x128xbf16, #tpu.memory_space<vmem>>, vector<1x64x128xbf16>
    %71 = vector.shape_cast %70 : vector<1x64x128xbf16> to vector<64x128xbf16>
    %cst_81 = arith.constant dense<0.000000e+00> : vector<8x128xf32>
    %72 = tpu.matmul %69, %71, %cst_81 {dimension_numbers = #tpu.dot_dimension_numbers<[1], [0], [0], [1], [0, 0, 1, 1], [], []>} : vector<8x64xbf16>, vector<64x128xbf16>, vector<8x128xf32> -> vector<8x128xf32>
    %73 = arith.addf %67, %72 : vector<8x128xf32>
    %c0_82 = arith.constant 0 : index
    %c2_83 = arith.constant 2 : index
    %c1_84 = arith.constant 1 : index
    %c0_85 = arith.constant 0 : index
    %74 = vector.load %arg1[%c0_82, %c2_83, %c1_84, %c0_85] : memref<1x9x9x64xbf16, #tpu.memory_space<vmem>>, vector<1x1x8x64xbf16>
    %75 = vector.shape_cast %74 : vector<1x1x8x64xbf16> to vector<8x64xbf16>
    %c1_86 = arith.constant 1 : index
    %c0_87 = arith.constant 0 : index
    %c0_88 = arith.constant 0 : index
    %76 = vector.load %arg2[%c1_86, %c0_87, %c0_88] : memref<4x64x128xbf16, #tpu.memory_space<vmem>>, vector<1x64x128xbf16>
    %77 = vector.shape_cast %76 : vector<1x64x128xbf16> to vector<64x128xbf16>
    %cst_89 = arith.constant dense<0.000000e+00> : vector<8x128xf32>
    %78 = tpu.matmul %75, %77, %cst_89 {dimension_numbers = #tpu.dot_dimension_numbers<[1], [0], [0], [1], [0, 0, 1, 1], [], []>} : vector<8x64xbf16>, vector<64x128xbf16>, vector<8x128xf32> -> vector<8x128xf32>
    %79 = arith.addf %73, %78 : vector<8x128xf32>
    %c0_90 = arith.constant 0 : index
    %c3_91 = arith.constant 3 : index
    %c0_92 = arith.constant 0 : index
    %c0_93 = arith.constant 0 : index
    %80 = vector.load %arg1[%c0_90, %c3_91, %c0_92, %c0_93] : memref<1x9x9x64xbf16, #tpu.memory_space<vmem>>, vector<1x1x8x64xbf16>
    %81 = vector.shape_cast %80 : vector<1x1x8x64xbf16> to vector<8x64xbf16>
    %c2_94 = arith.constant 2 : index
    %c0_95 = arith.constant 0 : index
    %c0_96 = arith.constant 0 : index
    %82 = vector.load %arg2[%c2_94, %c0_95, %c0_96] : memref<4x64x128xbf16, #tpu.memory_space<vmem>>, vector<1x64x128xbf16>
    %83 = vector.shape_cast %82 : vector<1x64x128xbf16> to vector<64x128xbf16>
    %cst_97 = arith.constant dense<0.000000e+00> : vector<8x128xf32>
    %84 = tpu.matmul %81, %83, %cst_97 {dimension_numbers = #tpu.dot_dimension_numbers<[1], [0], [0], [1], [0, 0, 1, 1], [], []>} : vector<8x64xbf16>, vector<64x128xbf16>, vector<8x128xf32> -> vector<8x128xf32>
    %85 = arith.addf %79, %84 : vector<8x128xf32>
    %c0_98 = arith.constant 0 : index
    %c3_99 = arith.constant 3 : index
    %c1_100 = arith.constant 1 : index
    %c0_101 = arith.constant 0 : index
    %86 = vector.load %arg1[%c0_98, %c3_99, %c1_100, %c0_101] : memref<1x9x9x64xbf16, #tpu.memory_space<vmem>>, vector<1x1x8x64xbf16>
    %87 = vector.shape_cast %86 : vector<1x1x8x64xbf16> to vector<8x64xbf16>
    %c3_102 = arith.constant 3 : index
    %c0_103 = arith.constant 0 : index
    %c0_104 = arith.constant 0 : index
    %88 = vector.load %arg2[%c3_102, %c0_103, %c0_104] : memref<4x64x128xbf16, #tpu.memory_space<vmem>>, vector<1x64x128xbf16>
    %89 = vector.shape_cast %88 : vector<1x64x128xbf16> to vector<64x128xbf16>
    %cst_105 = arith.constant dense<0.000000e+00> : vector<8x128xf32>
    %90 = tpu.matmul %87, %89, %cst_105 {dimension_numbers = #tpu.dot_dimension_numbers<[1], [0], [0], [1], [0, 0, 1, 1], [], []>} : vector<8x64xbf16>, vector<64x128xbf16>, vector<8x128xf32> -> vector<8x128xf32>
    %91 = arith.addf %85, %90 : vector<8x128xf32>
    %92 = vector.broadcast %0 : vector<1x128xf32> to vector<8x128xf32>
    %93 = arith.addf %91, %92 : vector<8x128xf32>
    %cst_106 = arith.constant 0.000000e+00 : f32
    %94 = vector.broadcast %cst_106 : f32 to vector<8x128xf32>
    %95 = arith.maximumf %93, %94 : vector<8x128xf32>
    %96 = arith.truncf %95 : vector<8x128xf32> to vector<8x128xbf16>
    %c0_107 = arith.constant 0 : index
    %c2_108 = arith.constant 2 : index
    %c0_109 = arith.constant 0 : index
    %c0_110 = arith.constant 0 : index
    %97 = vector.load %arg4[%c0_107, %c2_108, %c0_109, %c0_110] : memref<1x8x8x128xbf16, #tpu.memory_space<vmem>>, vector<1x1x8x128xbf16>
    %98 = vector.shape_cast %97 : vector<1x1x8x128xbf16> to vector<8x128xbf16>
    %99 = vector.shape_cast %96 : vector<8x128xbf16> to vector<1x1x8x128xbf16>
    tpu.vector_store %arg4[%c0_107, %c2_108, %c0_109, %c0_110], %99 {strides = array<i32>} : memref<1x8x8x128xbf16, #tpu.memory_space<vmem>>, vector<1x1x8x128xbf16>,
    %cst_111 = arith.constant 0.000000e+00 : f32
    %100 = vector.broadcast %cst_111 : f32 to vector<8x128xf32>
    %c0_112 = arith.constant 0 : index
    %c3_113 = arith.constant 3 : index
    %c0_114 = arith.constant 0 : index
    %c0_115 = arith.constant 0 : index
    %101 = vector.load %arg1[%c0_112, %c3_113, %c0_114, %c0_115] : memref<1x9x9x64xbf16, #tpu.memory_space<vmem>>, vector<1x1x8x64xbf16>
    %102 = vector.shape_cast %101 : vector<1x1x8x64xbf16> to vector<8x64xbf16>
    %c0_116 = arith.constant 0 : index
    %c0_117 = arith.constant 0 : index
    %c0_118 = arith.constant 0 : index
    %103 = vector.load %arg2[%c0_116, %c0_117, %c0_118] : memref<4x64x128xbf16, #tpu.memory_space<vmem>>, vector<1x64x128xbf16>
    %104 = vector.shape_cast %103 : vector<1x64x128xbf16> to vector<64x128xbf16>
    %cst_119 = arith.constant dense<0.000000e+00> : vector<8x128xf32>
    %105 = tpu.matmul %102, %104, %cst_119 {dimension_numbers = #tpu.dot_dimension_numbers<[1], [0], [0], [1], [0, 0, 1, 1], [], []>} : vector<8x64xbf16>, vector<64x128xbf16>, vector<8x128xf32> -> vector<8x128xf32>
    %106 = arith.addf %100, %105 : vector<8x128xf32>
    %c0_120 = arith.constant 0 : index
    %c3_121 = arith.constant 3 : index
    %c1_122 = arith.constant 1 : index
    %c0_123 = arith.constant 0 : index
    %107 = vector.load %arg1[%c0_120, %c3_121, %c1_122, %c0_123] : memref<1x9x9x64xbf16, #tpu.memory_space<vmem>>, vector<1x1x8x64xbf16>
    %108 = vector.shape_cast %107 : vector<1x1x8x64xbf16> to vector<8x64xbf16>
    %c1_124 = arith.constant 1 : index
    %c0_125 = arith.constant 0 : index
    %c0_126 = arith.constant 0 : index
    %109 = vector.load %arg2[%c1_124, %c0_125, %c0_126] : memref<4x64x128xbf16, #tpu.memory_space<vmem>>, vector<1x64x128xbf16>
    %110 = vector.shape_cast %109 : vector<1x64x128xbf16> to vector<64x128xbf16>
    %cst_127 = arith.constant dense<0.000000e+00> : vector<8x128xf32>
    %111 = tpu.matmul %108, %110, %cst_127 {dimension_numbers = #tpu.dot_dimension_numbers<[1], [0], [0], [1], [0, 0, 1, 1], [], []>} : vector<8x64xbf16>, vector<64x128xbf16>, vector<8x128xf32> -> vector<8x128xf32>
    %112 = arith.addf %106, %111 : vector<8x128xf32>
    %c0_128 = arith.constant 0 : index
    %c4 = arith.constant 4 : index
    %c0_129 = arith.constant 0 : index
    %c0_130 = arith.constant 0 : index
    %113 = vector.load %arg1[%c0_128, %c4, %c0_129, %c0_130] : memref<1x9x9x64xbf16, #tpu.memory_space<vmem>>, vector<1x1x8x64xbf16>
    %114 = vector.shape_cast %113 : vector<1x1x8x64xbf16> to vector<8x64xbf16>
    %c2_131 = arith.constant 2 : index
    %c0_132 = arith.constant 0 : index
    %c0_133 = arith.constant 0 : index
    %115 = vector.load %arg2[%c2_131, %c0_132, %c0_133] : memref<4x64x128xbf16, #tpu.memory_space<vmem>>, vector<1x64x128xbf16>
    %116 = vector.shape_cast %115 : vector<1x64x128xbf16> to vector<64x128xbf16>
    %cst_134 = arith.constant dense<0.000000e+00> : vector<8x128xf32>
    %117 = tpu.matmul %114, %116, %cst_134 {dimension_numbers = #tpu.dot_dimension_numbers<[1], [0], [0], [1], [0, 0, 1, 1], [], []>} : vector<8x64xbf16>, vector<64x128xbf16>, vector<8x128xf32> -> vector<8x128xf32>
    %118 = arith.addf %112, %117 : vector<8x128xf32>
    %c0_135 = arith.constant 0 : index
    %c4_136 = arith.constant 4 : index
    %c1_137 = arith.constant 1 : index
    %c0_138 = arith.constant 0 : index
    %119 = vector.load %arg1[%c0_135, %c4_136, %c1_137, %c0_138] : memref<1x9x9x64xbf16, #tpu.memory_space<vmem>>, vector<1x1x8x64xbf16>
    %120 = vector.shape_cast %119 : vector<1x1x8x64xbf16> to vector<8x64xbf16>
    %c3_139 = arith.constant 3 : index
    %c0_140 = arith.constant 0 : index
    %c0_141 = arith.constant 0 : index
    %121 = vector.load %arg2[%c3_139, %c0_140, %c0_141] : memref<4x64x128xbf16, #tpu.memory_space<vmem>>, vector<1x64x128xbf16>
    %122 = vector.shape_cast %121 : vector<1x64x128xbf16> to vector<64x128xbf16>
    %cst_142 = arith.constant dense<0.000000e+00> : vector<8x128xf32>
    %123 = tpu.matmul %120, %122, %cst_142 {dimension_numbers = #tpu.dot_dimension_numbers<[1], [0], [0], [1], [0, 0, 1, 1], [], []>} : vector<8x64xbf16>, vector<64x128xbf16>, vector<8x128xf32> -> vector<8x128xf32>
    %124 = arith.addf %118, %123 : vector<8x128xf32>
    %125 = vector.broadcast %0 : vector<1x128xf32> to vector<8x128xf32>
    %126 = arith.addf %124, %125 : vector<8x128xf32>
    %cst_143 = arith.constant 0.000000e+00 : f32
    %127 = vector.broadcast %cst_143 : f32 to vector<8x128xf32>
    %128 = arith.maximumf %126, %127 : vector<8x128xf32>
    %129 = arith.truncf %128 : vector<8x128xf32> to vector<8x128xbf16>
    %c0_144 = arith.constant 0 : index
    %c3_145 = arith.constant 3 : index
    %c0_146 = arith.constant 0 : index
    %c0_147 = arith.constant 0 : index
    %130 = vector.load %arg4[%c0_144, %c3_145, %c0_146, %c0_147] : memref<1x8x8x128xbf16, #tpu.memory_space<vmem>>, vector<1x1x8x128xbf16>
    %131 = vector.shape_cast %130 : vector<1x1x8x128xbf16> to vector<8x128xbf16>
    %132 = vector.shape_cast %129 : vector<8x128xbf16> to vector<1x1x8x128xbf16>
    tpu.vector_store %arg4[%c0_144, %c3_145, %c0_146, %c0_147], %132 {strides = array<i32>} : memref<1x8x8x128xbf16, #tpu.memory_space<vmem>>, vector<1x1x8x128xbf16>,
    %cst_148 = arith.constant 0.000000e+00 : f32
    %133 = vector.broadcast %cst_148 : f32 to vector<8x128xf32>
    %c0_149 = arith.constant 0 : index
    %c4_150 = arith.constant 4 : index
    %c0_151 = arith.constant 0 : index
    %c0_152 = arith.constant 0 : index
    %134 = vector.load %arg1[%c0_149, %c4_150, %c0_151, %c0_152] : memref<1x9x9x64xbf16, #tpu.memory_space<vmem>>, vector<1x1x8x64xbf16>
    %135 = vector.shape_cast %134 : vector<1x1x8x64xbf16> to vector<8x64xbf16>
    %c0_153 = arith.constant 0 : index
    %c0_154 = arith.constant 0 : index
    %c0_155 = arith.constant 0 : index
    %136 = vector.load %arg2[%c0_153, %c0_154, %c0_155] : memref<4x64x128xbf16, #tpu.memory_space<vmem>>, vector<1x64x128xbf16>
    %137 = vector.shape_cast %136 : vector<1x64x128xbf16> to vector<64x128xbf16>
    %cst_156 = arith.constant dense<0.000000e+00> : vector<8x128xf32>
    %138 = tpu.matmul %135, %137, %cst_156 {dimension_numbers = #tpu.dot_dimension_numbers<[1], [0], [0], [1], [0, 0, 1, 1], [], []>} : vector<8x64xbf16>, vector<64x128xbf16>, vector<8x128xf32> -> vector<8x128xf32>
    %139 = arith.addf %133, %138 : vector<8x128xf32>
    %c0_157 = arith.constant 0 : index
    %c4_158 = arith.constant 4 : index
    %c1_159 = arith.constant 1 : index
    %c0_160 = arith.constant 0 : index
    %140 = vector.load %arg1[%c0_157, %c4_158, %c1_159, %c0_160] : memref<1x9x9x64xbf16, #tpu.memory_space<vmem>>, vector<1x1x8x64xbf16>
    %141 = vector.shape_cast %140 : vector<1x1x8x64xbf16> to vector<8x64xbf16>
    %c1_161 = arith.constant 1 : index
    %c0_162 = arith.constant 0 : index
    %c0_163 = arith.constant 0 : index
    %142 = vector.load %arg2[%c1_161, %c0_162, %c0_163] : memref<4x64x128xbf16, #tpu.memory_space<vmem>>, vector<1x64x128xbf16>
    %143 = vector.shape_cast %142 : vector<1x64x128xbf16> to vector<64x128xbf16>
    %cst_164 = arith.constant dense<0.000000e+00> : vector<8x128xf32>
    %144 = tpu.matmul %141, %143, %cst_164 {dimension_numbers = #tpu.dot_dimension_numbers<[1], [0], [0], [1], [0, 0, 1, 1], [], []>} : vector<8x64xbf16>, vector<64x128xbf16>, vector<8x128xf32> -> vector<8x128xf32>
    %145 = arith.addf %139, %144 : vector<8x128xf32>
    %c0_165 = arith.constant 0 : index
    %c5 = arith.constant 5 : index
    %c0_166 = arith.constant 0 : index
    %c0_167 = arith.constant 0 : index
    %146 = vector.load %arg1[%c0_165, %c5, %c0_166, %c0_167] : memref<1x9x9x64xbf16, #tpu.memory_space<vmem>>, vector<1x1x8x64xbf16>
    %147 = vector.shape_cast %146 : vector<1x1x8x64xbf16> to vector<8x64xbf16>
    %c2_168 = arith.constant 2 : index
    %c0_169 = arith.constant 0 : index
    %c0_170 = arith.constant 0 : index
    %148 = vector.load %arg2[%c2_168, %c0_169, %c0_170] : memref<4x64x128xbf16, #tpu.memory_space<vmem>>, vector<1x64x128xbf16>
    %149 = vector.shape_cast %148 : vector<1x64x128xbf16> to vector<64x128xbf16>
    %cst_171 = arith.constant dense<0.000000e+00> : vector<8x128xf32>
    %150 = tpu.matmul %147, %149, %cst_171 {dimension_numbers = #tpu.dot_dimension_numbers<[1], [0], [0], [1], [0, 0, 1, 1], [], []>} : vector<8x64xbf16>, vector<64x128xbf16>, vector<8x128xf32> -> vector<8x128xf32>
    %151 = arith.addf %145, %150 : vector<8x128xf32>
    %c0_172 = arith.constant 0 : index
    %c5_173 = arith.constant 5 : index
    %c1_174 = arith.constant 1 : index
    %c0_175 = arith.constant 0 : index
    %152 = vector.load %arg1[%c0_172, %c5_173, %c1_174, %c0_175] : memref<1x9x9x64xbf16, #tpu.memory_space<vmem>>, vector<1x1x8x64xbf16>
    %153 = vector.shape_cast %152 : vector<1x1x8x64xbf16> to vector<8x64xbf16>
    %c3_176 = arith.constant 3 : index
    %c0_177 = arith.constant 0 : index
    %c0_178 = arith.constant 0 : index
    %154 = vector.load %arg2[%c3_176, %c0_177, %c0_178] : memref<4x64x128xbf16, #tpu.memory_space<vmem>>, vector<1x64x128xbf16>
    %155 = vector.shape_cast %154 : vector<1x64x128xbf16> to vector<64x128xbf16>
    %cst_179 = arith.constant dense<0.000000e+00> : vector<8x128xf32>
    %156 = tpu.matmul %153, %155, %cst_179 {dimension_numbers = #tpu.dot_dimension_numbers<[1], [0], [0], [1], [0, 0, 1, 1], [], []>} : vector<8x64xbf16>, vector<64x128xbf16>, vector<8x128xf32> -> vector<8x128xf32>
    %157 = arith.addf %151, %156 : vector<8x128xf32>
    %158 = vector.broadcast %0 : vector<1x128xf32> to vector<8x128xf32>
    %159 = arith.addf %157, %158 : vector<8x128xf32>
    %cst_180 = arith.constant 0.000000e+00 : f32
    %160 = vector.broadcast %cst_180 : f32 to vector<8x128xf32>
    %161 = arith.maximumf %159, %160 : vector<8x128xf32>
    %162 = arith.truncf %161 : vector<8x128xf32> to vector<8x128xbf16>
    %c0_181 = arith.constant 0 : index
    %c4_182 = arith.constant 4 : index
    %c0_183 = arith.constant 0 : index
    %c0_184 = arith.constant 0 : index
    %163 = vector.load %arg4[%c0_181, %c4_182, %c0_183, %c0_184] : memref<1x8x8x128xbf16, #tpu.memory_space<vmem>>, vector<1x1x8x128xbf16>
    %164 = vector.shape_cast %163 : vector<1x1x8x128xbf16> to vector<8x128xbf16>
    %165 = vector.shape_cast %162 : vector<8x128xbf16> to vector<1x1x8x128xbf16>
    tpu.vector_store %arg4[%c0_181, %c4_182, %c0_183, %c0_184], %165 {strides = array<i32>} : memref<1x8x8x128xbf16, #tpu.memory_space<vmem>>, vector<1x1x8x128xbf16>,
    %cst_185 = arith.constant 0.000000e+00 : f32
    %166 = vector.broadcast %cst_185 : f32 to vector<8x128xf32>
    %c0_186 = arith.constant 0 : index
    %c5_187 = arith.constant 5 : index
    %c0_188 = arith.constant 0 : index
    %c0_189 = arith.constant 0 : index
    %167 = vector.load %arg1[%c0_186, %c5_187, %c0_188, %c0_189] : memref<1x9x9x64xbf16, #tpu.memory_space<vmem>>, vector<1x1x8x64xbf16>
    %168 = vector.shape_cast %167 : vector<1x1x8x64xbf16> to vector<8x64xbf16>
    %c0_190 = arith.constant 0 : index
    %c0_191 = arith.constant 0 : index
    %c0_192 = arith.constant 0 : index
    %169 = vector.load %arg2[%c0_190, %c0_191, %c0_192] : memref<4x64x128xbf16, #tpu.memory_space<vmem>>, vector<1x64x128xbf16>
    %170 = vector.shape_cast %169 : vector<1x64x128xbf16> to vector<64x128xbf16>
    %cst_193 = arith.constant dense<0.000000e+00> : vector<8x128xf32>
    %171 = tpu.matmul %168, %170, %cst_193 {dimension_numbers = #tpu.dot_dimension_numbers<[1], [0], [0], [1], [0, 0, 1, 1], [], []>} : vector<8x64xbf16>, vector<64x128xbf16>, vector<8x128xf32> -> vector<8x128xf32>
    %172 = arith.addf %166, %171 : vector<8x128xf32>
    %c0_194 = arith.constant 0 : index
    %c5_195 = arith.constant 5 : index
    %c1_196 = arith.constant 1 : index
    %c0_197 = arith.constant 0 : index
    %173 = vector.load %arg1[%c0_194, %c5_195, %c1_196, %c0_197] : memref<1x9x9x64xbf16, #tpu.memory_space<vmem>>, vector<1x1x8x64xbf16>
    %174 = vector.shape_cast %173 : vector<1x1x8x64xbf16> to vector<8x64xbf16>
    %c1_198 = arith.constant 1 : index
    %c0_199 = arith.constant 0 : index
    %c0_200 = arith.constant 0 : index
    %175 = vector.load %arg2[%c1_198, %c0_199, %c0_200] : memref<4x64x128xbf16, #tpu.memory_space<vmem>>, vector<1x64x128xbf16>
    %176 = vector.shape_cast %175 : vector<1x64x128xbf16> to vector<64x128xbf16>
    %cst_201 = arith.constant dense<0.000000e+00> : vector<8x128xf32>
    %177 = tpu.matmul %174, %176, %cst_201 {dimension_numbers = #tpu.dot_dimension_numbers<[1], [0], [0], [1], [0, 0, 1, 1], [], []>} : vector<8x64xbf16>, vector<64x128xbf16>, vector<8x128xf32> -> vector<8x128xf32>
    %178 = arith.addf %172, %177 : vector<8x128xf32>
    %c0_202 = arith.constant 0 : index
    %c6 = arith.constant 6 : index
    %c0_203 = arith.constant 0 : index
    %c0_204 = arith.constant 0 : index
    %179 = vector.load %arg1[%c0_202, %c6, %c0_203, %c0_204] : memref<1x9x9x64xbf16, #tpu.memory_space<vmem>>, vector<1x1x8x64xbf16>
    %180 = vector.shape_cast %179 : vector<1x1x8x64xbf16> to vector<8x64xbf16>
    %c2_205 = arith.constant 2 : index
    %c0_206 = arith.constant 0 : index
    %c0_207 = arith.constant 0 : index
    %181 = vector.load %arg2[%c2_205, %c0_206, %c0_207] : memref<4x64x128xbf16, #tpu.memory_space<vmem>>, vector<1x64x128xbf16>
    %182 = vector.shape_cast %181 : vector<1x64x128xbf16> to vector<64x128xbf16>
    %cst_208 = arith.constant dense<0.000000e+00> : vector<8x128xf32>
    %183 = tpu.matmul %180, %182, %cst_208 {dimension_numbers = #tpu.dot_dimension_numbers<[1], [0], [0], [1], [0, 0, 1, 1], [], []>} : vector<8x64xbf16>, vector<64x128xbf16>, vector<8x128xf32> -> vector<8x128xf32>
    %184 = arith.addf %178, %183 : vector<8x128xf32>
    %c0_209 = arith.constant 0 : index
    %c6_210 = arith.constant 6 : index
    %c1_211 = arith.constant 1 : index
    %c0_212 = arith.constant 0 : index
    %185 = vector.load %arg1[%c0_209, %c6_210, %c1_211, %c0_212] : memref<1x9x9x64xbf16, #tpu.memory_space<vmem>>, vector<1x1x8x64xbf16>
    %186 = vector.shape_cast %185 : vector<1x1x8x64xbf16> to vector<8x64xbf16>
    %c3_213 = arith.constant 3 : index
    %c0_214 = arith.constant 0 : index
    %c0_215 = arith.constant 0 : index
    %187 = vector.load %arg2[%c3_213, %c0_214, %c0_215] : memref<4x64x128xbf16, #tpu.memory_space<vmem>>, vector<1x64x128xbf16>
    %188 = vector.shape_cast %187 : vector<1x64x128xbf16> to vector<64x128xbf16>
    %cst_216 = arith.constant dense<0.000000e+00> : vector<8x128xf32>
    %189 = tpu.matmul %186, %188, %cst_216 {dimension_numbers = #tpu.dot_dimension_numbers<[1], [0], [0], [1], [0, 0, 1, 1], [], []>} : vector<8x64xbf16>, vector<64x128xbf16>, vector<8x128xf32> -> vector<8x128xf32>
    %190 = arith.addf %184, %189 : vector<8x128xf32>
    %191 = vector.broadcast %0 : vector<1x128xf32> to vector<8x128xf32>
    %192 = arith.addf %190, %191 : vector<8x128xf32>
    %cst_217 = arith.constant 0.000000e+00 : f32
    %193 = vector.broadcast %cst_217 : f32 to vector<8x128xf32>
    %194 = arith.maximumf %192, %193 : vector<8x128xf32>
    %195 = arith.truncf %194 : vector<8x128xf32> to vector<8x128xbf16>
    %c0_218 = arith.constant 0 : index
    %c5_219 = arith.constant 5 : index
    %c0_220 = arith.constant 0 : index
    %c0_221 = arith.constant 0 : index
    %196 = vector.load %arg4[%c0_218, %c5_219, %c0_220, %c0_221] : memref<1x8x8x128xbf16, #tpu.memory_space<vmem>>, vector<1x1x8x128xbf16>
    %197 = vector.shape_cast %196 : vector<1x1x8x128xbf16> to vector<8x128xbf16>
    %198 = vector.shape_cast %195 : vector<8x128xbf16> to vector<1x1x8x128xbf16>
    tpu.vector_store %arg4[%c0_218, %c5_219, %c0_220, %c0_221], %198 {strides = array<i32>} : memref<1x8x8x128xbf16, #tpu.memory_space<vmem>>, vector<1x1x8x128xbf16>,
    %cst_222 = arith.constant 0.000000e+00 : f32
    %199 = vector.broadcast %cst_222 : f32 to vector<8x128xf32>
    %c0_223 = arith.constant 0 : index
    %c6_224 = arith.constant 6 : index
    %c0_225 = arith.constant 0 : index
    %c0_226 = arith.constant 0 : index
    %200 = vector.load %arg1[%c0_223, %c6_224, %c0_225, %c0_226] : memref<1x9x9x64xbf16, #tpu.memory_space<vmem>>, vector<1x1x8x64xbf16>
    %201 = vector.shape_cast %200 : vector<1x1x8x64xbf16> to vector<8x64xbf16>
    %c0_227 = arith.constant 0 : index
    %c0_228 = arith.constant 0 : index
    %c0_229 = arith.constant 0 : index
    %202 = vector.load %arg2[%c0_227, %c0_228, %c0_229] : memref<4x64x128xbf16, #tpu.memory_space<vmem>>, vector<1x64x128xbf16>
    %203 = vector.shape_cast %202 : vector<1x64x128xbf16> to vector<64x128xbf16>
    %cst_230 = arith.constant dense<0.000000e+00> : vector<8x128xf32>
    %204 = tpu.matmul %201, %203, %cst_230 {dimension_numbers = #tpu.dot_dimension_numbers<[1], [0], [0], [1], [0, 0, 1, 1], [], []>} : vector<8x64xbf16>, vector<64x128xbf16>, vector<8x128xf32> -> vector<8x128xf32>
    %205 = arith.addf %199, %204 : vector<8x128xf32>
    %c0_231 = arith.constant 0 : index
    %c6_232 = arith.constant 6 : index
    %c1_233 = arith.constant 1 : index
    %c0_234 = arith.constant 0 : index
    %206 = vector.load %arg1[%c0_231, %c6_232, %c1_233, %c0_234] : memref<1x9x9x64xbf16, #tpu.memory_space<vmem>>, vector<1x1x8x64xbf16>
    %207 = vector.shape_cast %206 : vector<1x1x8x64xbf16> to vector<8x64xbf16>
    %c1_235 = arith.constant 1 : index
    %c0_236 = arith.constant 0 : index
    %c0_237 = arith.constant 0 : index
    %208 = vector.load %arg2[%c1_235, %c0_236, %c0_237] : memref<4x64x128xbf16, #tpu.memory_space<vmem>>, vector<1x64x128xbf16>
    %209 = vector.shape_cast %208 : vector<1x64x128xbf16> to vector<64x128xbf16>
    %cst_238 = arith.constant dense<0.000000e+00> : vector<8x128xf32>
    %210 = tpu.matmul %207, %209, %cst_238 {dimension_numbers = #tpu.dot_dimension_numbers<[1], [0], [0], [1], [0, 0, 1, 1], [], []>} : vector<8x64xbf16>, vector<64x128xbf16>, vector<8x128xf32> -> vector<8x128xf32>
    %211 = arith.addf %205, %210 : vector<8x128xf32>
    %c0_239 = arith.constant 0 : index
    %c7 = arith.constant 7 : index
    %c0_240 = arith.constant 0 : index
    %c0_241 = arith.constant 0 : index
    %212 = vector.load %arg1[%c0_239, %c7, %c0_240, %c0_241] : memref<1x9x9x64xbf16, #tpu.memory_space<vmem>>, vector<1x1x8x64xbf16>
    %213 = vector.shape_cast %212 : vector<1x1x8x64xbf16> to vector<8x64xbf16>
    %c2_242 = arith.constant 2 : index
    %c0_243 = arith.constant 0 : index
    %c0_244 = arith.constant 0 : index
    %214 = vector.load %arg2[%c2_242, %c0_243, %c0_244] : memref<4x64x128xbf16, #tpu.memory_space<vmem>>, vector<1x64x128xbf16>
    %215 = vector.shape_cast %214 : vector<1x64x128xbf16> to vector<64x128xbf16>
    %cst_245 = arith.constant dense<0.000000e+00> : vector<8x128xf32>
    %216 = tpu.matmul %213, %215, %cst_245 {dimension_numbers = #tpu.dot_dimension_numbers<[1], [0], [0], [1], [0, 0, 1, 1], [], []>} : vector<8x64xbf16>, vector<64x128xbf16>, vector<8x128xf32> -> vector<8x128xf32>
    %217 = arith.addf %211, %216 : vector<8x128xf32>
    %c0_246 = arith.constant 0 : index
    %c7_247 = arith.constant 7 : index
    %c1_248 = arith.constant 1 : index
    %c0_249 = arith.constant 0 : index
    %218 = vector.load %arg1[%c0_246, %c7_247, %c1_248, %c0_249] : memref<1x9x9x64xbf16, #tpu.memory_space<vmem>>, vector<1x1x8x64xbf16>
    %219 = vector.shape_cast %218 : vector<1x1x8x64xbf16> to vector<8x64xbf16>
    %c3_250 = arith.constant 3 : index
    %c0_251 = arith.constant 0 : index
    %c0_252 = arith.constant 0 : index
    %220 = vector.load %arg2[%c3_250, %c0_251, %c0_252] : memref<4x64x128xbf16, #tpu.memory_space<vmem>>, vector<1x64x128xbf16>
    %221 = vector.shape_cast %220 : vector<1x64x128xbf16> to vector<64x128xbf16>
    %cst_253 = arith.constant dense<0.000000e+00> : vector<8x128xf32>
    %222 = tpu.matmul %219, %221, %cst_253 {dimension_numbers = #tpu.dot_dimension_numbers<[1], [0], [0], [1], [0, 0, 1, 1], [], []>} : vector<8x64xbf16>, vector<64x128xbf16>, vector<8x128xf32> -> vector<8x128xf32>
    %223 = arith.addf %217, %222 : vector<8x128xf32>
    %224 = vector.broadcast %0 : vector<1x128xf32> to vector<8x128xf32>
    %225 = arith.addf %223, %224 : vector<8x128xf32>
    %cst_254 = arith.constant 0.000000e+00 : f32
    %226 = vector.broadcast %cst_254 : f32 to vector<8x128xf32>
    %227 = arith.maximumf %225, %226 : vector<8x128xf32>
    %228 = arith.truncf %227 : vector<8x128xf32> to vector<8x128xbf16>
    %c0_255 = arith.constant 0 : index
    %c6_256 = arith.constant 6 : index
    %c0_257 = arith.constant 0 : index
    %c0_258 = arith.constant 0 : index
    %229 = vector.load %arg4[%c0_255, %c6_256, %c0_257, %c0_258] : memref<1x8x8x128xbf16, #tpu.memory_space<vmem>>, vector<1x1x8x128xbf16>
    %230 = vector.shape_cast %229 : vector<1x1x8x128xbf16> to vector<8x128xbf16>
    %231 = vector.shape_cast %228 : vector<8x128xbf16> to vector<1x1x8x128xbf16>
    tpu.vector_store %arg4[%c0_255, %c6_256, %c0_257, %c0_258], %231 {strides = array<i32>} : memref<1x8x8x128xbf16, #tpu.memory_space<vmem>>, vector<1x1x8x128xbf16>,
    %cst_259 = arith.constant 0.000000e+00 : f32
    %232 = vector.broadcast %cst_259 : f32 to vector<8x128xf32>
    %c0_260 = arith.constant 0 : index
    %c7_261 = arith.constant 7 : index
    %c0_262 = arith.constant 0 : index
    %c0_263 = arith.constant 0 : index
    %233 = vector.load %arg1[%c0_260, %c7_261, %c0_262, %c0_263] : memref<1x9x9x64xbf16, #tpu.memory_space<vmem>>, vector<1x1x8x64xbf16>
    %234 = vector.shape_cast %233 : vector<1x1x8x64xbf16> to vector<8x64xbf16>
    %c0_264 = arith.constant 0 : index
    %c0_265 = arith.constant 0 : index
    %c0_266 = arith.constant 0 : index
    %235 = vector.load %arg2[%c0_264, %c0_265, %c0_266] : memref<4x64x128xbf16, #tpu.memory_space<vmem>>, vector<1x64x128xbf16>
    %236 = vector.shape_cast %235 : vector<1x64x128xbf16> to vector<64x128xbf16>
    %cst_267 = arith.constant dense<0.000000e+00> : vector<8x128xf32>
    %237 = tpu.matmul %234, %236, %cst_267 {dimension_numbers = #tpu.dot_dimension_numbers<[1], [0], [0], [1], [0, 0, 1, 1], [], []>} : vector<8x64xbf16>, vector<64x128xbf16>, vector<8x128xf32> -> vector<8x128xf32>
    %238 = arith.addf %232, %237 : vector<8x128xf32>
    %c0_268 = arith.constant 0 : index
    %c7_269 = arith.constant 7 : index
    %c1_270 = arith.constant 1 : index
    %c0_271 = arith.constant 0 : index
    %239 = vector.load %arg1[%c0_268, %c7_269, %c1_270, %c0_271] : memref<1x9x9x64xbf16, #tpu.memory_space<vmem>>, vector<1x1x8x64xbf16>
    %240 = vector.shape_cast %239 : vector<1x1x8x64xbf16> to vector<8x64xbf16>
    %c1_272 = arith.constant 1 : index
    %c0_273 = arith.constant 0 : index
    %c0_274 = arith.constant 0 : index
    %241 = vector.load %arg2[%c1_272, %c0_273, %c0_274] : memref<4x64x128xbf16, #tpu.memory_space<vmem>>, vector<1x64x128xbf16>
    %242 = vector.shape_cast %241 : vector<1x64x128xbf16> to vector<64x128xbf16>
    %cst_275 = arith.constant dense<0.000000e+00> : vector<8x128xf32>
    %243 = tpu.matmul %240, %242, %cst_275 {dimension_numbers = #tpu.dot_dimension_numbers<[1], [0], [0], [1], [0, 0, 1, 1], [], []>} : vector<8x64xbf16>, vector<64x128xbf16>, vector<8x128xf32> -> vector<8x128xf32>
    %244 = arith.addf %238, %243 : vector<8x128xf32>
    %c0_276 = arith.constant 0 : index
    %c8 = arith.constant 8 : index
    %c0_277 = arith.constant 0 : index
    %c0_278 = arith.constant 0 : index
    %245 = vector.load %arg1[%c0_276, %c8, %c0_277, %c0_278] : memref<1x9x9x64xbf16, #tpu.memory_space<vmem>>, vector<1x1x8x64xbf16>
    %246 = vector.shape_cast %245 : vector<1x1x8x64xbf16> to vector<8x64xbf16>
    %c2_279 = arith.constant 2 : index
    %c0_280 = arith.constant 0 : index
    %c0_281 = arith.constant 0 : index
    %247 = vector.load %arg2[%c2_279, %c0_280, %c0_281] : memref<4x64x128xbf16, #tpu.memory_space<vmem>>, vector<1x64x128xbf16>
    %248 = vector.shape_cast %247 : vector<1x64x128xbf16> to vector<64x128xbf16>
    %cst_282 = arith.constant dense<0.000000e+00> : vector<8x128xf32>
    %249 = tpu.matmul %246, %248, %cst_282 {dimension_numbers = #tpu.dot_dimension_numbers<[1], [0], [0], [1], [0, 0, 1, 1], [], []>} : vector<8x64xbf16>, vector<64x128xbf16>, vector<8x128xf32> -> vector<8x128xf32>
    %250 = arith.addf %244, %249 : vector<8x128xf32>
    %c0_283 = arith.constant 0 : index
    %c8_284 = arith.constant 8 : index
    %c1_285 = arith.constant 1 : index
    %c0_286 = arith.constant 0 : index
    %251 = vector.load %arg1[%c0_283, %c8_284, %c1_285, %c0_286] : memref<1x9x9x64xbf16, #tpu.memory_space<vmem>>, vector<1x1x8x64xbf16>
    %252 = vector.shape_cast %251 : vector<1x1x8x64xbf16> to vector<8x64xbf16>
    %c3_287 = arith.constant 3 : index
    %c0_288 = arith.constant 0 : index
    %c0_289 = arith.constant 0 : index
    %253 = vector.load %arg2[%c3_287, %c0_288, %c0_289] : memref<4x64x128xbf16, #tpu.memory_space<vmem>>, vector<1x64x128xbf16>
    %254 = vector.shape_cast %253 : vector<1x64x128xbf16> to vector<64x128xbf16>
    %cst_290 = arith.constant dense<0.000000e+00> : vector<8x128xf32>
    %255 = tpu.matmul %252, %254, %cst_290 {dimension_numbers = #tpu.dot_dimension_numbers<[1], [0], [0], [1], [0, 0, 1, 1], [], []>} : vector<8x64xbf16>, vector<64x128xbf16>, vector<8x128xf32> -> vector<8x128xf32>
    %256 = arith.addf %250, %255 : vector<8x128xf32>
    %257 = vector.broadcast %0 : vector<1x128xf32> to vector<8x128xf32>
    %258 = arith.addf %256, %257 : vector<8x128xf32>
    %cst_291 = arith.constant 0.000000e+00 : f32
    %259 = vector.broadcast %cst_291 : f32 to vector<8x128xf32>
    %260 = arith.maximumf %258, %259 : vector<8x128xf32>
    %261 = arith.truncf %260 : vector<8x128xf32> to vector<8x128xbf16>
    %c0_292 = arith.constant 0 : index
    %c7_293 = arith.constant 7 : index
    %c0_294 = arith.constant 0 : index
    %c0_295 = arith.constant 0 : index
    %262 = vector.load %arg4[%c0_292, %c7_293, %c0_294, %c0_295] : memref<1x8x8x128xbf16, #tpu.memory_space<vmem>>, vector<1x1x8x128xbf16>
    %263 = vector.shape_cast %262 : vector<1x1x8x128xbf16> to vector<8x128xbf16>
    %264 = vector.shape_cast %261 : vector<8x128xbf16> to vector<1x1x8x128xbf16>
    tpu.vector_store %arg4[%c0_292, %c7_293, %c0_294, %c0_295], %264 {strides = array<i32>} : memref<1x8x8x128xbf16, #tpu.memory_space<vmem>>, vector<1x1x8x128xbf16>,
    return
  }
  func.func @transform_0(%arg0: i32) -> (i32, i32, i32, i32) {
    %c0_i32 = arith.constant 0 : i32
    %c0_i32_0 = arith.constant 0 : i32
    %c0_i32_1 = arith.constant 0 : i32
    %c0_i32_2 = arith.constant 0 : i32
    return %arg0, %c0_i32, %c0_i32_0, %c0_i32_1 : i32, i32, i32, i32
  }
  func.func @transform_1(%arg0: i32) -> (i32, i32, i32) {
    %c0_i32 = arith.constant 0 : i32
    %c0_i32_0 = arith.constant 0 : i32
    %c0_i32_1 = arith.constant 0 : i32
    %c0_i32_2 = arith.constant 0 : i32
    return %c0_i32, %c0_i32_0, %c0_i32_1 : i32, i32, i32
  }
  func.func @transform_2(%arg0: i32) -> (i32, i32) {
    %c0_i32 = arith.constant 0 : i32
    %c0_i32_0 = arith.constant 0 : i32
    %c0_i32_1 = arith.constant 0 : i32
    return %c0_i32, %c0_i32_0 : i32, i32
  }
  func.func @transform_3(%arg0: i32) -> (i32, i32, i32, i32) {
    %c0_i32 = arith.constant 0 : i32
    %c0_i32_0 = arith.constant 0 : i32
    %c0_i32_1 = arith.constant 0 : i32
    %c0_i32_2 = arith.constant 0 : i32
    return %arg0, %c0_i32, %c0_i32_0, %c0_i32_1 : i32, i32, i32, i32
  }
}

module attributes {stable_mosaic.version = 11 : i64} {
  func.func @_conv_s2d_kernel(%arg0: i32, %arg1: memref<1x4x4x512xbf16, #tpu.memory_space<vmem>>, %arg2: memref<4x512x128xbf16, #tpu.memory_space<vmem>>, %arg3: memref<1x128xf32, #tpu.memory_space<vmem>>, %arg4: memref<1x3x3x128xbf16, #tpu.memory_space<vmem>>) attributes {dimension_semantics = [#tpu.dimension_semantics<parallel>], iteration_bounds = array<i64: 2>, scalar_prefetch = 0 : i64, scratch_operands = 0 : i64, tpu.core_type = #tpu.core_type<tc>, window_params = [{transform_indices = @transform_0, window_bounds = array<i64: 1, 4, 4, 512>}, {pipeline_mode = #tpu.pipeline_mode<synchronous>, transform_indices = @transform_1, window_bounds = array<i64: 4, 512, 128>}, {pipeline_mode = #tpu.pipeline_mode<synchronous>, transform_indices = @transform_2, window_bounds = array<i64: 1, 128>}, {transform_indices = @transform_3, window_bounds = array<i64: 1, 3, 3, 128>}]} {
    %c0 = arith.constant 0 : index
    %c0_0 = arith.constant 0 : index
    %0 = vector.load %arg3[%c0, %c0_0] : memref<1x128xf32, #tpu.memory_space<vmem>>, vector<1x128xf32>
    %cst = arith.constant 0.000000e+00 : f32
    %1 = vector.broadcast %cst : f32 to vector<3x128xf32>
    %c0_1 = arith.constant 0 : index
    %c0_2 = arith.constant 0 : index
    %c0_3 = arith.constant 0 : index
    %c0_4 = arith.constant 0 : index
    %2 = vector.load %arg1[%c0_1, %c0_2, %c0_3, %c0_4] : memref<1x4x4x512xbf16, #tpu.memory_space<vmem>>, vector<1x1x3x512xbf16>
    %3 = vector.shape_cast %2 : vector<1x1x3x512xbf16> to vector<3x512xbf16>
    %c0_5 = arith.constant 0 : index
    %c0_6 = arith.constant 0 : index
    %c0_7 = arith.constant 0 : index
    %4 = vector.load %arg2[%c0_5, %c0_6, %c0_7] : memref<4x512x128xbf16, #tpu.memory_space<vmem>>, vector<1x512x128xbf16>
    %5 = vector.shape_cast %4 : vector<1x512x128xbf16> to vector<512x128xbf16>
    %cst_8 = arith.constant dense<0.000000e+00> : vector<3x128xf32>
    %6 = tpu.matmul %3, %5, %cst_8 {dimension_numbers = #tpu.dot_dimension_numbers<[1], [0], [0], [1], [0, 0, 1, 1], [], []>} : vector<3x512xbf16>, vector<512x128xbf16>, vector<3x128xf32> -> vector<3x128xf32>
    %7 = arith.addf %1, %6 : vector<3x128xf32>
    %c0_9 = arith.constant 0 : index
    %c0_10 = arith.constant 0 : index
    %c1 = arith.constant 1 : index
    %c0_11 = arith.constant 0 : index
    %8 = vector.load %arg1[%c0_9, %c0_10, %c1, %c0_11] : memref<1x4x4x512xbf16, #tpu.memory_space<vmem>>, vector<1x1x3x512xbf16>
    %9 = vector.shape_cast %8 : vector<1x1x3x512xbf16> to vector<3x512xbf16>
    %c1_12 = arith.constant 1 : index
    %c0_13 = arith.constant 0 : index
    %c0_14 = arith.constant 0 : index
    %10 = vector.load %arg2[%c1_12, %c0_13, %c0_14] : memref<4x512x128xbf16, #tpu.memory_space<vmem>>, vector<1x512x128xbf16>
    %11 = vector.shape_cast %10 : vector<1x512x128xbf16> to vector<512x128xbf16>
    %cst_15 = arith.constant dense<0.000000e+00> : vector<3x128xf32>
    %12 = tpu.matmul %9, %11, %cst_15 {dimension_numbers = #tpu.dot_dimension_numbers<[1], [0], [0], [1], [0, 0, 1, 1], [], []>} : vector<3x512xbf16>, vector<512x128xbf16>, vector<3x128xf32> -> vector<3x128xf32>
    %13 = arith.addf %7, %12 : vector<3x128xf32>
    %c0_16 = arith.constant 0 : index
    %c1_17 = arith.constant 1 : index
    %c0_18 = arith.constant 0 : index
    %c0_19 = arith.constant 0 : index
    %14 = vector.load %arg1[%c0_16, %c1_17, %c0_18, %c0_19] : memref<1x4x4x512xbf16, #tpu.memory_space<vmem>>, vector<1x1x3x512xbf16>
    %15 = vector.shape_cast %14 : vector<1x1x3x512xbf16> to vector<3x512xbf16>
    %c2 = arith.constant 2 : index
    %c0_20 = arith.constant 0 : index
    %c0_21 = arith.constant 0 : index
    %16 = vector.load %arg2[%c2, %c0_20, %c0_21] : memref<4x512x128xbf16, #tpu.memory_space<vmem>>, vector<1x512x128xbf16>
    %17 = vector.shape_cast %16 : vector<1x512x128xbf16> to vector<512x128xbf16>
    %cst_22 = arith.constant dense<0.000000e+00> : vector<3x128xf32>
    %18 = tpu.matmul %15, %17, %cst_22 {dimension_numbers = #tpu.dot_dimension_numbers<[1], [0], [0], [1], [0, 0, 1, 1], [], []>} : vector<3x512xbf16>, vector<512x128xbf16>, vector<3x128xf32> -> vector<3x128xf32>
    %19 = arith.addf %13, %18 : vector<3x128xf32>
    %c0_23 = arith.constant 0 : index
    %c1_24 = arith.constant 1 : index
    %c1_25 = arith.constant 1 : index
    %c0_26 = arith.constant 0 : index
    %20 = vector.load %arg1[%c0_23, %c1_24, %c1_25, %c0_26] : memref<1x4x4x512xbf16, #tpu.memory_space<vmem>>, vector<1x1x3x512xbf16>
    %21 = vector.shape_cast %20 : vector<1x1x3x512xbf16> to vector<3x512xbf16>
    %c3 = arith.constant 3 : index
    %c0_27 = arith.constant 0 : index
    %c0_28 = arith.constant 0 : index
    %22 = vector.load %arg2[%c3, %c0_27, %c0_28] : memref<4x512x128xbf16, #tpu.memory_space<vmem>>, vector<1x512x128xbf16>
    %23 = vector.shape_cast %22 : vector<1x512x128xbf16> to vector<512x128xbf16>
    %cst_29 = arith.constant dense<0.000000e+00> : vector<3x128xf32>
    %24 = tpu.matmul %21, %23, %cst_29 {dimension_numbers = #tpu.dot_dimension_numbers<[1], [0], [0], [1], [0, 0, 1, 1], [], []>} : vector<3x512xbf16>, vector<512x128xbf16>, vector<3x128xf32> -> vector<3x128xf32>
    %25 = arith.addf %19, %24 : vector<3x128xf32>
    %26 = vector.broadcast %0 : vector<1x128xf32> to vector<3x128xf32>
    %27 = arith.addf %25, %26 : vector<3x128xf32>
    %cst_30 = arith.constant 0.000000e+00 : f32
    %28 = vector.broadcast %cst_30 : f32 to vector<3x128xf32>
    %29 = arith.maximumf %27, %28 : vector<3x128xf32>
    %30 = arith.truncf %29 : vector<3x128xf32> to vector<3x128xbf16>
    %c0_31 = arith.constant 0 : index
    %c0_32 = arith.constant 0 : index
    %c0_33 = arith.constant 0 : index
    %c0_34 = arith.constant 0 : index
    %31 = vector.load %arg4[%c0_31, %c0_32, %c0_33, %c0_34] : memref<1x3x3x128xbf16, #tpu.memory_space<vmem>>, vector<1x1x3x128xbf16>
    %32 = vector.shape_cast %31 : vector<1x1x3x128xbf16> to vector<3x128xbf16>
    %33 = vector.shape_cast %30 : vector<3x128xbf16> to vector<1x1x3x128xbf16>
    tpu.vector_store %arg4[%c0_31, %c0_32, %c0_33, %c0_34], %33 {strides = array<i32>} : memref<1x3x3x128xbf16, #tpu.memory_space<vmem>>, vector<1x1x3x128xbf16>,
    %cst_35 = arith.constant 0.000000e+00 : f32
    %34 = vector.broadcast %cst_35 : f32 to vector<3x128xf32>
    %c0_36 = arith.constant 0 : index
    %c1_37 = arith.constant 1 : index
    %c0_38 = arith.constant 0 : index
    %c0_39 = arith.constant 0 : index
    %35 = vector.load %arg1[%c0_36, %c1_37, %c0_38, %c0_39] : memref<1x4x4x512xbf16, #tpu.memory_space<vmem>>, vector<1x1x3x512xbf16>
    %36 = vector.shape_cast %35 : vector<1x1x3x512xbf16> to vector<3x512xbf16>
    %c0_40 = arith.constant 0 : index
    %c0_41 = arith.constant 0 : index
    %c0_42 = arith.constant 0 : index
    %37 = vector.load %arg2[%c0_40, %c0_41, %c0_42] : memref<4x512x128xbf16, #tpu.memory_space<vmem>>, vector<1x512x128xbf16>
    %38 = vector.shape_cast %37 : vector<1x512x128xbf16> to vector<512x128xbf16>
    %cst_43 = arith.constant dense<0.000000e+00> : vector<3x128xf32>
    %39 = tpu.matmul %36, %38, %cst_43 {dimension_numbers = #tpu.dot_dimension_numbers<[1], [0], [0], [1], [0, 0, 1, 1], [], []>} : vector<3x512xbf16>, vector<512x128xbf16>, vector<3x128xf32> -> vector<3x128xf32>
    %40 = arith.addf %34, %39 : vector<3x128xf32>
    %c0_44 = arith.constant 0 : index
    %c1_45 = arith.constant 1 : index
    %c1_46 = arith.constant 1 : index
    %c0_47 = arith.constant 0 : index
    %41 = vector.load %arg1[%c0_44, %c1_45, %c1_46, %c0_47] : memref<1x4x4x512xbf16, #tpu.memory_space<vmem>>, vector<1x1x3x512xbf16>
    %42 = vector.shape_cast %41 : vector<1x1x3x512xbf16> to vector<3x512xbf16>
    %c1_48 = arith.constant 1 : index
    %c0_49 = arith.constant 0 : index
    %c0_50 = arith.constant 0 : index
    %43 = vector.load %arg2[%c1_48, %c0_49, %c0_50] : memref<4x512x128xbf16, #tpu.memory_space<vmem>>, vector<1x512x128xbf16>
    %44 = vector.shape_cast %43 : vector<1x512x128xbf16> to vector<512x128xbf16>
    %cst_51 = arith.constant dense<0.000000e+00> : vector<3x128xf32>
    %45 = tpu.matmul %42, %44, %cst_51 {dimension_numbers = #tpu.dot_dimension_numbers<[1], [0], [0], [1], [0, 0, 1, 1], [], []>} : vector<3x512xbf16>, vector<512x128xbf16>, vector<3x128xf32> -> vector<3x128xf32>
    %46 = arith.addf %40, %45 : vector<3x128xf32>
    %c0_52 = arith.constant 0 : index
    %c2_53 = arith.constant 2 : index
    %c0_54 = arith.constant 0 : index
    %c0_55 = arith.constant 0 : index
    %47 = vector.load %arg1[%c0_52, %c2_53, %c0_54, %c0_55] : memref<1x4x4x512xbf16, #tpu.memory_space<vmem>>, vector<1x1x3x512xbf16>
    %48 = vector.shape_cast %47 : vector<1x1x3x512xbf16> to vector<3x512xbf16>
    %c2_56 = arith.constant 2 : index
    %c0_57 = arith.constant 0 : index
    %c0_58 = arith.constant 0 : index
    %49 = vector.load %arg2[%c2_56, %c0_57, %c0_58] : memref<4x512x128xbf16, #tpu.memory_space<vmem>>, vector<1x512x128xbf16>
    %50 = vector.shape_cast %49 : vector<1x512x128xbf16> to vector<512x128xbf16>
    %cst_59 = arith.constant dense<0.000000e+00> : vector<3x128xf32>
    %51 = tpu.matmul %48, %50, %cst_59 {dimension_numbers = #tpu.dot_dimension_numbers<[1], [0], [0], [1], [0, 0, 1, 1], [], []>} : vector<3x512xbf16>, vector<512x128xbf16>, vector<3x128xf32> -> vector<3x128xf32>
    %52 = arith.addf %46, %51 : vector<3x128xf32>
    %c0_60 = arith.constant 0 : index
    %c2_61 = arith.constant 2 : index
    %c1_62 = arith.constant 1 : index
    %c0_63 = arith.constant 0 : index
    %53 = vector.load %arg1[%c0_60, %c2_61, %c1_62, %c0_63] : memref<1x4x4x512xbf16, #tpu.memory_space<vmem>>, vector<1x1x3x512xbf16>
    %54 = vector.shape_cast %53 : vector<1x1x3x512xbf16> to vector<3x512xbf16>
    %c3_64 = arith.constant 3 : index
    %c0_65 = arith.constant 0 : index
    %c0_66 = arith.constant 0 : index
    %55 = vector.load %arg2[%c3_64, %c0_65, %c0_66] : memref<4x512x128xbf16, #tpu.memory_space<vmem>>, vector<1x512x128xbf16>
    %56 = vector.shape_cast %55 : vector<1x512x128xbf16> to vector<512x128xbf16>
    %cst_67 = arith.constant dense<0.000000e+00> : vector<3x128xf32>
    %57 = tpu.matmul %54, %56, %cst_67 {dimension_numbers = #tpu.dot_dimension_numbers<[1], [0], [0], [1], [0, 0, 1, 1], [], []>} : vector<3x512xbf16>, vector<512x128xbf16>, vector<3x128xf32> -> vector<3x128xf32>
    %58 = arith.addf %52, %57 : vector<3x128xf32>
    %59 = vector.broadcast %0 : vector<1x128xf32> to vector<3x128xf32>
    %60 = arith.addf %58, %59 : vector<3x128xf32>
    %cst_68 = arith.constant 0.000000e+00 : f32
    %61 = vector.broadcast %cst_68 : f32 to vector<3x128xf32>
    %62 = arith.maximumf %60, %61 : vector<3x128xf32>
    %63 = arith.truncf %62 : vector<3x128xf32> to vector<3x128xbf16>
    %c0_69 = arith.constant 0 : index
    %c1_70 = arith.constant 1 : index
    %c0_71 = arith.constant 0 : index
    %c0_72 = arith.constant 0 : index
    %64 = vector.load %arg4[%c0_69, %c1_70, %c0_71, %c0_72] : memref<1x3x3x128xbf16, #tpu.memory_space<vmem>>, vector<1x1x3x128xbf16>
    %65 = vector.shape_cast %64 : vector<1x1x3x128xbf16> to vector<3x128xbf16>
    %66 = vector.shape_cast %63 : vector<3x128xbf16> to vector<1x1x3x128xbf16>
    tpu.vector_store %arg4[%c0_69, %c1_70, %c0_71, %c0_72], %66 {strides = array<i32>} : memref<1x3x3x128xbf16, #tpu.memory_space<vmem>>, vector<1x1x3x128xbf16>,
    %cst_73 = arith.constant 0.000000e+00 : f32
    %67 = vector.broadcast %cst_73 : f32 to vector<3x128xf32>
    %c0_74 = arith.constant 0 : index
    %c2_75 = arith.constant 2 : index
    %c0_76 = arith.constant 0 : index
    %c0_77 = arith.constant 0 : index
    %68 = vector.load %arg1[%c0_74, %c2_75, %c0_76, %c0_77] : memref<1x4x4x512xbf16, #tpu.memory_space<vmem>>, vector<1x1x3x512xbf16>
    %69 = vector.shape_cast %68 : vector<1x1x3x512xbf16> to vector<3x512xbf16>
    %c0_78 = arith.constant 0 : index
    %c0_79 = arith.constant 0 : index
    %c0_80 = arith.constant 0 : index
    %70 = vector.load %arg2[%c0_78, %c0_79, %c0_80] : memref<4x512x128xbf16, #tpu.memory_space<vmem>>, vector<1x512x128xbf16>
    %71 = vector.shape_cast %70 : vector<1x512x128xbf16> to vector<512x128xbf16>
    %cst_81 = arith.constant dense<0.000000e+00> : vector<3x128xf32>
    %72 = tpu.matmul %69, %71, %cst_81 {dimension_numbers = #tpu.dot_dimension_numbers<[1], [0], [0], [1], [0, 0, 1, 1], [], []>} : vector<3x512xbf16>, vector<512x128xbf16>, vector<3x128xf32> -> vector<3x128xf32>
    %73 = arith.addf %67, %72 : vector<3x128xf32>
    %c0_82 = arith.constant 0 : index
    %c2_83 = arith.constant 2 : index
    %c1_84 = arith.constant 1 : index
    %c0_85 = arith.constant 0 : index
    %74 = vector.load %arg1[%c0_82, %c2_83, %c1_84, %c0_85] : memref<1x4x4x512xbf16, #tpu.memory_space<vmem>>, vector<1x1x3x512xbf16>
    %75 = vector.shape_cast %74 : vector<1x1x3x512xbf16> to vector<3x512xbf16>
    %c1_86 = arith.constant 1 : index
    %c0_87 = arith.constant 0 : index
    %c0_88 = arith.constant 0 : index
    %76 = vector.load %arg2[%c1_86, %c0_87, %c0_88] : memref<4x512x128xbf16, #tpu.memory_space<vmem>>, vector<1x512x128xbf16>
    %77 = vector.shape_cast %76 : vector<1x512x128xbf16> to vector<512x128xbf16>
    %cst_89 = arith.constant dense<0.000000e+00> : vector<3x128xf32>
    %78 = tpu.matmul %75, %77, %cst_89 {dimension_numbers = #tpu.dot_dimension_numbers<[1], [0], [0], [1], [0, 0, 1, 1], [], []>} : vector<3x512xbf16>, vector<512x128xbf16>, vector<3x128xf32> -> vector<3x128xf32>
    %79 = arith.addf %73, %78 : vector<3x128xf32>
    %c0_90 = arith.constant 0 : index
    %c3_91 = arith.constant 3 : index
    %c0_92 = arith.constant 0 : index
    %c0_93 = arith.constant 0 : index
    %80 = vector.load %arg1[%c0_90, %c3_91, %c0_92, %c0_93] : memref<1x4x4x512xbf16, #tpu.memory_space<vmem>>, vector<1x1x3x512xbf16>
    %81 = vector.shape_cast %80 : vector<1x1x3x512xbf16> to vector<3x512xbf16>
    %c2_94 = arith.constant 2 : index
    %c0_95 = arith.constant 0 : index
    %c0_96 = arith.constant 0 : index
    %82 = vector.load %arg2[%c2_94, %c0_95, %c0_96] : memref<4x512x128xbf16, #tpu.memory_space<vmem>>, vector<1x512x128xbf16>
    %83 = vector.shape_cast %82 : vector<1x512x128xbf16> to vector<512x128xbf16>
    %cst_97 = arith.constant dense<0.000000e+00> : vector<3x128xf32>
    %84 = tpu.matmul %81, %83, %cst_97 {dimension_numbers = #tpu.dot_dimension_numbers<[1], [0], [0], [1], [0, 0, 1, 1], [], []>} : vector<3x512xbf16>, vector<512x128xbf16>, vector<3x128xf32> -> vector<3x128xf32>
    %85 = arith.addf %79, %84 : vector<3x128xf32>
    %c0_98 = arith.constant 0 : index
    %c3_99 = arith.constant 3 : index
    %c1_100 = arith.constant 1 : index
    %c0_101 = arith.constant 0 : index
    %86 = vector.load %arg1[%c0_98, %c3_99, %c1_100, %c0_101] : memref<1x4x4x512xbf16, #tpu.memory_space<vmem>>, vector<1x1x3x512xbf16>
    %87 = vector.shape_cast %86 : vector<1x1x3x512xbf16> to vector<3x512xbf16>
    %c3_102 = arith.constant 3 : index
    %c0_103 = arith.constant 0 : index
    %c0_104 = arith.constant 0 : index
    %88 = vector.load %arg2[%c3_102, %c0_103, %c0_104] : memref<4x512x128xbf16, #tpu.memory_space<vmem>>, vector<1x512x128xbf16>
    %89 = vector.shape_cast %88 : vector<1x512x128xbf16> to vector<512x128xbf16>
    %cst_105 = arith.constant dense<0.000000e+00> : vector<3x128xf32>
    %90 = tpu.matmul %87, %89, %cst_105 {dimension_numbers = #tpu.dot_dimension_numbers<[1], [0], [0], [1], [0, 0, 1, 1], [], []>} : vector<3x512xbf16>, vector<512x128xbf16>, vector<3x128xf32> -> vector<3x128xf32>
    %91 = arith.addf %85, %90 : vector<3x128xf32>
    %92 = vector.broadcast %0 : vector<1x128xf32> to vector<3x128xf32>
    %93 = arith.addf %91, %92 : vector<3x128xf32>
    %cst_106 = arith.constant 0.000000e+00 : f32
    %94 = vector.broadcast %cst_106 : f32 to vector<3x128xf32>
    %95 = arith.maximumf %93, %94 : vector<3x128xf32>
    %96 = arith.truncf %95 : vector<3x128xf32> to vector<3x128xbf16>
    %c0_107 = arith.constant 0 : index
    %c2_108 = arith.constant 2 : index
    %c0_109 = arith.constant 0 : index
    %c0_110 = arith.constant 0 : index
    %97 = vector.load %arg4[%c0_107, %c2_108, %c0_109, %c0_110] : memref<1x3x3x128xbf16, #tpu.memory_space<vmem>>, vector<1x1x3x128xbf16>
    %98 = vector.shape_cast %97 : vector<1x1x3x128xbf16> to vector<3x128xbf16>
    %99 = vector.shape_cast %96 : vector<3x128xbf16> to vector<1x1x3x128xbf16>
    tpu.vector_store %arg4[%c0_107, %c2_108, %c0_109, %c0_110], %99 {strides = array<i32>} : memref<1x3x3x128xbf16, #tpu.memory_space<vmem>>, vector<1x1x3x128xbf16>,
    return
  }
  func.func @transform_0(%arg0: i32) -> (i32, i32, i32, i32) {
    %c0_i32 = arith.constant 0 : i32
    %c0_i32_0 = arith.constant 0 : i32
    %c0_i32_1 = arith.constant 0 : i32
    %c0_i32_2 = arith.constant 0 : i32
    return %arg0, %c0_i32, %c0_i32_0, %c0_i32_1 : i32, i32, i32, i32
  }
  func.func @transform_1(%arg0: i32) -> (i32, i32, i32) {
    %c0_i32 = arith.constant 0 : i32
    %c0_i32_0 = arith.constant 0 : i32
    %c0_i32_1 = arith.constant 0 : i32
    %c0_i32_2 = arith.constant 0 : i32
    return %c0_i32, %c0_i32_0, %c0_i32_1 : i32, i32, i32
  }
  func.func @transform_2(%arg0: i32) -> (i32, i32) {
    %c0_i32 = arith.constant 0 : i32
    %c0_i32_0 = arith.constant 0 : i32
    %c0_i32_1 = arith.constant 0 : i32
    return %c0_i32, %c0_i32_0 : i32, i32
  }
  func.func @transform_3(%arg0: i32) -> (i32, i32, i32, i32) {
    %c0_i32 = arith.constant 0 : i32
    %c0_i32_0 = arith.constant 0 : i32
    %c0_i32_1 = arith.constant 0 : i32
    %c0_i32_2 = arith.constant 0 : i32
    return %arg0, %c0_i32, %c0_i32_0, %c0_i32_1 : i32, i32, i32, i32
  }
}

module attributes {stable_mosaic.version = 11 : i64} {
  func.func @_conv_s2d_kernel(%arg0: i32, %arg1: memref<1x3x3x128xbf16, #tpu.memory_space<vmem>>, %arg2: memref<9x128x128xbf16, #tpu.memory_space<vmem>>, %arg3: memref<1x128xf32, #tpu.memory_space<vmem>>, %arg4: memref<1x1x1x128xbf16, #tpu.memory_space<vmem>>) attributes {dimension_semantics = [#tpu.dimension_semantics<parallel>], iteration_bounds = array<i64: 2>, scalar_prefetch = 0 : i64, scratch_operands = 0 : i64, tpu.core_type = #tpu.core_type<tc>, window_params = [{transform_indices = @transform_0, window_bounds = array<i64: 1, 3, 3, 128>}, {pipeline_mode = #tpu.pipeline_mode<synchronous>, transform_indices = @transform_1, window_bounds = array<i64: 9, 128, 128>}, {pipeline_mode = #tpu.pipeline_mode<synchronous>, transform_indices = @transform_2, window_bounds = array<i64: 1, 128>}, {transform_indices = @transform_3, window_bounds = array<i64: 1, 1, 1, 128>}]} {
    %c0 = arith.constant 0 : index
    %c0_0 = arith.constant 0 : index
    %0 = vector.load %arg3[%c0, %c0_0] : memref<1x128xf32, #tpu.memory_space<vmem>>, vector<1x128xf32>
    %cst = arith.constant 0.000000e+00 : f32
    %1 = vector.broadcast %cst : f32 to vector<1x128xf32>
    %c0_1 = arith.constant 0 : index
    %c0_2 = arith.constant 0 : index
    %c0_3 = arith.constant 0 : index
    %c0_4 = arith.constant 0 : index
    %2 = vector.load %arg1[%c0_1, %c0_2, %c0_3, %c0_4] : memref<1x3x3x128xbf16, #tpu.memory_space<vmem>>, vector<1x1x1x128xbf16>
    %3 = vector.shape_cast %2 : vector<1x1x1x128xbf16> to vector<1x128xbf16>
    %c0_5 = arith.constant 0 : index
    %c0_6 = arith.constant 0 : index
    %c0_7 = arith.constant 0 : index
    %4 = vector.load %arg2[%c0_5, %c0_6, %c0_7] : memref<9x128x128xbf16, #tpu.memory_space<vmem>>, vector<1x128x128xbf16>
    %5 = vector.shape_cast %4 : vector<1x128x128xbf16> to vector<128x128xbf16>
    %cst_8 = arith.constant dense<0.000000e+00> : vector<1x128xf32>
    %6 = tpu.matmul %3, %5, %cst_8 {dimension_numbers = #tpu.dot_dimension_numbers<[1], [0], [0], [1], [0, 0, 1, 1], [], []>} : vector<1x128xbf16>, vector<128x128xbf16>, vector<1x128xf32> -> vector<1x128xf32>
    %7 = arith.addf %1, %6 : vector<1x128xf32>
    %c0_9 = arith.constant 0 : index
    %c0_10 = arith.constant 0 : index
    %c1 = arith.constant 1 : index
    %c0_11 = arith.constant 0 : index
    %8 = vector.load %arg1[%c0_9, %c0_10, %c1, %c0_11] : memref<1x3x3x128xbf16, #tpu.memory_space<vmem>>, vector<1x1x1x128xbf16>
    %9 = vector.shape_cast %8 : vector<1x1x1x128xbf16> to vector<1x128xbf16>
    %c1_12 = arith.constant 1 : index
    %c0_13 = arith.constant 0 : index
    %c0_14 = arith.constant 0 : index
    %10 = vector.load %arg2[%c1_12, %c0_13, %c0_14] : memref<9x128x128xbf16, #tpu.memory_space<vmem>>, vector<1x128x128xbf16>
    %11 = vector.shape_cast %10 : vector<1x128x128xbf16> to vector<128x128xbf16>
    %cst_15 = arith.constant dense<0.000000e+00> : vector<1x128xf32>
    %12 = tpu.matmul %9, %11, %cst_15 {dimension_numbers = #tpu.dot_dimension_numbers<[1], [0], [0], [1], [0, 0, 1, 1], [], []>} : vector<1x128xbf16>, vector<128x128xbf16>, vector<1x128xf32> -> vector<1x128xf32>
    %13 = arith.addf %7, %12 : vector<1x128xf32>
    %c0_16 = arith.constant 0 : index
    %c0_17 = arith.constant 0 : index
    %c2 = arith.constant 2 : index
    %c0_18 = arith.constant 0 : index
    %14 = vector.load %arg1[%c0_16, %c0_17, %c2, %c0_18] : memref<1x3x3x128xbf16, #tpu.memory_space<vmem>>, vector<1x1x1x128xbf16>
    %15 = vector.shape_cast %14 : vector<1x1x1x128xbf16> to vector<1x128xbf16>
    %c2_19 = arith.constant 2 : index
    %c0_20 = arith.constant 0 : index
    %c0_21 = arith.constant 0 : index
    %16 = vector.load %arg2[%c2_19, %c0_20, %c0_21] : memref<9x128x128xbf16, #tpu.memory_space<vmem>>, vector<1x128x128xbf16>
    %17 = vector.shape_cast %16 : vector<1x128x128xbf16> to vector<128x128xbf16>
    %cst_22 = arith.constant dense<0.000000e+00> : vector<1x128xf32>
    %18 = tpu.matmul %15, %17, %cst_22 {dimension_numbers = #tpu.dot_dimension_numbers<[1], [0], [0], [1], [0, 0, 1, 1], [], []>} : vector<1x128xbf16>, vector<128x128xbf16>, vector<1x128xf32> -> vector<1x128xf32>
    %19 = arith.addf %13, %18 : vector<1x128xf32>
    %c0_23 = arith.constant 0 : index
    %c1_24 = arith.constant 1 : index
    %c0_25 = arith.constant 0 : index
    %c0_26 = arith.constant 0 : index
    %20 = vector.load %arg1[%c0_23, %c1_24, %c0_25, %c0_26] : memref<1x3x3x128xbf16, #tpu.memory_space<vmem>>, vector<1x1x1x128xbf16>
    %21 = vector.shape_cast %20 : vector<1x1x1x128xbf16> to vector<1x128xbf16>
    %c3 = arith.constant 3 : index
    %c0_27 = arith.constant 0 : index
    %c0_28 = arith.constant 0 : index
    %22 = vector.load %arg2[%c3, %c0_27, %c0_28] : memref<9x128x128xbf16, #tpu.memory_space<vmem>>, vector<1x128x128xbf16>
    %23 = vector.shape_cast %22 : vector<1x128x128xbf16> to vector<128x128xbf16>
    %cst_29 = arith.constant dense<0.000000e+00> : vector<1x128xf32>
    %24 = tpu.matmul %21, %23, %cst_29 {dimension_numbers = #tpu.dot_dimension_numbers<[1], [0], [0], [1], [0, 0, 1, 1], [], []>} : vector<1x128xbf16>, vector<128x128xbf16>, vector<1x128xf32> -> vector<1x128xf32>
    %25 = arith.addf %19, %24 : vector<1x128xf32>
    %c0_30 = arith.constant 0 : index
    %c1_31 = arith.constant 1 : index
    %c1_32 = arith.constant 1 : index
    %c0_33 = arith.constant 0 : index
    %26 = vector.load %arg1[%c0_30, %c1_31, %c1_32, %c0_33] : memref<1x3x3x128xbf16, #tpu.memory_space<vmem>>, vector<1x1x1x128xbf16>
    %27 = vector.shape_cast %26 : vector<1x1x1x128xbf16> to vector<1x128xbf16>
    %c4 = arith.constant 4 : index
    %c0_34 = arith.constant 0 : index
    %c0_35 = arith.constant 0 : index
    %28 = vector.load %arg2[%c4, %c0_34, %c0_35] : memref<9x128x128xbf16, #tpu.memory_space<vmem>>, vector<1x128x128xbf16>
    %29 = vector.shape_cast %28 : vector<1x128x128xbf16> to vector<128x128xbf16>
    %cst_36 = arith.constant dense<0.000000e+00> : vector<1x128xf32>
    %30 = tpu.matmul %27, %29, %cst_36 {dimension_numbers = #tpu.dot_dimension_numbers<[1], [0], [0], [1], [0, 0, 1, 1], [], []>} : vector<1x128xbf16>, vector<128x128xbf16>, vector<1x128xf32> -> vector<1x128xf32>
    %31 = arith.addf %25, %30 : vector<1x128xf32>
    %c0_37 = arith.constant 0 : index
    %c1_38 = arith.constant 1 : index
    %c2_39 = arith.constant 2 : index
    %c0_40 = arith.constant 0 : index
    %32 = vector.load %arg1[%c0_37, %c1_38, %c2_39, %c0_40] : memref<1x3x3x128xbf16, #tpu.memory_space<vmem>>, vector<1x1x1x128xbf16>
    %33 = vector.shape_cast %32 : vector<1x1x1x128xbf16> to vector<1x128xbf16>
    %c5 = arith.constant 5 : index
    %c0_41 = arith.constant 0 : index
    %c0_42 = arith.constant 0 : index
    %34 = vector.load %arg2[%c5, %c0_41, %c0_42] : memref<9x128x128xbf16, #tpu.memory_space<vmem>>, vector<1x128x128xbf16>
    %35 = vector.shape_cast %34 : vector<1x128x128xbf16> to vector<128x128xbf16>
    %cst_43 = arith.constant dense<0.000000e+00> : vector<1x128xf32>
    %36 = tpu.matmul %33, %35, %cst_43 {dimension_numbers = #tpu.dot_dimension_numbers<[1], [0], [0], [1], [0, 0, 1, 1], [], []>} : vector<1x128xbf16>, vector<128x128xbf16>, vector<1x128xf32> -> vector<1x128xf32>
    %37 = arith.addf %31, %36 : vector<1x128xf32>
    %c0_44 = arith.constant 0 : index
    %c2_45 = arith.constant 2 : index
    %c0_46 = arith.constant 0 : index
    %c0_47 = arith.constant 0 : index
    %38 = vector.load %arg1[%c0_44, %c2_45, %c0_46, %c0_47] : memref<1x3x3x128xbf16, #tpu.memory_space<vmem>>, vector<1x1x1x128xbf16>
    %39 = vector.shape_cast %38 : vector<1x1x1x128xbf16> to vector<1x128xbf16>
    %c6 = arith.constant 6 : index
    %c0_48 = arith.constant 0 : index
    %c0_49 = arith.constant 0 : index
    %40 = vector.load %arg2[%c6, %c0_48, %c0_49] : memref<9x128x128xbf16, #tpu.memory_space<vmem>>, vector<1x128x128xbf16>
    %41 = vector.shape_cast %40 : vector<1x128x128xbf16> to vector<128x128xbf16>
    %cst_50 = arith.constant dense<0.000000e+00> : vector<1x128xf32>
    %42 = tpu.matmul %39, %41, %cst_50 {dimension_numbers = #tpu.dot_dimension_numbers<[1], [0], [0], [1], [0, 0, 1, 1], [], []>} : vector<1x128xbf16>, vector<128x128xbf16>, vector<1x128xf32> -> vector<1x128xf32>
    %43 = arith.addf %37, %42 : vector<1x128xf32>
    %c0_51 = arith.constant 0 : index
    %c2_52 = arith.constant 2 : index
    %c1_53 = arith.constant 1 : index
    %c0_54 = arith.constant 0 : index
    %44 = vector.load %arg1[%c0_51, %c2_52, %c1_53, %c0_54] : memref<1x3x3x128xbf16, #tpu.memory_space<vmem>>, vector<1x1x1x128xbf16>
    %45 = vector.shape_cast %44 : vector<1x1x1x128xbf16> to vector<1x128xbf16>
    %c7 = arith.constant 7 : index
    %c0_55 = arith.constant 0 : index
    %c0_56 = arith.constant 0 : index
    %46 = vector.load %arg2[%c7, %c0_55, %c0_56] : memref<9x128x128xbf16, #tpu.memory_space<vmem>>, vector<1x128x128xbf16>
    %47 = vector.shape_cast %46 : vector<1x128x128xbf16> to vector<128x128xbf16>
    %cst_57 = arith.constant dense<0.000000e+00> : vector<1x128xf32>
    %48 = tpu.matmul %45, %47, %cst_57 {dimension_numbers = #tpu.dot_dimension_numbers<[1], [0], [0], [1], [0, 0, 1, 1], [], []>} : vector<1x128xbf16>, vector<128x128xbf16>, vector<1x128xf32> -> vector<1x128xf32>
    %49 = arith.addf %43, %48 : vector<1x128xf32>
    %c0_58 = arith.constant 0 : index
    %c2_59 = arith.constant 2 : index
    %c2_60 = arith.constant 2 : index
    %c0_61 = arith.constant 0 : index
    %50 = vector.load %arg1[%c0_58, %c2_59, %c2_60, %c0_61] : memref<1x3x3x128xbf16, #tpu.memory_space<vmem>>, vector<1x1x1x128xbf16>
    %51 = vector.shape_cast %50 : vector<1x1x1x128xbf16> to vector<1x128xbf16>
    %c8 = arith.constant 8 : index
    %c0_62 = arith.constant 0 : index
    %c0_63 = arith.constant 0 : index
    %52 = vector.load %arg2[%c8, %c0_62, %c0_63] : memref<9x128x128xbf16, #tpu.memory_space<vmem>>, vector<1x128x128xbf16>
    %53 = vector.shape_cast %52 : vector<1x128x128xbf16> to vector<128x128xbf16>
    %cst_64 = arith.constant dense<0.000000e+00> : vector<1x128xf32>
    %54 = tpu.matmul %51, %53, %cst_64 {dimension_numbers = #tpu.dot_dimension_numbers<[1], [0], [0], [1], [0, 0, 1, 1], [], []>} : vector<1x128xbf16>, vector<128x128xbf16>, vector<1x128xf32> -> vector<1x128xf32>
    %55 = arith.addf %49, %54 : vector<1x128xf32>
    %56 = arith.addf %55, %0 : vector<1x128xf32>
    %cst_65 = arith.constant 0.000000e+00 : f32
    %57 = vector.broadcast %cst_65 : f32 to vector<1x128xf32>
    %58 = arith.maximumf %56, %57 : vector<1x128xf32>
    %59 = arith.truncf %58 : vector<1x128xf32> to vector<1x128xbf16>
    %c0_66 = arith.constant 0 : index
    %c0_67 = arith.constant 0 : index
    %c0_68 = arith.constant 0 : index
    %c0_69 = arith.constant 0 : index
    %60 = vector.load %arg4[%c0_66, %c0_67, %c0_68, %c0_69] : memref<1x1x1x128xbf16, #tpu.memory_space<vmem>>, vector<1x1x1x128xbf16>
    %61 = vector.shape_cast %60 : vector<1x1x1x128xbf16> to vector<1x128xbf16>
    %62 = vector.shape_cast %59 : vector<1x128xbf16> to vector<1x1x1x128xbf16>
    tpu.vector_store %arg4[%c0_66, %c0_67, %c0_68, %c0_69], %62 {strides = array<i32>} : memref<1x1x1x128xbf16, #tpu.memory_space<vmem>>, vector<1x1x1x128xbf16>,
    return
  }
  func.func @transform_0(%arg0: i32) -> (i32, i32, i32, i32) {
    %c0_i32 = arith.constant 0 : i32
    %c0_i32_0 = arith.constant 0 : i32
    %c0_i32_1 = arith.constant 0 : i32
    %c0_i32_2 = arith.constant 0 : i32
    return %arg0, %c0_i32, %c0_i32_0, %c0_i32_1 : i32, i32, i32, i32
  }
  func.func @transform_1(%arg0: i32) -> (i32, i32, i32) {
    %c0_i32 = arith.constant 0 : i32
    %c0_i32_0 = arith.constant 0 : i32
    %c0_i32_1 = arith.constant 0 : i32
    %c0_i32_2 = arith.constant 0 : i32
    return %c0_i32, %c0_i32_0, %c0_i32_1 : i32, i32, i32
  }
  func.func @transform_2(%arg0: i32) -> (i32, i32) {
    %c0_i32 = arith.constant 0 : i32
    %c0_i32_0 = arith.constant 0 : i32
    %c0_i32_1 = arith.constant 0 : i32
    return %c0_i32, %c0_i32_0 : i32, i32
  }
  func.func @transform_3(%arg0: i32) -> (i32, i32, i32, i32) {
    %c0_i32 = arith.constant 0 : i32
    %c0_i32_0 = arith.constant 0 : i32
    %c0_i32_1 = arith.constant 0 : i32
    %c0_i32_2 = arith.constant 0 : i32
    return %arg0, %c0_i32, %c0_i32_0, %c0_i32_1 : i32, i32, i32, i32
  }
}

module attributes {stable_mosaic.version = 11 : i64} {
  func.func @_tail_kernel(%arg0: memref<2x128xbf16, #tpu.memory_space<vmem>>, %arg1: memref<128x512xbf16, #tpu.memory_space<vmem>>, %arg2: memref<1x512xf32, #tpu.memory_space<vmem>>, %arg3: memref<512x384xbf16, #tpu.memory_space<vmem>>, %arg4: memref<1x384xf32, #tpu.memory_space<vmem>>, %arg5: memref<2x384xf32, #tpu.memory_space<vmem>>) attributes {dimension_semantics = [], scalar_prefetch = 0 : i64, scratch_operands = 0 : i64, tpu.core_type = #tpu.core_type<tc>} {
    %c0 = arith.constant 0 : index
    %c0_0 = arith.constant 0 : index
    %0 = vector.load %arg0[%c0, %c0_0] : memref<2x128xbf16, #tpu.memory_space<vmem>>, vector<2x128xbf16>
    %c0_1 = arith.constant 0 : index
    %c0_2 = arith.constant 0 : index
    %1 = vector.load %arg1[%c0_1, %c0_2] : memref<128x512xbf16, #tpu.memory_space<vmem>>, vector<128x512xbf16>
    %cst = arith.constant dense<0.000000e+00> : vector<2x512xf32>
    %2 = tpu.matmul %0, %1, %cst {dimension_numbers = #tpu.dot_dimension_numbers<[1], [0], [0], [1], [0, 0, 1, 1], [], []>} : vector<2x128xbf16>, vector<128x512xbf16>, vector<2x512xf32> -> vector<2x512xf32>
    %c0_3 = arith.constant 0 : index
    %c0_4 = arith.constant 0 : index
    %3 = vector.load %arg2[%c0_3, %c0_4] : memref<1x512xf32, #tpu.memory_space<vmem>>, vector<1x512xf32>
    %4 = vector.broadcast %3 : vector<1x512xf32> to vector<2x512xf32>
    %5 = arith.addf %2, %4 : vector<2x512xf32>
    %cst_5 = arith.constant 0.000000e+00 : f32
    %6 = vector.broadcast %cst_5 : f32 to vector<2x512xf32>
    %7 = arith.maximumf %5, %6 : vector<2x512xf32>
    %8 = arith.truncf %7 : vector<2x512xf32> to vector<2x512xbf16>
    %c0_6 = arith.constant 0 : index
    %c0_7 = arith.constant 0 : index
    %9 = vector.load %arg3[%c0_6, %c0_7] : memref<512x384xbf16, #tpu.memory_space<vmem>>, vector<512x384xbf16>
    %cst_8 = arith.constant dense<0.000000e+00> : vector<2x384xf32>
    %10 = tpu.matmul %8, %9, %cst_8 {dimension_numbers = #tpu.dot_dimension_numbers<[1], [0], [0], [1], [0, 0, 1, 1], [], []>} : vector<2x512xbf16>, vector<512x384xbf16>, vector<2x384xf32> -> vector<2x384xf32>
    %c0_9 = arith.constant 0 : index
    %c0_10 = arith.constant 0 : index
    %11 = vector.load %arg4[%c0_9, %c0_10] : memref<1x384xf32, #tpu.memory_space<vmem>>, vector<1x384xf32>
    %12 = vector.broadcast %11 : vector<1x384xf32> to vector<2x384xf32>
    %13 = arith.addf %10, %12 : vector<2x384xf32>
    %14 = tpu.iota {dimensions = array<i32: 1>} : vector<1x64xi32>
    %c51_i32 = arith.constant 51 : i32
    %15 = vector.broadcast %c51_i32 : i32 to vector<1x64xi32>
    %16 = arith.cmpi slt, %14, %15 : vector<1x64xi32>
    %17 = vector.extract_strided_slice %13 {offsets = [0, 0], sizes = [2, 64], strides = [1, 1]} : vector<2x384xf32> to vector<2x64xf32>
    %cst_11 = arith.constant -1.000000e+30 : f32
    %18 = vector.shape_cast %16 : vector<1x64xi1> to vector<1x64xi1>
    %19 = vector.broadcast %18 : vector<1x64xi1> to vector<2x64xi1>
    %20 = vector.broadcast %cst_11 : f32 to vector<2x64xf32>
    %21 = arith.select %19, %17, %20 : vector<2x64xi1>, vector<2x64xf32>
    %cst_12 = arith.constant dense<0xFF800000> : vector<2xf32>
    %22 = vector.multi_reduction <maximumf>, %21, %cst_12 [1] : vector<2x64xf32> to vector<2xf32>
    %23 = vector.shape_cast %22 : vector<2xf32> to vector<2x1xf32>
    %24 = vector.broadcast %23 : vector<2x1xf32> to vector<2x64xf32>
    %25 = arith.subf %21, %24 : vector<2x64xf32>
    %26 = math.exp %25 : vector<2x64xf32>
    %cst_13 = arith.constant dense<0.000000e+00> : vector<2xf32>
    %27 = vector.multi_reduction <add>, %26, %cst_13 [1] : vector<2x64xf32> to vector<2xf32>
    %28 = vector.shape_cast %27 : vector<2xf32> to vector<2x1xf32>
    %29 = tpu.reciprocal %28 {approx = true} : vector<2x1xf32> -> vector<2x1xf32>
    %30 = vector.broadcast %29 : vector<2x1xf32> to vector<2x64xf32>
    %31 = arith.mulf %26, %30 : vector<2x64xf32>
    %32 = vector.extract_strided_slice %13 {offsets = [0, 64], sizes = [2, 64], strides = [1, 1]} : vector<2x384xf32> to vector<2x64xf32>
    %cst_14 = arith.constant -1.000000e+30 : f32
    %33 = vector.shape_cast %16 : vector<1x64xi1> to vector<1x64xi1>
    %34 = vector.broadcast %33 : vector<1x64xi1> to vector<2x64xi1>
    %35 = vector.broadcast %cst_14 : f32 to vector<2x64xf32>
    %36 = arith.select %34, %32, %35 : vector<2x64xi1>, vector<2x64xf32>
    %cst_15 = arith.constant dense<0xFF800000> : vector<2xf32>
    %37 = vector.multi_reduction <maximumf>, %36, %cst_15 [1] : vector<2x64xf32> to vector<2xf32>
    %38 = vector.shape_cast %37 : vector<2xf32> to vector<2x1xf32>
    %39 = vector.broadcast %38 : vector<2x1xf32> to vector<2x64xf32>
    %40 = arith.subf %36, %39 : vector<2x64xf32>
    %41 = math.exp %40 : vector<2x64xf32>
    %cst_16 = arith.constant dense<0.000000e+00> : vector<2xf32>
    %42 = vector.multi_reduction <add>, %41, %cst_16 [1] : vector<2x64xf32> to vector<2xf32>
    %43 = vector.shape_cast %42 : vector<2xf32> to vector<2x1xf32>
    %44 = tpu.reciprocal %43 {approx = true} : vector<2x1xf32> -> vector<2x1xf32>
    %45 = vector.broadcast %44 : vector<2x1xf32> to vector<2x64xf32>
    %46 = arith.mulf %41, %45 : vector<2x64xf32>
    %47 = vector.extract_strided_slice %13 {offsets = [0, 128], sizes = [2, 64], strides = [1, 1]} : vector<2x384xf32> to vector<2x64xf32>
    %cst_17 = arith.constant -1.000000e+30 : f32
    %48 = vector.shape_cast %16 : vector<1x64xi1> to vector<1x64xi1>
    %49 = vector.broadcast %48 : vector<1x64xi1> to vector<2x64xi1>
    %50 = vector.broadcast %cst_17 : f32 to vector<2x64xf32>
    %51 = arith.select %49, %47, %50 : vector<2x64xi1>, vector<2x64xf32>
    %cst_18 = arith.constant dense<0xFF800000> : vector<2xf32>
    %52 = vector.multi_reduction <maximumf>, %51, %cst_18 [1] : vector<2x64xf32> to vector<2xf32>
    %53 = vector.shape_cast %52 : vector<2xf32> to vector<2x1xf32>
    %54 = vector.broadcast %53 : vector<2x1xf32> to vector<2x64xf32>
    %55 = arith.subf %51, %54 : vector<2x64xf32>
    %56 = math.exp %55 : vector<2x64xf32>
    %cst_19 = arith.constant dense<0.000000e+00> : vector<2xf32>
    %57 = vector.multi_reduction <add>, %56, %cst_19 [1] : vector<2x64xf32> to vector<2xf32>
    %58 = vector.shape_cast %57 : vector<2xf32> to vector<2x1xf32>
    %59 = tpu.reciprocal %58 {approx = true} : vector<2x1xf32> -> vector<2x1xf32>
    %60 = vector.broadcast %59 : vector<2x1xf32> to vector<2x64xf32>
    %61 = arith.mulf %56, %60 : vector<2x64xf32>
    %62 = vector.extract_strided_slice %13 {offsets = [0, 192], sizes = [2, 64], strides = [1, 1]} : vector<2x384xf32> to vector<2x64xf32>
    %cst_20 = arith.constant -1.000000e+30 : f32
    %63 = vector.shape_cast %16 : vector<1x64xi1> to vector<1x64xi1>
    %64 = vector.broadcast %63 : vector<1x64xi1> to vector<2x64xi1>
    %65 = vector.broadcast %cst_20 : f32 to vector<2x64xf32>
    %66 = arith.select %64, %62, %65 : vector<2x64xi1>, vector<2x64xf32>
    %cst_21 = arith.constant dense<0xFF800000> : vector<2xf32>
    %67 = vector.multi_reduction <maximumf>, %66, %cst_21 [1] : vector<2x64xf32> to vector<2xf32>
    %68 = vector.shape_cast %67 : vector<2xf32> to vector<2x1xf32>
    %69 = vector.broadcast %68 : vector<2x1xf32> to vector<2x64xf32>
    %70 = arith.subf %66, %69 : vector<2x64xf32>
    %71 = math.exp %70 : vector<2x64xf32>
    %cst_22 = arith.constant dense<0.000000e+00> : vector<2xf32>
    %72 = vector.multi_reduction <add>, %71, %cst_22 [1] : vector<2x64xf32> to vector<2xf32>
    %73 = vector.shape_cast %72 : vector<2xf32> to vector<2x1xf32>
    %74 = tpu.reciprocal %73 {approx = true} : vector<2x1xf32> -> vector<2x1xf32>
    %75 = vector.broadcast %74 : vector<2x1xf32> to vector<2x64xf32>
    %76 = arith.mulf %71, %75 : vector<2x64xf32>
    %77 = vector.extract_strided_slice %13 {offsets = [0, 256], sizes = [2, 64], strides = [1, 1]} : vector<2x384xf32> to vector<2x64xf32>
    %cst_23 = arith.constant -1.000000e+30 : f32
    %78 = vector.shape_cast %16 : vector<1x64xi1> to vector<1x64xi1>
    %79 = vector.broadcast %78 : vector<1x64xi1> to vector<2x64xi1>
    %80 = vector.broadcast %cst_23 : f32 to vector<2x64xf32>
    %81 = arith.select %79, %77, %80 : vector<2x64xi1>, vector<2x64xf32>
    %cst_24 = arith.constant dense<0xFF800000> : vector<2xf32>
    %82 = vector.multi_reduction <maximumf>, %81, %cst_24 [1] : vector<2x64xf32> to vector<2xf32>
    %83 = vector.shape_cast %82 : vector<2xf32> to vector<2x1xf32>
    %84 = vector.broadcast %83 : vector<2x1xf32> to vector<2x64xf32>
    %85 = arith.subf %81, %84 : vector<2x64xf32>
    %86 = math.exp %85 : vector<2x64xf32>
    %cst_25 = arith.constant dense<0.000000e+00> : vector<2xf32>
    %87 = vector.multi_reduction <add>, %86, %cst_25 [1] : vector<2x64xf32> to vector<2xf32>
    %88 = vector.shape_cast %87 : vector<2xf32> to vector<2x1xf32>
    %89 = tpu.reciprocal %88 {approx = true} : vector<2x1xf32> -> vector<2x1xf32>
    %90 = vector.broadcast %89 : vector<2x1xf32> to vector<2x64xf32>
    %91 = arith.mulf %86, %90 : vector<2x64xf32>
    %92 = vector.extract_strided_slice %13 {offsets = [0, 320], sizes = [2, 64], strides = [1, 1]} : vector<2x384xf32> to vector<2x64xf32>
    %cst_26 = arith.constant -1.000000e+30 : f32
    %93 = vector.shape_cast %16 : vector<1x64xi1> to vector<1x64xi1>
    %94 = vector.broadcast %93 : vector<1x64xi1> to vector<2x64xi1>
    %95 = vector.broadcast %cst_26 : f32 to vector<2x64xf32>
    %96 = arith.select %94, %92, %95 : vector<2x64xi1>, vector<2x64xf32>
    %cst_27 = arith.constant dense<0xFF800000> : vector<2xf32>
    %97 = vector.multi_reduction <maximumf>, %96, %cst_27 [1] : vector<2x64xf32> to vector<2xf32>
    %98 = vector.shape_cast %97 : vector<2xf32> to vector<2x1xf32>
    %99 = vector.broadcast %98 : vector<2x1xf32> to vector<2x64xf32>
    %100 = arith.subf %96, %99 : vector<2x64xf32>
    %101 = math.exp %100 : vector<2x64xf32>
    %cst_28 = arith.constant dense<0.000000e+00> : vector<2xf32>
    %102 = vector.multi_reduction <add>, %101, %cst_28 [1] : vector<2x64xf32> to vector<2xf32>
    %103 = vector.shape_cast %102 : vector<2xf32> to vector<2x1xf32>
    %104 = tpu.reciprocal %103 {approx = true} : vector<2x1xf32> -> vector<2x1xf32>
    %105 = vector.broadcast %104 : vector<2x1xf32> to vector<2x64xf32>
    %106 = arith.mulf %101, %105 : vector<2x64xf32>
    %107 = tpu.concatenate %31, %46, %61, %76, %91, %106 in 1 : vector<2x64xf32>, vector<2x64xf32>, vector<2x64xf32>, vector<2x64xf32>, vector<2x64xf32>, vector<2x64xf32> -> vector<2x384xf32>
    %c0_29 = arith.constant 0 : index
    %c0_30 = arith.constant 0 : index
    %108 = vector.load %arg5[%c0_29, %c0_30] : memref<2x384xf32, #tpu.memory_space<vmem>>, vector<2x384xf32>
    tpu.vector_store %arg5[%c0_29, %c0_30], %107 {strides = array<i32>} : memref<2x384xf32, #tpu.memory_space<vmem>>, vector<2x384xf32>,
    return
  }
}

</mosaic_0001>

<llo_original>
// kernel: c51_forward.4
$region0: #{c51_forward.4}
  #allocation0 [shape = 'u32[]', space=smem, size = 0x4, offset = 0x4, fixed_abs, tag = 'smem constant byte address 0x4 - core index']
  #allocation1 [shape = 'u32[144,128]{1,0:T(1,128)}', space=vmem, size = 0x12000, scoped, tag = 'internal scratch']
  %s0 = inlined_call_operand.vmem [shape: bf16[2,9,9,64], index: 0, kind: input, shape index: {}]
  %s1 = inlined_call_operand.vmem [shape: bf16[4,64,128], index: 1, kind: input, shape index: {}]
  %s2 = inlined_call_operand.vmem [shape: f32[1,128], index: 2, kind: input, shape index: {}]
  %s3 = inlined_call_operand.vmem [shape: bf16[2,8,8,128], index: 3, kind: output, shape index: {}]
  %s4 = sld [smem:[#allocation0]]
  $region45: #{c51_forward.4} parent=0
    _
  %s6 = ssub.s32 1, %s4
  %s7 = scalar_select 0, %s6, %s4
  loop: start=0, step=1, limit=4
  $region2: #{c51_forward.4} parent=0 // loop_pre_header
    _
  $region3: #{c51_forward.4} parent=0 // loop_header
    %s9 = sphi 0, %s13
    %p10 = scmp.ge.s32.totalorder %s9, 4
    %s19 = sphi 0, %s21
    %s22 = sphi 0, %s19
    %s23 = sphi 0, %s22
    %s39 = sphi 0, %s23
    %s43 = sphi 0, %s43
    %s45 = sphi 0, %s43
    %s46 = sphi 0, %s45
    %s60 = sphi 0, %s46
    %s64 = sphi 0, %s64
    %s66 = sphi 0, %s64
    %s67 = sphi 0, %s66
    %s81 = sphi 0, %s67
    %s87 = sphi 0, %s89
    %s90 = sphi 0, %s87
    %s91 = sphi 0, %s90
    %s107 = sphi 0, %s91
  $region4: #{c51_forward.4} parent=0 // loop_header_branch
    %12 = sbr.rel (%p10) target = $region8
  $region5: #{c51_forward.4} parent=0 // loop_body
    %s14 = ssub.s32 %s9, 1
    %s15 = ssub.s32 %s9, 2
    %s16 = sadd.s32 %s9, 1
    %s17 = ssub.s32 %s9, %s16
    %p18 = scmp.eq.s32.totalorder %s17, 0
    %s20 = sadd.s32 %s19, 1
    %s21 = scalar_select %p18, %s19, %s20
    %p24 = pneg %p18
    %p25 = scmp.eq.s32.totalorder %s9, 1
    %p26 = por %p24, %p25
    %p27 = scmp.ne.s32.totalorder %s19, %s22
    %p28 = scmp.eq.s32.totalorder %s9, 0
    %p29 = por %p27, %p28
    %p30 = scmp.ne.s32.totalorder %s19, %s22
    %p31 = scmp.eq.s32.totalorder %s14, 1
    %p32 = por %p30, %p31
    %p33 = scmp.ne.s32.totalorder %s22, %s23
    %p34 = scmp.eq.s32.totalorder %s14, 0
    %p35 = por %p33, %p34
    %p36 = scmp.ne.s32.totalorder %s22, %s23
    %p37 = scmp.eq.s32.totalorder %s15, 1
    %p38 = por %p36, %p37
    %p40 = scmp.ne.s32.totalorder %s23, %s39
    %p41 = scmp.eq.s32.totalorder %s15, 0
    %p42 = por %p40, %p41
    %s44 = sadd.s32 %s43, 1
    %p47 = scmp.eq.s32.totalorder %s9, 1
    %p48 = scmp.ne.s32.totalorder %s43, %s45
    %p49 = scmp.eq.s32.totalorder %s9, 0
    %p50 = por %p48, %p49
    %p51 = scmp.ne.s32.totalorder %s43, %s45
    %p52 = scmp.eq.s32.totalorder %s14, 1
    %p53 = por %p51, %p52
    %p54 = scmp.ne.s32.totalorder %s45, %s46
    %p55 = scmp.eq.s32.totalorder %s14, 0
    %p56 = por %p54, %p55
    %p57 = scmp.ne.s32.totalorder %s45, %s46
    %p58 = scmp.eq.s32.totalorder %s15, 1
    %p59 = por %p57, %p58
    %p61 = scmp.ne.s32.totalorder %s46, %s60
    %p62 = scmp.eq.s32.totalorder %s15, 0
    %p63 = por %p61, %p62
    %s65 = sadd.s32 %s64, 1
    %p68 = scmp.eq.s32.totalorder %s9, 1
    %p69 = scmp.ne.s32.totalorder %s64, %s66
    %p70 = scmp.eq.s32.totalorder %s9, 0
    %p71 = por %p69, %p70
    %p72 = scmp.ne.s32.totalorder %s64, %s66
    %p73 = scmp.eq.s32.totalorder %s14, 1
    %p74 = por %p72, %p73
    %p75 = scmp.ne.s32.totalorder %s66, %s67
    %p76 = scmp.eq.s32.totalorder %s14, 0
    %p77 = por %p75, %p76
    %p78 = scmp.ne.s32.totalorder %s66, %s67
    %p79 = scmp.eq.s32.totalorder %s15, 1
    %p80 = por %p78, %p79
    %p82 = scmp.ne.s32.totalorder %s67, %s81
    %p83 = scmp.eq.s32.totalorder %s15, 0
    %p84 = por %p82, %p83
    %s85 = ssub.s32 %s9, %s16
    %p86 = scmp.eq.s32.totalorder %s85, 0
    %s88 = sadd.s32 %s87, 1
    %s89 = scalar_select %p86, %s87, %s88
    %p92 = pneg %p86
    %p93 = scmp.eq.s32.totalorder %s9, 1
    %p94 = por %p92, %p93
    %p95 = scmp.ne.s32.totalorder %s87, %s90
    %p96 = scmp.eq.s32.totalorder %s9, 0
    %p97 = por %p95, %p96
    %p98 = scmp.ne.s32.totalorder %s87, %s90
    %p99 = scmp.eq.s32.totalorder %s14, 1
    %p100 = por %p98, %p99
    %p101 = scmp.ne.s32.totalorder %s90, %s91
    %p102 = scmp.eq.s32.totalorder %s14, 0
    %p103 = por %p101, %p102
    %p104 = scmp.ne.s32.totalorder %s90, %s91
    %p105 = scmp.eq.s32.totalorder %s15, 1
    %p106 = por %p104, %p105
    %p108 = scmp.ne.s32.totalorder %s91, %s107
    %p109 = scmp.eq.s32.totalorder %s15, 0
    %p110 = por %p108, %p109
    %p111 = scmp.le.s32.totalorder 1, %s9
    %p112 = scmp.lt.s32.totalorder %s9, 3
    %p113 = pnand %p111, %p112
    %p114 = pneg %p113
    // Predicated region
    $region9: #{c51_forward.4} parent=5 // pred_check
      _
    $region10: #{c51_forward.4} parent=5 // pred_check_branch
      %116 = sbr.rel (%p113) target = $region12
    $region11: #{c51_forward.4} parent=5 // pred_region
      %s117 = ssub.s32 %s9, 1
      // Predicated region
      $region13: #{c51_forward.4} parent=11 // pred_check
        %p118 = pneg %p56
      $region14: #{c51_forward.4} parent=11 // pred_check_branch
        %120 = sbr.rel (%p118) target = $region16
      $region15: #{c51_forward.4} parent=11 // pred_region
        _
      $region16: #{c51_forward.4} parent=11 // pred_fallthru
        _
      // Predicated region
      $region17: #{c51_forward.4} parent=11 // pred_check
        %p121 = pneg %p77
      $region18: #{c51_forward.4} parent=11 // pred_check_branch
        %123 = sbr.rel (%p121) target = $region20
      $region19: #{c51_forward.4} parent=11 // pred_region
        _
      $region20: #{c51_forward.4} parent=11 // pred_fallthru
        _
    $region12: #{c51_forward.4} parent=5 // pred_fallthru
      _
    %p124 = scmp.lt.s32.totalorder %s9, 2
    // Predicated region
    $region21: #{c51_forward.4} parent=5 // pred_check
      %p125 = pneg %p124
    $region22: #{c51_forward.4} parent=5 // pred_check_branch
      %127 = sbr.rel (%p125) target = $region24
    $region23: #{c51_forward.4} parent=5 // pred_region
      // Predicated region
      $region25: #{c51_forward.4} parent=23 // pred_check
        %p128 = pneg %p29
      $region26: #{c51_forward.4} parent=23 // pred_check_branch
        %130 = sbr.rel (%p128) target = $region28
      $region27: #{c51_forward.4} parent=23 // pred_region
        %p131 = scmp.lt.s32.totalorder %s9, 1
        %s132 = scalar_select %p131, %s9, 1
        %s133 = smul.addr %s132, 18
        %s134 = smul.addr %s133, 4
        %s135 = scalar_lea.vmem %s0, %s134
      $region28: #{c51_forward.4} parent=23 // pred_fallthru
        _
    $region24: #{c51_forward.4} parent=5 // pred_fallthru
      _
    %p136 = scmp.le.s32.totalorder 1, %s9
    %p137 = scmp.lt.s32.totalorder %s9, 3
    %p138 = pnand %p136, %p137
    %p139 = pneg %p138
    // Predicated region
    $region29: #{c51_forward.4} parent=5 // pred_check
      _
    $region30: #{c51_forward.4} parent=5 // pred_check_branch
      %141 = sbr.rel (%p138) target = $region32
    $region31: #{c51_forward.4} parent=5 // pred_region
      %s142 = ssub.s32 %s9, 1
      %p143 = scmp.lt.s32.totalorder %s14, 1
      %s144 = scalar_select %p143, %s14, 1
      %s145 = smul.addr %s144, 18
      %s146 = smul.addr %s145, 4
      %s147 = scalar_lea.vmem %s0, %s146
      %p148 = pneg %p35
      %p149 = pneg %p32
      %p150 = pneg %p56
      %p151 = pneg %p53
      %p152 = pneg %p77
      %p153 = pneg %p74
      %p154 = pneg %p103
      %p155 = pneg %p100
      %p156 = scmp.lt.s32.totalorder %s14, 1
      %s157 = scalar_select %p156, %s14, 1
      %s158 = smul.addr %s157, 8
      %s159 = smul.addr %s158, 4
      %s160 = scalar_lea.vmem %s3, %s159
      %p161 = scmp.lt.s32.totalorder %s14, 1
      %s162 = scalar_select %p161, %s14, 1
      %s163 = smul.addr %s162, 18
      %s164 = smul.addr %s163, 4
      %s165 = scalar_lea.vmem %s0, %s164
      %p166 = scmp.lt.s32.totalorder %s14, 1
      %s167 = scalar_select %p166, %s14, 1
      %s168 = smul.addr %s167, 8
      %s169 = smul.addr %s168, 4
      %s170 = scalar_lea.vmem %s3, %s169
      %v172 = vld [vmem:[%s2] sm:$0x1]
      %v173 = vld [vmem:[%s165] sm:$0xf]
      %v174 = vld [vmem:[%s1] sm:$0xf]
      %v175 = vld [vmem:[%s1 + $0x4] sm:$0xf]
      %v176 = vld [vmem:[%s1 + $0x8] sm:$0xf]
      %v177 = vld [vmem:[%s1 + $0xc] sm:$0xf]
      %v178 = vld [vmem:[%s1 + $0x10] sm:$0xf]
      %v179 = vld [vmem:[%s1 + $0x14] sm:$0xf]
      %v180 = vld [vmem:[%s1 + $0x18] sm:$0xf]
      %v181 = vld [vmem:[%s1 + $0x1c] sm:$0xf]
      %v182 = vld [vmem:[%s165 + $0x4] sm:$0x1]
      %s183 = scalar_lea.vmem %s1, 32
      %v184 = vld [vmem:[%s183] sm:$0xf]
      %v185 = vld [vmem:[%s183 + $0x4] sm:$0xf]
      %v186 = vld [vmem:[%s183 + $0x8] sm:$0xf]
      %v187 = vld [vmem:[%s183 + $0xc] sm:$0xf]
      %v188 = vld [vmem:[%s183 + $0x10] sm:$0xf]
      %v189 = vld [vmem:[%s183 + $0x14] sm:$0xf]
      %v190 = vld [vmem:[%s183 + $0x18] sm:$0xf]
      %v191 = vld [vmem:[%s183 + $0x1c] sm:$0xf]
      %v194 = vunpack.c.l.b16 %v173
      %v195 = vunpack.c.l.b16 %v182
      %v196 = vpack.c.b16 %v195, %v194
      %v198 = vshrl.u32 %v196, 16
      %v200 = vshll.u32 %v196, 16
      %v202 = vrot.slane %v200, 1
      %v203 = vor.u32 %v198, %v202
      %v212 = vunpack.c.l.b16 %v184
      %v213 = vunpack.c.l.b16 %v185
      %v214 = vunpack.c.l.b16 %v186
      %v215 = vunpack.c.l.b16 %v187
      %v216 = vunpack.c.l.b16 %v188
      %v217 = vunpack.c.l.b16 %v189
      %v218 = vunpack.c.l.b16 %v190
      %v219 = vunpack.c.l.b16 %v191
      %v220 = vpack.c.b16 %v213, %v212
      %v221 = vpack.c.b16 %v215, %v214
      %v222 = vpack.c.b16 %v217, %v216
      %v223 = vpack.c.b16 %v219, %v218
      %vm228 = vcmask 523264
      %v230 = vsel %vm228, %v203, 0
      %232 = vmatprep.subr.bf16.mxu0 0
      %233 = vmatpush1.bf16.msra.mxu0 0
      %234 = vmatprep.subr.bf16.mxu0 0
      %235 = vmatpush1.bf16.msra.mxu0 0
      %236 = vmatprep.subr.bf16.mxu0 0
      %237 = vmatpush1.bf16.msra.mxu0 0
      %238 = vmatprep.subr.bf16.mxu0 0
      %239 = vmatpush1.bf16.msra.mxu0 0
      %240 = vmatprep.subr.bf16.mxu0 0
      %241 = vmatpush1.bf16.msra.mxu0 %v223
      %242 = vmatprep.subr.bf16.mxu0 0
      %243 = vmatpush1.bf16.msra.mxu0 %v222
      %244 = vmatprep.subr.bf16.mxu0 0
      %245 = vmatpush1.bf16.msra.mxu0 %v221
      %246 = vmatprep.subr.bf16.mxu0 0
      %247 = vmatpush1.bf16.msra.mxu0 %v220
      %248 = vmatprep.subr.bf16.mxu0 0
      %249 = vmatpush2.bf16.msra.mxu0 0
      %250 = vmatprep.subr.bf16.mxu0 0
      %251 = vmatpush2.bf16.msra.mxu0 0
      %252 = vmatprep.subr.bf16.mxu0 0
      %253 = vmatpush2.bf16.msra.mxu0 0
      %254 = vmatprep.subr.bf16.mxu0 0
      %255 = vmatpush2.bf16.msra.mxu0 0
      %256 = vmatprep.subr.bf16.mxu0 0
      %257 = vmatpush2.bf16.msra.mxu0 0
      %258 = vmatprep.subr.bf16.mxu0 0
      %259 = vmatpush2.bf16.msra.mxu0 0
      %260 = vmatprep.subr.bf16.mxu0 0
      %261 = vmatpush2.bf16.msra.mxu0 0
      %262 = vmatprep.subr.bf16.mxu0 0
      %263 = vmatpush2.bf16.msra.mxu0 0
      %264 = vmatprep.mubr.bf16.mxu0 0
      %265 = vmatmul.mubr.bf16.gmra.mxu0 %v230
      %v266 = vpop.f32.mrf.mxu0
      %v267 = vadd.f32 0.0, %v266
      %v268 = vpop.f32.mrf.mxu0
      %v269 = vpop.f32.mrf.mxu0
      %v270 = vpop.f32.mrf.mxu0
      %271 = vdwg.mxu0
      %v280 = vunpack.c.l.b16 %v174
      %v281 = vunpack.c.l.b16 %v175
      %v282 = vunpack.c.l.b16 %v176
      %v283 = vunpack.c.l.b16 %v177
      %v284 = vunpack.c.l.b16 %v178
      %v285 = vunpack.c.l.b16 %v179
      %v286 = vunpack.c.l.b16 %v180
      %v287 = vunpack.c.l.b16 %v181
      %v288 = vpack.c.b16 %v281, %v280
      %v289 = vpack.c.b16 %v283, %v282
      %v290 = vpack.c.b16 %v285, %v284
      %v291 = vpack.c.b16 %v287, %v286
      %v297 = vsel %vm228, %v173, 0
      %299 = vmatprep.subr.bf16.mxu0 0
      %300 = vmatpush1.bf16.msra.mxu0 0
      %301 = vmatprep.subr.bf16.mxu0 0
      %302 = vmatpush1.bf16.msra.mxu0 0
      %303 = vmatprep.subr.bf16.mxu0 0
      %304 = vmatpush1.bf16.msra.mxu0 0
      %305 = vmatprep.subr.bf16.mxu0 0
      %306 = vmatpush1.bf16.msra.mxu0 0
      %307 = vmatprep.subr.bf16.mxu0 0
      %308 = vmatpush1.bf16.msra.mxu0 %v291
      %309 = vmatprep.subr.bf16.mxu0 0
      %310 = vmatpush1.bf16.msra.mxu0 %v290
      %311 = vmatprep.subr.bf16.mxu0 0
      %312 = vmatpush1.bf16.msra.mxu0 %v289
      %313 = vmatprep.subr.bf16.mxu0 0
      %314 = vmatpush1.bf16.msra.mxu0 %v288
      %315 = vmatprep.subr.bf16.mxu0 0
      %316 = vmatpush2.bf16.msra.mxu0 0
      %317 = vmatprep.subr.bf16.mxu0 0
      %318 = vmatpush2.bf16.msra.mxu0 0
      %319 = vmatprep.subr.bf16.mxu0 0
      %320 = vmatpush2.bf16.msra.mxu0 0
      %321 = vmatprep.subr.bf16.mxu0 0
      %322 = vmatpush2.bf16.msra.mxu0 0
      %323 = vmatprep.subr.bf16.mxu0 0
      %324 = vmatpush2.bf16.msra.mxu0 0
      %325 = vmatprep.subr.bf16.mxu0 0
      %326 = vmatpush2.bf16.msra.mxu0 0
      %327 = vmatprep.subr.bf16.mxu0 0
      %328 = vmatpush2.bf16.msra.mxu0 0
      %329 = vmatprep.subr.bf16.mxu0 0
      %330 = vmatpush2.bf16.msra.mxu0 0
      %331 = vmatprep.mubr.bf16.mxu0 0
      %332 = vmatmul.mubr.bf16.gmra.mxu0 %v297
      %v333 = vpop.f32.mrf.mxu0
      %v334 = vadd.f32 %v267, %v333
      %v335 = vpop.f32.mrf.mxu0
      %v336 = vpop.f32.mrf.mxu0
      %v337 = vpop.f32.mrf.mxu0
      %338 = vdwg.mxu0
      %s339 = scalar_lea.vmem %s165, 8
      %v340 = vld [vmem:[%s339] sm:$0xf]
      %s341 = scalar_lea.vmem %s1, 64
      %v342 = vld [vmem:[%s341] sm:$0xf]
      %v343 = vld [vmem:[%s341 + $0x4] sm:$0xf]
      %v344 = vld [vmem:[%s341 + $0x8] sm:$0xf]
      %v345 = vld [vmem:[%s341 + $0xc] sm:$0xf]
      %v346 = vld [vmem:[%s341 + $0x10] sm:$0xf]
      %v347 = vld [vmem:[%s341 + $0x14] sm:$0xf]
      %v348 = vld [vmem:[%s341 + $0x18] sm:$0xf]
      %v349 = vld [vmem:[%s341 + $0x1c] sm:$0xf]
      %v358 = vunpack.c.l.b16 %v342
      %v359 = vunpack.c.l.b16 %v343
      %v360 = vunpack.c.l.b16 %v344
      %v361 = vunpack.c.l.b16 %v345
      %v362 = vunpack.c.l.b16 %v346
      %v363 = vunpack.c.l.b16 %v347
      %v364 = vunpack.c.l.b16 %v348
      %v365 = vunpack.c.l.b16 %v349
      %v366 = vpack.c.b16 %v359, %v358
      %v367 = vpack.c.b16 %v361, %v360
      %v368 = vpack.c.b16 %v363, %v362
      %v369 = vpack.c.b16 %v365, %v364
      %v375 = vsel %vm228, %v340, 0
      %377 = vmatprep.subr.bf16.mxu0 0
      %378 = vmatpush1.bf16.msra.mxu0 0
      %379 = vmatprep.subr.bf16.mxu0 0
      %380 = vmatpush1.bf16.msra.mxu0 0
      %381 = vmatprep.subr.bf16.mxu0 0
      %382 = vmatpush1.bf16.msra.mxu0 0
      %383 = vmatprep.subr.bf16.mxu0 0
      %384 = vmatpush1.bf16.msra.mxu0 0
      %385 = vmatprep.subr.bf16.mxu0 0
      %386 = vmatpush1.bf16.msra.mxu0 %v369
      %387 = vmatprep.subr.bf16.mxu0 0
      %388 = vmatpush1.bf16.msra.mxu0 %v368
      %389 = vmatprep.subr.bf16.mxu0 0
      %390 = vmatpush1.bf16.msra.mxu0 %v367
      %391 = vmatprep.subr.bf16.mxu0 0
      %392 = vmatpush1.bf16.msra.mxu0 %v366
      %393 = vmatprep.subr.bf16.mxu0 0
      %394 = vmatpush2.bf16.msra.mxu0 0
      %395 = vmatprep.subr.bf16.mxu0 0
      %396 = vmatpush2.bf16.msra.mxu0 0
      %397 = vmatprep.subr.bf16.mxu0 0
      %398 = vmatpush2.bf16.msra.mxu0 0
      %399 = vmatprep.subr.bf16.mxu0 0
      %400 = vmatpush2.bf16.msra.mxu0 0
      %401 = vmatprep.subr.bf16.mxu0 0
      %402 = vmatpush2.bf16.msra.mxu0 0
      %403 = vmatprep.subr.bf16.mxu0 0
      %404 = vmatpush2.bf16.msra.mxu0 0
      %405 = vmatprep.subr.bf16.mxu0 0
      %406 = vmatpush2.bf16.msra.mxu0 0
      %407 = vmatprep.subr.bf16.mxu0 0
      %408 = vmatpush2.bf16.msra.mxu0 0
      %409 = vmatprep.mubr.bf16.mxu0 0
      %410 = vmatmul.mubr.bf16.gmra.mxu0 %v375
      %v411 = vpop.f32.mrf.mxu0
      %v412 = vadd.f32 0.0, %v411
      %v413 = vpop.f32.mrf.mxu0
      %v414 = vpop.f32.mrf.mxu0
      %v415 = vpop.f32.mrf.mxu0
      %416 = vdwg.mxu0
      %v417 = vadd.f32 %v334, %v412
      %v418 = vld [vmem:[%s339] sm:$0xf]
      %v419 = vld [vmem:[%s339 + $0x4] sm:$0x1]
      %s420 = scalar_lea.vmem %s1, 96
      %v421 = vld [vmem:[%s420] sm:$0xf]
      %v422 = vld [vmem:[%s420 + $0x4] sm:$0xf]
      %v423 = vld [vmem:[%s420 + $0x8] sm:$0xf]
      %v424 = vld [vmem:[%s420 + $0xc] sm:$0xf]
      %v425 = vld [vmem:[%s420 + $0x10] sm:$0xf]
      %v426 = vld [vmem:[%s420 + $0x14] sm:$0xf]
      %v427 = vld [vmem:[%s420 + $0x18] sm:$0xf]
      %v428 = vld [vmem:[%s420 + $0x1c] sm:$0xf]
      %v431 = vunpack.c.l.b16 %v418
      %v432 = vunpack.c.l.b16 %v419
      %v433 = vpack.c.b16 %v432, %v431
      %v435 = vshrl.u32 %v433, 16
      %v437 = vshll.u32 %v433, 16
      %v439 = vrot.slane %v437, 1
      %v440 = vor.u32 %v435, %v439
      %v449 = vunpack.c.l.b16 %v421
      %v450 = vunpack.c.l.b16 %v422
      %v451 = vunpack.c.l.b16 %v423
      %v452 = vunpack.c.l.b16 %v424
      %v453 = vunpack.c.l.b16 %v425
      %v454 = vunpack.c.l.b16 %v426
      %v455 = vunpack.c.l.b16 %v427
      %v456 = vunpack.c.l.b16 %v428
      %v457 = vpack.c.b16 %v450, %v449
      %v458 = vpack.c.b16 %v452, %v451
      %v459 = vpack.c.b16 %v454, %v453
      %v460 = vpack.c.b16 %v456, %v455
      %v466 = vsel %vm228, %v440, 0
      %468 = vmatprep.subr.bf16.mxu0 0
      %469 = vmatpush1.bf16.msra.mxu0 0
      %470 = vmatprep.subr.bf16.mxu0 0
      %471 = vmatpush1.bf16.msra.mxu0 0
      %472 = vmatprep.subr.bf16.mxu0 0
      %473 = vmatpush1.bf16.msra.mxu0 0
      %474 = vmatprep.subr.bf16.mxu0 0
      %475 = vmatpush1.bf16.msra.mxu0 0
      %476 = vmatprep.subr.bf16.mxu0 0
      %477 = vmatpush1.bf16.msra.mxu0 %v460
      %478 = vmatprep.subr.bf16.mxu0 0
      %479 = vmatpush1.bf16.msra.mxu0 %v459
      %480 = vmatprep.subr.bf16.mxu0 0
      %481 = vmatpush1.bf16.msra.mxu0 %v458
      %482 = vmatprep.subr.bf16.mxu0 0
      %483 = vmatpush1.bf16.msra.mxu0 %v457
      %484 = vmatprep.subr.bf16.mxu0 0
      %485 = vmatpush2.bf16.msra.mxu0 0
      %486 = vmatprep.subr.bf16.mxu0 0
      %487 = vmatpush2.bf16.msra.mxu0 0
      %488 = vmatprep.subr.bf16.mxu0 0
      %489 = vmatpush2.bf16.msra.mxu0 0
      %490 = vmatprep.subr.bf16.mxu0 0
      %491 = vmatpush2.bf16.msra.mxu0 0
      %492 = vmatprep.subr.bf16.mxu0 0
      %493 = vmatpush2.bf16.msra.mxu0 0
      %494 = vmatprep.subr.bf16.mxu0 0
      %495 = vmatpush2.bf16.msra.mxu0 0
      %496 = vmatprep.subr.bf16.mxu0 0
      %497 = vmatpush2.bf16.msra.mxu0 0
      %498 = vmatprep.subr.bf16.mxu0 0
      %499 = vmatpush2.bf16.msra.mxu0 0
      %500 = vmatprep.mubr.bf16.mxu0 0
      %501 = vmatmul.mubr.bf16.gmra.mxu0 %v466
      %v502 = vpop.f32.mrf.mxu0
      %v503 = vadd.f32 0.0, %v502
      %v504 = vpop.f32.mrf.mxu0
      %v505 = vpop.f32.mrf.mxu0
      %v506 = vpop.f32.mrf.mxu0
      %507 = vdwg.mxu0
      %v508 = vadd.f32 %v417, %v503
      %v510 = vlaneseq
      %v511 = vshrl.u32 %v510, 7
      %v512 = vsub.s32 0, %v511
      %v513 = vrot.slane %v172, %v512
      %v515 = vadd.f32 %v508, %v513
      %v516 = vmax.f32 %v515, 0.0
      %v517 = vpack.c.bf16 %v516, %v516
      %518 = vst [vmem:[%s170] sm:$0xf] %v517
      %v519 = vld [vmem:[%s339] sm:$0xf]
      %v520 = vld [vmem:[%s1] sm:$0xf]
      %v521 = vld [vmem:[%s1 + $0x4] sm:$0xf]
      %v522 = vld [vmem:[%s1 + $0x8] sm:$0xf]
      %v523 = vld [vmem:[%s1 + $0xc] sm:$0xf]
      %v524 = vld [vmem:[%s1 + $0x10] sm:$0xf]
      %v525 = vld [vmem:[%s1 + $0x14] sm:$0xf]
      %v526 = vld [vmem:[%s1 + $0x18] sm:$0xf]
      %v527 = vld [vmem:[%s1 + $0x1c] sm:$0xf]
      %v528 = vld [vmem:[%s339 + $0x4] sm:$0x1]
      %v529 = vld [vmem:[%s183] sm:$0xf]
      %v530 = vld [vmem:[%s183 + $0x4] sm:$0xf]
      %v531 = vld [vmem:[%s183 + $0x8] sm:$0xf]
      %v532 = vld [vmem:[%s183 + $0xc] sm:$0xf]
      %v533 = vld [vmem:[%s183 + $0x10] sm:$0xf]
      %v534 = vld [vmem:[%s183 + $0x14] sm:$0xf]
      %v535 = vld [vmem:[%s183 + $0x18] sm:$0xf]
      %v536 = vld [vmem:[%s183 + $0x1c] sm:$0xf]
      %v539 = vunpack.c.l.b16 %v519
      %v540 = vunpack.c.l.b16 %v528
      %v541 = vpack.c.b16 %v540, %v539
      %v543 = vshrl.u32 %v541, 16
      %v545 = vshll.u32 %v541, 16
      %v547 = vrot.slane %v545, 1
      %v548 = vor.u32 %v543, %v547
      %v557 = vunpack.c.l.b16 %v529
      %v558 = vunpack.c.l.b16 %v530
      %v559 = vunpack.c.l.b16 %v531
      %v560 = vunpack.c.l.b16 %v532
      %v561 = vunpack.c.l.b16 %v533
      %v562 = vunpack.c.l.b16 %v534
      %v563 = vunpack.c.l.b16 %v535
      %v564 = vunpack.c.l.b16 %v536
      %v565 = vpack.c.b16 %v558, %v557
      %v566 = vpack.c.b16 %v560, %v559
      %v567 = vpack.c.b16 %v562, %v561
      %v568 = vpack.c.b16 %v564, %v563
      %v574 = vsel %vm228, %v548, 0
      %576 = vmatprep.subr.bf16.mxu0 0
      %577 = vmatpush1.bf16.msra.mxu0 0
      %578 = vmatprep.subr.bf16.mxu0 0
      %579 = vmatpush1.bf16.msra.mxu0 0
      %580 = vmatprep.subr.bf16.mxu0 0
      %581 = vmatpush1.bf16.msra.mxu0 0
      %582 = vmatprep.subr.bf16.mxu0 0
      %583 = vmatpush1.bf16.msra.mxu0 0
      %584 = vmatprep.subr.bf16.mxu0 0
      %585 = vmatpush1.bf16.msra.mxu0 %v568
      %586 = vmatprep.subr.bf16.mxu0 0
      %587 = vmatpush1.bf16.msra.mxu0 %v567
      %588 = vmatprep.subr.bf16.mxu0 0
      %589 = vmatpush1.bf16.msra.mxu0 %v566
      %590 = vmatprep.subr.bf16.mxu0 0
      %591 = vmatpush1.bf16.msra.mxu0 %v565
      %592 = vmatprep.subr.bf16.mxu0 0
      %593 = vmatpush2.bf16.msra.mxu0 0
      %594 = vmatprep.subr.bf16.mxu0 0
      %595 = vmatpush2.bf16.msra.mxu0 0
      %596 = vmatprep.subr.bf16.mxu0 0
      %597 = vmatpush2.bf16.msra.mxu0 0
      %598 = vmatprep.subr.bf16.mxu0 0
      %599 = vmatpush2.bf16.msra.mxu0 0
      %600 = vmatprep.subr.bf16.mxu0 0
      %601 = vmatpush2.bf16.msra.mxu0 0
      %602 = vmatprep.subr.bf16.mxu0 0
      %603 = vmatpush2.bf16.msra.mxu0 0
      %604 = vmatprep.subr.bf16.mxu0 0
      %605 = vmatpush2.bf16.msra.mxu0 0
      %606 = vmatprep.subr.bf16.mxu0 0
      %607 = vmatpush2.bf16.msra.mxu0 0
      %608 = vmatprep.mubr.bf16.mxu0 0
      %609 = vmatmul.mubr.bf16.gmra.mxu0 %v574
      %v610 = vpop.f32.mrf.mxu0
      %v611 = vadd.f32 0.0, %v610
      %v612 = vpop.f32.mrf.mxu0
      %v613 = vpop.f32.mrf.mxu0
      %v614 = vpop.f32.mrf.mxu0
      %615 = vdwg.mxu0
      %v624 = vunpack.c.l.b16 %v520
      %v625 = vunpack.c.l.b16 %v521
      %v626 = vunpack.c.l.b16 %v522
      %v627 = vunpack.c.l.b16 %v523
      %v628 = vunpack.c.l.b16 %v524
      %v629 = vunpack.c.l.b16 %v525
      %v630 = vunpack.c.l.b16 %v526
      %v631 = vunpack.c.l.b16 %v527
      %v632 = vpack.c.b16 %v625, %v624
      %v633 = vpack.c.b16 %v627, %v626
      %v634 = vpack.c.b16 %v629, %v628
      %v635 = vpack.c.b16 %v631, %v630
      %v641 = vsel %vm228, %v519, 0
      %643 = vmatprep.subr.bf16.mxu0 0
      %644 = vmatpush1.bf16.msra.mxu0 0
      %645 = vmatprep.subr.bf16.mxu0 0
      %646 = vmatpush1.bf16.msra.mxu0 0
      %647 = vmatprep.subr.bf16.mxu0 0
      %648 = vmatpush1.bf16.msra.mxu0 0
      %649 = vmatprep.subr.bf16.mxu0 0
      %650 = vmatpush1.bf16.msra.mxu0 0
      %651 = vmatprep.subr.bf16.mxu0 0
      %652 = vmatpush1.bf16.msra.mxu0 %v635
      %653 = vmatprep.subr.bf16.mxu0 0
      %654 = vmatpush1.bf16.msra.mxu0 %v634
      %655 = vmatprep.subr.bf16.mxu0 0
      %656 = vmatpush1.bf16.msra.mxu0 %v633
      %657 = vmatprep.subr.bf16.mxu0 0
      %658 = vmatpush1.bf16.msra.mxu0 %v632
      %659 = vmatprep.subr.bf16.mxu0 0
      %660 = vmatpush2.bf16.msra.mxu0 0
      %661 = vmatprep.subr.bf16.mxu0 0
      %662 = vmatpush2.bf16.msra.mxu0 0
      %663 = vmatprep.subr.bf16.mxu0 0
      %664 = vmatpush2.bf16.msra.mxu0 0
      %665 = vmatprep.subr.bf16.mxu0 0
      %666 = vmatpush2.bf16.msra.mxu0 0
      %667 = vmatprep.subr.bf16.mxu0 0
      %668 = vmatpush2.bf16.msra.mxu0 0
      %669 = vmatprep.subr.bf16.mxu0 0
      %670 = vmatpush2.bf16.msra.mxu0 0
      %671 = vmatprep.subr.bf16.mxu0 0
      %672 = vmatpush2.bf16.msra.mxu0 0
      %673 = vmatprep.subr.bf16.mxu0 0
      %674 = vmatpush2.bf16.msra.mxu0 0
      %675 = vmatprep.mubr.bf16.mxu0 0
      %676 = vmatmul.mubr.bf16.gmra.mxu0 %v641
      %v677 = vpop.f32.mrf.mxu0
      %v678 = vadd.f32 %v611, %v677
      %v679 = vpop.f32.mrf.mxu0
      %v680 = vpop.f32.mrf.mxu0
      %v681 = vpop.f32.mrf.mxu0
      %682 = vdwg.mxu0
      %s683 = scalar_lea.vmem %s165, 16
      %v684 = vld [vmem:[%s683] sm:$0xf]
      %v685 = vld [vmem:[%s341] sm:$0xf]
      %v686 = vld [vmem:[%s341 + $0x4] sm:$0xf]
      %v687 = vld [vmem:[%s341 + $0x8] sm:$0xf]
      %v688 = vld [vmem:[%s341 + $0xc] sm:$0xf]
      %v689 = vld [vmem:[%s341 + $0x10] sm:$0xf]
      %v690 = vld [vmem:[%s341 + $0x14] sm:$0xf]
      %v691 = vld [vmem:[%s341 + $0x18] sm:$0xf]
      %v692 = vld [vmem:[%s341 + $0x1c] sm:$0xf]
      %v701 = vunpack.c.l.b16 %v685
      %v702 = vunpack.c.l.b16 %v686
      %v703 = vunpack.c.l.b16 %v687
      %v704 = vunpack.c.l.b16 %v688
      %v705 = vunpack.c.l.b16 %v689
      %v706 = vunpack.c.l.b16 %v690
      %v707 = vunpack.c.l.b16 %v691
      %v708 = vunpack.c.l.b16 %v692
      %v709 = vpack.c.b16 %v702, %v701
      %v710 = vpack.c.b16 %v704, %v703
      %v711 = vpack.c.b16 %v706, %v705
      %v712 = vpack.c.b16 %v708, %v707
      %v718 = vsel %vm228, %v684, 0
      %720 = vmatprep.subr.bf16.mxu0 0
      %721 = vmatpush1.bf16.msra.mxu0 0
      %722 = vmatprep.subr.bf16.mxu0 0
      %723 = vmatpush1.bf16.msra.mxu0 0
      %724 = vmatprep.subr.bf16.mxu0 0
      %725 = vmatpush1.bf16.msra.mxu0 0
      %726 = vmatprep.subr.bf16.mxu0 0
      %727 = vmatpush1.bf16.msra.mxu0 0
      %728 = vmatprep.subr.bf16.mxu0 0
      %729 = vmatpush1.bf16.msra.mxu0 %v712
      %730 = vmatprep.subr.bf16.mxu0 0
      %731 = vmatpush1.bf16.msra.mxu0 %v711
      %732 = vmatprep.subr.bf16.mxu0 0
      %733 = vmatpush1.bf16.msra.mxu0 %v710
      %734 = vmatprep.subr.bf16.mxu0 0
      %735 = vmatpush1.bf16.msra.mxu0 %v709
      %736 = vmatprep.subr.bf16.mxu0 0
      %737 = vmatpush2.bf16.msra.mxu0 0
      %738 = vmatprep.subr.bf16.mxu0 0
      %739 = vmatpush2.bf16.msra.mxu0 0
      %740 = vmatprep.subr.bf16.mxu0 0
      %741 = vmatpush2.bf16.msra.mxu0 0
      %742 = vmatprep.subr.bf16.mxu0 0
      %743 = vmatpush2.bf16.msra.mxu0 0
      %744 = vmatprep.subr.bf16.mxu0 0
      %745 = vmatpush2.bf16.msra.mxu0 0
      %746 = vmatprep.subr.bf16.mxu0 0
      %747 = vmatpush2.bf16.msra.mxu0 0
      %748 = vmatprep.subr.bf16.mxu0 0
      %749 = vmatpush2.bf16.msra.mxu0 0
      %750 = vmatprep.subr.bf16.mxu0 0
      %751 = vmatpush2.bf16.msra.mxu0 0
      %752 = vmatprep.mubr.bf16.mxu0 0
      %753 = vmatmul.mubr.bf16.gmra.mxu0 %v718
      %v754 = vpop.f32.mrf.mxu0
      %v755 = vadd.f32 0.0, %v754
      %v756 = vpop.f32.mrf.mxu0
      %v757 = vpop.f32.mrf.mxu0
      %v758 = vpop.f32.mrf.mxu0
      %759 = vdwg.mxu0
      %v760 = vadd.f32 %v678, %v755
      %v761 = vld [vmem:[%s683] sm:$0xf]
      %v762 = vld [vmem:[%s683 + $0x4] sm:$0x1]
      %v763 = vld [vmem:[%s420] sm:$0xf]
      %v764 = vld [vmem:[%s420 + $0x4] sm:$0xf]
      %v765 = vld [vmem:[%s420 + $0x8] sm:$0xf]
      %v766 = vld [vmem:[%s420 + $0xc] sm:$0xf]
      %v767 = vld [vmem:[%s420 + $0x10] sm:$0xf]
      %v768 = vld [vmem:[%s420 + $0x14] sm:$0xf]
      %v769 = vld [vmem:[%s420 + $0x18] sm:$0xf]
      %v770 = vld [vmem:[%s420 + $0x1c] sm:$0xf]
      %v773 = vunpack.c.l.b16 %v761
      %v774 = vunpack.c.l.b16 %v762
      %v775 = vpack.c.b16 %v774, %v773
      %v777 = vshrl.u32 %v775, 16
      %v779 = vshll.u32 %v775, 16
      %v781 = vrot.slane %v779, 1
      %v782 = vor.u32 %v777, %v781
      %v791 = vunpack.c.l.b16 %v763
      %v792 = vunpack.c.l.b16 %v764
      %v793 = vunpack.c.l.b16 %v765
      %v794 = vunpack.c.l.b16 %v766
      %v795 = vunpack.c.l.b16 %v767
      %v796 = vunpack.c.l.b16 %v768
      %v797 = vunpack.c.l.b16 %v769
      %v798 = vunpack.c.l.b16 %v770
      %v799 = vpack.c.b16 %v792, %v791
      %v800 = vpack.c.b16 %v794, %v793
      %v801 = vpack.c.b16 %v796, %v795
      %v802 = vpack.c.b16 %v798, %v797
      %v808 = vsel %vm228, %v782, 0
      %810 = vmatprep.subr.bf16.mxu0 0
      %811 = vmatpush1.bf16.msra.mxu0 0
      %812 = vmatprep.subr.bf16.mxu0 0
      %813 = vmatpush1.bf16.msra.mxu0 0
      %814 = vmatprep.subr.bf16.mxu0 0
      %815 = vmatpush1.bf16.msra.mxu0 0
      %816 = vmatprep.subr.bf16.mxu0 0
      %817 = vmatpush1.bf16.msra.mxu0 0
      %818 = vmatprep.subr.bf16.mxu0 0
      %819 = vmatpush1.bf16.msra.mxu0 %v802
      %820 = vmatprep.subr.bf16.mxu0 0
      %821 = vmatpush1.bf16.msra.mxu0 %v801
      %822 = vmatprep.subr.bf16.mxu0 0
      %823 = vmatpush1.bf16.msra.mxu0 %v800
      %824 = vmatprep.subr.bf16.mxu0 0
      %825 = vmatpush1.bf16.msra.mxu0 %v799
      %826 = vmatprep.subr.bf16.mxu0 0
      %827 = vmatpush2.bf16.msra.mxu0 0
      %828 = vmatprep.subr.bf16.mxu0 0
      %829 = vmatpush2.bf16.msra.mxu0 0
      %830 = vmatprep.subr.bf16.mxu0 0
      %831 = vmatpush2.bf16.msra.mxu0 0
      %832 = vmatprep.subr.bf16.mxu0 0
      %833 = vmatpush2.bf16.msra.mxu0 0
      %834 = vmatprep.subr.bf16.mxu0 0
      %835 = vmatpush2.bf16.msra.mxu0 0
      %836 = vmatprep.subr.bf16.mxu0 0
      %837 = vmatpush2.bf16.msra.mxu0 0
      %838 = vmatprep.subr.bf16.mxu0 0
      %839 = vmatpush2.bf16.msra.mxu0 0
      %840 = vmatprep.subr.bf16.mxu0 0
      %841 = vmatpush2.bf16.msra.mxu0 0
      %842 = vmatprep.mubr.bf16.mxu0 0
      %843 = vmatmul.mubr.bf16.gmra.mxu0 %v808
      %v844 = vpop.f32.mrf.mxu0
      %v845 = vadd.f32 0.0, %v844
      %v846 = vpop.f32.mrf.mxu0
      %v847 = vpop.f32.mrf.mxu0
      %v848 = vpop.f32.mrf.mxu0
      %849 = vdwg.mxu0
      %v850 = vadd.f32 %v760, %v845
      %v851 = vadd.f32 %v850, %v513
      %v852 = vmax.f32 %v851, 0.0
      %v853 = vpack.c.bf16 %v852, %v852
      %s854 = scalar_lea.vmem %s170, 4
      %855 = vst [vmem:[%s854] sm:$0xf] %v853
      %v856 = vld [vmem:[%s683] sm:$0xf]
      %v857 = vld [vmem:[%s1] sm:$0xf]
      %v858 = vld [vmem:[%s1 + $0x4] sm:$0xf]
      %v859 = vld [vmem:[%s1 + $0x8] sm:$0xf]
      %v860 = vld [vmem:[%s1 + $0xc] sm:$0xf]
      %v861 = vld [vmem:[%s1 + $0x10] sm:$0xf]
      %v862 = vld [vmem:[%s1 + $0x14] sm:$0xf]
      %v863 = vld [vmem:[%s1 + $0x18] sm:$0xf]
      %v864 = vld [vmem:[%s1 + $0x1c] sm:$0xf]
      %v865 = vld [vmem:[%s683 + $0x4] sm:$0x1]
      %v866 = vld [vmem:[%s183] sm:$0xf]
      %v867 = vld [vmem:[%s183 + $0x4] sm:$0xf]
      %v868 = vld [vmem:[%s183 + $0x8] sm:$0xf]
      %v869 = vld [vmem:[%s183 + $0xc] sm:$0xf]
      %v870 = vld [vmem:[%s183 + $0x10] sm:$0xf]
      %v871 = vld [vmem:[%s183 + $0x14] sm:$0xf]
      %v872 = vld [vmem:[%s183 + $0x18] sm:$0xf]
      %v873 = vld [vmem:[%s183 + $0x1c] sm:$0xf]
      %v876 = vunpack.c.l.b16 %v856
      %v877 = vunpack.c.l.b16 %v865
      %v878 = vpack.c.b16 %v877, %v876
      %v880 = vshrl.u32 %v878, 16
      %v882 = vshll.u32 %v878, 16
      %v884 = vrot.slane %v882, 1
      %v885 = vor.u32 %v880, %v884
      %v894 = vunpack.c.l.b16 %v866
      %v895 = vunpack.c.l.b16 %v867
      %v896 = vunpack.c.l.b16 %v868
      %v897 = vunpack.c.l.b16 %v869
      %v898 = vunpack.c.l.b16 %v870
      %v899 = vunpack.c.l.b16 %v871
      %v900 = vunpack.c.l.b16 %v872
      %v901 = vunpack.c.l.b16 %v873
      %v902 = vpack.c.b16 %v895, %v894
      %v903 = vpack.c.b16 %v897, %v896
      %v904 = vpack.c.b16 %v899, %v898
      %v905 = vpack.c.b16 %v901, %v900
      %v911 = vsel %vm228, %v885, 0
      %913 = vmatprep.subr.bf16.mxu0 0
      %914 = vmatpush1.bf16.msra.mxu0 0
      %915 = vmatprep.subr.bf16.mxu0 0
      %916 = vmatpush1.bf16.msra.mxu0 0
      %917 = vmatprep.subr.bf16.mxu0 0
      %918 = vmatpush1.bf16.msra.mxu0 0
      %919 = vmatprep.subr.bf16.mxu0 0
      %920 = vmatpush1.bf16.msra.mxu0 0
      %921 = vmatprep.subr.bf16.mxu0 0
      %922 = vmatpush1.bf16.msra.mxu0 %v905
      %923 = vmatprep.subr.bf16.mxu0 0
      %924 = vmatpush1.bf16.msra.mxu0 %v904
      %925 = vmatprep.subr.bf16.mxu0 0
      %926 = vmatpush1.bf16.msra.mxu0 %v903
      %927 = vmatprep.subr.bf16.mxu0 0
      %928 = vmatpush1.bf16.msra.mxu0 %v902
      %929 = vmatprep.subr.bf16.mxu0 0
      %930 = vmatpush2.bf16.msra.mxu0 0
      %931 = vmatprep.subr.bf16.mxu0 0
      %932 = vmatpush2.bf16.msra.mxu0 0
      %933 = vmatprep.subr.bf16.mxu0 0
      %934 = vmatpush2.bf16.msra.mxu0 0
      %935 = vmatprep.subr.bf16.mxu0 0
      %936 = vmatpush2.bf16.msra.mxu0 0
      %937 = vmatprep.subr.bf16.mxu0 0
      %938 = vmatpush2.bf16.msra.mxu0 0
      %939 = vmatprep.subr.bf16.mxu0 0
      %940 = vmatpush2.bf16.msra.mxu0 0
      %941 = vmatprep.subr.bf16.mxu0 0
      %942 = vmatpush2.bf16.msra.mxu0 0
      %943 = vmatprep.subr.bf16.mxu0 0
      %944 = vmatpush2.bf16.msra.mxu0 0
      %945 = vmatprep.mubr.bf16.mxu0 0
      %946 = vmatmul.mubr.bf16.gmra.mxu0 %v911
      %v947 = vpop.f32.mrf.mxu0
      %v948 = vadd.f32 0.0, %v947
      %v949 = vpop.f32.mrf.mxu0
      %v950 = vpop.f32.mrf.mxu0
      %v951 = vpop.f32.mrf.mxu0
      %952 = vdwg.mxu0
      %v961 = vunpack.c.l.b16 %v857
      %v962 = vunpack.c.l.b16 %v858
      %v963 = vunpack.c.l.b16 %v859
      %v964 = vunpack.c.l.b16 %v860
      %v965 = vunpack.c.l.b16 %v861
      %v966 = vunpack.c.l.b16 %v862
      %v967 = vunpack.c.l.b16 %v863
      %v968 = vunpack.c.l.b16 %v864
      %v969 = vpack.c.b16 %v962, %v961
      %v970 = vpack.c.b16 %v964, %v963
      %v971 = vpack.c.b16 %v966, %v965
      %v972 = vpack.c.b16 %v968, %v967
      %v978 = vsel %vm228, %v856, 0
      %980 = vmatprep.subr.bf16.mxu0 0
      %981 = vmatpush1.bf16.msra.mxu0 0
      %982 = vmatprep.subr.bf16.mxu0 0
      %983 = vmatpush1.bf16.msra.mxu0 0
      %984 = vmatprep.subr.bf16.mxu0 0
      %985 = vmatpush1.bf16.msra.mxu0 0
      %986 = vmatprep.subr.bf16.mxu0 0
      %987 = vmatpush1.bf16.msra.mxu0 0
      %988 = vmatprep.subr.bf16.mxu0 0
      %989 = vmatpush1.bf16.msra.mxu0 %v972
      %990 = vmatprep.subr.bf16.mxu0 0
      %991 = vmatpush1.bf16.msra.mxu0 %v971
      %992 = vmatprep.subr.bf16.mxu0 0
      %993 = vmatpush1.bf16.msra.mxu0 %v970
      %994 = vmatprep.subr.bf16.mxu0 0
      %995 = vmatpush1.bf16.msra.mxu0 %v969
      %996 = vmatprep.subr.bf16.mxu0 0
      %997 = vmatpush2.bf16.msra.mxu0 0
      %998 = vmatprep.subr.bf16.mxu0 0
      %999 = vmatpush2.bf16.msra.mxu0 0
      %1000 = vmatprep.subr.bf16.mxu0 0
      %1001 = vmatpush2.bf16.msra.mxu0 0
      %1002 = vmatprep.subr.bf16.mxu0 0
      %1003 = vmatpush2.bf16.msra.mxu0 0
      %1004 = vmatprep.subr.bf16.mxu0 0
      %1005 = vmatpush2.bf16.msra.mxu0 0
      %1006 = vmatprep.subr.bf16.mxu0 0
      %1007 = vmatpush2.bf16.msra.mxu0 0
      %1008 = vmatprep.subr.bf16.mxu0 0
      %1009 = vmatpush2.bf16.msra.mxu0 0
      %1010 = vmatprep.subr.bf16.mxu0 0
      %1011 = vmatpush2.bf16.msra.mxu0 0
      %1012 = vmatprep.mubr.bf16.mxu0 0
      %1013 = vmatmul.mubr.bf16.gmra.mxu0 %v978
      %v1014 = vpop.f32.mrf.mxu0
      %v1015 = vadd.f32 %v948, %v1014
      %v1016 = vpop.f32.mrf.mxu0
      %v1017 = vpop.f32.mrf.mxu0
      %v1018 = vpop.f32.mrf.mxu0
      %1019 = vdwg.mxu0
      %s1020 = scalar_lea.vmem %s165, 24
      %v1021 = vld [vmem:[%s1020] sm:$0xf]
      %v1022 = vld [vmem:[%s341] sm:$0xf]
      %v1023 = vld [vmem:[%s341 + $0x4] sm:$0xf]
      %v1024 = vld [vmem:[%s341 + $0x8] sm:$0xf]
      %v1025 = vld [vmem:[%s341 + $0xc] sm:$0xf]
      %v1026 = vld [vmem:[%s341 + $0x10] sm:$0xf]
      %v1027 = vld [vmem:[%s341 + $0x14] sm:$0xf]
      %v1028 = vld [vmem:[%s341 + $0x18] sm:$0xf]
      %v1029 = vld [vmem:[%s341 + $0x1c] sm:$0xf]
      %v1038 = vunpack.c.l.b16 %v1022
      %v1039 = vunpack.c.l.b16 %v1023
      %v1040 = vunpack.c.l.b16 %v1024
      %v1041 = vunpack.c.l.b16 %v1025
      %v1042 = vunpack.c.l.b16 %v1026
      %v1043 = vunpack.c.l.b16 %v1027
      %v1044 = vunpack.c.l.b16 %v1028
      %v1045 = vunpack.c.l.b16 %v1029
      %v1046 = vpack.c.b16 %v1039, %v1038
      %v1047 = vpack.c.b16 %v1041, %v1040
      %v1048 = vpack.c.b16 %v1043, %v1042
      %v1049 = vpack.c.b16 %v1045, %v1044
      %v1055 = vsel %vm228, %v1021, 0
      %1057 = vmatprep.subr.bf16.mxu0 0
      %1058 = vmatpush1.bf16.msra.mxu0 0
      %1059 = vmatprep.subr.bf16.mxu0 0
      %1060 = vmatpush1.bf16.msra.mxu0 0
      %1061 = vmatprep.subr.bf16.mxu0 0
      %1062 = vmatpush1.bf16.msra.mxu0 0
      %1063 = vmatprep.subr.bf16.mxu0 0
      %1064 = vmatpush1.bf16.msra.mxu0 0
      %1065 = vmatprep.subr.bf16.mxu0 0
      %1066 = vmatpush1.bf16.msra.mxu0 %v1049
      %1067 = vmatprep.subr.bf16.mxu0 0
      %1068 = vmatpush1.bf16.msra.mxu0 %v1048
      %1069 = vmatprep.subr.bf16.mxu0 0
      %1070 = vmatpush1.bf16.msra.mxu0 %v1047
      %1071 = vmatprep.subr.bf16.mxu0 0
      %1072 = vmatpush1.bf16.msra.mxu0 %v1046
      %1073 = vmatprep.subr.bf16.mxu0 0
      %1074 = vmatpush2.bf16.msra.mxu0 0
      %1075 = vmatprep.subr.bf16.mxu0 0
      %1076 = vmatpush2.bf16.msra.mxu0 0
      %1077 = vmatprep.subr.bf16.mxu0 0
      %1078 = vmatpush2.bf16.msra.mxu0 0
      %1079 = vmatprep.subr.bf16.mxu0 0
      %1080 = vmatpush2.bf16.msra.mxu0 0
      %1081 = vmatprep.subr.bf16.mxu0 0
      %1082 = vmatpush2.bf16.msra.mxu0 0
      %1083 = vmatprep.subr.bf16.mxu0 0
      %1084 = vmatpush2.bf16.msra.mxu0 0
      %1085 = vmatprep.subr.bf16.mxu0 0
      %1086 = vmatpush2.bf16.msra.mxu0 0
      %1087 = vmatprep.subr.bf16.mxu0 0
      %1088 = vmatpush2.bf16.msra.mxu0 0
      %1089 = vmatprep.mubr.bf16.mxu0 0
      %1090 = vmatmul.mubr.bf16.gmra.mxu0 %v1055
      %v1091 = vpop.f32.mrf.mxu0
      %v1092 = vadd.f32 0.0, %v1091
      %v1093 = vpop.f32.mrf.mxu0
      %v1094 = vpop.f32.mrf.mxu0
      %v1095 = vpop.f32.mrf.mxu0
      %1096 = vdwg.mxu0
      %v1097 = vadd.f32 %v1015, %v1092
      %v1098 = vld [vmem:[%s1020] sm:$0xf]
      %v1099 = vld [vmem:[%s1020 + $0x4] sm:$0x1]
      %v1100 = vld [vmem:[%s420] sm:$0xf]
      %v1101 = vld [vmem:[%s420 + $0x4] sm:$0xf]
      %v1102 = vld [vmem:[%s420 + $0x8] sm:$0xf]
      %v1103 = vld [vmem:[%s420 + $0xc] sm:$0xf]
      %v1104 = vld [vmem:[%s420 + $0x10] sm:$0xf]
      %v1105 = vld [vmem:[%s420 + $0x14] sm:$0xf]
      %v1106 = vld [vmem:[%s420 + $0x18] sm:$0xf]
      %v1107 = vld [vmem:[%s420 + $0x1c] sm:$0xf]
      %v1110 = vunpack.c.l.b16 %v1098
      %v1111 = vunpack.c.l.b16 %v1099
      %v1112 = vpack.c.b16 %v1111, %v1110
      %v1114 = vshrl.u32 %v1112, 16
      %v1116 = vshll.u32 %v1112, 16
      %v1118 = vrot.slane %v1116, 1
      %v1119 = vor.u32 %v1114, %v1118
      %v1128 = vunpack.c.l.b16 %v1100
      %v1129 = vunpack.c.l.b16 %v1101
      %v1130 = vunpack.c.l.b16 %v1102
      %v1131 = vunpack.c.l.b16 %v1103
      %v1132 = vunpack.c.l.b16 %v1104
      %v1133 = vunpack.c.l.b16 %v1105
      %v1134 = vunpack.c.l.b16 %v1106
      %v1135 = vunpack.c.l.b16 %v1107
      %v1136 = vpack.c.b16 %v1129, %v1128
      %v1137 = vpack.c.b16 %v1131, %v1130
      %v1138 = vpack.c.b16 %v1133, %v1132
      %v1139 = vpack.c.b16 %v1135, %v1134
      %v1145 = vsel %vm228, %v1119, 0
      %1147 = vmatprep.subr.bf16.mxu0 0
      %1148 = vmatpush1.bf16.msra.mxu0 0
      %1149 = vmatprep.subr.bf16.mxu0 0
      %1150 = vmatpush1.bf16.msra.mxu0 0
      %1151 = vmatprep.subr.bf16.mxu0 0
      %1152 = vmatpush1.bf16.msra.mxu0 0
      %1153 = vmatprep.subr.bf16.mxu0 0
      %1154 = vmatpush1.bf16.msra.mxu0 0
      %1155 = vmatprep.subr.bf16.mxu0 0
      %1156 = vmatpush1.bf16.msra.mxu0 %v1139
      %1157 = vmatprep.subr.bf16.mxu0 0
      %1158 = vmatpush1.bf16.msra.mxu0 %v1138
      %1159 = vmatprep.subr.bf16.mxu0 0
      %1160 = vmatpush1.bf16.msra.mxu0 %v1137
      %1161 = vmatprep.subr.bf16.mxu0 0
      %1162 = vmatpush1.bf16.msra.mxu0 %v1136
      %1163 = vmatprep.subr.bf16.mxu0 0
      %1164 = vmatpush2.bf16.msra.mxu0 0
      %1165 = vmatprep.subr.bf16.mxu0 0
      %1166 = vmatpush2.bf16.msra.mxu0 0
      %1167 = vmatprep.subr.bf16.mxu0 0
      %1168 = vmatpush2.bf16.msra.mxu0 0
      %1169 = vmatprep.subr.bf16.mxu0 0
      %1170 = vmatpush2.bf16.msra.mxu0 0
      %1171 = vmatprep.subr.bf16.mxu0 0
      %1172 = vmatpush2.bf16.msra.mxu0 0
      %1173 = vmatprep.subr.bf16.mxu0 0
      %1174 = vmatpush2.bf16.msra.mxu0 0
      %1175 = vmatprep.subr.bf16.mxu0 0
      %1176 = vmatpush2.bf16.msra.mxu0 0
      %1177 = vmatprep.subr.bf16.mxu0 0
      %1178 = vmatpush2.bf16.msra.mxu0 0
      %1179 = vmatprep.mubr.bf16.mxu0 0
      %1180 = vmatmul.mubr.bf16.gmra.mxu0 %v1145
      %v1181 = vpop.f32.mrf.mxu0
      %v1182 = vadd.f32 0.0, %v1181
      %v1183 = vpop.f32.mrf.mxu0
      %v1184 = vpop.f32.mrf.mxu0
      %v1185 = vpop.f32.mrf.mxu0
      %1186 = vdwg.mxu0
      %v1187 = vadd.f32 %v1097, %v1182
      %v1188 = vadd.f32 %v1187, %v513
      %v1189 = vmax.f32 %v1188, 0.0
      %v1190 = vpack.c.bf16 %v1189, %v1189
      %s1191 = scalar_lea.vmem %s170, 8
      %1192 = vst [vmem:[%s1191] sm:$0xf] %v1190
      %v1193 = vld [vmem:[%s1020] sm:$0xf]
      %v1194 = vld [vmem:[%s1] sm:$0xf]
      %v1195 = vld [vmem:[%s1 + $0x4] sm:$0xf]
      %v1196 = vld [vmem:[%s1 + $0x8] sm:$0xf]
      %v1197 = vld [vmem:[%s1 + $0xc] sm:$0xf]
      %v1198 = vld [vmem:[%s1 + $0x10] sm:$0xf]
      %v1199 = vld [vmem:[%s1 + $0x14] sm:$0xf]
      %v1200 = vld [vmem:[%s1 + $0x18] sm:$0xf]
      %v1201 = vld [vmem:[%s1 + $0x1c] sm:$0xf]
      %v1202 = vld [vmem:[%s1020 + $0x4] sm:$0x1]
      %v1203 = vld [vmem:[%s183] sm:$0xf]
      %v1204 = vld [vmem:[%s183 + $0x4] sm:$0xf]
      %v1205 = vld [vmem:[%s183 + $0x8] sm:$0xf]
      %v1206 = vld [vmem:[%s183 + $0xc] sm:$0xf]
      %v1207 = vld [vmem:[%s183 + $0x10] sm:$0xf]
      %v1208 = vld [vmem:[%s183 + $0x14] sm:$0xf]
      %v1209 = vld [vmem:[%s183 + $0x18] sm:$0xf]
      %v1210 = vld [vmem:[%s183 + $0x1c] sm:$0xf]
      %v1213 = vunpack.c.l.b16 %v1193
      %v1214 = vunpack.c.l.b16 %v1202
      %v1215 = vpack.c.b16 %v1214, %v1213
      %v1217 = vshrl.u32 %v1215, 16
      %v1219 = vshll.u32 %v1215, 16
      %v1221 = vrot.slane %v1219, 1
      %v1222 = vor.u32 %v1217, %v1221
      %v1231 = vunpack.c.l.b16 %v1203
      %v1232 = vunpack.c.l.b16 %v1204
      %v1233 = vunpack.c.l.b16 %v1205
      %v1234 = vunpack.c.l.b16 %v1206
      %v1235 = vunpack.c.l.b16 %v1207
      %v1236 = vunpack.c.l.b16 %v1208
      %v1237 = vunpack.c.l.b16 %v1209
      %v1238 = vunpack.c.l.b16 %v1210
      %v1239 = vpack.c.b16 %v1232, %v1231
      %v1240 = vpack.c.b16 %v1234, %v1233
      %v1241 = vpack.c.b16 %v1236, %v1235
      %v1242 = vpack.c.b16 %v1238, %v1237
      %v1248 = vsel %vm228, %v1222, 0
      %1250 = vmatprep.subr.bf16.mxu0 0
      %1251 = vmatpush1.bf16.msra.mxu0 0
      %1252 = vmatprep.subr.bf16.mxu0 0
      %1253 = vmatpush1.bf16.msra.mxu0 0
      %1254 = vmatprep.subr.bf16.mxu0 0
      %1255 = vmatpush1.bf16.msra.mxu0 0
      %1256 = vmatprep.subr.bf16.mxu0 0
      %1257 = vmatpush1.bf16.msra.mxu0 0
      %1258 = vmatprep.subr.bf16.mxu0 0
      %1259 = vmatpush1.bf16.msra.mxu0 %v1242
      %1260 = vmatprep.subr.bf16.mxu0 0
      %1261 = vmatpush1.bf16.msra.mxu0 %v1241
      %1262 = vmatprep.subr.bf16.mxu0 0
      %1263 = vmatpush1.bf16.msra.mxu0 %v1240
      %1264 = vmatprep.subr.bf16.mxu0 0
      %1265 = vmatpush1.bf16.msra.mxu0 %v1239
      %1266 = vmatprep.subr.bf16.mxu0 0
      %1267 = vmatpush2.bf16.msra.mxu0 0
      %1268 = vmatprep.subr.bf16.mxu0 0
      %1269 = vmatpush2.bf16.msra.mxu0 0
      %1270 = vmatprep.subr.bf16.mxu0 0
      %1271 = vmatpush2.bf16.msra.mxu0 0
      %1272 = vmatprep.subr.bf16.mxu0 0
      %1273 = vmatpush2.bf16.msra.mxu0 0
      %1274 = vmatprep.subr.bf16.mxu0 0
      %1275 = vmatpush2.bf16.msra.mxu0 0
      %1276 = vmatprep.subr.bf16.mxu0 0
      %1277 = vmatpush2.bf16.msra.mxu0 0
      %1278 = vmatprep.subr.bf16.mxu0 0
      %1279 = vmatpush2.bf16.msra.mxu0 0
      %1280 = vmatprep.subr.bf16.mxu0 0
      %1281 = vmatpush2.bf16.msra.mxu0 0
      %1282 = vmatprep.mubr.bf16.mxu0 0
      %1283 = vmatmul.mubr.bf16.gmra.mxu0 %v1248
      %v1284 = vpop.f32.mrf.mxu0
      %v1285 = vadd.f32 0.0, %v1284
      %v1286 = vpop.f32.mrf.mxu0
      %v1287 = vpop.f32.mrf.mxu0
      %v1288 = vpop.f32.mrf.mxu0
      %1289 = vdwg.mxu0
      %v1298 = vunpack.c.l.b16 %v1194
      %v1299 = vunpack.c.l.b16 %v1195
      %v1300 = vunpack.c.l.b16 %v1196
      %v1301 = vunpack.c.l.b16 %v1197
      %v1302 = vunpack.c.l.b16 %v1198
      %v1303 = vunpack.c.l.b16 %v1199
      %v1304 = vunpack.c.l.b16 %v1200
      %v1305 = vunpack.c.l.b16 %v1201
      %v1306 = vpack.c.b16 %v1299, %v1298
      %v1307 = vpack.c.b16 %v1301, %v1300
      %v1308 = vpack.c.b16 %v1303, %v1302
      %v1309 = vpack.c.b16 %v1305, %v1304
      %v1315 = vsel %vm228, %v1193, 0
      %1317 = vmatprep.subr.bf16.mxu0 0
      %1318 = vmatpush1.bf16.msra.mxu0 0
      %1319 = vmatprep.subr.bf16.mxu0 0
      %1320 = vmatpush1.bf16.msra.mxu0 0
      %1321 = vmatprep.subr.bf16.mxu0 0
      %1322 = vmatpush1.bf16.msra.mxu0 0
      %1323 = vmatprep.subr.bf16.mxu0 0
      %1324 = vmatpush1.bf16.msra.mxu0 0
      %1325 = vmatprep.subr.bf16.mxu0 0
      %1326 = vmatpush1.bf16.msra.mxu0 %v1309
      %1327 = vmatprep.subr.bf16.mxu0 0
      %1328 = vmatpush1.bf16.msra.mxu0 %v1308
      %1329 = vmatprep.subr.bf16.mxu0 0
      %1330 = vmatpush1.bf16.msra.mxu0 %v1307
      %1331 = vmatprep.subr.bf16.mxu0 0
      %1332 = vmatpush1.bf16.msra.mxu0 %v1306
      %1333 = vmatprep.subr.bf16.mxu0 0
      %1334 = vmatpush2.bf16.msra.mxu0 0
      %1335 = vmatprep.subr.bf16.mxu0 0
      %1336 = vmatpush2.bf16.msra.mxu0 0
      %1337 = vmatprep.subr.bf16.mxu0 0
      %1338 = vmatpush2.bf16.msra.mxu0 0
      %1339 = vmatprep.subr.bf16.mxu0 0
      %1340 = vmatpush2.bf16.msra.mxu0 0
      %1341 = vmatprep.subr.bf16.mxu0 0
      %1342 = vmatpush2.bf16.msra.mxu0 0
      %1343 = vmatprep.subr.bf16.mxu0 0
      %1344 = vmatpush2.bf16.msra.mxu0 0
      %1345 = vmatprep.subr.bf16.mxu0 0
      %1346 = vmatpush2.bf16.msra.mxu0 0
      %1347 = vmatprep.subr.bf16.mxu0 0
      %1348 = vmatpush2.bf16.msra.mxu0 0
      %1349 = vmatprep.mubr.bf16.mxu0 0
      %1350 = vmatmul.mubr.bf16.gmra.mxu0 %v1315
      %v1351 = vpop.f32.mrf.mxu0
      %v1352 = vadd.f32 %v1285, %v1351
      %v1353 = vpop.f32.mrf.mxu0
      %v1354 = vpop.f32.mrf.mxu0
      %v1355 = vpop.f32.mrf.mxu0
      %1356 = vdwg.mxu0
      %s1357 = scalar_lea.vmem %s165, 32
      %v1358 = vld [vmem:[%s1357] sm:$0xf]
      %v1359 = vld [vmem:[%s341] sm:$0xf]
      %v1360 = vld [vmem:[%s341 + $0x4] sm:$0xf]
      %v1361 = vld [vmem:[%s341 + $0x8] sm:$0xf]
      %v1362 = vld [vmem:[%s341 + $0xc] sm:$0xf]
      %v1363 = vld [vmem:[%s341 + $0x10] sm:$0xf]
      %v1364 = vld [vmem:[%s341 + $0x14] sm:$0xf]
      %v1365 = vld [vmem:[%s341 + $0x18] sm:$0xf]
      %v1366 = vld [vmem:[%s341 + $0x1c] sm:$0xf]
      %v1375 = vunpack.c.l.b16 %v1359
      %v1376 = vunpack.c.l.b16 %v1360
      %v1377 = vunpack.c.l.b16 %v1361
      %v1378 = vunpack.c.l.b16 %v1362
      %v1379 = vunpack.c.l.b16 %v1363
      %v1380 = vunpack.c.l.b16 %v1364
      %v1381 = vunpack.c.l.b16 %v1365
      %v1382 = vunpack.c.l.b16 %v1366
      %v1383 = vpack.c.b16 %v1376, %v1375
      %v1384 = vpack.c.b16 %v1378, %v1377
      %v1385 = vpack.c.b16 %v1380, %v1379
      %v1386 = vpack.c.b16 %v1382, %v1381
      %v1392 = vsel %vm228, %v1358, 0
      %1394 = vmatprep.subr.bf16.mxu0 0
      %1395 = vmatpush1.bf16.msra.mxu0 0
      %1396 = vmatprep.subr.bf16.mxu0 0
      %1397 = vmatpush1.bf16.msra.mxu0 0
      %1398 = vmatprep.subr.bf16.mxu0 0
      %1399 = vmatpush1.bf16.msra.mxu0 0
      %1400 = vmatprep.subr.bf16.mxu0 0
      %1401 = vmatpush1.bf16.msra.mxu0 0
      %1402 = vmatprep.subr.bf16.mxu0 0
      %1403 = vmatpush1.bf16.msra.mxu0 %v1386
      %1404 = vmatprep.subr.bf16.mxu0 0
      %1405 = vmatpush1.bf16.msra.mxu0 %v1385
      %1406 = vmatprep.subr.bf16.mxu0 0
      %1407 = vmatpush1.bf16.msra.mxu0 %v1384
      %1408 = vmatprep.subr.bf16.mxu0 0
      %1409 = vmatpush1.bf16.msra.mxu0 %v1383
      %1410 = vmatprep.subr.bf16.mxu0 0
      %1411 = vmatpush2.bf16.msra.mxu0 0
      %1412 = vmatprep.subr.bf16.mxu0 0
      %1413 = vmatpush2.bf16.msra.mxu0 0
      %1414 = vmatprep.subr.bf16.mxu0 0
      %1415 = vmatpush2.bf16.msra.mxu0 0
      %1416 = vmatprep.subr.bf16.mxu0 0
      %1417 = vmatpush2.bf16.msra.mxu0 0
      %1418 = vmatprep.subr.bf16.mxu0 0
      %1419 = vmatpush2.bf16.msra.mxu0 0
      %1420 = vmatprep.subr.bf16.mxu0 0
      %1421 = vmatpush2.bf16.msra.mxu0 0
      %1422 = vmatprep.subr.bf16.mxu0 0
      %1423 = vmatpush2.bf16.msra.mxu0 0
      %1424 = vmatprep.subr.bf16.mxu0 0
      %1425 = vmatpush2.bf16.msra.mxu0 0
      %1426 = vmatprep.mubr.bf16.mxu0 0
      %1427 = vmatmul.mubr.bf16.gmra.mxu0 %v1392
      %v1428 = vpop.f32.mrf.mxu0
      %v1429 = vadd.f32 0.0, %v1428
      %v1430 = vpop.f32.mrf.mxu0
      %v1431 = vpop.f32.mrf.mxu0
      %v1432 = vpop.f32.mrf.mxu0
      %1433 = vdwg.mxu0
      %v1434 = vadd.f32 %v1352, %v1429
      %v1435 = vld [vmem:[%s1357] sm:$0xf]
      %v1436 = vld [vmem:[%s1357 + $0x4] sm:$0x1]
      %v1437 = vld [vmem:[%s420] sm:$0xf]
      %v1438 = vld [vmem:[%s420 + $0x4] sm:$0xf]
      %v1439 = vld [vmem:[%s420 + $0x8] sm:$0xf]
      %v1440 = vld [vmem:[%s420 + $0xc] sm:$0xf]
      %v1441 = vld [vmem:[%s420 + $0x10] sm:$0xf]
      %v1442 = vld [vmem:[%s420 + $0x14] sm:$0xf]
      %v1443 = vld [vmem:[%s420 + $0x18] sm:$0xf]
      %v1444 = vld [vmem:[%s420 + $0x1c] sm:$0xf]
      %v1447 = vunpack.c.l.b16 %v1435
      %v1448 = vunpack.c.l.b16 %v1436
      %v1449 = vpack.c.b16 %v1448, %v1447
      %v1451 = vshrl.u32 %v1449, 16
      %v1453 = vshll.u32 %v1449, 16
      %v1455 = vrot.slane %v1453, 1
      %v1456 = vor.u32 %v1451, %v1455
      %v1465 = vunpack.c.l.b16 %v1437
      %v1466 = vunpack.c.l.b16 %v1438
      %v1467 = vunpack.c.l.b16 %v1439
      %v1468 = vunpack.c.l.b16 %v1440
      %v1469 = vunpack.c.l.b16 %v1441
      %v1470 = vunpack.c.l.b16 %v1442
      %v1471 = vunpack.c.l.b16 %v1443
      %v1472 = vunpack.c.l.b16 %v1444
      %v1473 = vpack.c.b16 %v1466, %v1465
      %v1474 = vpack.c.b16 %v1468, %v1467
      %v1475 = vpack.c.b16 %v1470, %v1469
      %v1476 = vpack.c.b16 %v1472, %v1471
      %v1482 = vsel %vm228, %v1456, 0
      %1484 = vmatprep.subr.bf16.mxu0 0
      %1485 = vmatpush1.bf16.msra.mxu0 0
      %1486 = vmatprep.subr.bf16.mxu0 0
      %1487 = vmatpush1.bf16.msra.mxu0 0
      %1488 = vmatprep.subr.bf16.mxu0 0
      %1489 = vmatpush1.bf16.msra.mxu0 0
      %1490 = vmatprep.subr.bf16.mxu0 0
      %1491 = vmatpush1.bf16.msra.mxu0 0
      %1492 = vmatprep.subr.bf16.mxu0 0
      %1493 = vmatpush1.bf16.msra.mxu0 %v1476
      %1494 = vmatprep.subr.bf16.mxu0 0
      %1495 = vmatpush1.bf16.msra.mxu0 %v1475
      %1496 = vmatprep.subr.bf16.mxu0 0
      %1497 = vmatpush1.bf16.msra.mxu0 %v1474
      %1498 = vmatprep.subr.bf16.mxu0 0
      %1499 = vmatpush1.bf16.msra.mxu0 %v1473
      %1500 = vmatprep.subr.bf16.mxu0 0
      %1501 = vmatpush2.bf16.msra.mxu0 0
      %1502 = vmatprep.subr.bf16.mxu0 0
      %1503 = vmatpush2.bf16.msra.mxu0 0
      %1504 = vmatprep.subr.bf16.mxu0 0
      %1505 = vmatpush2.bf16.msra.mxu0 0
      %1506 = vmatprep.subr.bf16.mxu0 0
      %1507 = vmatpush2.bf16.msra.mxu0 0
      %1508 = vmatprep.subr.bf16.mxu0 0
      %1509 = vmatpush2.bf16.msra.mxu0 0
      %1510 = vmatprep.subr.bf16.mxu0 0
      %1511 = vmatpush2.bf16.msra.mxu0 0
      %1512 = vmatprep.subr.bf16.mxu0 0
      %1513 = vmatpush2.bf16.msra.mxu0 0
      %1514 = vmatprep.subr.bf16.mxu0 0
      %1515 = vmatpush2.bf16.msra.mxu0 0
      %1516 = vmatprep.mubr.bf16.mxu0 0
      %1517 = vmatmul.mubr.bf16.gmra.mxu0 %v1482
      %v1518 = vpop.f32.mrf.mxu0
      %v1519 = vadd.f32 0.0, %v1518
      %v1520 = vpop.f32.mrf.mxu0
      %v1521 = vpop.f32.mrf.mxu0
      %v1522 = vpop.f32.mrf.mxu0
      %1523 = vdwg.mxu0
      %v1524 = vadd.f32 %v1434, %v1519
      %v1525 = vadd.f32 %v1524, %v513
      %v1526 = vmax.f32 %v1525, 0.0
      %v1527 = vpack.c.bf16 %v1526, %v1526
      %s1528 = scalar_lea.vmem %s170, 12
      %1529 = vst [vmem:[%s1528] sm:$0xf] %v1527
      %v1530 = vld [vmem:[%s1357] sm:$0xf]
      %v1531 = vld [vmem:[%s1] sm:$0xf]
      %v1532 = vld [vmem:[%s1 + $0x4] sm:$0xf]
      %v1533 = vld [vmem:[%s1 + $0x8] sm:$0xf]
      %v1534 = vld [vmem:[%s1 + $0xc] sm:$0xf]
      %v1535 = vld [vmem:[%s1 + $0x10] sm:$0xf]
      %v1536 = vld [vmem:[%s1 + $0x14] sm:$0xf]
      %v1537 = vld [vmem:[%s1 + $0x18] sm:$0xf]
      %v1538 = vld [vmem:[%s1 + $0x1c] sm:$0xf]
      %v1539 = vld [vmem:[%s1357 + $0x4] sm:$0x1]
      %v1540 = vld [vmem:[%s183] sm:$0xf]
      %v1541 = vld [vmem:[%s183 + $0x4] sm:$0xf]
      %v1542 = vld [vmem:[%s183 + $0x8] sm:$0xf]
      %v1543 = vld [vmem:[%s183 + $0xc] sm:$0xf]
      %v1544 = vld [vmem:[%s183 + $0x10] sm:$0xf]
      %v1545 = vld [vmem:[%s183 + $0x14] sm:$0xf]
      %v1546 = vld [vmem:[%s183 + $0x18] sm:$0xf]
      %v1547 = vld [vmem:[%s183 + $0x1c] sm:$0xf]
      %v1550 = vunpack.c.l.b16 %v1530
      %v1551 = vunpack.c.l.b16 %v1539
      %v1552 = vpack.c.b16 %v1551, %v1550
      %v1554 = vshrl.u32 %v1552, 16
      %v1556 = vshll.u32 %v1552, 16
      %v1558 = vrot.slane %v1556, 1
      %v1559 = vor.u32 %v1554, %v1558
      %v1568 = vunpack.c.l.b16 %v1540
      %v1569 = vunpack.c.l.b16 %v1541
      %v1570 = vunpack.c.l.b16 %v1542
      %v1571 = vunpack.c.l.b16 %v1543
      %v1572 = vunpack.c.l.b16 %v1544
      %v1573 = vunpack.c.l.b16 %v1545
      %v1574 = vunpack.c.l.b16 %v1546
      %v1575 = vunpack.c.l.b16 %v1547
      %v1576 = vpack.c.b16 %v1569, %v1568
      %v1577 = vpack.c.b16 %v1571, %v1570
      %v1578 = vpack.c.b16 %v1573, %v1572
      %v1579 = vpack.c.b16 %v1575, %v1574
      %v1585 = vsel %vm228, %v1559, 0
      %1587 = vmatprep.subr.bf16.mxu0 0
      %1588 = vmatpush1.bf16.msra.mxu0 0
      %1589 = vmatprep.subr.bf16.mxu0 0
      %1590 = vmatpush1.bf16.msra.mxu0 0
      %1591 = vmatprep.subr.bf16.mxu0 0
      %1592 = vmatpush1.bf16.msra.mxu0 0
      %1593 = vmatprep.subr.bf16.mxu0 0
      %1594 = vmatpush1.bf16.msra.mxu0 0
      %1595 = vmatprep.subr.bf16.mxu0 0
      %1596 = vmatpush1.bf16.msra.mxu0 %v1579
      %1597 = vmatprep.subr.bf16.mxu0 0
      %1598 = vmatpush1.bf16.msra.mxu0 %v1578
      %1599 = vmatprep.subr.bf16.mxu0 0
      %1600 = vmatpush1.bf16.msra.mxu0 %v1577
      %1601 = vmatprep.subr.bf16.mxu0 0
      %1602 = vmatpush1.bf16.msra.mxu0 %v1576
      %1603 = vmatprep.subr.bf16.mxu0 0
      %1604 = vmatpush2.bf16.msra.mxu0 0
      %1605 = vmatprep.subr.bf16.mxu0 0
      %1606 = vmatpush2.bf16.msra.mxu0 0
      %1607 = vmatprep.subr.bf16.mxu0 0
      %1608 = vmatpush2.bf16.msra.mxu0 0
      %1609 = vmatprep.subr.bf16.mxu0 0
      %1610 = vmatpush2.bf16.msra.mxu0 0
      %1611 = vmatprep.subr.bf16.mxu0 0
      %1612 = vmatpush2.bf16.msra.mxu0 0
      %1613 = vmatprep.subr.bf16.mxu0 0
      %1614 = vmatpush2.bf16.msra.mxu0 0
      %1615 = vmatprep.subr.bf16.mxu0 0
      %1616 = vmatpush2.bf16.msra.mxu0 0
      %1617 = vmatprep.subr.bf16.mxu0 0
      %1618 = vmatpush2.bf16.msra.mxu0 0
      %1619 = vmatprep.mubr.bf16.mxu0 0
      %1620 = vmatmul.mubr.bf16.gmra.mxu0 %v1585
      %v1621 = vpop.f32.mrf.mxu0
      %v1622 = vadd.f32 0.0, %v1621
      %v1623 = vpop.f32.mrf.mxu0
      %v1624 = vpop.f32.mrf.mxu0
      %v1625 = vpop.f32.mrf.mxu0
      %1626 = vdwg.mxu0
      %v1635 = vunpack.c.l.b16 %v1531
      %v1636 = vunpack.c.l.b16 %v1532
      %v1637 = vunpack.c.l.b16 %v1533
      %v1638 = vunpack.c.l.b16 %v1534
      %v1639 = vunpack.c.l.b16 %v1535
      %v1640 = vunpack.c.l.b16 %v1536
      %v1641 = vunpack.c.l.b16 %v1537
      %v1642 = vunpack.c.l.b16 %v1538
      %v1643 = vpack.c.b16 %v1636, %v1635
      %v1644 = vpack.c.b16 %v1638, %v1637
      %v1645 = vpack.c.b16 %v1640, %v1639
      %v1646 = vpack.c.b16 %v1642, %v1641
      %v1652 = vsel %vm228, %v1530, 0
      %1654 = vmatprep.subr.bf16.mxu0 0
      %1655 = vmatpush1.bf16.msra.mxu0 0
      %1656 = vmatprep.subr.bf16.mxu0 0
      %1657 = vmatpush1.bf16.msra.mxu0 0
      %1658 = vmatprep.subr.bf16.mxu0 0
      %1659 = vmatpush1.bf16.msra.mxu0 0
      %1660 = vmatprep.subr.bf16.mxu0 0
      %1661 = vmatpush1.bf16.msra.mxu0 0
      %1662 = vmatprep.subr.bf16.mxu0 0
      %1663 = vmatpush1.bf16.msra.mxu0 %v1646
      %1664 = vmatprep.subr.bf16.mxu0 0
      %1665 = vmatpush1.bf16.msra.mxu0 %v1645
      %1666 = vmatprep.subr.bf16.mxu0 0
      %1667 = vmatpush1.bf16.msra.mxu0 %v1644
      %1668 = vmatprep.subr.bf16.mxu0 0
      %1669 = vmatpush1.bf16.msra.mxu0 %v1643
      %1670 = vmatprep.subr.bf16.mxu0 0
      %1671 = vmatpush2.bf16.msra.mxu0 0
      %1672 = vmatprep.subr.bf16.mxu0 0
      %1673 = vmatpush2.bf16.msra.mxu0 0
      %1674 = vmatprep.subr.bf16.mxu0 0
      %1675 = vmatpush2.bf16.msra.mxu0 0
      %1676 = vmatprep.subr.bf16.mxu0 0
      %1677 = vmatpush2.bf16.msra.mxu0 0
      %1678 = vmatprep.subr.bf16.mxu0 0
      %1679 = vmatpush2.bf16.msra.mxu0 0
      %1680 = vmatprep.subr.bf16.mxu0 0
      %1681 = vmatpush2.bf16.msra.mxu0 0
      %1682 = vmatprep.subr.bf16.mxu0 0
      %1683 = vmatpush2.bf16.msra.mxu0 0
      %1684 = vmatprep.subr.bf16.mxu0 0
      %1685 = vmatpush2.bf16.msra.mxu0 0
      %1686 = vmatprep.mubr.bf16.mxu0 0
      %1687 = vmatmul.mubr.bf16.gmra.mxu0 %v1652
      %v1688 = vpop.f32.mrf.mxu0
      %v1689 = vadd.f32 %v1622, %v1688
      %v1690 = vpop.f32.mrf.mxu0
      %v1691 = vpop.f32.mrf.mxu0
      %v1692 = vpop.f32.mrf.mxu0
      %1693 = vdwg.mxu0
      %s1694 = scalar_lea.vmem %s165, 40
      %v1695 = vld [vmem:[%s1694] sm:$0xf]
      %v1696 = vld [vmem:[%s341] sm:$0xf]
      %v1697 = vld [vmem:[%s341 + $0x4] sm:$0xf]
      %v1698 = vld [vmem:[%s341 + $0x8] sm:$0xf]
      %v1699 = vld [vmem:[%s341 + $0xc] sm:$0xf]
      %v1700 = vld [vmem:[%s341 + $0x10] sm:$0xf]
      %v1701 = vld [vmem:[%s341 + $0x14] sm:$0xf]
      %v1702 = vld [vmem:[%s341 + $0x18] sm:$0xf]
      %v1703 = vld [vmem:[%s341 + $0x1c] sm:$0xf]
      %v1712 = vunpack.c.l.b16 %v1696
      %v1713 = vunpack.c.l.b16 %v1697
      %v1714 = vunpack.c.l.b16 %v1698
      %v1715 = vunpack.c.l.b16 %v1699
      %v1716 = vunpack.c.l.b16 %v1700
      %v1717 = vunpack.c.l.b16 %v1701
      %v1718 = vunpack.c.l.b16 %v1702
      %v1719 = vunpack.c.l.b16 %v1703
      %v1720 = vpack.c.b16 %v1713, %v1712
      %v1721 = vpack.c.b16 %v1715, %v1714
      %v1722 = vpack.c.b16 %v1717, %v1716
      %v1723 = vpack.c.b16 %v1719, %v1718
      %v1729 = vsel %vm228, %v1695, 0
      %1731 = vmatprep.subr.bf16.mxu0 0
      %1732 = vmatpush1.bf16.msra.mxu0 0
      %1733 = vmatprep.subr.bf16.mxu0 0
      %1734 = vmatpush1.bf16.msra.mxu0 0
      %1735 = vmatprep.subr.bf16.mxu0 0
      %1736 = vmatpush1.bf16.msra.mxu0 0
      %1737 = vmatprep.subr.bf16.mxu0 0
      %1738 = vmatpush1.bf16.msra.mxu0 0
      %1739 = vmatprep.subr.bf16.mxu0 0
      %1740 = vmatpush1.bf16.msra.mxu0 %v1723
      %1741 = vmatprep.subr.bf16.mxu0 0
      %1742 = vmatpush1.bf16.msra.mxu0 %v1722
      %1743 = vmatprep.subr.bf16.mxu0 0
      %1744 = vmatpush1.bf16.msra.mxu0 %v1721
      %1745 = vmatprep.subr.bf16.mxu0 0
      %1746 = vmatpush1.bf16.msra.mxu0 %v1720
      %1747 = vmatprep.subr.bf16.mxu0 0
      %1748 = vmatpush2.bf16.msra.mxu0 0
      %1749 = vmatprep.subr.bf16.mxu0 0
      %1750 = vmatpush2.bf16.msra.mxu0 0
      %1751 = vmatprep.subr.bf16.mxu0 0
      %1752 = vmatpush2.bf16.msra.mxu0 0
      %1753 = vmatprep.subr.bf16.mxu0 0
      %1754 = vmatpush2.bf16.msra.mxu0 0
      %1755 = vmatprep.subr.bf16.mxu0 0
      %1756 = vmatpush2.bf16.msra.mxu0 0
      %1757 = vmatprep.subr.bf16.mxu0 0
      %1758 = vmatpush2.bf16.msra.mxu0 0
      %1759 = vmatprep.subr.bf16.mxu0 0
      %1760 = vmatpush2.bf16.msra.mxu0 0
      %1761 = vmatprep.subr.bf16.mxu0 0
      %1762 = vmatpush2.bf16.msra.mxu0 0
      %1763 = vmatprep.mubr.bf16.mxu0 0
      %1764 = vmatmul.mubr.bf16.gmra.mxu0 %v1729
      %v1765 = vpop.f32.mrf.mxu0
      %v1766 = vadd.f32 0.0, %v1765
      %v1767 = vpop.f32.mrf.mxu0
      %v1768 = vpop.f32.mrf.mxu0
      %v1769 = vpop.f32.mrf.mxu0
      %1770 = vdwg.mxu0
      %v1771 = vadd.f32 %v1689, %v1766
      %v1772 = vld [vmem:[%s1694] sm:$0xf]
      %v1773 = vld [vmem:[%s1694 + $0x4] sm:$0x1]
      %v1774 = vld [vmem:[%s420] sm:$0xf]
      %v1775 = vld [vmem:[%s420 + $0x4] sm:$0xf]
      %v1776 = vld [vmem:[%s420 + $0x8] sm:$0xf]
      %v1777 = vld [vmem:[%s420 + $0xc] sm:$0xf]
      %v1778 = vld [vmem:[%s420 + $0x10] sm:$0xf]
      %v1779 = vld [vmem:[%s420 + $0x14] sm:$0xf]
      %v1780 = vld [vmem:[%s420 + $0x18] sm:$0xf]
      %v1781 = vld [vmem:[%s420 + $0x1c] sm:$0xf]
      %v1784 = vunpack.c.l.b16 %v1772
      %v1785 = vunpack.c.l.b16 %v1773
      %v1786 = vpack.c.b16 %v1785, %v1784
      %v1788 = vshrl.u32 %v1786, 16
      %v1790 = vshll.u32 %v1786, 16
      %v1792 = vrot.slane %v1790, 1
      %v1793 = vor.u32 %v1788, %v1792
      %v1802 = vunpack.c.l.b16 %v1774
      %v1803 = vunpack.c.l.b16 %v1775
      %v1804 = vunpack.c.l.b16 %v1776
      %v1805 = vunpack.c.l.b16 %v1777
      %v1806 = vunpack.c.l.b16 %v1778
      %v1807 = vunpack.c.l.b16 %v1779
      %v1808 = vunpack.c.l.b16 %v1780
      %v1809 = vunpack.c.l.b16 %v1781
      %v1810 = vpack.c.b16 %v1803, %v1802
      %v1811 = vpack.c.b16 %v1805, %v1804
      %v1812 = vpack.c.b16 %v1807, %v1806
      %v1813 = vpack.c.b16 %v1809, %v1808
      %v1819 = vsel %vm228, %v1793, 0
      %1821 = vmatprep.subr.bf16.mxu0 0
      %1822 = vmatpush1.bf16.msra.mxu0 0
      %1823 = vmatprep.subr.bf16.mxu0 0
      %1824 = vmatpush1.bf16.msra.mxu0 0
      %1825 = vmatprep.subr.bf16.mxu0 0
      %1826 = vmatpush1.bf16.msra.mxu0 0
      %1827 = vmatprep.subr.bf16.mxu0 0
      %1828 = vmatpush1.bf16.msra.mxu0 0
      %1829 = vmatprep.subr.bf16.mxu0 0
      %1830 = vmatpush1.bf16.msra.mxu0 %v1813
      %1831 = vmatprep.subr.bf16.mxu0 0
      %1832 = vmatpush1.bf16.msra.mxu0 %v1812
      %1833 = vmatprep.subr.bf16.mxu0 0
      %1834 = vmatpush1.bf16.msra.mxu0 %v1811
      %1835 = vmatprep.subr.bf16.mxu0 0
      %1836 = vmatpush1.bf16.msra.mxu0 %v1810
      %1837 = vmatprep.subr.bf16.mxu0 0
      %1838 = vmatpush2.bf16.msra.mxu0 0
      %1839 = vmatprep.subr.bf16.mxu0 0
      %1840 = vmatpush2.bf16.msra.mxu0 0
      %1841 = vmatprep.subr.bf16.mxu0 0
      %1842 = vmatpush2.bf16.msra.mxu0 0
      %1843 = vmatprep.subr.bf16.mxu0 0
      %1844 = vmatpush2.bf16.msra.mxu0 0
      %1845 = vmatprep.subr.bf16.mxu0 0
      %1846 = vmatpush2.bf16.msra.mxu0 0
      %1847 = vmatprep.subr.bf16.mxu0 0
      %1848 = vmatpush2.bf16.msra.mxu0 0
      %1849 = vmatprep.subr.bf16.mxu0 0
      %1850 = vmatpush2.bf16.msra.mxu0 0
      %1851 = vmatprep.subr.bf16.mxu0 0
      %1852 = vmatpush2.bf16.msra.mxu0 0
      %1853 = vmatprep.mubr.bf16.mxu0 0
      %1854 = vmatmul.mubr.bf16.gmra.mxu0 %v1819
      %v1855 = vpop.f32.mrf.mxu0
      %v1856 = vadd.f32 0.0, %v1855
      %v1857 = vpop.f32.mrf.mxu0
      %v1858 = vpop.f32.mrf.mxu0
      %v1859 = vpop.f32.mrf.mxu0
      %1860 = vdwg.mxu0
      %v1861 = vadd.f32 %v1771, %v1856
      %v1862 = vadd.f32 %v1861, %v513
      %v1863 = vmax.f32 %v1862, 0.0
      %v1864 = vpack.c.bf16 %v1863, %v1863
      %s1865 = scalar_lea.vmem %s170, 16
      %1866 = vst [vmem:[%s1865] sm:$0xf] %v1864
      %v1867 = vld [vmem:[%s1694] sm:$0xf]
      %v1868 = vld [vmem:[%s1] sm:$0xf]
      %v1869 = vld [vmem:[%s1 + $0x4] sm:$0xf]
      %v1870 = vld [vmem:[%s1 + $0x8] sm:$0xf]
      %v1871 = vld [vmem:[%s1 + $0xc] sm:$0xf]
      %v1872 = vld [vmem:[%s1 + $0x10] sm:$0xf]
      %v1873 = vld [vmem:[%s1 + $0x14] sm:$0xf]
      %v1874 = vld [vmem:[%s1 + $0x18] sm:$0xf]
      %v1875 = vld [vmem:[%s1 + $0x1c] sm:$0xf]
      %v1876 = vld [vmem:[%s1694 + $0x4] sm:$0x1]
      %v1877 = vld [vmem:[%s183] sm:$0xf]
      %v1878 = vld [vmem:[%s183 + $0x4] sm:$0xf]
      %v1879 = vld [vmem:[%s183 + $0x8] sm:$0xf]
      %v1880 = vld [vmem:[%s183 + $0xc] sm:$0xf]
      %v1881 = vld [vmem:[%s183 + $0x10] sm:$0xf]
      %v1882 = vld [vmem:[%s183 + $0x14] sm:$0xf]
      %v1883 = vld [vmem:[%s183 + $0x18] sm:$0xf]
      %v1884 = vld [vmem:[%s183 + $0x1c] sm:$0xf]
      %v1887 = vunpack.c.l.b16 %v1867
      %v1888 = vunpack.c.l.b16 %v1876
      %v1889 = vpack.c.b16 %v1888, %v1887
      %v1891 = vshrl.u32 %v1889, 16
      %v1893 = vshll.u32 %v1889, 16
      %v1895 = vrot.slane %v1893, 1
      %v1896 = vor.u32 %v1891, %v1895
      %v1905 = vunpack.c.l.b16 %v1877
      %v1906 = vunpack.c.l.b16 %v1878
      %v1907 = vunpack.c.l.b16 %v1879
      %v1908 = vunpack.c.l.b16 %v1880
      %v1909 = vunpack.c.l.b16 %v1881
      %v1910 = vunpack.c.l.b16 %v1882
      %v1911 = vunpack.c.l.b16 %v1883
      %v1912 = vunpack.c.l.b16 %v1884
      %v1913 = vpack.c.b16 %v1906, %v1905
      %v1914 = vpack.c.b16 %v1908, %v1907
      %v1915 = vpack.c.b16 %v1910, %v1909
      %v1916 = vpack.c.b16 %v1912, %v1911
      %v1922 = vsel %vm228, %v1896, 0
      %1924 = vmatprep.subr.bf16.mxu0 0
      %1925 = vmatpush1.bf16.msra.mxu0 0
      %1926 = vmatprep.subr.bf16.mxu0 0
      %1927 = vmatpush1.bf16.msra.mxu0 0
      %1928 = vmatprep.subr.bf16.mxu0 0
      %1929 = vmatpush1.bf16.msra.mxu0 0
      %1930 = vmatprep.subr.bf16.mxu0 0
      %1931 = vmatpush1.bf16.msra.mxu0 0
      %1932 = vmatprep.subr.bf16.mxu0 0
      %1933 = vmatpush1.bf16.msra.mxu0 %v1916
      %1934 = vmatprep.subr.bf16.mxu0 0
      %1935 = vmatpush1.bf16.msra.mxu0 %v1915
      %1936 = vmatprep.subr.bf16.mxu0 0
      %1937 = vmatpush1.bf16.msra.mxu0 %v1914
      %1938 = vmatprep.subr.bf16.mxu0 0
      %1939 = vmatpush1.bf16.msra.mxu0 %v1913
      %1940 = vmatprep.subr.bf16.mxu0 0
      %1941 = vmatpush2.bf16.msra.mxu0 0
      %1942 = vmatprep.subr.bf16.mxu0 0
      %1943 = vmatpush2.bf16.msra.mxu0 0
      %1944 = vmatprep.subr.bf16.mxu0 0
      %1945 = vmatpush2.bf16.msra.mxu0 0
      %1946 = vmatprep.subr.bf16.mxu0 0
      %1947 = vmatpush2.bf16.msra.mxu0 0
      %1948 = vmatprep.subr.bf16.mxu0 0
      %1949 = vmatpush2.bf16.msra.mxu0 0
      %1950 = vmatprep.subr.bf16.mxu0 0
      %1951 = vmatpush2.bf16.msra.mxu0 0
      %1952 = vmatprep.subr.bf16.mxu0 0
      %1953 = vmatpush2.bf16.msra.mxu0 0
      %1954 = vmatprep.subr.bf16.mxu0 0
      %1955 = vmatpush2.bf16.msra.mxu0 0
      %1956 = vmatprep.mubr.bf16.mxu0 0
      %1957 = vmatmul.mubr.bf16.gmra.mxu0 %v1922
      %v1958 = vpop.f32.mrf.mxu0
      %v1959 = vadd.f32 0.0, %v1958
      %v1960 = vpop.f32.mrf.mxu0
      %v1961 = vpop.f32.mrf.mxu0
      %v1962 = vpop.f32.mrf.mxu0
      %1963 = vdwg.mxu0
      %v1972 = vunpack.c.l.b16 %v1868
      %v1973 = vunpack.c.l.b16 %v1869
      %v1974 = vunpack.c.l.b16 %v1870
      %v1975 = vunpack.c.l.b16 %v1871
      %v1976 = vunpack.c.l.b16 %v1872
      %v1977 = vunpack.c.l.b16 %v1873
      %v1978 = vunpack.c.l.b16 %v1874
      %v1979 = vunpack.c.l.b16 %v1875
      %v1980 = vpack.c.b16 %v1973, %v1972
      %v1981 = vpack.c.b16 %v1975, %v1974
      %v1982 = vpack.c.b16 %v1977, %v1976
      %v1983 = vpack.c.b16 %v1979, %v1978
      %v1989 = vsel %vm228, %v1867, 0
      %1991 = vmatprep.subr.bf16.mxu0 0
      %1992 = vmatpush1.bf16.msra.mxu0 0
      %1993 = vmatprep.subr.bf16.mxu0 0
      %1994 = vmatpush1.bf16.msra.mxu0 0
      %1995 = vmatprep.subr.bf16.mxu0 0
      %1996 = vmatpush1.bf16.msra.mxu0 0
      %1997 = vmatprep.subr.bf16.mxu0 0
      %1998 = vmatpush1.bf16.msra.mxu0 0
      %1999 = vmatprep.subr.bf16.mxu0 0
      %2000 = vmatpush1.bf16.msra.mxu0 %v1983
      %2001 = vmatprep.subr.bf16.mxu0 0
      %2002 = vmatpush1.bf16.msra.mxu0 %v1982
      %2003 = vmatprep.subr.bf16.mxu0 0
      %2004 = vmatpush1.bf16.msra.mxu0 %v1981
      %2005 = vmatprep.subr.bf16.mxu0 0
      %2006 = vmatpush1.bf16.msra.mxu0 %v1980
      %2007 = vmatprep.subr.bf16.mxu0 0
      %2008 = vmatpush2.bf16.msra.mxu0 0
      %2009 = vmatprep.subr.bf16.mxu0 0
      %2010 = vmatpush2.bf16.msra.mxu0 0
      %2011 = vmatprep.subr.bf16.mxu0 0
      %2012 = vmatpush2.bf16.msra.mxu0 0
      %2013 = vmatprep.subr.bf16.mxu0 0
      %2014 = vmatpush2.bf16.msra.mxu0 0
      %2015 = vmatprep.subr.bf16.mxu0 0
      %2016 = vmatpush2.bf16.msra.mxu0 0
      %2017 = vmatprep.subr.bf16.mxu0 0
      %2018 = vmatpush2.bf16.msra.mxu0 0
      %2019 = vmatprep.subr.bf16.mxu0 0
      %2020 = vmatpush2.bf16.msra.mxu0 0
      %2021 = vmatprep.subr.bf16.mxu0 0
      %2022 = vmatpush2.bf16.msra.mxu0 0
      %2023 = vmatprep.mubr.bf16.mxu0 0
      %2024 = vmatmul.mubr.bf16.gmra.mxu0 %v1989
      %v2025 = vpop.f32.mrf.mxu0
      %v2026 = vadd.f32 %v1959, %v2025
      %v2027 = vpop.f32.mrf.mxu0
      %v2028 = vpop.f32.mrf.mxu0
      %v2029 = vpop.f32.mrf.mxu0
      %2030 = vdwg.mxu0
      %s2031 = scalar_lea.vmem %s165, 48
      %v2032 = vld [vmem:[%s2031] sm:$0xf]
      %v2033 = vld [vmem:[%s341] sm:$0xf]
      %v2034 = vld [vmem:[%s341 + $0x4] sm:$0xf]
      %v2035 = vld [vmem:[%s341 + $0x8] sm:$0xf]
      %v2036 = vld [vmem:[%s341 + $0xc] sm:$0xf]
      %v2037 = vld [vmem:[%s341 + $0x10] sm:$0xf]
      %v2038 = vld [vmem:[%s341 + $0x14] sm:$0xf]
      %v2039 = vld [vmem:[%s341 + $0x18] sm:$0xf]
      %v2040 = vld [vmem:[%s341 + $0x1c] sm:$0xf]
      %v2049 = vunpack.c.l.b16 %v2033
      %v2050 = vunpack.c.l.b16 %v2034
      %v2051 = vunpack.c.l.b16 %v2035
      %v2052 = vunpack.c.l.b16 %v2036
      %v2053 = vunpack.c.l.b16 %v2037
      %v2054 = vunpack.c.l.b16 %v2038
      %v2055 = vunpack.c.l.b16 %v2039
      %v2056 = vunpack.c.l.b16 %v2040
      %v2057 = vpack.c.b16 %v2050, %v2049
      %v2058 = vpack.c.b16 %v2052, %v2051
      %v2059 = vpack.c.b16 %v2054, %v2053
      %v2060 = vpack.c.b16 %v2056, %v2055
      %v2066 = vsel %vm228, %v2032, 0
      %2068 = vmatprep.subr.bf16.mxu0 0
      %2069 = vmatpush1.bf16.msra.mxu0 0
      %2070 = vmatprep.subr.bf16.mxu0 0
      %2071 = vmatpush1.bf16.msra.mxu0 0
      %2072 = vmatprep.subr.bf16.mxu0 0
      %2073 = vmatpush1.bf16.msra.mxu0 0
      %2074 = vmatprep.subr.bf16.mxu0 0
      %2075 = vmatpush1.bf16.msra.mxu0 0
      %2076 = vmatprep.subr.bf16.mxu0 0
      %2077 = vmatpush1.bf16.msra.mxu0 %v2060
      %2078 = vmatprep.subr.bf16.mxu0 0
      %2079 = vmatpush1.bf16.msra.mxu0 %v2059
      %2080 = vmatprep.subr.bf16.mxu0 0
      %2081 = vmatpush1.bf16.msra.mxu0 %v2058
      %2082 = vmatprep.subr.bf16.mxu0 0
      %2083 = vmatpush1.bf16.msra.mxu0 %v2057
      %2084 = vmatprep.subr.bf16.mxu0 0
      %2085 = vmatpush2.bf16.msra.mxu0 0
      %2086 = vmatprep.subr.bf16.mxu0 0
      %2087 = vmatpush2.bf16.msra.mxu0 0
      %2088 = vmatprep.subr.bf16.mxu0 0
      %2089 = vmatpush2.bf16.msra.mxu0 0
      %2090 = vmatprep.subr.bf16.mxu0 0
      %2091 = vmatpush2.bf16.msra.mxu0 0
      %2092 = vmatprep.subr.bf16.mxu0 0
      %2093 = vmatpush2.bf16.msra.mxu0 0
      %2094 = vmatprep.subr.bf16.mxu0 0
      %2095 = vmatpush2.bf16.msra.mxu0 0
      %2096 = vmatprep.subr.bf16.mxu0 0
      %2097 = vmatpush2.bf16.msra.mxu0 0
      %2098 = vmatprep.subr.bf16.mxu0 0
      %2099 = vmatpush2.bf16.msra.mxu0 0
      %2100 = vmatprep.mubr.bf16.mxu0 0
      %2101 = vmatmul.mubr.bf16.gmra.mxu0 %v2066
      %v2102 = vpop.f32.mrf.mxu0
      %v2103 = vadd.f32 0.0, %v2102
      %v2104 = vpop.f32.mrf.mxu0
      %v2105 = vpop.f32.mrf.mxu0
      %v2106 = vpop.f32.mrf.mxu0
      %2107 = vdwg.mxu0
      %v2108 = vadd.f32 %v2026, %v2103
      %v2109 = vld [vmem:[%s2031] sm:$0xf]
      %v2110 = vld [vmem:[%s2031 + $0x4] sm:$0x1]
      %v2111 = vld [vmem:[%s420] sm:$0xf]
      %v2112 = vld [vmem:[%s420 + $0x4] sm:$0xf]
      %v2113 = vld [vmem:[%s420 + $0x8] sm:$0xf]
      %v2114 = vld [vmem:[%s420 + $0xc] sm:$0xf]
      %v2115 = vld [vmem:[%s420 + $0x10] sm:$0xf]
      %v2116 = vld [vmem:[%s420 + $0x14] sm:$0xf]
      %v2117 = vld [vmem:[%s420 + $0x18] sm:$0xf]
      %v2118 = vld [vmem:[%s420 + $0x1c] sm:$0xf]
      %v2121 = vunpack.c.l.b16 %v2109
      %v2122 = vunpack.c.l.b16 %v2110
      %v2123 = vpack.c.b16 %v2122, %v2121
      %v2125 = vshrl.u32 %v2123, 16
      %v2127 = vshll.u32 %v2123, 16
      %v2129 = vrot.slane %v2127, 1
      %v2130 = vor.u32 %v2125, %v2129
      %v2139 = vunpack.c.l.b16 %v2111
      %v2140 = vunpack.c.l.b16 %v2112
      %v2141 = vunpack.c.l.b16 %v2113
      %v2142 = vunpack.c.l.b16 %v2114
      %v2143 = vunpack.c.l.b16 %v2115
      %v2144 = vunpack.c.l.b16 %v2116
      %v2145 = vunpack.c.l.b16 %v2117
      %v2146 = vunpack.c.l.b16 %v2118
      %v2147 = vpack.c.b16 %v2140, %v2139
      %v2148 = vpack.c.b16 %v2142, %v2141
      %v2149 = vpack.c.b16 %v2144, %v2143
      %v2150 = vpack.c.b16 %v2146, %v2145
      %v2156 = vsel %vm228, %v2130, 0
      %2158 = vmatprep.subr.bf16.mxu0 0
      %2159 = vmatpush1.bf16.msra.mxu0 0
      %2160 = vmatprep.subr.bf16.mxu0 0
      %2161 = vmatpush1.bf16.msra.mxu0 0
      %2162 = vmatprep.subr.bf16.mxu0 0
      %2163 = vmatpush1.bf16.msra.mxu0 0
      %2164 = vmatprep.subr.bf16.mxu0 0
      %2165 = vmatpush1.bf16.msra.mxu0 0
      %2166 = vmatprep.subr.bf16.mxu0 0
      %2167 = vmatpush1.bf16.msra.mxu0 %v2150
      %2168 = vmatprep.subr.bf16.mxu0 0
      %2169 = vmatpush1.bf16.msra.mxu0 %v2149
      %2170 = vmatprep.subr.bf16.mxu0 0
      %2171 = vmatpush1.bf16.msra.mxu0 %v2148
      %2172 = vmatprep.subr.bf16.mxu0 0
      %2173 = vmatpush1.bf16.msra.mxu0 %v2147
      %2174 = vmatprep.subr.bf16.mxu0 0
      %2175 = vmatpush2.bf16.msra.mxu0 0
      %2176 = vmatprep.subr.bf16.mxu0 0
      %2177 = vmatpush2.bf16.msra.mxu0 0
      %2178 = vmatprep.subr.bf16.mxu0 0
      %2179 = vmatpush2.bf16.msra.mxu0 0
      %2180 = vmatprep.subr.bf16.mxu0 0
      %2181 = vmatpush2.bf16.msra.mxu0 0
      %2182 = vmatprep.subr.bf16.mxu0 0
      %2183 = vmatpush2.bf16.msra.mxu0 0
      %2184 = vmatprep.subr.bf16.mxu0 0
      %2185 = vmatpush2.bf16.msra.mxu0 0
      %2186 = vmatprep.subr.bf16.mxu0 0
      %2187 = vmatpush2.bf16.msra.mxu0 0
      %2188 = vmatprep.subr.bf16.mxu0 0
      %2189 = vmatpush2.bf16.msra.mxu0 0
      %2190 = vmatprep.mubr.bf16.mxu0 0
      %2191 = vmatmul.mubr.bf16.gmra.mxu0 %v2156
      %v2192 = vpop.f32.mrf.mxu0
      %v2193 = vadd.f32 0.0, %v2192
      %v2194 = vpop.f32.mrf.mxu0
      %v2195 = vpop.f32.mrf.mxu0
      %v2196 = vpop.f32.mrf.mxu0
      %2197 = vdwg.mxu0
      %v2198 = vadd.f32 %v2108, %v2193
      %v2199 = vadd.f32 %v2198, %v513
      %v2200 = vmax.f32 %v2199, 0.0
      %v2201 = vpack.c.bf16 %v2200, %v2200
      %s2202 = scalar_lea.vmem %s170, 20
      %2203 = vst [vmem:[%s2202] sm:$0xf] %v2201
      %v2204 = vld [vmem:[%s2031] sm:$0xf]
      %v2205 = vld [vmem:[%s1] sm:$0xf]
      %v2206 = vld [vmem:[%s1 + $0x4] sm:$0xf]
      %v2207 = vld [vmem:[%s1 + $0x8] sm:$0xf]
      %v2208 = vld [vmem:[%s1 + $0xc] sm:$0xf]
      %v2209 = vld [vmem:[%s1 + $0x10] sm:$0xf]
      %v2210 = vld [vmem:[%s1 + $0x14] sm:$0xf]
      %v2211 = vld [vmem:[%s1 + $0x18] sm:$0xf]
      %v2212 = vld [vmem:[%s1 + $0x1c] sm:$0xf]
      %v2213 = vld [vmem:[%s2031 + $0x4] sm:$0x1]
      %v2214 = vld [vmem:[%s183] sm:$0xf]
      %v2215 = vld [vmem:[%s183 + $0x4] sm:$0xf]
      %v2216 = vld [vmem:[%s183 + $0x8] sm:$0xf]
      %v2217 = vld [vmem:[%s183 + $0xc] sm:$0xf]
      %v2218 = vld [vmem:[%s183 + $0x10] sm:$0xf]
      %v2219 = vld [vmem:[%s183 + $0x14] sm:$0xf]
      %v2220 = vld [vmem:[%s183 + $0x18] sm:$0xf]
      %v2221 = vld [vmem:[%s183 + $0x1c] sm:$0xf]
      %v2224 = vunpack.c.l.b16 %v2204
      %v2225 = vunpack.c.l.b16 %v2213
      %v2226 = vpack.c.b16 %v2225, %v2224
      %v2228 = vshrl.u32 %v2226, 16
      %v2230 = vshll.u32 %v2226, 16
      %v2232 = vrot.slane %v2230, 1
      %v2233 = vor.u32 %v2228, %v2232
      %v2242 = vunpack.c.l.b16 %v2214
      %v2243 = vunpack.c.l.b16 %v2215
      %v2244 = vunpack.c.l.b16 %v2216
      %v2245 = vunpack.c.l.b16 %v2217
      %v2246 = vunpack.c.l.b16 %v2218
      %v2247 = vunpack.c.l.b16 %v2219
      %v2248 = vunpack.c.l.b16 %v2220
      %v2249 = vunpack.c.l.b16 %v2221
      %v2250 = vpack.c.b16 %v2243, %v2242
      %v2251 = vpack.c.b16 %v2245, %v2244
      %v2252 = vpack.c.b16 %v2247, %v2246
      %v2253 = vpack.c.b16 %v2249, %v2248
      %v2259 = vsel %vm228, %v2233, 0
      %2261 = vmatprep.subr.bf16.mxu0 0
      %2262 = vmatpush1.bf16.msra.mxu0 0
      %2263 = vmatprep.subr.bf16.mxu0 0
      %2264 = vmatpush1.bf16.msra.mxu0 0
      %2265 = vmatprep.subr.bf16.mxu0 0
      %2266 = vmatpush1.bf16.msra.mxu0 0
      %2267 = vmatprep.subr.bf16.mxu0 0
      %2268 = vmatpush1.bf16.msra.mxu0 0
      %2269 = vmatprep.subr.bf16.mxu0 0
      %2270 = vmatpush1.bf16.msra.mxu0 %v2253
      %2271 = vmatprep.subr.bf16.mxu0 0
      %2272 = vmatpush1.bf16.msra.mxu0 %v2252
      %2273 = vmatprep.subr.bf16.mxu0 0
      %2274 = vmatpush1.bf16.msra.mxu0 %v2251
      %2275 = vmatprep.subr.bf16.mxu0 0
      %2276 = vmatpush1.bf16.msra.mxu0 %v2250
      %2277 = vmatprep.subr.bf16.mxu0 0
      %2278 = vmatpush2.bf16.msra.mxu0 0
      %2279 = vmatprep.subr.bf16.mxu0 0
      %2280 = vmatpush2.bf16.msra.mxu0 0
      %2281 = vmatprep.subr.bf16.mxu0 0
      %2282 = vmatpush2.bf16.msra.mxu0 0
      %2283 = vmatprep.subr.bf16.mxu0 0
      %2284 = vmatpush2.bf16.msra.mxu0 0
      %2285 = vmatprep.subr.bf16.mxu0 0
      %2286 = vmatpush2.bf16.msra.mxu0 0
      %2287 = vmatprep.subr.bf16.mxu0 0
      %2288 = vmatpush2.bf16.msra.mxu0 0
      %2289 = vmatprep.subr.bf16.mxu0 0
      %2290 = vmatpush2.bf16.msra.mxu0 0
      %2291 = vmatprep.subr.bf16.mxu0 0
      %2292 = vmatpush2.bf16.msra.mxu0 0
      %2293 = vmatprep.mubr.bf16.mxu0 0
      %2294 = vmatmul.mubr.bf16.gmra.mxu0 %v2259
      %v2295 = vpop.f32.mrf.mxu0
      %v2296 = vadd.f32 0.0, %v2295
      %v2297 = vpop.f32.mrf.mxu0
      %v2298 = vpop.f32.mrf.mxu0
      %v2299 = vpop.f32.mrf.mxu0
      %2300 = vdwg.mxu0
      %v2309 = vunpack.c.l.b16 %v2205
      %v2310 = vunpack.c.l.b16 %v2206
      %v2311 = vunpack.c.l.b16 %v2207
      %v2312 = vunpack.c.l.b16 %v2208
      %v2313 = vunpack.c.l.b16 %v2209
      %v2314 = vunpack.c.l.b16 %v2210
      %v2315 = vunpack.c.l.b16 %v2211
      %v2316 = vunpack.c.l.b16 %v2212
      %v2317 = vpack.c.b16 %v2310, %v2309
      %v2318 = vpack.c.b16 %v2312, %v2311
      %v2319 = vpack.c.b16 %v2314, %v2313
      %v2320 = vpack.c.b16 %v2316, %v2315
      %v2326 = vsel %vm228, %v2204, 0
      %2328 = vmatprep.subr.bf16.mxu0 0
      %2329 = vmatpush1.bf16.msra.mxu0 0
      %2330 = vmatprep.subr.bf16.mxu0 0
      %2331 = vmatpush1.bf16.msra.mxu0 0
      %2332 = vmatprep.subr.bf16.mxu0 0
      %2333 = vmatpush1.bf16.msra.mxu0 0
      %2334 = vmatprep.subr.bf16.mxu0 0
      %2335 = vmatpush1.bf16.msra.mxu0 0
      %2336 = vmatprep.subr.bf16.mxu0 0
      %2337 = vmatpush1.bf16.msra.mxu0 %v2320
      %2338 = vmatprep.subr.bf16.mxu0 0
      %2339 = vmatpush1.bf16.msra.mxu0 %v2319
      %2340 = vmatprep.subr.bf16.mxu0 0
      %2341 = vmatpush1.bf16.msra.mxu0 %v2318
      %2342 = vmatprep.subr.bf16.mxu0 0
      %2343 = vmatpush1.bf16.msra.mxu0 %v2317
      %2344 = vmatprep.subr.bf16.mxu0 0
      %2345 = vmatpush2.bf16.msra.mxu0 0
      %2346 = vmatprep.subr.bf16.mxu0 0
      %2347 = vmatpush2.bf16.msra.mxu0 0
      %2348 = vmatprep.subr.bf16.mxu0 0
      %2349 = vmatpush2.bf16.msra.mxu0 0
      %2350 = vmatprep.subr.bf16.mxu0 0
      %2351 = vmatpush2.bf16.msra.mxu0 0
      %2352 = vmatprep.subr.bf16.mxu0 0
      %2353 = vmatpush2.bf16.msra.mxu0 0
      %2354 = vmatprep.subr.bf16.mxu0 0
      %2355 = vmatpush2.bf16.msra.mxu0 0
      %2356 = vmatprep.subr.bf16.mxu0 0
      %2357 = vmatpush2.bf16.msra.mxu0 0
      %2358 = vmatprep.subr.bf16.mxu0 0
      %2359 = vmatpush2.bf16.msra.mxu0 0
      %2360 = vmatprep.mubr.bf16.mxu0 0
      %2361 = vmatmul.mubr.bf16.gmra.mxu0 %v2326
      %v2362 = vpop.f32.mrf.mxu0
      %v2363 = vadd.f32 %v2296, %v2362
      %v2364 = vpop.f32.mrf.mxu0
      %v2365 = vpop.f32.mrf.mxu0
      %v2366 = vpop.f32.mrf.mxu0
      %2367 = vdwg.mxu0
      %s2368 = scalar_lea.vmem %s165, 56
      %v2369 = vld [vmem:[%s2368] sm:$0xf]
      %v2370 = vld [vmem:[%s341] sm:$0xf]
      %v2371 = vld [vmem:[%s341 + $0x4] sm:$0xf]
      %v2372 = vld [vmem:[%s341 + $0x8] sm:$0xf]
      %v2373 = vld [vmem:[%s341 + $0xc] sm:$0xf]
      %v2374 = vld [vmem:[%s341 + $0x10] sm:$0xf]
      %v2375 = vld [vmem:[%s341 + $0x14] sm:$0xf]
      %v2376 = vld [vmem:[%s341 + $0x18] sm:$0xf]
      %v2377 = vld [vmem:[%s341 + $0x1c] sm:$0xf]
      %v2386 = vunpack.c.l.b16 %v2370
      %v2387 = vunpack.c.l.b16 %v2371
      %v2388 = vunpack.c.l.b16 %v2372
      %v2389 = vunpack.c.l.b16 %v2373
      %v2390 = vunpack.c.l.b16 %v2374
      %v2391 = vunpack.c.l.b16 %v2375
      %v2392 = vunpack.c.l.b16 %v2376
      %v2393 = vunpack.c.l.b16 %v2377
      %v2394 = vpack.c.b16 %v2387, %v2386
      %v2395 = vpack.c.b16 %v2389, %v2388
      %v2396 = vpack.c.b16 %v2391, %v2390
      %v2397 = vpack.c.b16 %v2393, %v2392
      %v2403 = vsel %vm228, %v2369, 0
      %2405 = vmatprep.subr.bf16.mxu0 0
      %2406 = vmatpush1.bf16.msra.mxu0 0
      %2407 = vmatprep.subr.bf16.mxu0 0
      %2408 = vmatpush1.bf16.msra.mxu0 0
      %2409 = vmatprep.subr.bf16.mxu0 0
      %2410 = vmatpush1.bf16.msra.mxu0 0
      %2411 = vmatprep.subr.bf16.mxu0 0
      %2412 = vmatpush1.bf16.msra.mxu0 0
      %2413 = vmatprep.subr.bf16.mxu0 0
      %2414 = vmatpush1.bf16.msra.mxu0 %v2397
      %2415 = vmatprep.subr.bf16.mxu0 0
      %2416 = vmatpush1.bf16.msra.mxu0 %v2396
      %2417 = vmatprep.subr.bf16.mxu0 0
      %2418 = vmatpush1.bf16.msra.mxu0 %v2395
      %2419 = vmatprep.subr.bf16.mxu0 0
      %2420 = vmatpush1.bf16.msra.mxu0 %v2394
      %2421 = vmatprep.subr.bf16.mxu0 0
      %2422 = vmatpush2.bf16.msra.mxu0 0
      %2423 = vmatprep.subr.bf16.mxu0 0
      %2424 = vmatpush2.bf16.msra.mxu0 0
      %2425 = vmatprep.subr.bf16.mxu0 0
      %2426 = vmatpush2.bf16.msra.mxu0 0
      %2427 = vmatprep.subr.bf16.mxu0 0
      %2428 = vmatpush2.bf16.msra.mxu0 0
      %2429 = vmatprep.subr.bf16.mxu0 0
      %2430 = vmatpush2.bf16.msra.mxu0 0
      %2431 = vmatprep.subr.bf16.mxu0 0
      %2432 = vmatpush2.bf16.msra.mxu0 0
      %2433 = vmatprep.subr.bf16.mxu0 0
      %2434 = vmatpush2.bf16.msra.mxu0 0
      %2435 = vmatprep.subr.bf16.mxu0 0
      %2436 = vmatpush2.bf16.msra.mxu0 0
      %2437 = vmatprep.mubr.bf16.mxu0 0
      %2438 = vmatmul.mubr.bf16.gmra.mxu0 %v2403
      %v2439 = vpop.f32.mrf.mxu0
      %v2440 = vadd.f32 0.0, %v2439
      %v2441 = vpop.f32.mrf.mxu0
      %v2442 = vpop.f32.mrf.mxu0
      %v2443 = vpop.f32.mrf.mxu0
      %2444 = vdwg.mxu0
      %v2445 = vadd.f32 %v2363, %v2440
      %v2446 = vld [vmem:[%s2368] sm:$0xf]
      %v2447 = vld [vmem:[%s2368 + $0x4] sm:$0x1]
      %v2448 = vld [vmem:[%s420] sm:$0xf]
      %v2449 = vld [vmem:[%s420 + $0x4] sm:$0xf]
      %v2450 = vld [vmem:[%s420 + $0x8] sm:$0xf]
      %v2451 = vld [vmem:[%s420 + $0xc] sm:$0xf]
      %v2452 = vld [vmem:[%s420 + $0x10] sm:$0xf]
      %v2453 = vld [vmem:[%s420 + $0x14] sm:$0xf]
      %v2454 = vld [vmem:[%s420 + $0x18] sm:$0xf]
      %v2455 = vld [vmem:[%s420 + $0x1c] sm:$0xf]
      %v2458 = vunpack.c.l.b16 %v2446
      %v2459 = vunpack.c.l.b16 %v2447
      %v2460 = vpack.c.b16 %v2459, %v2458
      %v2462 = vshrl.u32 %v2460, 16
      %v2464 = vshll.u32 %v2460, 16
      %v2466 = vrot.slane %v2464, 1
      %v2467 = vor.u32 %v2462, %v2466
      %v2476 = vunpack.c.l.b16 %v2448
      %v2477 = vunpack.c.l.b16 %v2449
      %v2478 = vunpack.c.l.b16 %v2450
      %v2479 = vunpack.c.l.b16 %v2451
      %v2480 = vunpack.c.l.b16 %v2452
      %v2481 = vunpack.c.l.b16 %v2453
      %v2482 = vunpack.c.l.b16 %v2454
      %v2483 = vunpack.c.l.b16 %v2455
      %v2484 = vpack.c.b16 %v2477, %v2476
      %v2485 = vpack.c.b16 %v2479, %v2478
      %v2486 = vpack.c.b16 %v2481, %v2480
      %v2487 = vpack.c.b16 %v2483, %v2482
      %v2493 = vsel %vm228, %v2467, 0
      %2495 = vmatprep.subr.bf16.mxu0 0
      %2496 = vmatpush1.bf16.msra.mxu0 0
      %2497 = vmatprep.subr.bf16.mxu0 0
      %2498 = vmatpush1.bf16.msra.mxu0 0
      %2499 = vmatprep.subr.bf16.mxu0 0
      %2500 = vmatpush1.bf16.msra.mxu0 0
      %2501 = vmatprep.subr.bf16.mxu0 0
      %2502 = vmatpush1.bf16.msra.mxu0 0
      %2503 = vmatprep.subr.bf16.mxu0 0
      %2504 = vmatpush1.bf16.msra.mxu0 %v2487
      %2505 = vmatprep.subr.bf16.mxu0 0
      %2506 = vmatpush1.bf16.msra.mxu0 %v2486
      %2507 = vmatprep.subr.bf16.mxu0 0
      %2508 = vmatpush1.bf16.msra.mxu0 %v2485
      %2509 = vmatprep.subr.bf16.mxu0 0
      %2510 = vmatpush1.bf16.msra.mxu0 %v2484
      %2511 = vmatprep.subr.bf16.mxu0 0
      %2512 = vmatpush2.bf16.msra.mxu0 0
      %2513 = vmatprep.subr.bf16.mxu0 0
      %2514 = vmatpush2.bf16.msra.mxu0 0
      %2515 = vmatprep.subr.bf16.mxu0 0
      %2516 = vmatpush2.bf16.msra.mxu0 0
      %2517 = vmatprep.subr.bf16.mxu0 0
      %2518 = vmatpush2.bf16.msra.mxu0 0
      %2519 = vmatprep.subr.bf16.mxu0 0
      %2520 = vmatpush2.bf16.msra.mxu0 0
      %2521 = vmatprep.subr.bf16.mxu0 0
      %2522 = vmatpush2.bf16.msra.mxu0 0
      %2523 = vmatprep.subr.bf16.mxu0 0
      %2524 = vmatpush2.bf16.msra.mxu0 0
      %2525 = vmatprep.subr.bf16.mxu0 0
      %2526 = vmatpush2.bf16.msra.mxu0 0
      %2527 = vmatprep.mubr.bf16.mxu0 0
      %2528 = vmatmul.mubr.bf16.gmra.mxu0 %v2493
      %v2529 = vpop.f32.mrf.mxu0
      %v2530 = vadd.f32 0.0, %v2529
      %v2531 = vpop.f32.mrf.mxu0
      %v2532 = vpop.f32.mrf.mxu0
      %v2533 = vpop.f32.mrf.mxu0
      %2534 = vdwg.mxu0
      %v2535 = vadd.f32 %v2445, %v2530
      %v2536 = vadd.f32 %v2535, %v513
      %v2537 = vmax.f32 %v2536, 0.0
      %v2538 = vpack.c.bf16 %v2537, %v2537
      %s2539 = scalar_lea.vmem %s170, 24
      %2540 = vst [vmem:[%s2539] sm:$0xf] %v2538
      %v2541 = vld [vmem:[%s2368] sm:$0xf]
      %v2542 = vld [vmem:[%s1] sm:$0xf]
      %v2543 = vld [vmem:[%s1 + $0x4] sm:$0xf]
      %v2544 = vld [vmem:[%s1 + $0x8] sm:$0xf]
      %v2545 = vld [vmem:[%s1 + $0xc] sm:$0xf]
      %v2546 = vld [vmem:[%s1 + $0x10] sm:$0xf]
      %v2547 = vld [vmem:[%s1 + $0x14] sm:$0xf]
      %v2548 = vld [vmem:[%s1 + $0x18] sm:$0xf]
      %v2549 = vld [vmem:[%s1 + $0x1c] sm:$0xf]
      %v2550 = vld [vmem:[%s2368 + $0x4] sm:$0x1]
      %v2551 = vld [vmem:[%s183] sm:$0xf]
      %v2552 = vld [vmem:[%s183 + $0x4] sm:$0xf]
      %v2553 = vld [vmem:[%s183 + $0x8] sm:$0xf]
      %v2554 = vld [vmem:[%s183 + $0xc] sm:$0xf]
      %v2555 = vld [vmem:[%s183 + $0x10] sm:$0xf]
      %v2556 = vld [vmem:[%s183 + $0x14] sm:$0xf]
      %v2557 = vld [vmem:[%s183 + $0x18] sm:$0xf]
      %v2558 = vld [vmem:[%s183 + $0x1c] sm:$0xf]
      %v2561 = vunpack.c.l.b16 %v2541
      %v2562 = vunpack.c.l.b16 %v2550
      %v2563 = vpack.c.b16 %v2562, %v2561
      %v2565 = vshrl.u32 %v2563, 16
      %v2567 = vshll.u32 %v2563, 16
      %v2569 = vrot.slane %v2567, 1
      %v2570 = vor.u32 %v2565, %v2569
      %v2579 = vunpack.c.l.b16 %v2551
      %v2580 = vunpack.c.l.b16 %v2552
      %v2581 = vunpack.c.l.b16 %v2553
      %v2582 = vunpack.c.l.b16 %v2554
      %v2583 = vunpack.c.l.b16 %v2555
      %v2584 = vunpack.c.l.b16 %v2556
      %v2585 = vunpack.c.l.b16 %v2557
      %v2586 = vunpack.c.l.b16 %v2558
      %v2587 = vpack.c.b16 %v2580, %v2579
      %v2588 = vpack.c.b16 %v2582, %v2581
      %v2589 = vpack.c.b16 %v2584, %v2583
      %v2590 = vpack.c.b16 %v2586, %v2585
      %v2596 = vsel %vm228, %v2570, 0
      %2598 = vmatprep.subr.bf16.mxu0 0
      %2599 = vmatpush1.bf16.msra.mxu0 0
      %2600 = vmatprep.subr.bf16.mxu0 0
      %2601 = vmatpush1.bf16.msra.mxu0 0
      %2602 = vmatprep.subr.bf16.mxu0 0
      %2603 = vmatpush1.bf16.msra.mxu0 0
      %2604 = vmatprep.subr.bf16.mxu0 0
      %2605 = vmatpush1.bf16.msra.mxu0 0
      %2606 = vmatprep.subr.bf16.mxu0 0
      %2607 = vmatpush1.bf16.msra.mxu0 %v2590
      %2608 = vmatprep.subr.bf16.mxu0 0
      %2609 = vmatpush1.bf16.msra.mxu0 %v2589
      %2610 = vmatprep.subr.bf16.mxu0 0
      %2611 = vmatpush1.bf16.msra.mxu0 %v2588
      %2612 = vmatprep.subr.bf16.mxu0 0
      %2613 = vmatpush1.bf16.msra.mxu0 %v2587
      %2614 = vmatprep.subr.bf16.mxu0 0
      %2615 = vmatpush2.bf16.msra.mxu0 0
      %2616 = vmatprep.subr.bf16.mxu0 0
      %2617 = vmatpush2.bf16.msra.mxu0 0
      %2618 = vmatprep.subr.bf16.mxu0 0
      %2619 = vmatpush2.bf16.msra.mxu0 0
      %2620 = vmatprep.subr.bf16.mxu0 0
      %2621 = vmatpush2.bf16.msra.mxu0 0
      %2622 = vmatprep.subr.bf16.mxu0 0
      %2623 = vmatpush2.bf16.msra.mxu0 0
      %2624 = vmatprep.subr.bf16.mxu0 0
      %2625 = vmatpush2.bf16.msra.mxu0 0
      %2626 = vmatprep.subr.bf16.mxu0 0
      %2627 = vmatpush2.bf16.msra.mxu0 0
      %2628 = vmatprep.subr.bf16.mxu0 0
      %2629 = vmatpush2.bf16.msra.mxu0 0
      %2630 = vmatprep.mubr.bf16.mxu0 0
      %2631 = vmatmul.mubr.bf16.gmra.mxu0 %v2596
      %v2632 = vpop.f32.mrf.mxu0
      %v2633 = vadd.f32 0.0, %v2632
      %v2634 = vpop.f32.mrf.mxu0
      %v2635 = vpop.f32.mrf.mxu0
      %v2636 = vpop.f32.mrf.mxu0
      %2637 = vdwg.mxu0
      %v2646 = vunpack.c.l.b16 %v2542
      %v2647 = vunpack.c.l.b16 %v2543
      %v2648 = vunpack.c.l.b16 %v2544
      %v2649 = vunpack.c.l.b16 %v2545
      %v2650 = vunpack.c.l.b16 %v2546
      %v2651 = vunpack.c.l.b16 %v2547
      %v2652 = vunpack.c.l.b16 %v2548
      %v2653 = vunpack.c.l.b16 %v2549
      %v2654 = vpack.c.b16 %v2647, %v2646
      %v2655 = vpack.c.b16 %v2649, %v2648
      %v2656 = vpack.c.b16 %v2651, %v2650
      %v2657 = vpack.c.b16 %v2653, %v2652
      %v2663 = vsel %vm228, %v2541, 0
      %2665 = vmatprep.subr.bf16.mxu0 0
      %2666 = vmatpush1.bf16.msra.mxu0 0
      %2667 = vmatprep.subr.bf16.mxu0 0
      %2668 = vmatpush1.bf16.msra.mxu0 0
      %2669 = vmatprep.subr.bf16.mxu0 0
      %2670 = vmatpush1.bf16.msra.mxu0 0
      %2671 = vmatprep.subr.bf16.mxu0 0
      %2672 = vmatpush1.bf16.msra.mxu0 0
      %2673 = vmatprep.subr.bf16.mxu0 0
      %2674 = vmatpush1.bf16.msra.mxu0 %v2657
      %2675 = vmatprep.subr.bf16.mxu0 0
      %2676 = vmatpush1.bf16.msra.mxu0 %v2656
      %2677 = vmatprep.subr.bf16.mxu0 0
      %2678 = vmatpush1.bf16.msra.mxu0 %v2655
      %2679 = vmatprep.subr.bf16.mxu0 0
      %2680 = vmatpush1.bf16.msra.mxu0 %v2654
      %2681 = vmatprep.subr.bf16.mxu0 0
      %2682 = vmatpush2.bf16.msra.mxu0 0
      %2683 = vmatprep.subr.bf16.mxu0 0
      %2684 = vmatpush2.bf16.msra.mxu0 0
      %2685 = vmatprep.subr.bf16.mxu0 0
      %2686 = vmatpush2.bf16.msra.mxu0 0
      %2687 = vmatprep.subr.bf16.mxu0 0
      %2688 = vmatpush2.bf16.msra.mxu0 0
      %2689 = vmatprep.subr.bf16.mxu0 0
      %2690 = vmatpush2.bf16.msra.mxu0 0
      %2691 = vmatprep.subr.bf16.mxu0 0
      %2692 = vmatpush2.bf16.msra.mxu0 0
      %2693 = vmatprep.subr.bf16.mxu0 0
      %2694 = vmatpush2.bf16.msra.mxu0 0
      %2695 = vmatprep.subr.bf16.mxu0 0
      %2696 = vmatpush2.bf16.msra.mxu0 0
      %2697 = vmatprep.mubr.bf16.mxu0 0
      %2698 = vmatmul.mubr.bf16.gmra.mxu0 %v2663
      %v2699 = vpop.f32.mrf.mxu0
      %v2700 = vadd.f32 %v2633, %v2699
      %v2701 = vpop.f32.mrf.mxu0
      %v2702 = vpop.f32.mrf.mxu0
      %v2703 = vpop.f32.mrf.mxu0
      %2704 = vdwg.mxu0
      %s2705 = scalar_lea.vmem %s165, 64
      %v2706 = vld [vmem:[%s2705] sm:$0xf]
      %v2707 = vld [vmem:[%s341] sm:$0xf]
      %v2708 = vld [vmem:[%s341 + $0x4] sm:$0xf]
      %v2709 = vld [vmem:[%s341 + $0x8] sm:$0xf]
      %v2710 = vld [vmem:[%s341 + $0xc] sm:$0xf]
      %v2711 = vld [vmem:[%s341 + $0x10] sm:$0xf]
      %v2712 = vld [vmem:[%s341 + $0x14] sm:$0xf]
      %v2713 = vld [vmem:[%s341 + $0x18] sm:$0xf]
      %v2714 = vld [vmem:[%s341 + $0x1c] sm:$0xf]
      %v2723 = vunpack.c.l.b16 %v2707
      %v2724 = vunpack.c.l.b16 %v2708
      %v2725 = vunpack.c.l.b16 %v2709
      %v2726 = vunpack.c.l.b16 %v2710
      %v2727 = vunpack.c.l.b16 %v2711
      %v2728 = vunpack.c.l.b16 %v2712
      %v2729 = vunpack.c.l.b16 %v2713
      %v2730 = vunpack.c.l.b16 %v2714
      %v2731 = vpack.c.b16 %v2724, %v2723
      %v2732 = vpack.c.b16 %v2726, %v2725
      %v2733 = vpack.c.b16 %v2728, %v2727
      %v2734 = vpack.c.b16 %v2730, %v2729
      %v2740 = vsel %vm228, %v2706, 0
      %2742 = vmatprep.subr.bf16.mxu0 0
      %2743 = vmatpush1.bf16.msra.mxu0 0
      %2744 = vmatprep.subr.bf16.mxu0 0
      %2745 = vmatpush1.bf16.msra.mxu0 0
      %2746 = vmatprep.subr.bf16.mxu0 0
      %2747 = vmatpush1.bf16.msra.mxu0 0
      %2748 = vmatprep.subr.bf16.mxu0 0
      %2749 = vmatpush1.bf16.msra.mxu0 0
      %2750 = vmatprep.subr.bf16.mxu0 0
      %2751 = vmatpush1.bf16.msra.mxu0 %v2734
      %2752 = vmatprep.subr.bf16.mxu0 0
      %2753 = vmatpush1.bf16.msra.mxu0 %v2733
      %2754 = vmatprep.subr.bf16.mxu0 0
      %2755 = vmatpush1.bf16.msra.mxu0 %v2732
      %2756 = vmatprep.subr.bf16.mxu0 0
      %2757 = vmatpush1.bf16.msra.mxu0 %v2731
      %2758 = vmatprep.subr.bf16.mxu0 0
      %2759 = vmatpush2.bf16.msra.mxu0 0
      %2760 = vmatprep.subr.bf16.mxu0 0
      %2761 = vmatpush2.bf16.msra.mxu0 0
      %2762 = vmatprep.subr.bf16.mxu0 0
      %2763 = vmatpush2.bf16.msra.mxu0 0
      %2764 = vmatprep.subr.bf16.mxu0 0
      %2765 = vmatpush2.bf16.msra.mxu0 0
      %2766 = vmatprep.subr.bf16.mxu0 0
      %2767 = vmatpush2.bf16.msra.mxu0 0
      %2768 = vmatprep.subr.bf16.mxu0 0
      %2769 = vmatpush2.bf16.msra.mxu0 0
      %2770 = vmatprep.subr.bf16.mxu0 0
      %2771 = vmatpush2.bf16.msra.mxu0 0
      %2772 = vmatprep.subr.bf16.mxu0 0
      %2773 = vmatpush2.bf16.msra.mxu0 0
      %2774 = vmatprep.mubr.bf16.mxu0 0
      %2775 = vmatmul.mubr.bf16.gmra.mxu0 %v2740
      %v2776 = vpop.f32.mrf.mxu0
      %v2777 = vadd.f32 0.0, %v2776
      %v2778 = vpop.f32.mrf.mxu0
      %v2779 = vpop.f32.mrf.mxu0
      %v2780 = vpop.f32.mrf.mxu0
      %2781 = vdwg.mxu0
      %v2782 = vadd.f32 %v2700, %v2777
      %v2783 = vld [vmem:[%s2705] sm:$0xf]
      %v2784 = vld [vmem:[%s2705 + $0x4] sm:$0x1]
      %v2785 = vld [vmem:[%s420] sm:$0xf]
      %v2786 = vld [vmem:[%s420 + $0x4] sm:$0xf]
      %v2787 = vld [vmem:[%s420 + $0x8] sm:$0xf]
      %v2788 = vld [vmem:[%s420 + $0xc] sm:$0xf]
      %v2789 = vld [vmem:[%s420 + $0x10] sm:$0xf]
      %v2790 = vld [vmem:[%s420 + $0x14] sm:$0xf]
      %v2791 = vld [vmem:[%s420 + $0x18] sm:$0xf]
      %v2792 = vld [vmem:[%s420 + $0x1c] sm:$0xf]
      %v2795 = vunpack.c.l.b16 %v2783
      %v2796 = vunpack.c.l.b16 %v2784
      %v2797 = vpack.c.b16 %v2796, %v2795
      %v2799 = vshrl.u32 %v2797, 16
      %v2801 = vshll.u32 %v2797, 16
      %v2803 = vrot.slane %v2801, 1
      %v2804 = vor.u32 %v2799, %v2803
      %v2813 = vunpack.c.l.b16 %v2785
      %v2814 = vunpack.c.l.b16 %v2786
      %v2815 = vunpack.c.l.b16 %v2787
      %v2816 = vunpack.c.l.b16 %v2788
      %v2817 = vunpack.c.l.b16 %v2789
      %v2818 = vunpack.c.l.b16 %v2790
      %v2819 = vunpack.c.l.b16 %v2791
      %v2820 = vunpack.c.l.b16 %v2792
      %v2821 = vpack.c.b16 %v2814, %v2813
      %v2822 = vpack.c.b16 %v2816, %v2815
      %v2823 = vpack.c.b16 %v2818, %v2817
      %v2824 = vpack.c.b16 %v2820, %v2819
      %v2830 = vsel %vm228, %v2804, 0
      %2832 = vmatprep.subr.bf16.mxu0 0
      %2833 = vmatpush1.bf16.msra.mxu0 0
      %2834 = vmatprep.subr.bf16.mxu0 0
      %2835 = vmatpush1.bf16.msra.mxu0 0
      %2836 = vmatprep.subr.bf16.mxu0 0
      %2837 = vmatpush1.bf16.msra.mxu0 0
      %2838 = vmatprep.subr.bf16.mxu0 0
      %2839 = vmatpush1.bf16.msra.mxu0 0
      %2840 = vmatprep.subr.bf16.mxu0 0
      %2841 = vmatpush1.bf16.msra.mxu0 %v2824
      %2842 = vmatprep.subr.bf16.mxu0 0
      %2843 = vmatpush1.bf16.msra.mxu0 %v2823
      %2844 = vmatprep.subr.bf16.mxu0 0
      %2845 = vmatpush1.bf16.msra.mxu0 %v2822
      %2846 = vmatprep.subr.bf16.mxu0 0
      %2847 = vmatpush1.bf16.msra.mxu0 %v2821
      %2848 = vmatprep.subr.bf16.mxu0 0
      %2849 = vmatpush2.bf16.msra.mxu0 0
      %2850 = vmatprep.subr.bf16.mxu0 0
      %2851 = vmatpush2.bf16.msra.mxu0 0
      %2852 = vmatprep.subr.bf16.mxu0 0
      %2853 = vmatpush2.bf16.msra.mxu0 0
      %2854 = vmatprep.subr.bf16.mxu0 0
      %2855 = vmatpush2.bf16.msra.mxu0 0
      %2856 = vmatprep.subr.bf16.mxu0 0
      %2857 = vmatpush2.bf16.msra.mxu0 0
      %2858 = vmatprep.subr.bf16.mxu0 0
      %2859 = vmatpush2.bf16.msra.mxu0 0
      %2860 = vmatprep.subr.bf16.mxu0 0
      %2861 = vmatpush2.bf16.msra.mxu0 0
      %2862 = vmatprep.subr.bf16.mxu0 0
      %2863 = vmatpush2.bf16.msra.mxu0 0
      %2864 = vmatprep.mubr.bf16.mxu0 0
      %2865 = vmatmul.mubr.bf16.gmra.mxu0 %v2830
      %v2866 = vpop.f32.mrf.mxu0
      %v2867 = vadd.f32 0.0, %v2866
      %v2868 = vpop.f32.mrf.mxu0
      %v2869 = vpop.f32.mrf.mxu0
      %v2870 = vpop.f32.mrf.mxu0
      %2871 = vdwg.mxu0
      %v2872 = vadd.f32 %v2782, %v2867
      %v2873 = vadd.f32 %v2872, %v513
      %v2874 = vmax.f32 %v2873, 0.0
      %v2875 = vpack.c.bf16 %v2874, %v2874
      %s2876 = scalar_lea.vmem %s170, 28
      %2877 = vst [vmem:[%s2876] sm:$0xf] %v2875
      %p2878 = scmp.lt.s32.totalorder %s14, 1
      %s2879 = scalar_select %p2878, %s14, 1
      %s2880 = smul.addr %s2879, 8
      %s2881 = smul.addr %s2880, 4
      %s2882 = scalar_lea.vmem %s3, %s2881
      // Predicated region
      $region33: #{c51_forward.4} parent=31 // pred_check
        %p2883 = pneg %p100
      $region34: #{c51_forward.4} parent=31 // pred_check_branch
        %2885 = sbr.rel (%p2883) target = $region36
      $region35: #{c51_forward.4} parent=31 // pred_region
        _
      $region36: #{c51_forward.4} parent=31 // pred_fallthru
        _
    $region32: #{c51_forward.4} parent=5 // pred_fallthru
      _
    %p2886 = scmp.le.s32.totalorder 2, %s9
    // Predicated region
    $region37: #{c51_forward.4} parent=5 // pred_check
      %p2887 = pneg %p2886
    $region38: #{c51_forward.4} parent=5 // pred_check_branch
      %2889 = sbr.rel (%p2887) target = $region40
    $region39: #{c51_forward.4} parent=5 // pred_region
      %s2890 = ssub.s32 %s9, 2
      // Predicated region
      $region41: #{c51_forward.4} parent=39 // pred_check
        %p2891 = pneg %p106
      $region42: #{c51_forward.4} parent=39 // pred_check_branch
        %2893 = sbr.rel (%p2891) target = $region44
      $region43: #{c51_forward.4} parent=39 // pred_region
        %p2894 = scmp.lt.s32.totalorder %s15, 1
        %s2895 = scalar_select %p2894, %s15, 1
        %s2896 = smul.addr %s2895, 8
        %s2897 = smul.addr %s2896, 4
        %s2898 = scalar_lea.vmem %s3, %s2897
      $region44: #{c51_forward.4} parent=39 // pred_fallthru
        _
    $region40: #{c51_forward.4} parent=5 // pred_fallthru
      _
  $region6: #{c51_forward.4} parent=0 // loop_footer
    %s13 = sadd.s32 1, %s9
  $region7: #{c51_forward.4} parent=0 // loop_footer_branch
    %8 = sbr.rel target = $region3
  $region8: #{c51_forward.4} parent=0 // loop_exit
    _

// kernel: c51_forward.6
$region0: #{c51_forward.6}
  #allocation0 [shape = 'u32[]', space=smem, size = 0x4, offset = 0x4, fixed_abs, tag = 'smem constant byte address 0x4 - core index']
  #allocation1 [shape = 'u32[144,128]{1,0:T(1,128)}', space=vmem, size = 0x12000, scoped, tag = 'internal scratch']
  %s0 = inlined_call_operand.vmem [shape: bf16[2,3,3,128], index: 0, kind: input, shape index: {}]
  %s1 = inlined_call_operand.vmem [shape: bf16[9,128,128], index: 1, kind: input, shape index: {}]
  %s2 = inlined_call_operand.vmem [shape: f32[1,128], index: 2, kind: input, shape index: {}]
  %s3 = inlined_call_operand.vmem [shape: bf16[2,1,1,128], index: 3, kind: output, shape index: {}]
  %s4 = sld [smem:[#allocation0]]
  $region45: #{c51_forward.6} parent=0
    _
  %s6 = ssub.s32 1, %s4
  %s7 = scalar_select 0, %s6, %s4
  loop: start=0, step=1, limit=4
  $region2: #{c51_forward.6} parent=0 // loop_pre_header
    _
  $region3: #{c51_forward.6} parent=0 // loop_header
    %s9 = sphi 0, %s13
    %p10 = scmp.ge.s32.totalorder %s9, 4
    %s19 = sphi 0, %s21
    %s22 = sphi 0, %s19
    %s23 = sphi 0, %s22
    %s39 = sphi 0, %s23
    %s43 = sphi 0, %s43
    %s45 = sphi 0, %s43
    %s46 = sphi 0, %s45
    %s60 = sphi 0, %s46
    %s64 = sphi 0, %s64
    %s66 = sphi 0, %s64
    %s67 = sphi 0, %s66
    %s81 = sphi 0, %s67
    %s87 = sphi 0, %s89
    %s90 = sphi 0, %s87
    %s91 = sphi 0, %s90
    %s107 = sphi 0, %s91
  $region4: #{c51_forward.6} parent=0 // loop_header_branch
    %12 = sbr.rel (%p10) target = $region8
  $region5: #{c51_forward.6} parent=0 // loop_body
    %s14 = ssub.s32 %s9, 1
    %s15 = ssub.s32 %s9, 2
    %s16 = sadd.s32 %s9, 1
    %s17 = ssub.s32 %s9, %s16
    %p18 = scmp.eq.s32.totalorder %s17, 0
    %s20 = sadd.s32 %s19, 1
    %s21 = scalar_select %p18, %s19, %s20
    %p24 = pneg %p18
    %p25 = scmp.eq.s32.totalorder %s9, 1
    %p26 = por %p24, %p25
    %p27 = scmp.ne.s32.totalorder %s19, %s22
    %p28 = scmp.eq.s32.totalorder %s9, 0
    %p29 = por %p27, %p28
    %p30 = scmp.ne.s32.totalorder %s19, %s22
    %p31 = scmp.eq.s32.totalorder %s14, 1
    %p32 = por %p30, %p31
    %p33 = scmp.ne.s32.totalorder %s22, %s23
    %p34 = scmp.eq.s32.totalorder %s14, 0
    %p35 = por %p33, %p34
    %p36 = scmp.ne.s32.totalorder %s22, %s23
    %p37 = scmp.eq.s32.totalorder %s15, 1
    %p38 = por %p36, %p37
    %p40 = scmp.ne.s32.totalorder %s23, %s39
    %p41 = scmp.eq.s32.totalorder %s15, 0
    %p42 = por %p40, %p41
    %s44 = sadd.s32 %s43, 1
    %p47 = scmp.eq.s32.totalorder %s9, 1
    %p48 = scmp.ne.s32.totalorder %s43, %s45
    %p49 = scmp.eq.s32.totalorder %s9, 0
    %p50 = por %p48, %p49
    %p51 = scmp.ne.s32.totalorder %s43, %s45
    %p52 = scmp.eq.s32.totalorder %s14, 1
    %p53 = por %p51, %p52
    %p54 = scmp.ne.s32.totalorder %s45, %s46
    %p55 = scmp.eq.s32.totalorder %s14, 0
    %p56 = por %p54, %p55
    %p57 = scmp.ne.s32.totalorder %s45, %s46
    %p58 = scmp.eq.s32.totalorder %s15, 1
    %p59 = por %p57, %p58
    %p61 = scmp.ne.s32.totalorder %s46, %s60
    %p62 = scmp.eq.s32.totalorder %s15, 0
    %p63 = por %p61, %p62
    %s65 = sadd.s32 %s64, 1
    %p68 = scmp.eq.s32.totalorder %s9, 1
    %p69 = scmp.ne.s32.totalorder %s64, %s66
    %p70 = scmp.eq.s32.totalorder %s9, 0
    %p71 = por %p69, %p70
    %p72 = scmp.ne.s32.totalorder %s64, %s66
    %p73 = scmp.eq.s32.totalorder %s14, 1
    %p74 = por %p72, %p73
    %p75 = scmp.ne.s32.totalorder %s66, %s67
    %p76 = scmp.eq.s32.totalorder %s14, 0
    %p77 = por %p75, %p76
    %p78 = scmp.ne.s32.totalorder %s66, %s67
    %p79 = scmp.eq.s32.totalorder %s15, 1
    %p80 = por %p78, %p79
    %p82 = scmp.ne.s32.totalorder %s67, %s81
    %p83 = scmp.eq.s32.totalorder %s15, 0
    %p84 = por %p82, %p83
    %s85 = ssub.s32 %s9, %s16
    %p86 = scmp.eq.s32.totalorder %s85, 0
    %s88 = sadd.s32 %s87, 1
    %s89 = scalar_select %p86, %s87, %s88
    %p92 = pneg %p86
    %p93 = scmp.eq.s32.totalorder %s9, 1
    %p94 = por %p92, %p93
    %p95 = scmp.ne.s32.totalorder %s87, %s90
    %p96 = scmp.eq.s32.totalorder %s9, 0
    %p97 = por %p95, %p96
    %p98 = scmp.ne.s32.totalorder %s87, %s90
    %p99 = scmp.eq.s32.totalorder %s14, 1
    %p100 = por %p98, %p99
    %p101 = scmp.ne.s32.totalorder %s90, %s91
    %p102 = scmp.eq.s32.totalorder %s14, 0
    %p103 = por %p101, %p102
    %p104 = scmp.ne.s32.totalorder %s90, %s91
    %p105 = scmp.eq.s32.totalorder %s15, 1
    %p106 = por %p104, %p105
    %p108 = scmp.ne.s32.totalorder %s91, %s107
    %p109 = scmp.eq.s32.totalorder %s15, 0
    %p110 = por %p108, %p109
    %p111 = scmp.le.s32.totalorder 1, %s9
    %p112 = scmp.lt.s32.totalorder %s9, 3
    %p113 = pnand %p111, %p112
    %p114 = pneg %p113
    // Predicated region
    $region9: #{c51_forward.6} parent=5 // pred_check
      _
    $region10: #{c51_forward.6} parent=5 // pred_check_branch
      %116 = sbr.rel (%p113) target = $region12
    $region11: #{c51_forward.6} parent=5 // pred_region
      %s117 = ssub.s32 %s9, 1
      // Predicated region
      $region13: #{c51_forward.6} parent=11 // pred_check
        %p118 = pneg %p56
      $region14: #{c51_forward.6} parent=11 // pred_check_branch
        %120 = sbr.rel (%p118) target = $region16
      $region15: #{c51_forward.6} parent=11 // pred_region
        _
      $region16: #{c51_forward.6} parent=11 // pred_fallthru
        _
      // Predicated region
      $region17: #{c51_forward.6} parent=11 // pred_check
        %p121 = pneg %p77
      $region18: #{c51_forward.6} parent=11 // pred_check_branch
        %123 = sbr.rel (%p121) target = $region20
      $region19: #{c51_forward.6} parent=11 // pred_region
        _
      $region20: #{c51_forward.6} parent=11 // pred_fallthru
        _
    $region12: #{c51_forward.6} parent=5 // pred_fallthru
      _
    %p124 = scmp.lt.s32.totalorder %s9, 2
    // Predicated region
    $region21: #{c51_forward.6} parent=5 // pred_check
      %p125 = pneg %p124
    $region22: #{c51_forward.6} parent=5 // pred_check_branch
      %127 = sbr.rel (%p125) target = $region24
    $region23: #{c51_forward.6} parent=5 // pred_region
      // Predicated region
      $region25: #{c51_forward.6} parent=23 // pred_check
        %p128 = pneg %p29
      $region26: #{c51_forward.6} parent=23 // pred_check_branch
        %130 = sbr.rel (%p128) target = $region28
      $region27: #{c51_forward.6} parent=23 // pred_region
        %p131 = scmp.lt.s32.totalorder %s9, 1
        %s132 = scalar_select %p131, %s9, 1
        %s133 = smul.addr %s132, 3
        %s134 = smul.addr %s133, 2
        %s135 = scalar_lea.vmem %s0, %s134
      $region28: #{c51_forward.6} parent=23 // pred_fallthru
        _
    $region24: #{c51_forward.6} parent=5 // pred_fallthru
      _
    %p136 = scmp.le.s32.totalorder 1, %s9
    %p137 = scmp.lt.s32.totalorder %s9, 3
    %p138 = pnand %p136, %p137
    %p139 = pneg %p138
    // Predicated region
    $region29: #{c51_forward.6} parent=5 // pred_check
      _
    $region30: #{c51_forward.6} parent=5 // pred_check_branch
      %141 = sbr.rel (%p138) target = $region32
    $region31: #{c51_forward.6} parent=5 // pred_region
      %s142 = ssub.s32 %s9, 1
      %p143 = scmp.lt.s32.totalorder %s14, 1
      %s144 = scalar_select %p143, %s14, 1
      %s145 = smul.addr %s144, 3
      %s146 = smul.addr %s145, 2
      %s147 = scalar_lea.vmem %s0, %s146
      %p148 = pneg %p35
      %p149 = pneg %p32
      %p150 = pneg %p56
      %p151 = pneg %p53
      %p152 = pneg %p77
      %p153 = pneg %p74
      %p154 = pneg %p103
      %p155 = pneg %p100
      %p156 = scmp.lt.s32.totalorder %s14, 1
      %s157 = scalar_select %p156, %s14, 1
      %s158 = scalar_lea.vmem %s3, %s157
      %p159 = scmp.lt.s32.totalorder %s14, 1
      %s160 = scalar_select %p159, %s14, 1
      %s161 = smul.addr %s160, 3
      %s162 = smul.addr %s161, 2
      %s163 = scalar_lea.vmem %s0, %s162
      %p164 = scmp.lt.s32.totalorder %s14, 1
      %s165 = scalar_select %p164, %s14, 1
      %s166 = scalar_lea.vmem %s3, %s165
      %v168 = vld [vmem:[%s2] sm:$0x1]
      %v169 = vld [vmem:[%s163] sm:$0x1]
      %v170 = vld [vmem:[%s1] sm:$0xf]
      %v171 = vld [vmem:[%s1 + $0x4] sm:$0xf]
      %v172 = vld [vmem:[%s1 + $0x8] sm:$0xf]
      %v173 = vld [vmem:[%s1 + $0xc] sm:$0xf]
      %v174 = vld [vmem:[%s1 + $0x10] sm:$0xf]
      %v175 = vld [vmem:[%s1 + $0x14] sm:$0xf]
      %v176 = vld [vmem:[%s1 + $0x18] sm:$0xf]
      %v177 = vld [vmem:[%s1 + $0x1c] sm:$0xf]
      %v178 = vld [vmem:[%s1 + $0x20] sm:$0xf]
      %v179 = vld [vmem:[%s1 + $0x24] sm:$0xf]
      %v180 = vld [vmem:[%s1 + $0x28] sm:$0xf]
      %v181 = vld [vmem:[%s1 + $0x2c] sm:$0xf]
      %v182 = vld [vmem:[%s1 + $0x30] sm:$0xf]
      %v183 = vld [vmem:[%s1 + $0x34] sm:$0xf]
      %v184 = vld [vmem:[%s1 + $0x38] sm:$0xf]
      %v185 = vld [vmem:[%s1 + $0x3c] sm:$0xf]
      %s186 = scalar_lea.vmem %s1, 64
      %v187 = vld [vmem:[%s186] sm:$0xf]
      %v188 = vld [vmem:[%s186 + $0x4] sm:$0xf]
      %v189 = vld [vmem:[%s186 + $0x8] sm:$0xf]
      %v190 = vld [vmem:[%s186 + $0xc] sm:$0xf]
      %v191 = vld [vmem:[%s186 + $0x10] sm:$0xf]
      %v192 = vld [vmem:[%s186 + $0x14] sm:$0xf]
      %v193 = vld [vmem:[%s186 + $0x18] sm:$0xf]
      %v194 = vld [vmem:[%s186 + $0x1c] sm:$0xf]
      %v195 = vld [vmem:[%s186 + $0x20] sm:$0xf]
      %v196 = vld [vmem:[%s186 + $0x24] sm:$0xf]
      %v197 = vld [vmem:[%s186 + $0x28] sm:$0xf]
      %v198 = vld [vmem:[%s186 + $0x2c] sm:$0xf]
      %v199 = vld [vmem:[%s186 + $0x30] sm:$0xf]
      %v200 = vld [vmem:[%s186 + $0x34] sm:$0xf]
      %v201 = vld [vmem:[%s186 + $0x38] sm:$0xf]
      %v202 = vld [vmem:[%s186 + $0x3c] sm:$0xf]
      %v205 = vunpack.c.l.s4 1983009808
      %v206 = vunpack.c.0.s8 %v205
      %v207 = vlaneseq
      %v208 = vshrl.u32 %v207, 7
      %v209 = vsub.s32 %v206, %v208
      %v210 = vrot.slane %v169, %v209
      %v212 = vshrl.u32 %v210, 16
      %v231 = vunpack.c.l.b16 %v187
      %v232 = vunpack.c.l.b16 %v188
      %v233 = vunpack.c.l.b16 %v189
      %v234 = vunpack.c.l.b16 %v190
      %v235 = vunpack.c.l.b16 %v191
      %v236 = vunpack.c.l.b16 %v192
      %v237 = vunpack.c.l.b16 %v193
      %v238 = vunpack.c.l.b16 %v194
      %v239 = vunpack.c.l.b16 %v195
      %v240 = vunpack.c.l.b16 %v196
      %v241 = vunpack.c.l.b16 %v197
      %v242 = vunpack.c.l.b16 %v198
      %v243 = vunpack.c.l.b16 %v199
      %v244 = vunpack.c.l.b16 %v200
      %v245 = vunpack.c.l.b16 %v201
      %v246 = vunpack.c.l.b16 %v202
      %v247 = vpack.c.b16 %v232, %v231
      %v248 = vpack.c.b16 %v234, %v233
      %v249 = vpack.c.b16 %v236, %v235
      %v250 = vpack.c.b16 %v238, %v237
      %v251 = vpack.c.b16 %v240, %v239
      %v252 = vpack.c.b16 %v242, %v241
      %v253 = vpack.c.b16 %v244, %v243
      %v254 = vpack.c.b16 %v246, %v245
      %263 = vmatprep.subr.bf16.mxu0 0
      %264 = vmatpush1.bf16.msra.mxu0 %v254
      %265 = vmatprep.subr.bf16.mxu0 0
      %266 = vmatpush1.bf16.msra.mxu0 %v253
      %267 = vmatprep.subr.bf16.mxu0 0
      %268 = vmatpush1.bf16.msra.mxu0 %v252
      %269 = vmatprep.subr.bf16.mxu0 0
      %270 = vmatpush1.bf16.msra.mxu0 %v251
      %271 = vmatprep.subr.bf16.mxu0 0
      %272 = vmatpush1.bf16.msra.mxu0 %v250
      %273 = vmatprep.subr.bf16.mxu0 0
      %274 = vmatpush1.bf16.msra.mxu0 %v249
      %275 = vmatprep.subr.bf16.mxu0 0
      %276 = vmatpush1.bf16.msra.mxu0 %v248
      %277 = vmatprep.subr.bf16.mxu0 0
      %278 = vmatpush1.bf16.msra.mxu0 %v247
      %279 = vmatprep.subr.bf16.mxu0 0
      %280 = vmatpush2.bf16.msra.mxu0 0
      %281 = vmatprep.subr.bf16.mxu0 0
      %282 = vmatpush2.bf16.msra.mxu0 0
      %283 = vmatprep.subr.bf16.mxu0 0
      %284 = vmatpush2.bf16.msra.mxu0 0
      %285 = vmatprep.subr.bf16.mxu0 0
      %286 = vmatpush2.bf16.msra.mxu0 0
      %287 = vmatprep.subr.bf16.mxu0 0
      %288 = vmatpush2.bf16.msra.mxu0 0
      %289 = vmatprep.subr.bf16.mxu0 0
      %290 = vmatpush2.bf16.msra.mxu0 0
      %291 = vmatprep.subr.bf16.mxu0 0
      %292 = vmatpush2.bf16.msra.mxu0 0
      %293 = vmatprep.subr.bf16.mxu0 0
      %294 = vmatpush2.bf16.msra.mxu0 0
      %295 = vmatprep.mubr.bf16.mxu0 0
      %296 = vmatmul.mubr.bf16.gmra.mxu0 %v212
      %v297 = vpop.f32.mrf.mxu0
      %v298 = vadd.f32 0.0, %v297
      %v299 = vpop.f32.mrf.mxu0
      %v300 = vpop.f32.mrf.mxu0
      %v301 = vpop.f32.mrf.mxu0
      %302 = vdwg.mxu0
      %v319 = vunpack.c.l.b16 %v170
      %v320 = vunpack.c.l.b16 %v171
      %v321 = vunpack.c.l.b16 %v172
      %v322 = vunpack.c.l.b16 %v173
      %v323 = vunpack.c.l.b16 %v174
      %v324 = vunpack.c.l.b16 %v175
      %v325 = vunpack.c.l.b16 %v176
      %v326 = vunpack.c.l.b16 %v177
      %v327 = vunpack.c.l.b16 %v178
      %v328 = vunpack.c.l.b16 %v179
      %v329 = vunpack.c.l.b16 %v180
      %v330 = vunpack.c.l.b16 %v181
      %v331 = vunpack.c.l.b16 %v182
      %v332 = vunpack.c.l.b16 %v183
      %v333 = vunpack.c.l.b16 %v184
      %v334 = vunpack.c.l.b16 %v185
      %v335 = vpack.c.b16 %v320, %v319
      %v336 = vpack.c.b16 %v322, %v321
      %v337 = vpack.c.b16 %v324, %v323
      %v338 = vpack.c.b16 %v326, %v325
      %v339 = vpack.c.b16 %v328, %v327
      %v340 = vpack.c.b16 %v330, %v329
      %v341 = vpack.c.b16 %v332, %v331
      %v342 = vpack.c.b16 %v334, %v333
      %351 = vmatprep.subr.bf16.mxu0 0
      %352 = vmatpush1.bf16.msra.mxu0 %v342
      %353 = vmatprep.subr.bf16.mxu0 0
      %354 = vmatpush1.bf16.msra.mxu0 %v341
      %355 = vmatprep.subr.bf16.mxu0 0
      %356 = vmatpush1.bf16.msra.mxu0 %v340
      %357 = vmatprep.subr.bf16.mxu0 0
      %358 = vmatpush1.bf16.msra.mxu0 %v339
      %359 = vmatprep.subr.bf16.mxu0 0
      %360 = vmatpush1.bf16.msra.mxu0 %v338
      %361 = vmatprep.subr.bf16.mxu0 0
      %362 = vmatpush1.bf16.msra.mxu0 %v337
      %363 = vmatprep.subr.bf16.mxu0 0
      %364 = vmatpush1.bf16.msra.mxu0 %v336
      %365 = vmatprep.subr.bf16.mxu0 0
      %366 = vmatpush1.bf16.msra.mxu0 %v335
      %367 = vmatprep.subr.bf16.mxu0 0
      %368 = vmatpush2.bf16.msra.mxu0 0
      %369 = vmatprep.subr.bf16.mxu0 0
      %370 = vmatpush2.bf16.msra.mxu0 0
      %371 = vmatprep.subr.bf16.mxu0 0
      %372 = vmatpush2.bf16.msra.mxu0 0
      %373 = vmatprep.subr.bf16.mxu0 0
      %374 = vmatpush2.bf16.msra.mxu0 0
      %375 = vmatprep.subr.bf16.mxu0 0
      %376 = vmatpush2.bf16.msra.mxu0 0
      %377 = vmatprep.subr.bf16.mxu0 0
      %378 = vmatpush2.bf16.msra.mxu0 0
      %379 = vmatprep.subr.bf16.mxu0 0
      %380 = vmatpush2.bf16.msra.mxu0 0
      %381 = vmatprep.subr.bf16.mxu0 0
      %382 = vmatpush2.bf16.msra.mxu0 0
      %383 = vmatprep.mubr.bf16.mxu0 0
      %384 = vmatmul.mubr.bf16.gmra.mxu0 %v169
      %v385 = vpop.f32.mrf.mxu0
      %v386 = vadd.f32 %v298, %v385
      %v387 = vpop.f32.mrf.mxu0
      %v388 = vpop.f32.mrf.mxu0
      %v389 = vpop.f32.mrf.mxu0
      %390 = vdwg.mxu0
      %v391 = vld [vmem:[%s163] sm:$0x2]
      %s392 = scalar_lea.vmem %s1, 128
      %v393 = vld [vmem:[%s392] sm:$0xf]
      %v394 = vld [vmem:[%s392 + $0x4] sm:$0xf]
      %v395 = vld [vmem:[%s392 + $0x8] sm:$0xf]
      %v396 = vld [vmem:[%s392 + $0xc] sm:$0xf]
      %v397 = vld [vmem:[%s392 + $0x10] sm:$0xf]
      %v398 = vld [vmem:[%s392 + $0x14] sm:$0xf]
      %v399 = vld [vmem:[%s392 + $0x18] sm:$0xf]
      %v400 = vld [vmem:[%s392 + $0x1c] sm:$0xf]
      %v401 = vld [vmem:[%s392 + $0x20] sm:$0xf]
      %v402 = vld [vmem:[%s392 + $0x24] sm:$0xf]
      %v403 = vld [vmem:[%s392 + $0x28] sm:$0xf]
      %v404 = vld [vmem:[%s392 + $0x2c] sm:$0xf]
      %v405 = vld [vmem:[%s392 + $0x30] sm:$0xf]
      %v406 = vld [vmem:[%s392 + $0x34] sm:$0xf]
      %v407 = vld [vmem:[%s392 + $0x38] sm:$0xf]
      %v408 = vld [vmem:[%s392 + $0x3c] sm:$0xf]
      %v411 = vunpack.c.l.s4 1983009808
      %v412 = vunpack.c.0.s8 %v411
      %v413 = vlaneseq
      %v414 = vshrl.u32 %v413, 7
      %v415 = vsub.s32 %v412, %v414
      %v416 = vrot.slane %v391, %v415
      %v417 = vrot.slane %v416, 1
      %v435 = vunpack.c.l.b16 %v393
      %v436 = vunpack.c.l.b16 %v394
      %v437 = vunpack.c.l.b16 %v395
      %v438 = vunpack.c.l.b16 %v396
      %v439 = vunpack.c.l.b16 %v397
      %v440 = vunpack.c.l.b16 %v398
      %v441 = vunpack.c.l.b16 %v399
      %v442 = vunpack.c.l.b16 %v400
      %v443 = vunpack.c.l.b16 %v401
      %v444 = vunpack.c.l.b16 %v402
      %v445 = vunpack.c.l.b16 %v403
      %v446 = vunpack.c.l.b16 %v404
      %v447 = vunpack.c.l.b16 %v405
      %v448 = vunpack.c.l.b16 %v406
      %v449 = vunpack.c.l.b16 %v407
      %v450 = vunpack.c.l.b16 %v408
      %v451 = vpack.c.b16 %v436, %v435
      %v452 = vpack.c.b16 %v438, %v437
      %v453 = vpack.c.b16 %v440, %v439
      %v454 = vpack.c.b16 %v442, %v441
      %v455 = vpack.c.b16 %v444, %v443
      %v456 = vpack.c.b16 %v446, %v445
      %v457 = vpack.c.b16 %v448, %v447
      %v458 = vpack.c.b16 %v450, %v449
      %467 = vmatprep.subr.bf16.mxu0 0
      %468 = vmatpush1.bf16.msra.mxu0 %v458
      %469 = vmatprep.subr.bf16.mxu0 0
      %470 = vmatpush1.bf16.msra.mxu0 %v457
      %471 = vmatprep.subr.bf16.mxu0 0
      %472 = vmatpush1.bf16.msra.mxu0 %v456
      %473 = vmatprep.subr.bf16.mxu0 0
      %474 = vmatpush1.bf16.msra.mxu0 %v455
      %475 = vmatprep.subr.bf16.mxu0 0
      %476 = vmatpush1.bf16.msra.mxu0 %v454
      %477 = vmatprep.subr.bf16.mxu0 0
      %478 = vmatpush1.bf16.msra.mxu0 %v453
      %479 = vmatprep.subr.bf16.mxu0 0
      %480 = vmatpush1.bf16.msra.mxu0 %v452
      %481 = vmatprep.subr.bf16.mxu0 0
      %482 = vmatpush1.bf16.msra.mxu0 %v451
      %483 = vmatprep.subr.bf16.mxu0 0
      %484 = vmatpush2.bf16.msra.mxu0 0
      %485 = vmatprep.subr.bf16.mxu0 0
      %486 = vmatpush2.bf16.msra.mxu0 0
      %487 = vmatprep.subr.bf16.mxu0 0
      %488 = vmatpush2.bf16.msra.mxu0 0
      %489 = vmatprep.subr.bf16.mxu0 0
      %490 = vmatpush2.bf16.msra.mxu0 0
      %491 = vmatprep.subr.bf16.mxu0 0
      %492 = vmatpush2.bf16.msra.mxu0 0
      %493 = vmatprep.subr.bf16.mxu0 0
      %494 = vmatpush2.bf16.msra.mxu0 0
      %495 = vmatprep.subr.bf16.mxu0 0
      %496 = vmatpush2.bf16.msra.mxu0 0
      %497 = vmatprep.subr.bf16.mxu0 0
      %498 = vmatpush2.bf16.msra.mxu0 0
      %499 = vmatprep.mubr.bf16.mxu0 0
      %500 = vmatmul.mubr.bf16.gmra.mxu0 %v417
      %v501 = vpop.f32.mrf.mxu0
      %v502 = vadd.f32 0.0, %v501
      %v503 = vpop.f32.mrf.mxu0
      %v504 = vpop.f32.mrf.mxu0
      %v505 = vpop.f32.mrf.mxu0
      %506 = vdwg.mxu0
      %v507 = vadd.f32 %v386, %v502
      %s508 = scalar_lea.vmem %s163, 2
      %v509 = vld [vmem:[%s508] sm:$0x1]
      %s510 = scalar_lea.vmem %s1, 192
      %v511 = vld [vmem:[%s510] sm:$0xf]
      %v512 = vld [vmem:[%s510 + $0x4] sm:$0xf]
      %v513 = vld [vmem:[%s510 + $0x8] sm:$0xf]
      %v514 = vld [vmem:[%s510 + $0xc] sm:$0xf]
      %v515 = vld [vmem:[%s510 + $0x10] sm:$0xf]
      %v516 = vld [vmem:[%s510 + $0x14] sm:$0xf]
      %v517 = vld [vmem:[%s510 + $0x18] sm:$0xf]
      %v518 = vld [vmem:[%s510 + $0x1c] sm:$0xf]
      %v519 = vld [vmem:[%s510 + $0x20] sm:$0xf]
      %v520 = vld [vmem:[%s510 + $0x24] sm:$0xf]
      %v521 = vld [vmem:[%s510 + $0x28] sm:$0xf]
      %v522 = vld [vmem:[%s510 + $0x2c] sm:$0xf]
      %v523 = vld [vmem:[%s510 + $0x30] sm:$0xf]
      %v524 = vld [vmem:[%s510 + $0x34] sm:$0xf]
      %v525 = vld [vmem:[%s510 + $0x38] sm:$0xf]
      %v526 = vld [vmem:[%s510 + $0x3c] sm:$0xf]
      %v543 = vunpack.c.l.b16 %v511
      %v544 = vunpack.c.l.b16 %v512
      %v545 = vunpack.c.l.b16 %v513
      %v546 = vunpack.c.l.b16 %v514
      %v547 = vunpack.c.l.b16 %v515
      %v548 = vunpack.c.l.b16 %v516
      %v549 = vunpack.c.l.b16 %v517
      %v550 = vunpack.c.l.b16 %v518
      %v551 = vunpack.c.l.b16 %v519
      %v552 = vunpack.c.l.b16 %v520
      %v553 = vunpack.c.l.b16 %v521
      %v554 = vunpack.c.l.b16 %v522
      %v555 = vunpack.c.l.b16 %v523
      %v556 = vunpack.c.l.b16 %v524
      %v557 = vunpack.c.l.b16 %v525
      %v558 = vunpack.c.l.b16 %v526
      %v559 = vpack.c.b16 %v544, %v543
      %v560 = vpack.c.b16 %v546, %v545
      %v561 = vpack.c.b16 %v548, %v547
      %v562 = vpack.c.b16 %v550, %v549
      %v563 = vpack.c.b16 %v552, %v551
      %v564 = vpack.c.b16 %v554, %v553
      %v565 = vpack.c.b16 %v556, %v555
      %v566 = vpack.c.b16 %v558, %v557
      %575 = vmatprep.subr.bf16.mxu0 0
      %576 = vmatpush1.bf16.msra.mxu0 %v566
      %577 = vmatprep.subr.bf16.mxu0 0
      %578 = vmatpush1.bf16.msra.mxu0 %v565
      %579 = vmatprep.subr.bf16.mxu0 0
      %580 = vmatpush1.bf16.msra.mxu0 %v564
      %581 = vmatprep.subr.bf16.mxu0 0
      %582 = vmatpush1.bf16.msra.mxu0 %v563
      %583 = vmatprep.subr.bf16.mxu0 0
      %584 = vmatpush1.bf16.msra.mxu0 %v562
      %585 = vmatprep.subr.bf16.mxu0 0
      %586 = vmatpush1.bf16.msra.mxu0 %v561
      %587 = vmatprep.subr.bf16.mxu0 0
      %588 = vmatpush1.bf16.msra.mxu0 %v560
      %589 = vmatprep.subr.bf16.mxu0 0
      %590 = vmatpush1.bf16.msra.mxu0 %v559
      %591 = vmatprep.subr.bf16.mxu0 0
      %592 = vmatpush2.bf16.msra.mxu0 0
      %593 = vmatprep.subr.bf16.mxu0 0
      %594 = vmatpush2.bf16.msra.mxu0 0
      %595 = vmatprep.subr.bf16.mxu0 0
      %596 = vmatpush2.bf16.msra.mxu0 0
      %597 = vmatprep.subr.bf16.mxu0 0
      %598 = vmatpush2.bf16.msra.mxu0 0
      %599 = vmatprep.subr.bf16.mxu0 0
      %600 = vmatpush2.bf16.msra.mxu0 0
      %601 = vmatprep.subr.bf16.mxu0 0
      %602 = vmatpush2.bf16.msra.mxu0 0
      %603 = vmatprep.subr.bf16.mxu0 0
      %604 = vmatpush2.bf16.msra.mxu0 0
      %605 = vmatprep.subr.bf16.mxu0 0
      %606 = vmatpush2.bf16.msra.mxu0 0
      %607 = vmatprep.mubr.bf16.mxu0 0
      %608 = vmatmul.mubr.bf16.gmra.mxu0 %v509
      %v609 = vpop.f32.mrf.mxu0
      %v610 = vadd.f32 0.0, %v609
      %v611 = vpop.f32.mrf.mxu0
      %v612 = vpop.f32.mrf.mxu0
      %v613 = vpop.f32.mrf.mxu0
      %614 = vdwg.mxu0
      %v615 = vadd.f32 %v507, %v610
      %s616 = scalar_lea.vmem %s1, 256
      %v617 = vld [vmem:[%s616] sm:$0xf]
      %v618 = vld [vmem:[%s616 + $0x4] sm:$0xf]
      %v619 = vld [vmem:[%s616 + $0x8] sm:$0xf]
      %v620 = vld [vmem:[%s616 + $0xc] sm:$0xf]
      %v621 = vld [vmem:[%s616 + $0x10] sm:$0xf]
      %v622 = vld [vmem:[%s616 + $0x14] sm:$0xf]
      %v623 = vld [vmem:[%s616 + $0x18] sm:$0xf]
      %v624 = vld [vmem:[%s616 + $0x1c] sm:$0xf]
      %v625 = vld [vmem:[%s616 + $0x20] sm:$0xf]
      %v626 = vld [vmem:[%s616 + $0x24] sm:$0xf]
      %v627 = vld [vmem:[%s616 + $0x28] sm:$0xf]
      %v628 = vld [vmem:[%s616 + $0x2c] sm:$0xf]
      %v629 = vld [vmem:[%s616 + $0x30] sm:$0xf]
      %v630 = vld [vmem:[%s616 + $0x34] sm:$0xf]
      %v631 = vld [vmem:[%s616 + $0x38] sm:$0xf]
      %v632 = vld [vmem:[%s616 + $0x3c] sm:$0xf]
      %v635 = vunpack.c.l.s4 1983009808
      %v636 = vunpack.c.0.s8 %v635
      %v637 = vlaneseq
      %v638 = vshrl.u32 %v637, 7
      %v639 = vsub.s32 %v636, %v638
      %v640 = vrot.slane %v509, %v639
      %v642 = vshrl.u32 %v640, 16
      %v661 = vunpack.c.l.b16 %v617
      %v662 = vunpack.c.l.b16 %v618
      %v663 = vunpack.c.l.b16 %v619
      %v664 = vunpack.c.l.b16 %v620
      %v665 = vunpack.c.l.b16 %v621
      %v666 = vunpack.c.l.b16 %v622
      %v667 = vunpack.c.l.b16 %v623
      %v668 = vunpack.c.l.b16 %v624
      %v669 = vunpack.c.l.b16 %v625
      %v670 = vunpack.c.l.b16 %v626
      %v671 = vunpack.c.l.b16 %v627
      %v672 = vunpack.c.l.b16 %v628
      %v673 = vunpack.c.l.b16 %v629
      %v674 = vunpack.c.l.b16 %v630
      %v675 = vunpack.c.l.b16 %v631
      %v676 = vunpack.c.l.b16 %v632
      %v677 = vpack.c.b16 %v662, %v661
      %v678 = vpack.c.b16 %v664, %v663
      %v679 = vpack.c.b16 %v666, %v665
      %v680 = vpack.c.b16 %v668, %v667
      %v681 = vpack.c.b16 %v670, %v669
      %v682 = vpack.c.b16 %v672, %v671
      %v683 = vpack.c.b16 %v674, %v673
      %v684 = vpack.c.b16 %v676, %v675
      %693 = vmatprep.subr.bf16.mxu0 0
      %694 = vmatpush1.bf16.msra.mxu0 %v684
      %695 = vmatprep.subr.bf16.mxu0 0
      %696 = vmatpush1.bf16.msra.mxu0 %v683
      %697 = vmatprep.subr.bf16.mxu0 0
      %698 = vmatpush1.bf16.msra.mxu0 %v682
      %699 = vmatprep.subr.bf16.mxu0 0
      %700 = vmatpush1.bf16.msra.mxu0 %v681
      %701 = vmatprep.subr.bf16.mxu0 0
      %702 = vmatpush1.bf16.msra.mxu0 %v680
      %703 = vmatprep.subr.bf16.mxu0 0
      %704 = vmatpush1.bf16.msra.mxu0 %v679
      %705 = vmatprep.subr.bf16.mxu0 0
      %706 = vmatpush1.bf16.msra.mxu0 %v678
      %707 = vmatprep.subr.bf16.mxu0 0
      %708 = vmatpush1.bf16.msra.mxu0 %v677
      %709 = vmatprep.subr.bf16.mxu0 0
      %710 = vmatpush2.bf16.msra.mxu0 0
      %711 = vmatprep.subr.bf16.mxu0 0
      %712 = vmatpush2.bf16.msra.mxu0 0
      %713 = vmatprep.subr.bf16.mxu0 0
      %714 = vmatpush2.bf16.msra.mxu0 0
      %715 = vmatprep.subr.bf16.mxu0 0
      %716 = vmatpush2.bf16.msra.mxu0 0
      %717 = vmatprep.subr.bf16.mxu0 0
      %718 = vmatpush2.bf16.msra.mxu0 0
      %719 = vmatprep.subr.bf16.mxu0 0
      %720 = vmatpush2.bf16.msra.mxu0 0
      %721 = vmatprep.subr.bf16.mxu0 0
      %722 = vmatpush2.bf16.msra.mxu0 0
      %723 = vmatprep.subr.bf16.mxu0 0
      %724 = vmatpush2.bf16.msra.mxu0 0
      %725 = vmatprep.mubr.bf16.mxu0 0
      %726 = vmatmul.mubr.bf16.gmra.mxu0 %v642
      %v727 = vpop.f32.mrf.mxu0
      %v728 = vadd.f32 0.0, %v727
      %v729 = vpop.f32.mrf.mxu0
      %v730 = vpop.f32.mrf.mxu0
      %v731 = vpop.f32.mrf.mxu0
      %732 = vdwg.mxu0
      %v733 = vadd.f32 %v615, %v728
      %v734 = vld [vmem:[%s508] sm:$0x2]
      %s735 = scalar_lea.vmem %s1, 320
      %v736 = vld [vmem:[%s735] sm:$0xf]
      %v737 = vld [vmem:[%s735 + $0x4] sm:$0xf]
      %v738 = vld [vmem:[%s735 + $0x8] sm:$0xf]
      %v739 = vld [vmem:[%s735 + $0xc] sm:$0xf]
      %v740 = vld [vmem:[%s735 + $0x10] sm:$0xf]
      %v741 = vld [vmem:[%s735 + $0x14] sm:$0xf]
      %v742 = vld [vmem:[%s735 + $0x18] sm:$0xf]
      %v743 = vld [vmem:[%s735 + $0x1c] sm:$0xf]
      %v744 = vld [vmem:[%s735 + $0x20] sm:$0xf]
      %v745 = vld [vmem:[%s735 + $0x24] sm:$0xf]
      %v746 = vld [vmem:[%s735 + $0x28] sm:$0xf]
      %v747 = vld [vmem:[%s735 + $0x2c] sm:$0xf]
      %v748 = vld [vmem:[%s735 + $0x30] sm:$0xf]
      %v749 = vld [vmem:[%s735 + $0x34] sm:$0xf]
      %v750 = vld [vmem:[%s735 + $0x38] sm:$0xf]
      %v751 = vld [vmem:[%s735 + $0x3c] sm:$0xf]
      %v754 = vunpack.c.l.s4 1983009808
      %v755 = vunpack.c.0.s8 %v754
      %v756 = vlaneseq
      %v757 = vshrl.u32 %v756, 7
      %v758 = vsub.s32 %v755, %v757
      %v759 = vrot.slane %v734, %v758
      %v760 = vrot.slane %v759, 1
      %v778 = vunpack.c.l.b16 %v736
      %v779 = vunpack.c.l.b16 %v737
      %v780 = vunpack.c.l.b16 %v738
      %v781 = vunpack.c.l.b16 %v739
      %v782 = vunpack.c.l.b16 %v740
      %v783 = vunpack.c.l.b16 %v741
      %v784 = vunpack.c.l.b16 %v742
      %v785 = vunpack.c.l.b16 %v743
      %v786 = vunpack.c.l.b16 %v744
      %v787 = vunpack.c.l.b16 %v745
      %v788 = vunpack.c.l.b16 %v746
      %v789 = vunpack.c.l.b16 %v747
      %v790 = vunpack.c.l.b16 %v748
      %v791 = vunpack.c.l.b16 %v749
      %v792 = vunpack.c.l.b16 %v750
      %v793 = vunpack.c.l.b16 %v751
      %v794 = vpack.c.b16 %v779, %v778
      %v795 = vpack.c.b16 %v781, %v780
      %v796 = vpack.c.b16 %v783, %v782
      %v797 = vpack.c.b16 %v785, %v784
      %v798 = vpack.c.b16 %v787, %v786
      %v799 = vpack.c.b16 %v789, %v788
      %v800 = vpack.c.b16 %v791, %v790
      %v801 = vpack.c.b16 %v793, %v792
      %810 = vmatprep.subr.bf16.mxu0 0
      %811 = vmatpush1.bf16.msra.mxu0 %v801
      %812 = vmatprep.subr.bf16.mxu0 0
      %813 = vmatpush1.bf16.msra.mxu0 %v800
      %814 = vmatprep.subr.bf16.mxu0 0
      %815 = vmatpush1.bf16.msra.mxu0 %v799
      %816 = vmatprep.subr.bf16.mxu0 0
      %817 = vmatpush1.bf16.msra.mxu0 %v798
      %818 = vmatprep.subr.bf16.mxu0 0
      %819 = vmatpush1.bf16.msra.mxu0 %v797
      %820 = vmatprep.subr.bf16.mxu0 0
      %821 = vmatpush1.bf16.msra.mxu0 %v796
      %822 = vmatprep.subr.bf16.mxu0 0
      %823 = vmatpush1.bf16.msra.mxu0 %v795
      %824 = vmatprep.subr.bf16.mxu0 0
      %825 = vmatpush1.bf16.msra.mxu0 %v794
      %826 = vmatprep.subr.bf16.mxu0 0
      %827 = vmatpush2.bf16.msra.mxu0 0
      %828 = vmatprep.subr.bf16.mxu0 0
      %829 = vmatpush2.bf16.msra.mxu0 0
      %830 = vmatprep.subr.bf16.mxu0 0
      %831 = vmatpush2.bf16.msra.mxu0 0
      %832 = vmatprep.subr.bf16.mxu0 0
      %833 = vmatpush2.bf16.msra.mxu0 0
      %834 = vmatprep.subr.bf16.mxu0 0
      %835 = vmatpush2.bf16.msra.mxu0 0
      %836 = vmatprep.subr.bf16.mxu0 0
      %837 = vmatpush2.bf16.msra.mxu0 0
      %838 = vmatprep.subr.bf16.mxu0 0
      %839 = vmatpush2.bf16.msra.mxu0 0
      %840 = vmatprep.subr.bf16.mxu0 0
      %841 = vmatpush2.bf16.msra.mxu0 0
      %842 = vmatprep.mubr.bf16.mxu0 0
      %843 = vmatmul.mubr.bf16.gmra.mxu0 %v760
      %v844 = vpop.f32.mrf.mxu0
      %v845 = vadd.f32 0.0, %v844
      %v846 = vpop.f32.mrf.mxu0
      %v847 = vpop.f32.mrf.mxu0
      %v848 = vpop.f32.mrf.mxu0
      %849 = vdwg.mxu0
      %v850 = vadd.f32 %v733, %v845
      %s851 = scalar_lea.vmem %s163, 4
      %v852 = vld [vmem:[%s851] sm:$0x1]
      %s853 = scalar_lea.vmem %s1, 384
      %v854 = vld [vmem:[%s853] sm:$0xf]
      %v855 = vld [vmem:[%s853 + $0x4] sm:$0xf]
      %v856 = vld [vmem:[%s853 + $0x8] sm:$0xf]
      %v857 = vld [vmem:[%s853 + $0xc] sm:$0xf]
      %v858 = vld [vmem:[%s853 + $0x10] sm:$0xf]
      %v859 = vld [vmem:[%s853 + $0x14] sm:$0xf]
      %v860 = vld [vmem:[%s853 + $0x18] sm:$0xf]
      %v861 = vld [vmem:[%s853 + $0x1c] sm:$0xf]
      %v862 = vld [vmem:[%s853 + $0x20] sm:$0xf]
      %v863 = vld [vmem:[%s853 + $0x24] sm:$0xf]
      %v864 = vld [vmem:[%s853 + $0x28] sm:$0xf]
      %v865 = vld [vmem:[%s853 + $0x2c] sm:$0xf]
      %v866 = vld [vmem:[%s853 + $0x30] sm:$0xf]
      %v867 = vld [vmem:[%s853 + $0x34] sm:$0xf]
      %v868 = vld [vmem:[%s853 + $0x38] sm:$0xf]
      %v869 = vld [vmem:[%s853 + $0x3c] sm:$0xf]
      %v886 = vunpack.c.l.b16 %v854
      %v887 = vunpack.c.l.b16 %v855
      %v888 = vunpack.c.l.b16 %v856
      %v889 = vunpack.c.l.b16 %v857
      %v890 = vunpack.c.l.b16 %v858
      %v891 = vunpack.c.l.b16 %v859
      %v892 = vunpack.c.l.b16 %v860
      %v893 = vunpack.c.l.b16 %v861
      %v894 = vunpack.c.l.b16 %v862
      %v895 = vunpack.c.l.b16 %v863
      %v896 = vunpack.c.l.b16 %v864
      %v897 = vunpack.c.l.b16 %v865
      %v898 = vunpack.c.l.b16 %v866
      %v899 = vunpack.c.l.b16 %v867
      %v900 = vunpack.c.l.b16 %v868
      %v901 = vunpack.c.l.b16 %v869
      %v902 = vpack.c.b16 %v887, %v886
      %v903 = vpack.c.b16 %v889, %v888
      %v904 = vpack.c.b16 %v891, %v890
      %v905 = vpack.c.b16 %v893, %v892
      %v906 = vpack.c.b16 %v895, %v894
      %v907 = vpack.c.b16 %v897, %v896
      %v908 = vpack.c.b16 %v899, %v898
      %v909 = vpack.c.b16 %v901, %v900
      %918 = vmatprep.subr.bf16.mxu0 0
      %919 = vmatpush1.bf16.msra.mxu0 %v909
      %920 = vmatprep.subr.bf16.mxu0 0
      %921 = vmatpush1.bf16.msra.mxu0 %v908
      %922 = vmatprep.subr.bf16.mxu0 0
      %923 = vmatpush1.bf16.msra.mxu0 %v907
      %924 = vmatprep.subr.bf16.mxu0 0
      %925 = vmatpush1.bf16.msra.mxu0 %v906
      %926 = vmatprep.subr.bf16.mxu0 0
      %927 = vmatpush1.bf16.msra.mxu0 %v905
      %928 = vmatprep.subr.bf16.mxu0 0
      %929 = vmatpush1.bf16.msra.mxu0 %v904
      %930 = vmatprep.subr.bf16.mxu0 0
      %931 = vmatpush1.bf16.msra.mxu0 %v903
      %932 = vmatprep.subr.bf16.mxu0 0
      %933 = vmatpush1.bf16.msra.mxu0 %v902
      %934 = vmatprep.subr.bf16.mxu0 0
      %935 = vmatpush2.bf16.msra.mxu0 0
      %936 = vmatprep.subr.bf16.mxu0 0
      %937 = vmatpush2.bf16.msra.mxu0 0
      %938 = vmatprep.subr.bf16.mxu0 0
      %939 = vmatpush2.bf16.msra.mxu0 0
      %940 = vmatprep.subr.bf16.mxu0 0
      %941 = vmatpush2.bf16.msra.mxu0 0
      %942 = vmatprep.subr.bf16.mxu0 0
      %943 = vmatpush2.bf16.msra.mxu0 0
      %944 = vmatprep.subr.bf16.mxu0 0
      %945 = vmatpush2.bf16.msra.mxu0 0
      %946 = vmatprep.subr.bf16.mxu0 0
      %947 = vmatpush2.bf16.msra.mxu0 0
      %948 = vmatprep.subr.bf16.mxu0 0
      %949 = vmatpush2.bf16.msra.mxu0 0
      %950 = vmatprep.mubr.bf16.mxu0 0
      %951 = vmatmul.mubr.bf16.gmra.mxu0 %v852
      %v952 = vpop.f32.mrf.mxu0
      %v953 = vadd.f32 0.0, %v952
      %v954 = vpop.f32.mrf.mxu0
      %v955 = vpop.f32.mrf.mxu0
      %v956 = vpop.f32.mrf.mxu0
      %957 = vdwg.mxu0
      %v958 = vadd.f32 %v850, %v953
      %s959 = scalar_lea.vmem %s1, 448
      %v960 = vld [vmem:[%s959] sm:$0xf]
      %v961 = vld [vmem:[%s959 + $0x4] sm:$0xf]
      %v962 = vld [vmem:[%s959 + $0x8] sm:$0xf]
      %v963 = vld [vmem:[%s959 + $0xc] sm:$0xf]
      %v964 = vld [vmem:[%s959 + $0x10] sm:$0xf]
      %v965 = vld [vmem:[%s959 + $0x14] sm:$0xf]
      %v966 = vld [vmem:[%s959 + $0x18] sm:$0xf]
      %v967 = vld [vmem:[%s959 + $0x1c] sm:$0xf]
      %v968 = vld [vmem:[%s959 + $0x20] sm:$0xf]
      %v969 = vld [vmem:[%s959 + $0x24] sm:$0xf]
      %v970 = vld [vmem:[%s959 + $0x28] sm:$0xf]
      %v971 = vld [vmem:[%s959 + $0x2c] sm:$0xf]
      %v972 = vld [vmem:[%s959 + $0x30] sm:$0xf]
      %v973 = vld [vmem:[%s959 + $0x34] sm:$0xf]
      %v974 = vld [vmem:[%s959 + $0x38] sm:$0xf]
      %v975 = vld [vmem:[%s959 + $0x3c] sm:$0xf]
      %v978 = vunpack.c.l.s4 1983009808
      %v979 = vunpack.c.0.s8 %v978
      %v980 = vlaneseq
      %v981 = vshrl.u32 %v980, 7
      %v982 = vsub.s32 %v979, %v981
      %v983 = vrot.slane %v852, %v982
      %v985 = vshrl.u32 %v983, 16
      %v1004 = vunpack.c.l.b16 %v960
      %v1005 = vunpack.c.l.b16 %v961
      %v1006 = vunpack.c.l.b16 %v962
      %v1007 = vunpack.c.l.b16 %v963
      %v1008 = vunpack.c.l.b16 %v964
      %v1009 = vunpack.c.l.b16 %v965
      %v1010 = vunpack.c.l.b16 %v966
      %v1011 = vunpack.c.l.b16 %v967
      %v1012 = vunpack.c.l.b16 %v968
      %v1013 = vunpack.c.l.b16 %v969
      %v1014 = vunpack.c.l.b16 %v970
      %v1015 = vunpack.c.l.b16 %v971
      %v1016 = vunpack.c.l.b16 %v972
      %v1017 = vunpack.c.l.b16 %v973
      %v1018 = vunpack.c.l.b16 %v974
      %v1019 = vunpack.c.l.b16 %v975
      %v1020 = vpack.c.b16 %v1005, %v1004
      %v1021 = vpack.c.b16 %v1007, %v1006
      %v1022 = vpack.c.b16 %v1009, %v1008
      %v1023 = vpack.c.b16 %v1011, %v1010
      %v1024 = vpack.c.b16 %v1013, %v1012
      %v1025 = vpack.c.b16 %v1015, %v1014
      %v1026 = vpack.c.b16 %v1017, %v1016
      %v1027 = vpack.c.b16 %v1019, %v1018
      %1036 = vmatprep.subr.bf16.mxu0 0
      %1037 = vmatpush1.bf16.msra.mxu0 %v1027
      %1038 = vmatprep.subr.bf16.mxu0 0
      %1039 = vmatpush1.bf16.msra.mxu0 %v1026
      %1040 = vmatprep.subr.bf16.mxu0 0
      %1041 = vmatpush1.bf16.msra.mxu0 %v1025
      %1042 = vmatprep.subr.bf16.mxu0 0
      %1043 = vmatpush1.bf16.msra.mxu0 %v1024
      %1044 = vmatprep.subr.bf16.mxu0 0
      %1045 = vmatpush1.bf16.msra.mxu0 %v1023
      %1046 = vmatprep.subr.bf16.mxu0 0
      %1047 = vmatpush1.bf16.msra.mxu0 %v1022
      %1048 = vmatprep.subr.bf16.mxu0 0
      %1049 = vmatpush1.bf16.msra.mxu0 %v1021
      %1050 = vmatprep.subr.bf16.mxu0 0
      %1051 = vmatpush1.bf16.msra.mxu0 %v1020
      %1052 = vmatprep.subr.bf16.mxu0 0
      %1053 = vmatpush2.bf16.msra.mxu0 0
      %1054 = vmatprep.subr.bf16.mxu0 0
      %1055 = vmatpush2.bf16.msra.mxu0 0
      %1056 = vmatprep.subr.bf16.mxu0 0
      %1057 = vmatpush2.bf16.msra.mxu0 0
      %1058 = vmatprep.subr.bf16.mxu0 0
      %1059 = vmatpush2.bf16.msra.mxu0 0
      %1060 = vmatprep.subr.bf16.mxu0 0
      %1061 = vmatpush2.bf16.msra.mxu0 0
      %1062 = vmatprep.subr.bf16.mxu0 0
      %1063 = vmatpush2.bf16.msra.mxu0 0
      %1064 = vmatprep.subr.bf16.mxu0 0
      %1065 = vmatpush2.bf16.msra.mxu0 0
      %1066 = vmatprep.subr.bf16.mxu0 0
      %1067 = vmatpush2.bf16.msra.mxu0 0
      %1068 = vmatprep.mubr.bf16.mxu0 0
      %1069 = vmatmul.mubr.bf16.gmra.mxu0 %v985
      %v1070 = vpop.f32.mrf.mxu0
      %v1071 = vadd.f32 0.0, %v1070
      %v1072 = vpop.f32.mrf.mxu0
      %v1073 = vpop.f32.mrf.mxu0
      %v1074 = vpop.f32.mrf.mxu0
      %1075 = vdwg.mxu0
      %v1076 = vadd.f32 %v958, %v1071
      %v1077 = vld [vmem:[%s851] sm:$0x2]
      %s1078 = scalar_lea.vmem %s1, 512
      %v1079 = vld [vmem:[%s1078] sm:$0xf]
      %v1080 = vld [vmem:[%s1078 + $0x4] sm:$0xf]
      %v1081 = vld [vmem:[%s1078 + $0x8] sm:$0xf]
      %v1082 = vld [vmem:[%s1078 + $0xc] sm:$0xf]
      %v1083 = vld [vmem:[%s1078 + $0x10] sm:$0xf]
      %v1084 = vld [vmem:[%s1078 + $0x14] sm:$0xf]
      %v1085 = vld [vmem:[%s1078 + $0x18] sm:$0xf]
      %v1086 = vld [vmem:[%s1078 + $0x1c] sm:$0xf]
      %v1087 = vld [vmem:[%s1078 + $0x20] sm:$0xf]
      %v1088 = vld [vmem:[%s1078 + $0x24] sm:$0xf]
      %v1089 = vld [vmem:[%s1078 + $0x28] sm:$0xf]
      %v1090 = vld [vmem:[%s1078 + $0x2c] sm:$0xf]
      %v1091 = vld [vmem:[%s1078 + $0x30] sm:$0xf]
      %v1092 = vld [vmem:[%s1078 + $0x34] sm:$0xf]
      %v1093 = vld [vmem:[%s1078 + $0x38] sm:$0xf]
      %v1094 = vld [vmem:[%s1078 + $0x3c] sm:$0xf]
      %v1097 = vunpack.c.l.s4 1983009808
      %v1098 = vunpack.c.0.s8 %v1097
      %v1099 = vlaneseq
      %v1100 = vshrl.u32 %v1099, 7
      %v1101 = vsub.s32 %v1098, %v1100
      %v1102 = vrot.slane %v1077, %v1101
      %v1103 = vrot.slane %v1102, 1
      %v1121 = vunpack.c.l.b16 %v1079
      %v1122 = vunpack.c.l.b16 %v1080
      %v1123 = vunpack.c.l.b16 %v1081
      %v1124 = vunpack.c.l.b16 %v1082
      %v1125 = vunpack.c.l.b16 %v1083
      %v1126 = vunpack.c.l.b16 %v1084
      %v1127 = vunpack.c.l.b16 %v1085
      %v1128 = vunpack.c.l.b16 %v1086
      %v1129 = vunpack.c.l.b16 %v1087
      %v1130 = vunpack.c.l.b16 %v1088
      %v1131 = vunpack.c.l.b16 %v1089
      %v1132 = vunpack.c.l.b16 %v1090
      %v1133 = vunpack.c.l.b16 %v1091
      %v1134 = vunpack.c.l.b16 %v1092
      %v1135 = vunpack.c.l.b16 %v1093
      %v1136 = vunpack.c.l.b16 %v1094
      %v1137 = vpack.c.b16 %v1122, %v1121
      %v1138 = vpack.c.b16 %v1124, %v1123
      %v1139 = vpack.c.b16 %v1126, %v1125
      %v1140 = vpack.c.b16 %v1128, %v1127
      %v1141 = vpack.c.b16 %v1130, %v1129
      %v1142 = vpack.c.b16 %v1132, %v1131
      %v1143 = vpack.c.b16 %v1134, %v1133
      %v1144 = vpack.c.b16 %v1136, %v1135
      %1153 = vmatprep.subr.bf16.mxu0 0
      %1154 = vmatpush1.bf16.msra.mxu0 %v1144
      %1155 = vmatprep.subr.bf16.mxu0 0
      %1156 = vmatpush1.bf16.msra.mxu0 %v1143
      %1157 = vmatprep.subr.bf16.mxu0 0
      %1158 = vmatpush1.bf16.msra.mxu0 %v1142
      %1159 = vmatprep.subr.bf16.mxu0 0
      %1160 = vmatpush1.bf16.msra.mxu0 %v1141
      %1161 = vmatprep.subr.bf16.mxu0 0
      %1162 = vmatpush1.bf16.msra.mxu0 %v1140
      %1163 = vmatprep.subr.bf16.mxu0 0
      %1164 = vmatpush1.bf16.msra.mxu0 %v1139
      %1165 = vmatprep.subr.bf16.mxu0 0
      %1166 = vmatpush1.bf16.msra.mxu0 %v1138
      %1167 = vmatprep.subr.bf16.mxu0 0
      %1168 = vmatpush1.bf16.msra.mxu0 %v1137
      %1169 = vmatprep.subr.bf16.mxu0 0
      %1170 = vmatpush2.bf16.msra.mxu0 0
      %1171 = vmatprep.subr.bf16.mxu0 0
      %1172 = vmatpush2.bf16.msra.mxu0 0
      %1173 = vmatprep.subr.bf16.mxu0 0
      %1174 = vmatpush2.bf16.msra.mxu0 0
      %1175 = vmatprep.subr.bf16.mxu0 0
      %1176 = vmatpush2.bf16.msra.mxu0 0
      %1177 = vmatprep.subr.bf16.mxu0 0
      %1178 = vmatpush2.bf16.msra.mxu0 0
      %1179 = vmatprep.subr.bf16.mxu0 0
      %1180 = vmatpush2.bf16.msra.mxu0 0
      %1181 = vmatprep.subr.bf16.mxu0 0
      %1182 = vmatpush2.bf16.msra.mxu0 0
      %1183 = vmatprep.subr.bf16.mxu0 0
      %1184 = vmatpush2.bf16.msra.mxu0 0
      %1185 = vmatprep.mubr.bf16.mxu0 0
      %1186 = vmatmul.mubr.bf16.gmra.mxu0 %v1103
      %v1187 = vpop.f32.mrf.mxu0
      %v1188 = vadd.f32 0.0, %v1187
      %v1189 = vpop.f32.mrf.mxu0
      %v1190 = vpop.f32.mrf.mxu0
      %v1191 = vpop.f32.mrf.mxu0
      %1192 = vdwg.mxu0
      %v1193 = vadd.f32 %v1076, %v1188
      %v1194 = vadd.f32 %v1193, %v168
      %v1195 = vmax.f32 %v1194, 0.0
      %v1196 = vpack.c.bf16 %v1195, %v1195
      %vm1197 = vcmask 1040384
      %vm1198 = vsmask.f32 256
      %vm1199 = vmand %vm1197, %vm1198
      %v1200 = vld [vmem:[%s166] sm:$0x1]
      %v1201 = vsel %vm1199, %v1196, %v1200
      %1202 = vst [vmem:[%s166] sm:$0x1] %v1201
      %p1203 = scmp.lt.s32.totalorder %s14, 1
      %s1204 = scalar_select %p1203, %s14, 1
      %s1205 = scalar_lea.vmem %s3, %s1204
      // Predicated region
      $region33: #{c51_forward.6} parent=31 // pred_check
        %p1206 = pneg %p100
      $region34: #{c51_forward.6} parent=31 // pred_check_branch
        %1208 = sbr.rel (%p1206) target = $region36
      $region35: #{c51_forward.6} parent=31 // pred_region
        _
      $region36: #{c51_forward.6} parent=31 // pred_fallthru
        _
    $region32: #{c51_forward.6} parent=5 // pred_fallthru
      _
    %p1209 = scmp.le.s32.totalorder 2, %s9
    // Predicated region
    $region37: #{c51_forward.6} parent=5 // pred_check
      %p1210 = pneg %p1209
    $region38: #{c51_forward.6} parent=5 // pred_check_branch
      %1212 = sbr.rel (%p1210) target = $region40
    $region39: #{c51_forward.6} parent=5 // pred_region
      %s1213 = ssub.s32 %s9, 2
      // Predicated region
      $region41: #{c51_forward.6} parent=39 // pred_check
        %p1214 = pneg %p106
      $region42: #{c51_forward.6} parent=39 // pred_check_branch
        %1216 = sbr.rel (%p1214) target = $region44
      $region43: #{c51_forward.6} parent=39 // pred_region
        %p1217 = scmp.lt.s32.totalorder %s15, 1
        %s1218 = scalar_select %p1217, %s15, 1
        %s1219 = scalar_lea.vmem %s3, %s1218
      $region44: #{c51_forward.6} parent=39 // pred_fallthru
        _
    $region40: #{c51_forward.6} parent=5 // pred_fallthru
      _
  $region6: #{c51_forward.6} parent=0 // loop_footer
    %s13 = sadd.s32 1, %s9
  $region7: #{c51_forward.6} parent=0 // loop_footer_branch
    %8 = sbr.rel target = $region3
  $region8: #{c51_forward.6} parent=0 // loop_exit
    _

// kernel: c51_forward.7
$region0: #{c51_forward.7}
  #allocation0 [shape = 'u32[]', space=smem, size = 0x4, offset = 0x4, fixed_abs, tag = 'smem constant byte address 0x4 - core index']
  #allocation1 [shape = 'u32[144,128]{1,0:T(1,128)}', space=vmem, size = 0x12000, scoped, tag = 'internal scratch']
  %s0 = inlined_call_operand.vmem [shape: bf16[2,128], index: 0, kind: input, shape index: {}]
  %s1 = inlined_call_operand.vmem [shape: bf16[128,512], index: 1, kind: input, shape index: {}]
  %s2 = inlined_call_operand.vmem [shape: f32[1,512], index: 2, kind: input, shape index: {}]
  %s3 = inlined_call_operand.vmem [shape: bf16[512,384], index: 3, kind: input, shape index: {}]
  %s4 = inlined_call_operand.vmem [shape: f32[1,384], index: 4, kind: input, shape index: {}]
  %s5 = inlined_call_operand.vmem [shape: f32[2,384], index: 5, kind: output, shape index: {}]
  %s6 = sld [smem:[#allocation0]]
  $region30: #{c51_forward.7} parent=0
    _
  %s8 = ssub.s32 1, %s6
  %s9 = scalar_select 0, %s8, %s6
  // Predicated region
  $region2: #{c51_forward.7} parent=0 // pred_check
    _
  $region3: #{c51_forward.7} parent=0 // pred_check_branch
    %11 = sbr.rel (0) target = $region5
  $region4: #{c51_forward.7} parent=0 // pred_region
    _
  $region5: #{c51_forward.7} parent=0 // pred_fallthru
    _
  // Predicated region
  $region6: #{c51_forward.7} parent=0 // pred_check
    _
  $region7: #{c51_forward.7} parent=0 // pred_check_branch
    %13 = sbr.rel (0) target = $region9
  $region8: #{c51_forward.7} parent=0 // pred_region
    _
  $region9: #{c51_forward.7} parent=0 // pred_fallthru
    _
  // Predicated region
  $region10: #{c51_forward.7} parent=0 // pred_check
    _
  $region11: #{c51_forward.7} parent=0 // pred_check_branch
    %15 = sbr.rel (0) target = $region13
  $region12: #{c51_forward.7} parent=0 // pred_region
    _
  $region13: #{c51_forward.7} parent=0 // pred_fallthru
    _
  // Predicated region
  $region14: #{c51_forward.7} parent=0 // pred_check
    _
  $region15: #{c51_forward.7} parent=0 // pred_check_branch
    %17 = sbr.rel (0) target = $region17
  $region16: #{c51_forward.7} parent=0 // pred_region
    _
  $region17: #{c51_forward.7} parent=0 // pred_fallthru
    _
  // Predicated region
  $region18: #{c51_forward.7} parent=0 // pred_check
    _
  $region19: #{c51_forward.7} parent=0 // pred_check_branch
    %19 = sbr.rel (0) target = $region21
  $region20: #{c51_forward.7} parent=0 // pred_region
    _
  $region21: #{c51_forward.7} parent=0 // pred_fallthru
    _
  %v21 = vld [vmem:[%s0] sm:$0x1]
  %v22 = vld [vmem:[%s1] sm:$0xff]
  %v23 = vld [vmem:[%s1 + $0x8] sm:$0xff]
  %v24 = vld [vmem:[%s1 + $0x10] sm:$0xff]
  %v25 = vld [vmem:[%s1 + $0x18] sm:$0xff]
  %v26 = vld [vmem:[%s1 + $0x20] sm:$0xff]
  %v27 = vld [vmem:[%s1 + $0x28] sm:$0xff]
  %v28 = vld [vmem:[%s1 + $0x30] sm:$0xff]
  %v29 = vld [vmem:[%s1 + $0x38] sm:$0xff]
  %v30 = vld [vmem:[%s1 + $0x40] sm:$0xff]
  %v31 = vld [vmem:[%s1 + $0x48] sm:$0xff]
  %v32 = vld [vmem:[%s1 + $0x50] sm:$0xff]
  %v33 = vld [vmem:[%s1 + $0x58] sm:$0xff]
  %v34 = vld [vmem:[%s1 + $0x60] sm:$0xff]
  %v35 = vld [vmem:[%s1 + $0x68] sm:$0xff]
  %v36 = vld [vmem:[%s1 + $0x70] sm:$0xff]
  %v37 = vld [vmem:[%s1 + $0x78] sm:$0xff]
  %v38 = vld [vmem:[%s1 + $0x80] sm:$0xff]
  %v39 = vld [vmem:[%s1 + $0x88] sm:$0xff]
  %v40 = vld [vmem:[%s1 + $0x90] sm:$0xff]
  %v41 = vld [vmem:[%s1 + $0x98] sm:$0xff]
  %v42 = vld [vmem:[%s1 + $0xa0] sm:$0xff]
  %v43 = vld [vmem:[%s1 + $0xa8] sm:$0xff]
  %v44 = vld [vmem:[%s1 + $0xb0] sm:$0xff]
  %v45 = vld [vmem:[%s1 + $0xb8] sm:$0xff]
  %v46 = vld [vmem:[%s1 + $0xc0] sm:$0xff]
  %v47 = vld [vmem:[%s1 + $0xc8] sm:$0xff]
  %v48 = vld [vmem:[%s1 + $0xd0] sm:$0xff]
  %v49 = vld [vmem:[%s1 + $0xd8] sm:$0xff]
  %v50 = vld [vmem:[%s1 + $0xe0] sm:$0xff]
  %v51 = vld [vmem:[%s1 + $0xe8] sm:$0xff]
  %v52 = vld [vmem:[%s1 + $0xf0] sm:$0xff]
  %v53 = vld [vmem:[%s1 + $0xf8] sm:$0xff]
  %v54 = vld [vmem:[%s2] sm:$0xf]
  %v56 = vlaneseq
  %v57 = vshrl.u32 %v56, 7
  %v58 = vsub.s32 0, %v57
  %v59 = vrot.slane %v54, %v58
  %v60 = vlaneseq
  %v61 = vshrl.u32 %v60, 7
  %v62 = vsub.s32 1, %v61
  %v63 = vrot.slane %v54, %v62
  %v64 = vlaneseq
  %v65 = vshrl.u32 %v64, 7
  %v66 = vsub.s32 2, %v65
  %v67 = vrot.slane %v54, %v66
  %v68 = vlaneseq
  %v69 = vshrl.u32 %v68, 7
  %v70 = vsub.s32 3, %v69
  %v71 = vrot.slane %v54, %v70
  %v108 = vunpack.c.l.b16 %v22
  %v109 = vunpack.c.h.b16 %v22
  %v110 = vunpack.c.l.b16 %v23
  %v111 = vunpack.c.h.b16 %v23
  %v112 = vunpack.c.l.b16 %v24
  %v113 = vunpack.c.h.b16 %v24
  %v114 = vunpack.c.l.b16 %v25
  %v115 = vunpack.c.h.b16 %v25
  %v116 = vunpack.c.l.b16 %v26
  %v117 = vunpack.c.h.b16 %v26
  %v118 = vunpack.c.l.b16 %v27
  %v119 = vunpack.c.h.b16 %v27
  %v120 = vunpack.c.l.b16 %v28
  %v121 = vunpack.c.h.b16 %v28
  %v122 = vunpack.c.l.b16 %v29
  %v123 = vunpack.c.h.b16 %v29
  %v124 = vunpack.c.l.b16 %v30
  %v125 = vunpack.c.h.b16 %v30
  %v126 = vunpack.c.l.b16 %v31
  %v127 = vunpack.c.h.b16 %v31
  %v128 = vunpack.c.l.b16 %v32
  %v129 = vunpack.c.h.b16 %v32
  %v130 = vunpack.c.l.b16 %v33
  %v131 = vunpack.c.h.b16 %v33
  %v132 = vunpack.c.l.b16 %v34
  %v133 = vunpack.c.h.b16 %v34
  %v134 = vunpack.c.l.b16 %v35
  %v135 = vunpack.c.h.b16 %v35
  %v136 = vunpack.c.l.b16 %v36
  %v137 = vunpack.c.h.b16 %v36
  %v138 = vunpack.c.l.b16 %v37
  %v139 = vunpack.c.h.b16 %v37
  %v140 = vunpack.c.l.b16 %v38
  %v141 = vunpack.c.h.b16 %v38
  %v142 = vunpack.c.l.b16 %v39
  %v143 = vunpack.c.h.b16 %v39
  %v144 = vunpack.c.l.b16 %v40
  %v145 = vunpack.c.h.b16 %v40
  %v146 = vunpack.c.l.b16 %v41
  %v147 = vunpack.c.h.b16 %v41
  %v148 = vunpack.c.l.b16 %v42
  %v149 = vunpack.c.h.b16 %v42
  %v150 = vunpack.c.l.b16 %v43
  %v151 = vunpack.c.h.b16 %v43
  %v152 = vunpack.c.l.b16 %v44
  %v153 = vunpack.c.h.b16 %v44
  %v154 = vunpack.c.l.b16 %v45
  %v155 = vunpack.c.h.b16 %v45
  %v156 = vunpack.c.l.b16 %v46
  %v157 = vunpack.c.h.b16 %v46
  %v158 = vunpack.c.l.b16 %v47
  %v159 = vunpack.c.h.b16 %v47
  %v160 = vunpack.c.l.b16 %v48
  %v161 = vunpack.c.h.b16 %v48
  %v162 = vunpack.c.l.b16 %v49
  %v163 = vunpack.c.h.b16 %v49
  %v164 = vunpack.c.l.b16 %v50
  %v165 = vunpack.c.h.b16 %v50
  %v166 = vunpack.c.l.b16 %v51
  %v167 = vunpack.c.h.b16 %v51
  %v168 = vunpack.c.l.b16 %v52
  %v169 = vunpack.c.h.b16 %v52
  %v170 = vunpack.c.l.b16 %v53
  %v171 = vunpack.c.h.b16 %v53
  %v172 = vpack.c.b16 %v112, %v108
  %v173 = vpack.c.b16 %v113, %v109
  %v174 = vpack.c.b16 %v114, %v110
  %v175 = vpack.c.b16 %v115, %v111
  %v176 = vpack.c.b16 %v120, %v116
  %v177 = vpack.c.b16 %v121, %v117
  %v178 = vpack.c.b16 %v122, %v118
  %v179 = vpack.c.b16 %v123, %v119
  %v180 = vpack.c.b16 %v128, %v124
  %v181 = vpack.c.b16 %v129, %v125
  %v182 = vpack.c.b16 %v130, %v126
  %v183 = vpack.c.b16 %v131, %v127
  %v184 = vpack.c.b16 %v136, %v132
  %v185 = vpack.c.b16 %v137, %v133
  %v186 = vpack.c.b16 %v138, %v134
  %v187 = vpack.c.b16 %v139, %v135
  %v188 = vpack.c.b16 %v144, %v140
  %v189 = vpack.c.b16 %v145, %v141
  %v190 = vpack.c.b16 %v146, %v142
  %v191 = vpack.c.b16 %v147, %v143
  %v192 = vpack.c.b16 %v152, %v148
  %v193 = vpack.c.b16 %v153, %v149
  %v194 = vpack.c.b16 %v154, %v150
  %v195 = vpack.c.b16 %v155, %v151
  %v196 = vpack.c.b16 %v160, %v156
  %v197 = vpack.c.b16 %v161, %v157
  %v198 = vpack.c.b16 %v162, %v158
  %v199 = vpack.c.b16 %v163, %v159
  %v200 = vpack.c.b16 %v168, %v164
  %v201 = vpack.c.b16 %v169, %v165
  %v202 = vpack.c.b16 %v170, %v166
  %v203 = vpack.c.b16 %v171, %v167
  %236 = vmatprep.subr.bf16.mxu0 %v201
  %237 = vmatpush1.bf16.msra.mxu0 %v200
  %238 = vmatprep.subr.bf16.mxu0 %v197
  %239 = vmatpush1.bf16.msra.mxu0 %v196
  %240 = vmatprep.subr.bf16.mxu0 %v193
  %241 = vmatpush1.bf16.msra.mxu0 %v192
  %242 = vmatprep.subr.bf16.mxu0 %v189
  %243 = vmatpush1.bf16.msra.mxu0 %v188
  %244 = vmatprep.subr.bf16.mxu0 %v185
  %245 = vmatpush1.bf16.msra.mxu0 %v184
  %246 = vmatprep.subr.bf16.mxu0 %v181
  %247 = vmatpush1.bf16.msra.mxu0 %v180
  %248 = vmatprep.subr.bf16.mxu0 %v177
  %249 = vmatpush1.bf16.msra.mxu0 %v176
  %250 = vmatprep.subr.bf16.mxu0 %v173
  %251 = vmatpush1.bf16.msra.mxu0 %v172
  %252 = vmatprep.subr.bf16.mxu0 0
  %253 = vmatpush2.bf16.msra.mxu0 0
  %254 = vmatprep.subr.bf16.mxu0 0
  %255 = vmatpush2.bf16.msra.mxu0 0
  %256 = vmatprep.subr.bf16.mxu0 0
  %257 = vmatpush2.bf16.msra.mxu0 0
  %258 = vmatprep.subr.bf16.mxu0 0
  %259 = vmatpush2.bf16.msra.mxu0 0
  %260 = vmatprep.subr.bf16.mxu0 0
  %261 = vmatpush2.bf16.msra.mxu0 0
  %262 = vmatprep.subr.bf16.mxu0 0
  %263 = vmatpush2.bf16.msra.mxu0 0
  %264 = vmatprep.subr.bf16.mxu0 0
  %265 = vmatpush2.bf16.msra.mxu0 0
  %266 = vmatprep.subr.bf16.mxu0 0
  %267 = vmatpush2.bf16.msra.mxu0 0
  %268 = vmatprep.mubr.bf16.mxu0 0
  %269 = vmatmul.mubr.bf16.gmra.mxu0 %v21
  %v270 = vpop.f32.mrf.mxu0
  %v271 = vadd.f32 %v59, %v270
  %v272 = vpop.f32.mrf.mxu0
  %v273 = vadd.f32 %v63, %v272
  %v274 = vpop.f32.mrf.mxu0
  %v275 = vpop.f32.mrf.mxu0
  %276 = vdwg.mxu0
  %277 = vmatprep.subr.bf16.mxu0 %v203
  %278 = vmatpush1.bf16.msra.mxu0 %v202
  %279 = vmatprep.subr.bf16.mxu0 %v199
  %280 = vmatpush1.bf16.msra.mxu0 %v198
  %281 = vmatprep.subr.bf16.mxu0 %v195
  %282 = vmatpush1.bf16.msra.mxu0 %v194
  %283 = vmatprep.subr.bf16.mxu0 %v191
  %284 = vmatpush1.bf16.msra.mxu0 %v190
  %285 = vmatprep.subr.bf16.mxu0 %v187
  %286 = vmatpush1.bf16.msra.mxu0 %v186
  %287 = vmatprep.subr.bf16.mxu0 %v183
  %288 = vmatpush1.bf16.msra.mxu0 %v182
  %289 = vmatprep.subr.bf16.mxu0 %v179
  %290 = vmatpush1.bf16.msra.mxu0 %v178
  %291 = vmatprep.subr.bf16.mxu0 %v175
  %292 = vmatpush1.bf16.msra.mxu0 %v174
  %293 = vmatprep.subr.bf16.mxu0 0
  %294 = vmatpush2.bf16.msra.mxu0 0
  %295 = vmatprep.subr.bf16.mxu0 0
  %296 = vmatpush2.bf16.msra.mxu0 0
  %297 = vmatprep.subr.bf16.mxu0 0
  %298 = vmatpush2.bf16.msra.mxu0 0
  %299 = vmatprep.subr.bf16.mxu0 0
  %300 = vmatpush2.bf16.msra.mxu0 0
  %301 = vmatprep.subr.bf16.mxu0 0
  %302 = vmatpush2.bf16.msra.mxu0 0
  %303 = vmatprep.subr.bf16.mxu0 0
  %304 = vmatpush2.bf16.msra.mxu0 0
  %305 = vmatprep.subr.bf16.mxu0 0
  %306 = vmatpush2.bf16.msra.mxu0 0
  %307 = vmatprep.subr.bf16.mxu0 0
  %308 = vmatpush2.bf16.msra.mxu0 0
  %309 = vmatprep.mubr.bf16.mxu0 0
  %310 = vmatmul.mubr.bf16.gmra.mxu0 %v21
  %v311 = vpop.f32.mrf.mxu0
  %v312 = vadd.f32 %v67, %v311
  %v313 = vpop.f32.mrf.mxu0
  %v314 = vadd.f32 %v71, %v313
  %v315 = vpop.f32.mrf.mxu0
  %v316 = vpop.f32.mrf.mxu0
  %317 = vdwg.mxu0
  %v318 = vmax.f32 %v271, 0.0
  %v319 = vmax.f32 %v273, 0.0
  %v320 = vmax.f32 %v312, 0.0
  %v321 = vmax.f32 %v314, 0.0
  %v322 = vpack.c.bf16 %v318, %v318
  %v323 = vpack.c.bf16 %v319, %v319
  %v324 = vpack.c.bf16 %v320, %v320
  %v325 = vpack.c.bf16 %v321, %v321
  %v326 = vld [vmem:[%s3] sm:$0xff]
  %v327 = vld [vmem:[%s3 + $0x8] sm:$0xf]
  %v328 = vld [vmem:[%s3 + $0xc] sm:$0xff]
  %v329 = vld [vmem:[%s3 + $0x14] sm:$0xf]
  %v330 = vld [vmem:[%s3 + $0x18] sm:$0xff]
  %v331 = vld [vmem:[%s3 + $0x20] sm:$0xf]
  %v332 = vld [vmem:[%s3 + $0x24] sm:$0xff]
  %v333 = vld [vmem:[%s3 + $0x2c] sm:$0xf]
  %v334 = vld [vmem:[%s3 + $0x30] sm:$0xff]
  %v335 = vld [vmem:[%s3 + $0x38] sm:$0xf]
  %v336 = vld [vmem:[%s3 + $0x3c] sm:$0xff]
  %v337 = vld [vmem:[%s3 + $0x44] sm:$0xf]
  %v338 = vld [vmem:[%s3 + $0x48] sm:$0xff]
  %v339 = vld [vmem:[%s3 + $0x50] sm:$0xf]
  %v340 = vld [vmem:[%s3 + $0x54] sm:$0xff]
  %v341 = vld [vmem:[%s3 + $0x5c] sm:$0xf]
  %v342 = vld [vmem:[%s3 + $0x60] sm:$0xff]
  %v343 = vld [vmem:[%s3 + $0x68] sm:$0xf]
  %v344 = vld [vmem:[%s3 + $0x6c] sm:$0xff]
  %v345 = vld [vmem:[%s3 + $0x74] sm:$0xf]
  %v346 = vld [vmem:[%s3 + $0x78] sm:$0xff]
  %v347 = vld [vmem:[%s3 + $0x80] sm:$0xf]
  %v348 = vld [vmem:[%s3 + $0x84] sm:$0xff]
  %v349 = vld [vmem:[%s3 + $0x8c] sm:$0xf]
  %v350 = vld [vmem:[%s3 + $0x90] sm:$0xff]
  %v351 = vld [vmem:[%s3 + $0x98] sm:$0xf]
  %v352 = vld [vmem:[%s3 + $0x9c] sm:$0xff]
  %v353 = vld [vmem:[%s3 + $0xa4] sm:$0xf]
  %v354 = vld [vmem:[%s3 + $0xa8] sm:$0xff]
  %v355 = vld [vmem:[%s3 + $0xb0] sm:$0xf]
  %v356 = vld [vmem:[%s3 + $0xb4] sm:$0xff]
  %v357 = vld [vmem:[%s3 + $0xbc] sm:$0xf]
  %v358 = vld [vmem:[%s3 + $0xc0] sm:$0xff]
  %v359 = vld [vmem:[%s3 + $0xc8] sm:$0xf]
  %v360 = vld [vmem:[%s3 + $0xcc] sm:$0xff]
  %v361 = vld [vmem:[%s3 + $0xd4] sm:$0xf]
  %v362 = vld [vmem:[%s3 + $0xd8] sm:$0xff]
  %v363 = vld [vmem:[%s3 + $0xe0] sm:$0xf]
  %v364 = vld [vmem:[%s3 + $0xe4] sm:$0xff]
  %v365 = vld [vmem:[%s3 + $0xec] sm:$0xf]
  %v366 = vld [vmem:[%s3 + $0xf0] sm:$0xff]
  %v367 = vld [vmem:[%s3 + $0xf8] sm:$0xf]
  %v368 = vld [vmem:[%s3 + $0xfc] sm:$0xff]
  %v369 = vld [vmem:[%s3 + $0x104] sm:$0xf]
  %v370 = vld [vmem:[%s3 + $0x108] sm:$0xff]
  %v371 = vld [vmem:[%s3 + $0x110] sm:$0xf]
  %v372 = vld [vmem:[%s3 + $0x114] sm:$0xff]
  %v373 = vld [vmem:[%s3 + $0x11c] sm:$0xf]
  %v374 = vld [vmem:[%s3 + $0x120] sm:$0xff]
  %v375 = vld [vmem:[%s3 + $0x128] sm:$0xf]
  %v376 = vld [vmem:[%s3 + $0x12c] sm:$0xff]
  %v377 = vld [vmem:[%s3 + $0x134] sm:$0xf]
  %v378 = vld [vmem:[%s3 + $0x138] sm:$0xff]
  %v379 = vld [vmem:[%s3 + $0x140] sm:$0xf]
  %v380 = vld [vmem:[%s3 + $0x144] sm:$0xff]
  %v381 = vld [vmem:[%s3 + $0x14c] sm:$0xf]
  %v382 = vld [vmem:[%s3 + $0x150] sm:$0xff]
  %v383 = vld [vmem:[%s3 + $0x158] sm:$0xf]
  %v384 = vld [vmem:[%s3 + $0x15c] sm:$0xff]
  %v385 = vld [vmem:[%s3 + $0x164] sm:$0xf]
  %v386 = vld [vmem:[%s3 + $0x168] sm:$0xff]
  %v387 = vld [vmem:[%s3 + $0x170] sm:$0xf]
  %v388 = vld [vmem:[%s3 + $0x174] sm:$0xff]
  %v389 = vld [vmem:[%s3 + $0x17c] sm:$0xf]
  %v390 = vld [vmem:[%s3 + $0x180] sm:$0xff]
  %v391 = vld [vmem:[%s3 + $0x188] sm:$0xf]
  %v392 = vld [vmem:[%s3 + $0x18c] sm:$0xff]
  %v393 = vld [vmem:[%s3 + $0x194] sm:$0xf]
  %v394 = vld [vmem:[%s3 + $0x198] sm:$0xff]
  %v395 = vld [vmem:[%s3 + $0x1a0] sm:$0xf]
  %v396 = vld [vmem:[%s3 + $0x1a4] sm:$0xff]
  %v397 = vld [vmem:[%s3 + $0x1ac] sm:$0xf]
  %v398 = vld [vmem:[%s3 + $0x1b0] sm:$0xff]
  %v399 = vld [vmem:[%s3 + $0x1b8] sm:$0xf]
  %v400 = vld [vmem:[%s3 + $0x1bc] sm:$0xff]
  %v401 = vld [vmem:[%s3 + $0x1c4] sm:$0xf]
  %v402 = vld [vmem:[%s3 + $0x1c8] sm:$0xff]
  %v403 = vld [vmem:[%s3 + $0x1d0] sm:$0xf]
  %v404 = vld [vmem:[%s3 + $0x1d4] sm:$0xff]
  %v405 = vld [vmem:[%s3 + $0x1dc] sm:$0xf]
  %v406 = vld [vmem:[%s3 + $0x1e0] sm:$0xff]
  %v407 = vld [vmem:[%s3 + $0x1e8] sm:$0xf]
  %v408 = vld [vmem:[%s3 + $0x1ec] sm:$0xff]
  %v409 = vld [vmem:[%s3 + $0x1f4] sm:$0xf]
  %v410 = vld [vmem:[%s3 + $0x1f8] sm:$0xff]
  %v411 = vld [vmem:[%s3 + $0x200] sm:$0xf]
  %v412 = vld [vmem:[%s3 + $0x204] sm:$0xff]
  %v413 = vld [vmem:[%s3 + $0x20c] sm:$0xf]
  %v414 = vld [vmem:[%s3 + $0x210] sm:$0xff]
  %v415 = vld [vmem:[%s3 + $0x218] sm:$0xf]
  %v416 = vld [vmem:[%s3 + $0x21c] sm:$0xff]
  %v417 = vld [vmem:[%s3 + $0x224] sm:$0xf]
  %v418 = vld [vmem:[%s3 + $0x228] sm:$0xff]
  %v419 = vld [vmem:[%s3 + $0x230] sm:$0xf]
  %v420 = vld [vmem:[%s3 + $0x234] sm:$0xff]
  %v421 = vld [vmem:[%s3 + $0x23c] sm:$0xf]
  %v422 = vld [vmem:[%s3 + $0x240] sm:$0xff]
  %v423 = vld [vmem:[%s3 + $0x248] sm:$0xf]
  %v424 = vld [vmem:[%s3 + $0x24c] sm:$0xff]
  %v425 = vld [vmem:[%s3 + $0x254] sm:$0xf]
  %v426 = vld [vmem:[%s3 + $0x258] sm:$0xff]
  %v427 = vld [vmem:[%s3 + $0x260] sm:$0xf]
  %v428 = vld [vmem:[%s3 + $0x264] sm:$0xff]
  %v429 = vld [vmem:[%s3 + $0x26c] sm:$0xf]
  %v430 = vld [vmem:[%s3 + $0x270] sm:$0xff]
  %v431 = vld [vmem:[%s3 + $0x278] sm:$0xf]
  %v432 = vld [vmem:[%s3 + $0x27c] sm:$0xff]
  %v433 = vld [vmem:[%s3 + $0x284] sm:$0xf]
  %v434 = vld [vmem:[%s3 + $0x288] sm:$0xff]
  %v435 = vld [vmem:[%s3 + $0x290] sm:$0xf]
  %v436 = vld [vmem:[%s3 + $0x294] sm:$0xff]
  %v437 = vld [vmem:[%s3 + $0x29c] sm:$0xf]
  %v438 = vld [vmem:[%s3 + $0x2a0] sm:$0xff]
  %v439 = vld [vmem:[%s3 + $0x2a8] sm:$0xf]
  %v440 = vld [vmem:[%s3 + $0x2ac] sm:$0xff]
  %v441 = vld [vmem:[%s3 + $0x2b4] sm:$0xf]
  %v442 = vld [vmem:[%s3 + $0x2b8] sm:$0xff]
  %v443 = vld [vmem:[%s3 + $0x2c0] sm:$0xf]
  %v444 = vld [vmem:[%s3 + $0x2c4] sm:$0xff]
  %v445 = vld [vmem:[%s3 + $0x2cc] sm:$0xf]
  %v446 = vld [vmem:[%s3 + $0x2d0] sm:$0xff]
  %v447 = vld [vmem:[%s3 + $0x2d8] sm:$0xf]
  %v448 = vld [vmem:[%s3 + $0x2dc] sm:$0xff]
  %v449 = vld [vmem:[%s3 + $0x2e4] sm:$0xf]
  %v450 = vld [vmem:[%s3 + $0x2e8] sm:$0xff]
  %v451 = vld [vmem:[%s3 + $0x2f0] sm:$0xf]
  %v452 = vld [vmem:[%s3 + $0x2f4] sm:$0xff]
  %v453 = vld [vmem:[%s3 + $0x2fc] sm:$0xf]
  %v454 = vld [vmem:[%s4] sm:$0x7]
  %v456 = vlaneseq
  %v457 = vshrl.u32 %v456, 7
  %v458 = vsub.s32 0, %v457
  %v459 = vrot.slane %v454, %v458
  %v460 = vlaneseq
  %v461 = vshrl.u32 %v460, 7
  %v462 = vsub.s32 1, %v461
  %v463 = vrot.slane %v454, %v462
  %v464 = vlaneseq
  %v465 = vshrl.u32 %v464, 7
  %v466 = vsub.s32 2, %v465
  %v467 = vrot.slane %v454, %v466
  %v599 = vunpack.c.l.b16 %v326
  %v600 = vunpack.c.h.b16 %v326
  %v601 = vunpack.c.l.b16 %v327
  %v602 = vunpack.c.l.b16 %v328
  %v603 = vunpack.c.h.b16 %v328
  %v604 = vunpack.c.l.b16 %v329
  %v605 = vunpack.c.l.b16 %v330
  %v606 = vunpack.c.h.b16 %v330
  %v607 = vunpack.c.l.b16 %v331
  %v608 = vunpack.c.l.b16 %v332
  %v609 = vunpack.c.h.b16 %v332
  %v610 = vunpack.c.l.b16 %v333
  %v611 = vunpack.c.l.b16 %v334
  %v612 = vunpack.c.h.b16 %v334
  %v613 = vunpack.c.l.b16 %v335
  %v614 = vunpack.c.l.b16 %v336
  %v615 = vunpack.c.h.b16 %v336
  %v616 = vunpack.c.l.b16 %v337
  %v617 = vunpack.c.l.b16 %v338
  %v618 = vunpack.c.h.b16 %v338
  %v619 = vunpack.c.l.b16 %v339
  %v620 = vunpack.c.l.b16 %v340
  %v621 = vunpack.c.h.b16 %v340
  %v622 = vunpack.c.l.b16 %v341
  %v623 = vunpack.c.l.b16 %v342
  %v624 = vunpack.c.h.b16 %v342
  %v625 = vunpack.c.l.b16 %v343
  %v626 = vunpack.c.l.b16 %v344
  %v627 = vunpack.c.h.b16 %v344
  %v628 = vunpack.c.l.b16 %v345
  %v629 = vunpack.c.l.b16 %v346
  %v630 = vunpack.c.h.b16 %v346
  %v631 = vunpack.c.l.b16 %v347
  %v632 = vunpack.c.l.b16 %v348
  %v633 = vunpack.c.h.b16 %v348
  %v634 = vunpack.c.l.b16 %v349
  %v635 = vunpack.c.l.b16 %v350
  %v636 = vunpack.c.h.b16 %v350
  %v637 = vunpack.c.l.b16 %v351
  %v638 = vunpack.c.l.b16 %v352
  %v639 = vunpack.c.h.b16 %v352
  %v640 = vunpack.c.l.b16 %v353
  %v641 = vunpack.c.l.b16 %v354
  %v642 = vunpack.c.h.b16 %v354
  %v643 = vunpack.c.l.b16 %v355
  %v644 = vunpack.c.l.b16 %v356
  %v645 = vunpack.c.h.b16 %v356
  %v646 = vunpack.c.l.b16 %v357
  %v647 = vunpack.c.l.b16 %v358
  %v648 = vunpack.c.h.b16 %v358
  %v649 = vunpack.c.l.b16 %v359
  %v650 = vunpack.c.l.b16 %v360
  %v651 = vunpack.c.h.b16 %v360
  %v652 = vunpack.c.l.b16 %v361
  %v653 = vunpack.c.l.b16 %v362
  %v654 = vunpack.c.h.b16 %v362
  %v655 = vunpack.c.l.b16 %v363
  %v656 = vunpack.c.l.b16 %v364
  %v657 = vunpack.c.h.b16 %v364
  %v658 = vunpack.c.l.b16 %v365
  %v659 = vunpack.c.l.b16 %v366
  %v660 = vunpack.c.h.b16 %v366
  %v661 = vunpack.c.l.b16 %v367
  %v662 = vunpack.c.l.b16 %v368
  %v663 = vunpack.c.h.b16 %v368
  %v664 = vunpack.c.l.b16 %v369
  %v665 = vunpack.c.l.b16 %v370
  %v666 = vunpack.c.h.b16 %v370
  %v667 = vunpack.c.l.b16 %v371
  %v668 = vunpack.c.l.b16 %v372
  %v669 = vunpack.c.h.b16 %v372
  %v670 = vunpack.c.l.b16 %v373
  %v671 = vunpack.c.l.b16 %v374
  %v672 = vunpack.c.h.b16 %v374
  %v673 = vunpack.c.l.b16 %v375
  %v674 = vunpack.c.l.b16 %v376
  %v675 = vunpack.c.h.b16 %v376
  %v676 = vunpack.c.l.b16 %v377
  %v677 = vunpack.c.l.b16 %v378
  %v678 = vunpack.c.h.b16 %v378
  %v679 = vunpack.c.l.b16 %v379
  %v680 = vunpack.c.l.b16 %v380
  %v681 = vunpack.c.h.b16 %v380
  %v682 = vunpack.c.l.b16 %v381
  %v683 = vunpack.c.l.b16 %v382
  %v684 = vunpack.c.h.b16 %v382
  %v685 = vunpack.c.l.b16 %v383
  %v686 = vunpack.c.l.b16 %v384
  %v687 = vunpack.c.h.b16 %v384
  %v688 = vunpack.c.l.b16 %v385
  %v689 = vunpack.c.l.b16 %v386
  %v690 = vunpack.c.h.b16 %v386
  %v691 = vunpack.c.l.b16 %v387
  %v692 = vunpack.c.l.b16 %v388
  %v693 = vunpack.c.h.b16 %v388
  %v694 = vunpack.c.l.b16 %v389
  %v695 = vunpack.c.l.b16 %v390
  %v696 = vunpack.c.h.b16 %v390
  %v697 = vunpack.c.l.b16 %v391
  %v698 = vunpack.c.l.b16 %v392
  %v699 = vunpack.c.h.b16 %v392
  %v700 = vunpack.c.l.b16 %v393
  %v701 = vunpack.c.l.b16 %v394
  %v702 = vunpack.c.h.b16 %v394
  %v703 = vunpack.c.l.b16 %v395
  %v704 = vunpack.c.l.b16 %v396
  %v705 = vunpack.c.h.b16 %v396
  %v706 = vunpack.c.l.b16 %v397
  %v707 = vunpack.c.l.b16 %v398
  %v708 = vunpack.c.h.b16 %v398
  %v709 = vunpack.c.l.b16 %v399
  %v710 = vunpack.c.l.b16 %v400
  %v711 = vunpack.c.h.b16 %v400
  %v712 = vunpack.c.l.b16 %v401
  %v713 = vunpack.c.l.b16 %v402
  %v714 = vunpack.c.h.b16 %v402
  %v715 = vunpack.c.l.b16 %v403
  %v716 = vunpack.c.l.b16 %v404
  %v717 = vunpack.c.h.b16 %v404
  %v718 = vunpack.c.l.b16 %v405
  %v719 = vunpack.c.l.b16 %v406
  %v720 = vunpack.c.h.b16 %v406
  %v721 = vunpack.c.l.b16 %v407
  %v722 = vunpack.c.l.b16 %v408
  %v723 = vunpack.c.h.b16 %v408
  %v724 = vunpack.c.l.b16 %v409
  %v725 = vunpack.c.l.b16 %v410
  %v726 = vunpack.c.h.b16 %v410
  %v727 = vunpack.c.l.b16 %v411
  %v728 = vunpack.c.l.b16 %v412
  %v729 = vunpack.c.h.b16 %v412
  %v730 = vunpack.c.l.b16 %v413
  %v731 = vunpack.c.l.b16 %v414
  %v732 = vunpack.c.h.b16 %v414
  %v733 = vunpack.c.l.b16 %v415
  %v734 = vunpack.c.l.b16 %v416
  %v735 = vunpack.c.h.b16 %v416
  %v736 = vunpack.c.l.b16 %v417
  %v737 = vunpack.c.l.b16 %v418
  %v738 = vunpack.c.h.b16 %v418
  %v739 = vunpack.c.l.b16 %v419
  %v740 = vunpack.c.l.b16 %v420
  %v741 = vunpack.c.h.b16 %v420
  %v742 = vunpack.c.l.b16 %v421
  %v743 = vunpack.c.l.b16 %v422
  %v744 = vunpack.c.h.b16 %v422
  %v745 = vunpack.c.l.b16 %v423
  %v746 = vunpack.c.l.b16 %v424
  %v747 = vunpack.c.h.b16 %v424
  %v748 = vunpack.c.l.b16 %v425
  %v749 = vunpack.c.l.b16 %v426
  %v750 = vunpack.c.h.b16 %v426
  %v751 = vunpack.c.l.b16 %v427
  %v752 = vunpack.c.l.b16 %v428
  %v753 = vunpack.c.h.b16 %v428
  %v754 = vunpack.c.l.b16 %v429
  %v755 = vunpack.c.l.b16 %v430
  %v756 = vunpack.c.h.b16 %v430
  %v757 = vunpack.c.l.b16 %v431
  %v758 = vunpack.c.l.b16 %v432
  %v759 = vunpack.c.h.b16 %v432
  %v760 = vunpack.c.l.b16 %v433
  %v761 = vunpack.c.l.b16 %v434
  %v762 = vunpack.c.h.b16 %v434
  %v763 = vunpack.c.l.b16 %v435
  %v764 = vunpack.c.l.b16 %v436
  %v765 = vunpack.c.h.b16 %v436
  %v766 = vunpack.c.l.b16 %v437
  %v767 = vunpack.c.l.b16 %v438
  %v768 = vunpack.c.h.b16 %v438
  %v769 = vunpack.c.l.b16 %v439
  %v770 = vunpack.c.l.b16 %v440
  %v771 = vunpack.c.h.b16 %v440
  %v772 = vunpack.c.l.b16 %v441
  %v773 = vunpack.c.l.b16 %v442
  %v774 = vunpack.c.h.b16 %v442
  %v775 = vunpack.c.l.b16 %v443
  %v776 = vunpack.c.l.b16 %v444
  %v777 = vunpack.c.h.b16 %v444
  %v778 = vunpack.c.l.b16 %v445
  %v779 = vunpack.c.l.b16 %v446
  %v780 = vunpack.c.h.b16 %v446
  %v781 = vunpack.c.l.b16 %v447
  %v782 = vunpack.c.l.b16 %v448
  %v783 = vunpack.c.h.b16 %v448
  %v784 = vunpack.c.l.b16 %v449
  %v785 = vunpack.c.l.b16 %v450
  %v786 = vunpack.c.h.b16 %v450
  %v787 = vunpack.c.l.b16 %v451
  %v788 = vunpack.c.l.b16 %v452
  %v789 = vunpack.c.h.b16 %v452
  %v790 = vunpack.c.l.b16 %v453
  %v791 = vpack.c.b16 %v602, %v599
  %v792 = vpack.c.b16 %v603, %v600
  %v793 = vpack.c.b16 %v604, %v601
  %v794 = vpack.c.b16 %v608, %v605
  %v795 = vpack.c.b16 %v609, %v606
  %v796 = vpack.c.b16 %v610, %v607
  %v797 = vpack.c.b16 %v614, %v611
  %v798 = vpack.c.b16 %v615, %v612
  %v799 = vpack.c.b16 %v616, %v613
  %v800 = vpack.c.b16 %v620, %v617
  %v801 = vpack.c.b16 %v621, %v618
  %v802 = vpack.c.b16 %v622, %v619
  %v803 = vpack.c.b16 %v626, %v623
  %v804 = vpack.c.b16 %v627, %v624
  %v805 = vpack.c.b16 %v628, %v625
  %v806 = vpack.c.b16 %v632, %v629
  %v807 = vpack.c.b16 %v633, %v630
  %v808 = vpack.c.b16 %v634, %v631
  %v809 = vpack.c.b16 %v638, %v635
  %v810 = vpack.c.b16 %v639, %v636
  %v811 = vpack.c.b16 %v640, %v637
  %v812 = vpack.c.b16 %v644, %v641
  %v813 = vpack.c.b16 %v645, %v642
  %v814 = vpack.c.b16 %v646, %v643
  %v815 = vpack.c.b16 %v650, %v647
  %v816 = vpack.c.b16 %v651, %v648
  %v817 = vpack.c.b16 %v652, %v649
  %v818 = vpack.c.b16 %v656, %v653
  %v819 = vpack.c.b16 %v657, %v654
  %v820 = vpack.c.b16 %v658, %v655
  %v821 = vpack.c.b16 %v662, %v659
  %v822 = vpack.c.b16 %v663, %v660
  %v823 = vpack.c.b16 %v664, %v661
  %v824 = vpack.c.b16 %v668, %v665
  %v825 = vpack.c.b16 %v669, %v666
  %v826 = vpack.c.b16 %v670, %v667
  %v827 = vpack.c.b16 %v674, %v671
  %v828 = vpack.c.b16 %v675, %v672
  %v829 = vpack.c.b16 %v676, %v673
  %v830 = vpack.c.b16 %v680, %v677
  %v831 = vpack.c.b16 %v681, %v678
  %v832 = vpack.c.b16 %v682, %v679
  %v833 = vpack.c.b16 %v686, %v683
  %v834 = vpack.c.b16 %v687, %v684
  %v835 = vpack.c.b16 %v688, %v685
  %v836 = vpack.c.b16 %v692, %v689
  %v837 = vpack.c.b16 %v693, %v690
  %v838 = vpack.c.b16 %v694, %v691
  %v839 = vpack.c.b16 %v698, %v695
  %v840 = vpack.c.b16 %v699, %v696
  %v841 = vpack.c.b16 %v700, %v697
  %v842 = vpack.c.b16 %v704, %v701
  %v843 = vpack.c.b16 %v705, %v702
  %v844 = vpack.c.b16 %v706, %v703
  %v845 = vpack.c.b16 %v710, %v707
  %v846 = vpack.c.b16 %v711, %v708
  %v847 = vpack.c.b16 %v712, %v709
  %v848 = vpack.c.b16 %v716, %v713
  %v849 = vpack.c.b16 %v717, %v714
  %v850 = vpack.c.b16 %v718, %v715
  %v851 = vpack.c.b16 %v722, %v719
  %v852 = vpack.c.b16 %v723, %v720
  %v853 = vpack.c.b16 %v724, %v721
  %v854 = vpack.c.b16 %v728, %v725
  %v855 = vpack.c.b16 %v729, %v726
  %v856 = vpack.c.b16 %v730, %v727
  %v857 = vpack.c.b16 %v734, %v731
  %v858 = vpack.c.b16 %v735, %v732
  %v859 = vpack.c.b16 %v736, %v733
  %v860 = vpack.c.b16 %v740, %v737
  %v861 = vpack.c.b16 %v741, %v738
  %v862 = vpack.c.b16 %v742, %v739
  %v863 = vpack.c.b16 %v746, %v743
  %v864 = vpack.c.b16 %v747, %v744
  %v865 = vpack.c.b16 %v748, %v745
  %v866 = vpack.c.b16 %v752, %v749
  %v867 = vpack.c.b16 %v753, %v750
  %v868 = vpack.c.b16 %v754, %v751
  %v869 = vpack.c.b16 %v758, %v755
  %v870 = vpack.c.b16 %v759, %v756
  %v871 = vpack.c.b16 %v760, %v757
  %v872 = vpack.c.b16 %v764, %v761
  %v873 = vpack.c.b16 %v765, %v762
  %v874 = vpack.c.b16 %v766, %v763
  %v875 = vpack.c.b16 %v770, %v767
  %v876 = vpack.c.b16 %v771, %v768
  %v877 = vpack.c.b16 %v772, %v769
  %v878 = vpack.c.b16 %v776, %v773
  %v879 = vpack.c.b16 %v777, %v774
  %v880 = vpack.c.b16 %v778, %v775
  %v881 = vpack.c.b16 %v782, %v779
  %v882 = vpack.c.b16 %v783, %v780
  %v883 = vpack.c.b16 %v784, %v781
  %v884 = vpack.c.b16 %v788, %v785
  %v885 = vpack.c.b16 %v789, %v786
  %v886 = vpack.c.b16 %v790, %v787
  %983 = vmatprep.subr.bf16.mxu0 %v813
  %984 = vmatpush1.bf16.msra.mxu0 %v812
  %985 = vmatprep.subr.bf16.mxu0 %v810
  %986 = vmatpush1.bf16.msra.mxu0 %v809
  %987 = vmatprep.subr.bf16.mxu0 %v807
  %988 = vmatpush1.bf16.msra.mxu0 %v806
  %989 = vmatprep.subr.bf16.mxu0 %v804
  %990 = vmatpush1.bf16.msra.mxu0 %v803
  %991 = vmatprep.subr.bf16.mxu0 %v801
  %992 = vmatpush1.bf16.msra.mxu0 %v800
  %993 = vmatprep.subr.bf16.mxu0 %v798
  %994 = vmatpush1.bf16.msra.mxu0 %v797
  %995 = vmatprep.subr.bf16.mxu0 %v795
  %996 = vmatpush1.bf16.msra.mxu0 %v794
  %997 = vmatprep.subr.bf16.mxu0 %v792
  %998 = vmatpush1.bf16.msra.mxu0 %v791
  %999 = vmatprep.subr.bf16.mxu0 %v837
  %1000 = vmatpush2.bf16.msra.mxu0 %v836
  %1001 = vmatprep.subr.bf16.mxu0 %v834
  %1002 = vmatpush2.bf16.msra.mxu0 %v833
  %1003 = vmatprep.subr.bf16.mxu0 %v831
  %1004 = vmatpush2.bf16.msra.mxu0 %v830
  %1005 = vmatprep.subr.bf16.mxu0 %v828
  %1006 = vmatpush2.bf16.msra.mxu0 %v827
  %1007 = vmatprep.subr.bf16.mxu0 %v825
  %1008 = vmatpush2.bf16.msra.mxu0 %v824
  %1009 = vmatprep.subr.bf16.mxu0 %v822
  %1010 = vmatpush2.bf16.msra.mxu0 %v821
  %1011 = vmatprep.subr.bf16.mxu0 %v819
  %1012 = vmatpush2.bf16.msra.mxu0 %v818
  %1013 = vmatprep.subr.bf16.mxu0 %v816
  %1014 = vmatpush2.bf16.msra.mxu0 %v815
  %1015 = vmatprep.mubr.bf16.mxu0 %v323
  %1016 = vmatmul.mubr.bf16.gmra.mxu0 %v322
  %v1017 = vpop.f32.mrf.mxu0
  %v1018 = vadd.f32 %v459, %v1017
  %v1019 = vpop.f32.mrf.mxu0
  %v1020 = vadd.f32 %v463, %v1019
  %v1021 = vpop.f32.mrf.mxu0
  %v1022 = vpop.f32.mrf.mxu0
  %1023 = vdwg.mxu0
  %1024 = vmatprep.subr.bf16.mxu0 %v861
  %1025 = vmatpush1.bf16.msra.mxu0 %v860
  %1026 = vmatprep.subr.bf16.mxu0 %v858
  %1027 = vmatpush1.bf16.msra.mxu0 %v857
  %1028 = vmatprep.subr.bf16.mxu0 %v855
  %1029 = vmatpush1.bf16.msra.mxu0 %v854
  %1030 = vmatprep.subr.bf16.mxu0 %v852
  %1031 = vmatpush1.bf16.msra.mxu0 %v851
  %1032 = vmatprep.subr.bf16.mxu0 %v849
  %1033 = vmatpush1.bf16.msra.mxu0 %v848
  %1034 = vmatprep.subr.bf16.mxu0 %v846
  %1035 = vmatpush1.bf16.msra.mxu0 %v845
  %1036 = vmatprep.subr.bf16.mxu0 %v843
  %1037 = vmatpush1.bf16.msra.mxu0 %v842
  %1038 = vmatprep.subr.bf16.mxu0 %v840
  %1039 = vmatpush1.bf16.msra.mxu0 %v839
  %1040 = vmatprep.subr.bf16.mxu0 %v885
  %1041 = vmatpush2.bf16.msra.mxu0 %v884
  %1042 = vmatprep.subr.bf16.mxu0 %v882
  %1043 = vmatpush2.bf16.msra.mxu0 %v881
  %1044 = vmatprep.subr.bf16.mxu0 %v879
  %1045 = vmatpush2.bf16.msra.mxu0 %v878
  %1046 = vmatprep.subr.bf16.mxu0 %v876
  %1047 = vmatpush2.bf16.msra.mxu0 %v875
  %1048 = vmatprep.subr.bf16.mxu0 %v873
  %1049 = vmatpush2.bf16.msra.mxu0 %v872
  %1050 = vmatprep.subr.bf16.mxu0 %v870
  %1051 = vmatpush2.bf16.msra.mxu0 %v869
  %1052 = vmatprep.subr.bf16.mxu0 %v867
  %1053 = vmatpush2.bf16.msra.mxu0 %v866
  %1054 = vmatprep.subr.bf16.mxu0 %v864
  %1055 = vmatpush2.bf16.msra.mxu0 %v863
  %1056 = vmatprep.mubr.bf16.mxu0 %v325
  %1057 = vmatmul.mubr.bf16.gmra.mxu0 %v324
  %v1058 = vpop.f32.mrf.mxu0
  %v1059 = vadd.f32 %v1018, %v1058
  %v1060 = vpop.f32.mrf.mxu0
  %v1061 = vadd.f32 %v1020, %v1060
  %v1062 = vpop.f32.mrf.mxu0
  %v1063 = vpop.f32.mrf.mxu0
  %1064 = vdwg.mxu0
  %1065 = vmatprep.subr.bf16.mxu0 0
  %1066 = vmatpush1.bf16.msra.mxu0 %v814
  %1067 = vmatprep.subr.bf16.mxu0 0
  %1068 = vmatpush1.bf16.msra.mxu0 %v811
  %1069 = vmatprep.subr.bf16.mxu0 0
  %1070 = vmatpush1.bf16.msra.mxu0 %v808
  %1071 = vmatprep.subr.bf16.mxu0 0
  %1072 = vmatpush1.bf16.msra.mxu0 %v805
  %1073 = vmatprep.subr.bf16.mxu0 0
  %1074 = vmatpush1.bf16.msra.mxu0 %v802
  %1075 = vmatprep.subr.bf16.mxu0 0
  %1076 = vmatpush1.bf16.msra.mxu0 %v799
  %1077 = vmatprep.subr.bf16.mxu0 0
  %1078 = vmatpush1.bf16.msra.mxu0 %v796
  %1079 = vmatprep.subr.bf16.mxu0 0
  %1080 = vmatpush1.bf16.msra.mxu0 %v793
  %1081 = vmatprep.subr.bf16.mxu0 0
  %1082 = vmatpush2.bf16.msra.mxu0 %v838
  %1083 = vmatprep.subr.bf16.mxu0 0
  %1084 = vmatpush2.bf16.msra.mxu0 %v835
  %1085 = vmatprep.subr.bf16.mxu0 0
  %1086 = vmatpush2.bf16.msra.mxu0 %v832
  %1087 = vmatprep.subr.bf16.mxu0 0
  %1088 = vmatpush2.bf16.msra.mxu0 %v829
  %1089 = vmatprep.subr.bf16.mxu0 0
  %1090 = vmatpush2.bf16.msra.mxu0 %v826
  %1091 = vmatprep.subr.bf16.mxu0 0
  %1092 = vmatpush2.bf16.msra.mxu0 %v823
  %1093 = vmatprep.subr.bf16.mxu0 0
  %1094 = vmatpush2.bf16.msra.mxu0 %v820
  %1095 = vmatprep.subr.bf16.mxu0 0
  %1096 = vmatpush2.bf16.msra.mxu0 %v817
  %1097 = vmatprep.mubr.bf16.mxu0 %v323
  %1098 = vmatmul.mubr.bf16.gmra.mxu0 %v322
  %v1099 = vpop.f32.mrf.mxu0
  %v1100 = vadd.f32 %v467, %v1099
  %v1101 = vpop.f32.mrf.mxu0
  %v1102 = vpop.f32.mrf.mxu0
  %v1103 = vpop.f32.mrf.mxu0
  %1104 = vdwg.mxu0
  %1105 = vmatprep.subr.bf16.mxu0 0
  %1106 = vmatpush1.bf16.msra.mxu0 %v862
  %1107 = vmatprep.subr.bf16.mxu0 0
  %1108 = vmatpush1.bf16.msra.mxu0 %v859
  %1109 = vmatprep.subr.bf16.mxu0 0
  %1110 = vmatpush1.bf16.msra.mxu0 %v856
  %1111 = vmatprep.subr.bf16.mxu0 0
  %1112 = vmatpush1.bf16.msra.mxu0 %v853
  %1113 = vmatprep.subr.bf16.mxu0 0
  %1114 = vmatpush1.bf16.msra.mxu0 %v850
  %1115 = vmatprep.subr.bf16.mxu0 0
  %1116 = vmatpush1.bf16.msra.mxu0 %v847
  %1117 = vmatprep.subr.bf16.mxu0 0
  %1118 = vmatpush1.bf16.msra.mxu0 %v844
  %1119 = vmatprep.subr.bf16.mxu0 0
  %1120 = vmatpush1.bf16.msra.mxu0 %v841
  %1121 = vmatprep.subr.bf16.mxu0 0
  %1122 = vmatpush2.bf16.msra.mxu0 %v886
  %1123 = vmatprep.subr.bf16.mxu0 0
  %1124 = vmatpush2.bf16.msra.mxu0 %v883
  %1125 = vmatprep.subr.bf16.mxu0 0
  %1126 = vmatpush2.bf16.msra.mxu0 %v880
  %1127 = vmatprep.subr.bf16.mxu0 0
  %1128 = vmatpush2.bf16.msra.mxu0 %v877
  %1129 = vmatprep.subr.bf16.mxu0 0
  %1130 = vmatpush2.bf16.msra.mxu0 %v874
  %1131 = vmatprep.subr.bf16.mxu0 0
  %1132 = vmatpush2.bf16.msra.mxu0 %v871
  %1133 = vmatprep.subr.bf16.mxu0 0
  %1134 = vmatpush2.bf16.msra.mxu0 %v868
  %1135 = vmatprep.subr.bf16.mxu0 0
  %1136 = vmatpush2.bf16.msra.mxu0 %v865
  %1137 = vmatprep.mubr.bf16.mxu0 %v325
  %1138 = vmatmul.mubr.bf16.gmra.mxu0 %v324
  %v1139 = vpop.f32.mrf.mxu0
  %v1140 = vadd.f32 %v1100, %v1139
  %v1141 = vpop.f32.mrf.mxu0
  %v1142 = vpop.f32.mrf.mxu0
  %v1143 = vpop.f32.mrf.mxu0
  %1144 = vdwg.mxu0
  %v1145 = vlaneseq
  %v1146 = vand.u32 %v1145, 127
  %vm1147 = vcmp.lt.s32.totalorder %v1146, 51
  %v1148 = vsel %vm1147, 1, 0
  %vm1149 = vcmp.eq.s32.totalorder %v1148, 1
  %v1150 = vsel %vm1149, %v1059, -1e+30
  %vm1151 = vcmask 517120
  %v1152 = vsel %vm1151, %v1150, -inf
  %1153 = vmax.xlane.f32.xlu0 %v1152
  %v1154 = vpop.xlane.xlu0 %1153
  %v1155 = vsub.f32 %v1150, %v1154
  %v1156 = vmul.f32 %v1155, 1.442695
  %v1157 = vpow.pop %v1156
  %v1158 = vsel %vm1151, %v1157, 0.0
  %1159 = vadd.xlane.f32.xlu0 %v1158
  %v1160 = vpop.xlane.xlu0 %1159
  %v1161 = vrcp.pop %v1160
  %v1162 = vmul.f32 %v1157, %v1161
  %1164 = vrot.lane.b32.xlu0 %v1059, 64
  %v1165 = vpop.permute.xlu0 %1164
  %v1167 = vsel %vm1149, %v1165, -1e+30
  %v1168 = vsel %vm1151, %v1167, -inf
  %1169 = vmax.xlane.f32.xlu0 %v1168
  %v1170 = vpop.xlane.xlu0 %1169
  %v1171 = vsub.f32 %v1167, %v1170
  %v1172 = vmul.f32 %v1171, 1.442695
  %v1173 = vpow.pop %v1172
  %v1174 = vsel %vm1151, %v1173, 0.0
  %1175 = vadd.xlane.f32.xlu0 %v1174
  %v1176 = vpop.xlane.xlu0 %1175
  %v1177 = vrcp.pop %v1176
  %v1178 = vmul.f32 %v1173, %v1177
  %v1179 = vsel %vm1149, %v1061, -1e+30
  %v1180 = vsel %vm1151, %v1179, -inf
  %1181 = vmax.xlane.f32.xlu0 %v1180
  %v1182 = vpop.xlane.xlu0 %1181
  %v1183 = vsub.f32 %v1179, %v1182
  %v1184 = vmul.f32 %v1183, 1.442695
  %v1185 = vpow.pop %v1184
  %v1186 = vsel %vm1151, %v1185, 0.0
  %1187 = vadd.xlane.f32.xlu0 %v1186
  %v1188 = vpop.xlane.xlu0 %1187
  %v1189 = vrcp.pop %v1188
  %v1190 = vmul.f32 %v1185, %v1189
  %1192 = vrot.lane.b32.xlu0 %v1061, 64
  %v1193 = vpop.permute.xlu0 %1192
  %v1195 = vsel %vm1149, %v1193, -1e+30
  %v1196 = vsel %vm1151, %v1195, -inf
  %1197 = vmax.xlane.f32.xlu0 %v1196
  %v1198 = vpop.xlane.xlu0 %1197
  %v1199 = vsub.f32 %v1195, %v1198
  %v1200 = vmul.f32 %v1199, 1.442695
  %v1201 = vpow.pop %v1200
  %v1202 = vsel %vm1151, %v1201, 0.0
  %1203 = vadd.xlane.f32.xlu0 %v1202
  %v1204 = vpop.xlane.xlu0 %1203
  %v1205 = vrcp.pop %v1204
  %v1206 = vmul.f32 %v1201, %v1205
  %v1207 = vsel %vm1149, %v1140, -1e+30
  %v1208 = vsel %vm1151, %v1207, -inf
  %1209 = vmax.xlane.f32.xlu0 %v1208
  %v1210 = vpop.xlane.xlu0 %1209
  %v1211 = vsub.f32 %v1207, %v1210
  %v1212 = vmul.f32 %v1211, 1.442695
  %v1213 = vpow.pop %v1212
  %v1214 = vsel %vm1151, %v1213, 0.0
  %1215 = vadd.xlane.f32.xlu0 %v1214
  %v1216 = vpop.xlane.xlu0 %1215
  %v1217 = vrcp.pop %v1216
  %v1218 = vmul.f32 %v1213, %v1217
  %1220 = vrot.lane.b32.xlu0 %v1140, 64
  %v1221 = vpop.permute.xlu0 %1220
  %v1223 = vsel %vm1149, %v1221, -1e+30
  %v1224 = vsel %vm1151, %v1223, -inf
  %1225 = vmax.xlane.f32.xlu0 %v1224
  %v1226 = vpop.xlane.xlu0 %1225
  %v1227 = vsub.f32 %v1223, %v1226
  %v1228 = vmul.f32 %v1227, 1.442695
  %v1229 = vpow.pop %v1228
  %v1230 = vsel %vm1151, %v1229, 0.0
  %1231 = vadd.xlane.f32.xlu0 %v1230
  %v1232 = vpop.xlane.xlu0 %1231
  %v1233 = vrcp.pop %v1232
  %v1234 = vmul.f32 %v1229, %v1233
  %1236 = vrot.lane.b32.xlu0 %v1178, 64
  %v1237 = vpop.permute.xlu0 %1236
  %1240 = vrot.lane.b32.xlu0 %v1206, 64
  %v1241 = vpop.permute.xlu0 %1240
  %1244 = vrot.lane.b32.xlu0 %v1234, 64
  %v1245 = vpop.permute.xlu0 %1244
  %vm1247 = vcmask 523264
  %v1248 = vsel %vm1247, %v1162, %v1237
  %v1249 = vsel %vm1247, %v1190, %v1241
  %v1250 = vsel %vm1247, %v1218, %v1245
  %v1254 = vcombine.low %v1248, %v1249
  %v1256 = vunpack.c.l.s4 1983009808
  %v1257 = vunpack.c.0.s8 %v1256
  %v1258 = vlaneseq
  %v1259 = vshrl.u32 %v1258, 7
  %v1260 = vsub.s32 %v1257, %v1259
  %v1261 = vrot.slane %v1254, %v1260
  %v1263 = vunpack.c.l.s4 1983009808
  %v1264 = vunpack.c.0.s8 %v1263
  %v1265 = vlaneseq
  %v1266 = vshrl.u32 %v1265, 7
  %v1267 = vsub.s32 %v1264, %v1266
  %v1268 = vrot.slane %v1250, %v1267
  %v1269 = vcombine.low %v1261, %v1268
  %1271 = vst [vmem:[%s5] sm:$0x3f] %v1269
  // Predicated region
  $region22: #{c51_forward.7} parent=0 // pred_check
    _
  $region23: #{c51_forward.7} parent=0 // pred_check_branch
    %1273 = sbr.rel (0) target = $region25
  $region24: #{c51_forward.7} parent=0 // pred_region
    _
  $region25: #{c51_forward.7} parent=0 // pred_fallthru
    _
  // Predicated region
  $region26: #{c51_forward.7} parent=0 // pred_check
    _
  $region27: #{c51_forward.7} parent=0 // pred_check_branch
    %1275 = sbr.rel (0) target = $region29
  $region28: #{c51_forward.7} parent=0 // pred_region
    _
  $region29: #{c51_forward.7} parent=0 // pred_fallthru
    _

// kernel: c51_forward.5
$region0: #{c51_forward.5}
  #allocation0 [shape = 'u32[]', space=smem, size = 0x4, offset = 0x4, fixed_abs, tag = 'smem constant byte address 0x4 - core index']
  #allocation1 [shape = 'u32[144,128]{1,0:T(1,128)}', space=vmem, size = 0x12000, scoped, tag = 'internal scratch']
  %s0 = inlined_call_operand.vmem [shape: bf16[2,4,4,512], index: 0, kind: input, shape index: {}]
  %s1 = inlined_call_operand.vmem [shape: bf16[4,512,128], index: 1, kind: input, shape index: {}]
  %s2 = inlined_call_operand.vmem [shape: f32[1,128], index: 2, kind: input, shape index: {}]
  %s3 = inlined_call_operand.vmem [shape: bf16[2,3,3,128], index: 3, kind: output, shape index: {}]
  %s4 = sld [smem:[#allocation0]]
  $region45: #{c51_forward.5} parent=0
    _
  %s6 = ssub.s32 1, %s4
  %s7 = scalar_select 0, %s6, %s4
  loop: start=0, step=1, limit=4
  $region2: #{c51_forward.5} parent=0 // loop_pre_header
    _
  $region3: #{c51_forward.5} parent=0 // loop_header
    %s9 = sphi 0, %s13
    %p10 = scmp.ge.s32.totalorder %s9, 4
    %s19 = sphi 0, %s21
    %s22 = sphi 0, %s19
    %s23 = sphi 0, %s22
    %s39 = sphi 0, %s23
    %s43 = sphi 0, %s43
    %s45 = sphi 0, %s43
    %s46 = sphi 0, %s45
    %s60 = sphi 0, %s46
    %s64 = sphi 0, %s64
    %s66 = sphi 0, %s64
    %s67 = sphi 0, %s66
    %s81 = sphi 0, %s67
    %s87 = sphi 0, %s89
    %s90 = sphi 0, %s87
    %s91 = sphi 0, %s90
    %s107 = sphi 0, %s91
  $region4: #{c51_forward.5} parent=0 // loop_header_branch
    %12 = sbr.rel (%p10) target = $region8
  $region5: #{c51_forward.5} parent=0 // loop_body
    %s14 = ssub.s32 %s9, 1
    %s15 = ssub.s32 %s9, 2
    %s16 = sadd.s32 %s9, 1
    %s17 = ssub.s32 %s9, %s16
    %p18 = scmp.eq.s32.totalorder %s17, 0
    %s20 = sadd.s32 %s19, 1
    %s21 = scalar_select %p18, %s19, %s20
    %p24 = pneg %p18
    %p25 = scmp.eq.s32.totalorder %s9, 1
    %p26 = por %p24, %p25
    %p27 = scmp.ne.s32.totalorder %s19, %s22
    %p28 = scmp.eq.s32.totalorder %s9, 0
    %p29 = por %p27, %p28
    %p30 = scmp.ne.s32.totalorder %s19, %s22
    %p31 = scmp.eq.s32.totalorder %s14, 1
    %p32 = por %p30, %p31
    %p33 = scmp.ne.s32.totalorder %s22, %s23
    %p34 = scmp.eq.s32.totalorder %s14, 0
    %p35 = por %p33, %p34
    %p36 = scmp.ne.s32.totalorder %s22, %s23
    %p37 = scmp.eq.s32.totalorder %s15, 1
    %p38 = por %p36, %p37
    %p40 = scmp.ne.s32.totalorder %s23, %s39
    %p41 = scmp.eq.s32.totalorder %s15, 0
    %p42 = por %p40, %p41
    %s44 = sadd.s32 %s43, 1
    %p47 = scmp.eq.s32.totalorder %s9, 1
    %p48 = scmp.ne.s32.totalorder %s43, %s45
    %p49 = scmp.eq.s32.totalorder %s9, 0
    %p50 = por %p48, %p49
    %p51 = scmp.ne.s32.totalorder %s43, %s45
    %p52 = scmp.eq.s32.totalorder %s14, 1
    %p53 = por %p51, %p52
    %p54 = scmp.ne.s32.totalorder %s45, %s46
    %p55 = scmp.eq.s32.totalorder %s14, 0
    %p56 = por %p54, %p55
    %p57 = scmp.ne.s32.totalorder %s45, %s46
    %p58 = scmp.eq.s32.totalorder %s15, 1
    %p59 = por %p57, %p58
    %p61 = scmp.ne.s32.totalorder %s46, %s60
    %p62 = scmp.eq.s32.totalorder %s15, 0
    %p63 = por %p61, %p62
    %s65 = sadd.s32 %s64, 1
    %p68 = scmp.eq.s32.totalorder %s9, 1
    %p69 = scmp.ne.s32.totalorder %s64, %s66
    %p70 = scmp.eq.s32.totalorder %s9, 0
    %p71 = por %p69, %p70
    %p72 = scmp.ne.s32.totalorder %s64, %s66
    %p73 = scmp.eq.s32.totalorder %s14, 1
    %p74 = por %p72, %p73
    %p75 = scmp.ne.s32.totalorder %s66, %s67
    %p76 = scmp.eq.s32.totalorder %s14, 0
    %p77 = por %p75, %p76
    %p78 = scmp.ne.s32.totalorder %s66, %s67
    %p79 = scmp.eq.s32.totalorder %s15, 1
    %p80 = por %p78, %p79
    %p82 = scmp.ne.s32.totalorder %s67, %s81
    %p83 = scmp.eq.s32.totalorder %s15, 0
    %p84 = por %p82, %p83
    %s85 = ssub.s32 %s9, %s16
    %p86 = scmp.eq.s32.totalorder %s85, 0
    %s88 = sadd.s32 %s87, 1
    %s89 = scalar_select %p86, %s87, %s88
    %p92 = pneg %p86
    %p93 = scmp.eq.s32.totalorder %s9, 1
    %p94 = por %p92, %p93
    %p95 = scmp.ne.s32.totalorder %s87, %s90
    %p96 = scmp.eq.s32.totalorder %s9, 0
    %p97 = por %p95, %p96
    %p98 = scmp.ne.s32.totalorder %s87, %s90
    %p99 = scmp.eq.s32.totalorder %s14, 1
    %p100 = por %p98, %p99
    %p101 = scmp.ne.s32.totalorder %s90, %s91
    %p102 = scmp.eq.s32.totalorder %s14, 0
    %p103 = por %p101, %p102
    %p104 = scmp.ne.s32.totalorder %s90, %s91
    %p105 = scmp.eq.s32.totalorder %s15, 1
    %p106 = por %p104, %p105
    %p108 = scmp.ne.s32.totalorder %s91, %s107
    %p109 = scmp.eq.s32.totalorder %s15, 0
    %p110 = por %p108, %p109
    %p111 = scmp.le.s32.totalorder 1, %s9
    %p112 = scmp.lt.s32.totalorder %s9, 3
    %p113 = pnand %p111, %p112
    %p114 = pneg %p113
    // Predicated region
    $region9: #{c51_forward.5} parent=5 // pred_check
      _
    $region10: #{c51_forward.5} parent=5 // pred_check_branch
      %116 = sbr.rel (%p113) target = $region12
    $region11: #{c51_forward.5} parent=5 // pred_region
      %s117 = ssub.s32 %s9, 1
      // Predicated region
      $region13: #{c51_forward.5} parent=11 // pred_check
        %p118 = pneg %p56
      $region14: #{c51_forward.5} parent=11 // pred_check_branch
        %120 = sbr.rel (%p118) target = $region16
      $region15: #{c51_forward.5} parent=11 // pred_region
        _
      $region16: #{c51_forward.5} parent=11 // pred_fallthru
        _
      // Predicated region
      $region17: #{c51_forward.5} parent=11 // pred_check
        %p121 = pneg %p77
      $region18: #{c51_forward.5} parent=11 // pred_check_branch
        %123 = sbr.rel (%p121) target = $region20
      $region19: #{c51_forward.5} parent=11 // pred_region
        _
      $region20: #{c51_forward.5} parent=11 // pred_fallthru
        _
    $region12: #{c51_forward.5} parent=5 // pred_fallthru
      _
    %p124 = scmp.lt.s32.totalorder %s9, 2
    // Predicated region
    $region21: #{c51_forward.5} parent=5 // pred_check
      %p125 = pneg %p124
    $region22: #{c51_forward.5} parent=5 // pred_check_branch
      %127 = sbr.rel (%p125) target = $region24
    $region23: #{c51_forward.5} parent=5 // pred_region
      // Predicated region
      $region25: #{c51_forward.5} parent=23 // pred_check
        %p128 = pneg %p29
      $region26: #{c51_forward.5} parent=23 // pred_check_branch
        %130 = sbr.rel (%p128) target = $region28
      $region27: #{c51_forward.5} parent=23 // pred_region
        %p131 = scmp.lt.s32.totalorder %s9, 1
        %s132 = scalar_select %p131, %s9, 1
        %s133 = smul.addr %s132, 16
        %s134 = smul.addr %s133, 2
        %s135 = scalar_lea.vmem %s0, %s134
      $region28: #{c51_forward.5} parent=23 // pred_fallthru
        _
    $region24: #{c51_forward.5} parent=5 // pred_fallthru
      _
    %p136 = scmp.le.s32.totalorder 1, %s9
    %p137 = scmp.lt.s32.totalorder %s9, 3
    %p138 = pnand %p136, %p137
    %p139 = pneg %p138
    // Predicated region
    $region29: #{c51_forward.5} parent=5 // pred_check
      _
    $region30: #{c51_forward.5} parent=5 // pred_check_branch
      %141 = sbr.rel (%p138) target = $region32
    $region31: #{c51_forward.5} parent=5 // pred_region
      %s142 = ssub.s32 %s9, 1
      %p143 = scmp.lt.s32.totalorder %s14, 1
      %s144 = scalar_select %p143, %s14, 1
      %s145 = smul.addr %s144, 16
      %s146 = smul.addr %s145, 2
      %s147 = scalar_lea.vmem %s0, %s146
      %p148 = pneg %p35
      %p149 = pneg %p32
      %p150 = pneg %p56
      %p151 = pneg %p53
      %p152 = pneg %p77
      %p153 = pneg %p74
      %p154 = pneg %p103
      %p155 = pneg %p100
      %p156 = scmp.lt.s32.totalorder %s14, 1
      %s157 = scalar_select %p156, %s14, 1
      %s158 = smul.addr %s157, 3
      %s159 = smul.addr %s158, 2
      %s160 = scalar_lea.vmem %s3, %s159
      %p161 = scmp.lt.s32.totalorder %s14, 1
      %s162 = scalar_select %p161, %s14, 1
      %s163 = smul.addr %s162, 16
      %s164 = smul.addr %s163, 2
      %s165 = scalar_lea.vmem %s0, %s164
      %p166 = scmp.lt.s32.totalorder %s14, 1
      %s167 = scalar_select %p166, %s14, 1
      %s168 = smul.addr %s167, 3
      %s169 = smul.addr %s168, 2
      %s170 = scalar_lea.vmem %s3, %s169
      %v172 = vld [vmem:[%s2] sm:$0x1]
      %v173 = vld [vmem:[%s165] sm:$0xff]
      %v174 = vld [vmem:[%s1] sm:$0xf]
      %v175 = vld [vmem:[%s1 + $0x4] sm:$0xf]
      %v176 = vld [vmem:[%s1 + $0x8] sm:$0xf]
      %v177 = vld [vmem:[%s1 + $0xc] sm:$0xf]
      %v178 = vld [vmem:[%s1 + $0x10] sm:$0xf]
      %v179 = vld [vmem:[%s1 + $0x14] sm:$0xf]
      %v180 = vld [vmem:[%s1 + $0x18] sm:$0xf]
      %v181 = vld [vmem:[%s1 + $0x1c] sm:$0xf]
      %v182 = vld [vmem:[%s1 + $0x20] sm:$0xf]
      %v183 = vld [vmem:[%s1 + $0x24] sm:$0xf]
      %v184 = vld [vmem:[%s1 + $0x28] sm:$0xf]
      %v185 = vld [vmem:[%s1 + $0x2c] sm:$0xf]
      %v186 = vld [vmem:[%s1 + $0x30] sm:$0xf]
      %v187 = vld [vmem:[%s1 + $0x34] sm:$0xf]
      %v188 = vld [vmem:[%s1 + $0x38] sm:$0xf]
      %v189 = vld [vmem:[%s1 + $0x3c] sm:$0xf]
      %v190 = vld [vmem:[%s1 + $0x40] sm:$0xf]
      %v191 = vld [vmem:[%s1 + $0x44] sm:$0xf]
      %v192 = vld [vmem:[%s1 + $0x48] sm:$0xf]
      %v193 = vld [vmem:[%s1 + $0x4c] sm:$0xf]
      %v194 = vld [vmem:[%s1 + $0x50] sm:$0xf]
      %v195 = vld [vmem:[%s1 + $0x54] sm:$0xf]
      %v196 = vld [vmem:[%s1 + $0x58] sm:$0xf]
      %v197 = vld [vmem:[%s1 + $0x5c] sm:$0xf]
      %v198 = vld [vmem:[%s1 + $0x60] sm:$0xf]
      %v199 = vld [vmem:[%s1 + $0x64] sm:$0xf]
      %v200 = vld [vmem:[%s1 + $0x68] sm:$0xf]
      %v201 = vld [vmem:[%s1 + $0x6c] sm:$0xf]
      %v202 = vld [vmem:[%s1 + $0x70] sm:$0xf]
      %v203 = vld [vmem:[%s1 + $0x74] sm:$0xf]
      %v204 = vld [vmem:[%s1 + $0x78] sm:$0xf]
      %v205 = vld [vmem:[%s1 + $0x7c] sm:$0xf]
      %v206 = vld [vmem:[%s1 + $0x80] sm:$0xf]
      %v207 = vld [vmem:[%s1 + $0x84] sm:$0xf]
      %v208 = vld [vmem:[%s1 + $0x88] sm:$0xf]
      %v209 = vld [vmem:[%s1 + $0x8c] sm:$0xf]
      %v210 = vld [vmem:[%s1 + $0x90] sm:$0xf]
      %v211 = vld [vmem:[%s1 + $0x94] sm:$0xf]
      %v212 = vld [vmem:[%s1 + $0x98] sm:$0xf]
      %v213 = vld [vmem:[%s1 + $0x9c] sm:$0xf]
      %v214 = vld [vmem:[%s1 + $0xa0] sm:$0xf]
      %v215 = vld [vmem:[%s1 + $0xa4] sm:$0xf]
      %v216 = vld [vmem:[%s1 + $0xa8] sm:$0xf]
      %v217 = vld [vmem:[%s1 + $0xac] sm:$0xf]
      %v218 = vld [vmem:[%s1 + $0xb0] sm:$0xf]
      %v219 = vld [vmem:[%s1 + $0xb4] sm:$0xf]
      %v220 = vld [vmem:[%s1 + $0xb8] sm:$0xf]
      %v221 = vld [vmem:[%s1 + $0xbc] sm:$0xf]
      %v222 = vld [vmem:[%s1 + $0xc0] sm:$0xf]
      %v223 = vld [vmem:[%s1 + $0xc4] sm:$0xf]
      %v224 = vld [vmem:[%s1 + $0xc8] sm:$0xf]
      %v225 = vld [vmem:[%s1 + $0xcc] sm:$0xf]
      %v226 = vld [vmem:[%s1 + $0xd0] sm:$0xf]
      %v227 = vld [vmem:[%s1 + $0xd4] sm:$0xf]
      %v228 = vld [vmem:[%s1 + $0xd8] sm:$0xf]
      %v229 = vld [vmem:[%s1 + $0xdc] sm:$0xf]
      %v230 = vld [vmem:[%s1 + $0xe0] sm:$0xf]
      %v231 = vld [vmem:[%s1 + $0xe4] sm:$0xf]
      %v232 = vld [vmem:[%s1 + $0xe8] sm:$0xf]
      %v233 = vld [vmem:[%s1 + $0xec] sm:$0xf]
      %v234 = vld [vmem:[%s1 + $0xf0] sm:$0xf]
      %v235 = vld [vmem:[%s1 + $0xf4] sm:$0xf]
      %v236 = vld [vmem:[%s1 + $0xf8] sm:$0xf]
      %v237 = vld [vmem:[%s1 + $0xfc] sm:$0xf]
      %s238 = scalar_lea.vmem %s1, 256
      %v239 = vld [vmem:[%s238] sm:$0xf]
      %v240 = vld [vmem:[%s238 + $0x4] sm:$0xf]
      %v241 = vld [vmem:[%s238 + $0x8] sm:$0xf]
      %v242 = vld [vmem:[%s238 + $0xc] sm:$0xf]
      %v243 = vld [vmem:[%s238 + $0x10] sm:$0xf]
      %v244 = vld [vmem:[%s238 + $0x14] sm:$0xf]
      %v245 = vld [vmem:[%s238 + $0x18] sm:$0xf]
      %v246 = vld [vmem:[%s238 + $0x1c] sm:$0xf]
      %v247 = vld [vmem:[%s238 + $0x20] sm:$0xf]
      %v248 = vld [vmem:[%s238 + $0x24] sm:$0xf]
      %v249 = vld [vmem:[%s238 + $0x28] sm:$0xf]
      %v250 = vld [vmem:[%s238 + $0x2c] sm:$0xf]
      %v251 = vld [vmem:[%s238 + $0x30] sm:$0xf]
      %v252 = vld [vmem:[%s238 + $0x34] sm:$0xf]
      %v253 = vld [vmem:[%s238 + $0x38] sm:$0xf]
      %v254 = vld [vmem:[%s238 + $0x3c] sm:$0xf]
      %v255 = vld [vmem:[%s238 + $0x40] sm:$0xf]
      %v256 = vld [vmem:[%s238 + $0x44] sm:$0xf]
      %v257 = vld [vmem:[%s238 + $0x48] sm:$0xf]
      %v258 = vld [vmem:[%s238 + $0x4c] sm:$0xf]
      %v259 = vld [vmem:[%s238 + $0x50] sm:$0xf]
      %v260 = vld [vmem:[%s238 + $0x54] sm:$0xf]
      %v261 = vld [vmem:[%s238 + $0x58] sm:$0xf]
      %v262 = vld [vmem:[%s238 + $0x5c] sm:$0xf]
      %v263 = vld [vmem:[%s238 + $0x60] sm:$0xf]
      %v264 = vld [vmem:[%s238 + $0x64] sm:$0xf]
      %v265 = vld [vmem:[%s238 + $0x68] sm:$0xf]
      %v266 = vld [vmem:[%s238 + $0x6c] sm:$0xf]
      %v267 = vld [vmem:[%s238 + $0x70] sm:$0xf]
      %v268 = vld [vmem:[%s238 + $0x74] sm:$0xf]
      %v269 = vld [vmem:[%s238 + $0x78] sm:$0xf]
      %v270 = vld [vmem:[%s238 + $0x7c] sm:$0xf]
      %v271 = vld [vmem:[%s238 + $0x80] sm:$0xf]
      %v272 = vld [vmem:[%s238 + $0x84] sm:$0xf]
      %v273 = vld [vmem:[%s238 + $0x88] sm:$0xf]
      %v274 = vld [vmem:[%s238 + $0x8c] sm:$0xf]
      %v275 = vld [vmem:[%s238 + $0x90] sm:$0xf]
      %v276 = vld [vmem:[%s238 + $0x94] sm:$0xf]
      %v277 = vld [vmem:[%s238 + $0x98] sm:$0xf]
      %v278 = vld [vmem:[%s238 + $0x9c] sm:$0xf]
      %v279 = vld [vmem:[%s238 + $0xa0] sm:$0xf]
      %v280 = vld [vmem:[%s238 + $0xa4] sm:$0xf]
      %v281 = vld [vmem:[%s238 + $0xa8] sm:$0xf]
      %v282 = vld [vmem:[%s238 + $0xac] sm:$0xf]
      %v283 = vld [vmem:[%s238 + $0xb0] sm:$0xf]
      %v284 = vld [vmem:[%s238 + $0xb4] sm:$0xf]
      %v285 = vld [vmem:[%s238 + $0xb8] sm:$0xf]
      %v286 = vld [vmem:[%s238 + $0xbc] sm:$0xf]
      %v287 = vld [vmem:[%s238 + $0xc0] sm:$0xf]
      %v288 = vld [vmem:[%s238 + $0xc4] sm:$0xf]
      %v289 = vld [vmem:[%s238 + $0xc8] sm:$0xf]
      %v290 = vld [vmem:[%s238 + $0xcc] sm:$0xf]
      %v291 = vld [vmem:[%s238 + $0xd0] sm:$0xf]
      %v292 = vld [vmem:[%s238 + $0xd4] sm:$0xf]
      %v293 = vld [vmem:[%s238 + $0xd8] sm:$0xf]
      %v294 = vld [vmem:[%s238 + $0xdc] sm:$0xf]
      %v295 = vld [vmem:[%s238 + $0xe0] sm:$0xf]
      %v296 = vld [vmem:[%s238 + $0xe4] sm:$0xf]
      %v297 = vld [vmem:[%s238 + $0xe8] sm:$0xf]
      %v298 = vld [vmem:[%s238 + $0xec] sm:$0xf]
      %v299 = vld [vmem:[%s238 + $0xf0] sm:$0xf]
      %v300 = vld [vmem:[%s238 + $0xf4] sm:$0xf]
      %v301 = vld [vmem:[%s238 + $0xf8] sm:$0xf]
      %v302 = vld [vmem:[%s238 + $0xfc] sm:$0xf]
      %v304 = vcombine.high %v173, %v173
      %v306 = vunpack.c.l.s4 1983009808
      %v307 = vunpack.c.0.s8 %v306
      %v308 = vlaneseq
      %v309 = vshrl.u32 %v308, 7
      %v310 = vsub.s32 %v307, %v309
      %v311 = vrot.slane %v173, %v310
      %v313 = vunpack.c.l.s4 1983009808
      %v314 = vunpack.c.0.s8 %v313
      %v315 = vlaneseq
      %v316 = vshrl.u32 %v315, 7
      %v317 = vsub.s32 %v314, %v316
      %v318 = vrot.slane %v304, %v317
      %v319 = vcombine.high %v311, %v311
      %v320 = vcombine.high %v318, %v318
      %v322 = vshrl.u32 %v311, 16
      %v324 = vshll.u32 %v311, 16
      %v326 = vrot.slane %v324, 1
      %v327 = vor.u32 %v322, %v326
      %v329 = vshrl.u32 %v319, 16
      %v331 = vshll.u32 %v319, 16
      %v333 = vrot.slane %v331, 1
      %v334 = vor.u32 %v329, %v333
      %v336 = vshrl.u32 %v318, 16
      %v338 = vshll.u32 %v318, 16
      %v340 = vrot.slane %v338, 1
      %v341 = vor.u32 %v336, %v340
      %v343 = vshrl.u32 %v320, 16
      %v345 = vshll.u32 %v320, 16
      %v347 = vrot.slane %v345, 1
      %v348 = vor.u32 %v343, %v347
      %v417 = vunpack.c.l.b16 %v239
      %v418 = vunpack.c.l.b16 %v240
      %v419 = vunpack.c.l.b16 %v241
      %v420 = vunpack.c.l.b16 %v242
      %v421 = vunpack.c.l.b16 %v243
      %v422 = vunpack.c.l.b16 %v244
      %v423 = vunpack.c.l.b16 %v245
      %v424 = vunpack.c.l.b16 %v246
      %v425 = vunpack.c.l.b16 %v247
      %v426 = vunpack.c.l.b16 %v248
      %v427 = vunpack.c.l.b16 %v249
      %v428 = vunpack.c.l.b16 %v250
      %v429 = vunpack.c.l.b16 %v251
      %v430 = vunpack.c.l.b16 %v252
      %v431 = vunpack.c.l.b16 %v253
      %v432 = vunpack.c.l.b16 %v254
      %v433 = vunpack.c.l.b16 %v255
      %v434 = vunpack.c.l.b16 %v256
      %v435 = vunpack.c.l.b16 %v257
      %v436 = vunpack.c.l.b16 %v258
      %v437 = vunpack.c.l.b16 %v259
      %v438 = vunpack.c.l.b16 %v260
      %v439 = vunpack.c.l.b16 %v261
      %v440 = vunpack.c.l.b16 %v262
      %v441 = vunpack.c.l.b16 %v263
      %v442 = vunpack.c.l.b16 %v264
      %v443 = vunpack.c.l.b16 %v265
      %v444 = vunpack.c.l.b16 %v266
      %v445 = vunpack.c.l.b16 %v267
      %v446 = vunpack.c.l.b16 %v268
      %v447 = vunpack.c.l.b16 %v269
      %v448 = vunpack.c.l.b16 %v270
      %v449 = vunpack.c.l.b16 %v271
      %v450 = vunpack.c.l.b16 %v272
      %v451 = vunpack.c.l.b16 %v273
      %v452 = vunpack.c.l.b16 %v274
      %v453 = vunpack.c.l.b16 %v275
      %v454 = vunpack.c.l.b16 %v276
      %v455 = vunpack.c.l.b16 %v277
      %v456 = vunpack.c.l.b16 %v278
      %v457 = vunpack.c.l.b16 %v279
      %v458 = vunpack.c.l.b16 %v280
      %v459 = vunpack.c.l.b16 %v281
      %v460 = vunpack.c.l.b16 %v282
      %v461 = vunpack.c.l.b16 %v283
      %v462 = vunpack.c.l.b16 %v284
      %v463 = vunpack.c.l.b16 %v285
      %v464 = vunpack.c.l.b16 %v286
      %v465 = vunpack.c.l.b16 %v287
      %v466 = vunpack.c.l.b16 %v288
      %v467 = vunpack.c.l.b16 %v289
      %v468 = vunpack.c.l.b16 %v290
      %v469 = vunpack.c.l.b16 %v291
      %v470 = vunpack.c.l.b16 %v292
      %v471 = vunpack.c.l.b16 %v293
      %v472 = vunpack.c.l.b16 %v294
      %v473 = vunpack.c.l.b16 %v295
      %v474 = vunpack.c.l.b16 %v296
      %v475 = vunpack.c.l.b16 %v297
      %v476 = vunpack.c.l.b16 %v298
      %v477 = vunpack.c.l.b16 %v299
      %v478 = vunpack.c.l.b16 %v300
      %v479 = vunpack.c.l.b16 %v301
      %v480 = vunpack.c.l.b16 %v302
      %v481 = vpack.c.b16 %v418, %v417
      %v482 = vpack.c.b16 %v420, %v419
      %v483 = vpack.c.b16 %v422, %v421
      %v484 = vpack.c.b16 %v424, %v423
      %v485 = vpack.c.b16 %v426, %v425
      %v486 = vpack.c.b16 %v428, %v427
      %v487 = vpack.c.b16 %v430, %v429
      %v488 = vpack.c.b16 %v432, %v431
      %v489 = vpack.c.b16 %v434, %v433
      %v490 = vpack.c.b16 %v436, %v435
      %v491 = vpack.c.b16 %v438, %v437
      %v492 = vpack.c.b16 %v440, %v439
      %v493 = vpack.c.b16 %v442, %v441
      %v494 = vpack.c.b16 %v444, %v443
      %v495 = vpack.c.b16 %v446, %v445
      %v496 = vpack.c.b16 %v448, %v447
      %v497 = vpack.c.b16 %v450, %v449
      %v498 = vpack.c.b16 %v452, %v451
      %v499 = vpack.c.b16 %v454, %v453
      %v500 = vpack.c.b16 %v456, %v455
      %v501 = vpack.c.b16 %v458, %v457
      %v502 = vpack.c.b16 %v460, %v459
      %v503 = vpack.c.b16 %v462, %v461
      %v504 = vpack.c.b16 %v464, %v463
      %v505 = vpack.c.b16 %v466, %v465
      %v506 = vpack.c.b16 %v468, %v467
      %v507 = vpack.c.b16 %v470, %v469
      %v508 = vpack.c.b16 %v472, %v471
      %v509 = vpack.c.b16 %v474, %v473
      %v510 = vpack.c.b16 %v476, %v475
      %v511 = vpack.c.b16 %v478, %v477
      %v512 = vpack.c.b16 %v480, %v479
      %545 = vmatprep.subr.bf16.mxu0 0
      %546 = vmatpush1.bf16.msra.mxu0 %v488
      %547 = vmatprep.subr.bf16.mxu0 0
      %548 = vmatpush1.bf16.msra.mxu0 %v487
      %549 = vmatprep.subr.bf16.mxu0 0
      %550 = vmatpush1.bf16.msra.mxu0 %v486
      %551 = vmatprep.subr.bf16.mxu0 0
      %552 = vmatpush1.bf16.msra.mxu0 %v485
      %553 = vmatprep.subr.bf16.mxu0 0
      %554 = vmatpush1.bf16.msra.mxu0 %v484
      %555 = vmatprep.subr.bf16.mxu0 0
      %556 = vmatpush1.bf16.msra.mxu0 %v483
      %557 = vmatprep.subr.bf16.mxu0 0
      %558 = vmatpush1.bf16.msra.mxu0 %v482
      %559 = vmatprep.subr.bf16.mxu0 0
      %560 = vmatpush1.bf16.msra.mxu0 %v481
      %561 = vmatprep.subr.bf16.mxu0 0
      %562 = vmatpush2.bf16.msra.mxu0 %v496
      %563 = vmatprep.subr.bf16.mxu0 0
      %564 = vmatpush2.bf16.msra.mxu0 %v495
      %565 = vmatprep.subr.bf16.mxu0 0
      %566 = vmatpush2.bf16.msra.mxu0 %v494
      %567 = vmatprep.subr.bf16.mxu0 0
      %568 = vmatpush2.bf16.msra.mxu0 %v493
      %569 = vmatprep.subr.bf16.mxu0 0
      %570 = vmatpush2.bf16.msra.mxu0 %v492
      %571 = vmatprep.subr.bf16.mxu0 0
      %572 = vmatpush2.bf16.msra.mxu0 %v491
      %573 = vmatprep.subr.bf16.mxu0 0
      %574 = vmatpush2.bf16.msra.mxu0 %v490
      %575 = vmatprep.subr.bf16.mxu0 0
      %576 = vmatpush2.bf16.msra.mxu0 %v489
      %577 = vmatprep.mubr.bf16.mxu0 %v334
      %578 = vmatmul.mubr.bf16.gmra.mxu0 %v327
      %v579 = vpop.f32.mrf.mxu0
      %v580 = vadd.f32 0.0, %v579
      %v581 = vpop.f32.mrf.mxu0
      %v582 = vpop.f32.mrf.mxu0
      %v583 = vpop.f32.mrf.mxu0
      %584 = vdwg.mxu0
      %585 = vmatprep.subr.bf16.mxu0 0
      %586 = vmatpush1.bf16.msra.mxu0 %v504
      %587 = vmatprep.subr.bf16.mxu0 0
      %588 = vmatpush1.bf16.msra.mxu0 %v503
      %589 = vmatprep.subr.bf16.mxu0 0
      %590 = vmatpush1.bf16.msra.mxu0 %v502
      %591 = vmatprep.subr.bf16.mxu0 0
      %592 = vmatpush1.bf16.msra.mxu0 %v501
      %593 = vmatprep.subr.bf16.mxu0 0
      %594 = vmatpush1.bf16.msra.mxu0 %v500
      %595 = vmatprep.subr.bf16.mxu0 0
      %596 = vmatpush1.bf16.msra.mxu0 %v499
      %597 = vmatprep.subr.bf16.mxu0 0
      %598 = vmatpush1.bf16.msra.mxu0 %v498
      %599 = vmatprep.subr.bf16.mxu0 0
      %600 = vmatpush1.bf16.msra.mxu0 %v497
      %601 = vmatprep.subr.bf16.mxu0 0
      %602 = vmatpush2.bf16.msra.mxu0 %v512
      %603 = vmatprep.subr.bf16.mxu0 0
      %604 = vmatpush2.bf16.msra.mxu0 %v511
      %605 = vmatprep.subr.bf16.mxu0 0
      %606 = vmatpush2.bf16.msra.mxu0 %v510
      %607 = vmatprep.subr.bf16.mxu0 0
      %608 = vmatpush2.bf16.msra.mxu0 %v509
      %609 = vmatprep.subr.bf16.mxu0 0
      %610 = vmatpush2.bf16.msra.mxu0 %v508
      %611 = vmatprep.subr.bf16.mxu0 0
      %612 = vmatpush2.bf16.msra.mxu0 %v507
      %613 = vmatprep.subr.bf16.mxu0 0
      %614 = vmatpush2.bf16.msra.mxu0 %v506
      %615 = vmatprep.subr.bf16.mxu0 0
      %616 = vmatpush2.bf16.msra.mxu0 %v505
      %617 = vmatprep.mubr.bf16.mxu0 %v348
      %618 = vmatmul.mubr.bf16.gmra.mxu0 %v341
      %v619 = vpop.f32.mrf.mxu0
      %v620 = vadd.f32 %v580, %v619
      %v621 = vpop.f32.mrf.mxu0
      %v622 = vpop.f32.mrf.mxu0
      %v623 = vpop.f32.mrf.mxu0
      %624 = vdwg.mxu0
      %v693 = vunpack.c.l.b16 %v174
      %v694 = vunpack.c.l.b16 %v175
      %v695 = vunpack.c.l.b16 %v176
      %v696 = vunpack.c.l.b16 %v177
      %v697 = vunpack.c.l.b16 %v178
      %v698 = vunpack.c.l.b16 %v179
      %v699 = vunpack.c.l.b16 %v180
      %v700 = vunpack.c.l.b16 %v181
      %v701 = vunpack.c.l.b16 %v182
      %v702 = vunpack.c.l.b16 %v183
      %v703 = vunpack.c.l.b16 %v184
      %v704 = vunpack.c.l.b16 %v185
      %v705 = vunpack.c.l.b16 %v186
      %v706 = vunpack.c.l.b16 %v187
      %v707 = vunpack.c.l.b16 %v188
      %v708 = vunpack.c.l.b16 %v189
      %v709 = vunpack.c.l.b16 %v190
      %v710 = vunpack.c.l.b16 %v191
      %v711 = vunpack.c.l.b16 %v192
      %v712 = vunpack.c.l.b16 %v193
      %v713 = vunpack.c.l.b16 %v194
      %v714 = vunpack.c.l.b16 %v195
      %v715 = vunpack.c.l.b16 %v196
      %v716 = vunpack.c.l.b16 %v197
      %v717 = vunpack.c.l.b16 %v198
      %v718 = vunpack.c.l.b16 %v199
      %v719 = vunpack.c.l.b16 %v200
      %v720 = vunpack.c.l.b16 %v201
      %v721 = vunpack.c.l.b16 %v202
      %v722 = vunpack.c.l.b16 %v203
      %v723 = vunpack.c.l.b16 %v204
      %v724 = vunpack.c.l.b16 %v205
      %v725 = vunpack.c.l.b16 %v206
      %v726 = vunpack.c.l.b16 %v207
      %v727 = vunpack.c.l.b16 %v208
      %v728 = vunpack.c.l.b16 %v209
      %v729 = vunpack.c.l.b16 %v210
      %v730 = vunpack.c.l.b16 %v211
      %v731 = vunpack.c.l.b16 %v212
      %v732 = vunpack.c.l.b16 %v213
      %v733 = vunpack.c.l.b16 %v214
      %v734 = vunpack.c.l.b16 %v215
      %v735 = vunpack.c.l.b16 %v216
      %v736 = vunpack.c.l.b16 %v217
      %v737 = vunpack.c.l.b16 %v218
      %v738 = vunpack.c.l.b16 %v219
      %v739 = vunpack.c.l.b16 %v220
      %v740 = vunpack.c.l.b16 %v221
      %v741 = vunpack.c.l.b16 %v222
      %v742 = vunpack.c.l.b16 %v223
      %v743 = vunpack.c.l.b16 %v224
      %v744 = vunpack.c.l.b16 %v225
      %v745 = vunpack.c.l.b16 %v226
      %v746 = vunpack.c.l.b16 %v227
      %v747 = vunpack.c.l.b16 %v228
      %v748 = vunpack.c.l.b16 %v229
      %v749 = vunpack.c.l.b16 %v230
      %v750 = vunpack.c.l.b16 %v231
      %v751 = vunpack.c.l.b16 %v232
      %v752 = vunpack.c.l.b16 %v233
      %v753 = vunpack.c.l.b16 %v234
      %v754 = vunpack.c.l.b16 %v235
      %v755 = vunpack.c.l.b16 %v236
      %v756 = vunpack.c.l.b16 %v237
      %v757 = vpack.c.b16 %v694, %v693
      %v758 = vpack.c.b16 %v696, %v695
      %v759 = vpack.c.b16 %v698, %v697
      %v760 = vpack.c.b16 %v700, %v699
      %v761 = vpack.c.b16 %v702, %v701
      %v762 = vpack.c.b16 %v704, %v703
      %v763 = vpack.c.b16 %v706, %v705
      %v764 = vpack.c.b16 %v708, %v707
      %v765 = vpack.c.b16 %v710, %v709
      %v766 = vpack.c.b16 %v712, %v711
      %v767 = vpack.c.b16 %v714, %v713
      %v768 = vpack.c.b16 %v716, %v715
      %v769 = vpack.c.b16 %v718, %v717
      %v770 = vpack.c.b16 %v720, %v719
      %v771 = vpack.c.b16 %v722, %v721
      %v772 = vpack.c.b16 %v724, %v723
      %v773 = vpack.c.b16 %v726, %v725
      %v774 = vpack.c.b16 %v728, %v727
      %v775 = vpack.c.b16 %v730, %v729
      %v776 = vpack.c.b16 %v732, %v731
      %v777 = vpack.c.b16 %v734, %v733
      %v778 = vpack.c.b16 %v736, %v735
      %v779 = vpack.c.b16 %v738, %v737
      %v780 = vpack.c.b16 %v740, %v739
      %v781 = vpack.c.b16 %v742, %v741
      %v782 = vpack.c.b16 %v744, %v743
      %v783 = vpack.c.b16 %v746, %v745
      %v784 = vpack.c.b16 %v748, %v747
      %v785 = vpack.c.b16 %v750, %v749
      %v786 = vpack.c.b16 %v752, %v751
      %v787 = vpack.c.b16 %v754, %v753
      %v788 = vpack.c.b16 %v756, %v755
      %821 = vmatprep.subr.bf16.mxu0 0
      %822 = vmatpush1.bf16.msra.mxu0 %v764
      %823 = vmatprep.subr.bf16.mxu0 0
      %824 = vmatpush1.bf16.msra.mxu0 %v763
      %825 = vmatprep.subr.bf16.mxu0 0
      %826 = vmatpush1.bf16.msra.mxu0 %v762
      %827 = vmatprep.subr.bf16.mxu0 0
      %828 = vmatpush1.bf16.msra.mxu0 %v761
      %829 = vmatprep.subr.bf16.mxu0 0
      %830 = vmatpush1.bf16.msra.mxu0 %v760
      %831 = vmatprep.subr.bf16.mxu0 0
      %832 = vmatpush1.bf16.msra.mxu0 %v759
      %833 = vmatprep.subr.bf16.mxu0 0
      %834 = vmatpush1.bf16.msra.mxu0 %v758
      %835 = vmatprep.subr.bf16.mxu0 0
      %836 = vmatpush1.bf16.msra.mxu0 %v757
      %837 = vmatprep.subr.bf16.mxu0 0
      %838 = vmatpush2.bf16.msra.mxu0 %v772
      %839 = vmatprep.subr.bf16.mxu0 0
      %840 = vmatpush2.bf16.msra.mxu0 %v771
      %841 = vmatprep.subr.bf16.mxu0 0
      %842 = vmatpush2.bf16.msra.mxu0 %v770
      %843 = vmatprep.subr.bf16.mxu0 0
      %844 = vmatpush2.bf16.msra.mxu0 %v769
      %845 = vmatprep.subr.bf16.mxu0 0
      %846 = vmatpush2.bf16.msra.mxu0 %v768
      %847 = vmatprep.subr.bf16.mxu0 0
      %848 = vmatpush2.bf16.msra.mxu0 %v767
      %849 = vmatprep.subr.bf16.mxu0 0
      %850 = vmatpush2.bf16.msra.mxu0 %v766
      %851 = vmatprep.subr.bf16.mxu0 0
      %852 = vmatpush2.bf16.msra.mxu0 %v765
      %853 = vmatprep.mubr.bf16.mxu0 %v319
      %854 = vmatmul.mubr.bf16.gmra.mxu0 %v311
      %v855 = vpop.f32.mrf.mxu0
      %v856 = vadd.f32 %v620, %v855
      %v857 = vpop.f32.mrf.mxu0
      %v858 = vpop.f32.mrf.mxu0
      %v859 = vpop.f32.mrf.mxu0
      %860 = vdwg.mxu0
      %861 = vmatprep.subr.bf16.mxu0 0
      %862 = vmatpush1.bf16.msra.mxu0 %v780
      %863 = vmatprep.subr.bf16.mxu0 0
      %864 = vmatpush1.bf16.msra.mxu0 %v779
      %865 = vmatprep.subr.bf16.mxu0 0
      %866 = vmatpush1.bf16.msra.mxu0 %v778
      %867 = vmatprep.subr.bf16.mxu0 0
      %868 = vmatpush1.bf16.msra.mxu0 %v777
      %869 = vmatprep.subr.bf16.mxu0 0
      %870 = vmatpush1.bf16.msra.mxu0 %v776
      %871 = vmatprep.subr.bf16.mxu0 0
      %872 = vmatpush1.bf16.msra.mxu0 %v775
      %873 = vmatprep.subr.bf16.mxu0 0
      %874 = vmatpush1.bf16.msra.mxu0 %v774
      %875 = vmatprep.subr.bf16.mxu0 0
      %876 = vmatpush1.bf16.msra.mxu0 %v773
      %877 = vmatprep.subr.bf16.mxu0 0
      %878 = vmatpush2.bf16.msra.mxu0 %v788
      %879 = vmatprep.subr.bf16.mxu0 0
      %880 = vmatpush2.bf16.msra.mxu0 %v787
      %881 = vmatprep.subr.bf16.mxu0 0
      %882 = vmatpush2.bf16.msra.mxu0 %v786
      %883 = vmatprep.subr.bf16.mxu0 0
      %884 = vmatpush2.bf16.msra.mxu0 %v785
      %885 = vmatprep.subr.bf16.mxu0 0
      %886 = vmatpush2.bf16.msra.mxu0 %v784
      %887 = vmatprep.subr.bf16.mxu0 0
      %888 = vmatpush2.bf16.msra.mxu0 %v783
      %889 = vmatprep.subr.bf16.mxu0 0
      %890 = vmatpush2.bf16.msra.mxu0 %v782
      %891 = vmatprep.subr.bf16.mxu0 0
      %892 = vmatpush2.bf16.msra.mxu0 %v781
      %893 = vmatprep.mubr.bf16.mxu0 %v320
      %894 = vmatmul.mubr.bf16.gmra.mxu0 %v318
      %v895 = vpop.f32.mrf.mxu0
      %v896 = vadd.f32 %v856, %v895
      %v897 = vpop.f32.mrf.mxu0
      %v898 = vpop.f32.mrf.mxu0
      %v899 = vpop.f32.mrf.mxu0
      %900 = vdwg.mxu0
      %s901 = scalar_lea.vmem %s165, 8
      %v902 = vld [vmem:[%s901] sm:$0xff]
      %s903 = scalar_lea.vmem %s1, 512
      %v904 = vld [vmem:[%s903] sm:$0xf]
      %v905 = vld [vmem:[%s903 + $0x4] sm:$0xf]
      %v906 = vld [vmem:[%s903 + $0x8] sm:$0xf]
      %v907 = vld [vmem:[%s903 + $0xc] sm:$0xf]
      %v908 = vld [vmem:[%s903 + $0x10] sm:$0xf]
      %v909 = vld [vmem:[%s903 + $0x14] sm:$0xf]
      %v910 = vld [vmem:[%s903 + $0x18] sm:$0xf]
      %v911 = vld [vmem:[%s903 + $0x1c] sm:$0xf]
      %v912 = vld [vmem:[%s903 + $0x20] sm:$0xf]
      %v913 = vld [vmem:[%s903 + $0x24] sm:$0xf]
      %v914 = vld [vmem:[%s903 + $0x28] sm:$0xf]
      %v915 = vld [vmem:[%s903 + $0x2c] sm:$0xf]
      %v916 = vld [vmem:[%s903 + $0x30] sm:$0xf]
      %v917 = vld [vmem:[%s903 + $0x34] sm:$0xf]
      %v918 = vld [vmem:[%s903 + $0x38] sm:$0xf]
      %v919 = vld [vmem:[%s903 + $0x3c] sm:$0xf]
      %v920 = vld [vmem:[%s903 + $0x40] sm:$0xf]
      %v921 = vld [vmem:[%s903 + $0x44] sm:$0xf]
      %v922 = vld [vmem:[%s903 + $0x48] sm:$0xf]
      %v923 = vld [vmem:[%s903 + $0x4c] sm:$0xf]
      %v924 = vld [vmem:[%s903 + $0x50] sm:$0xf]
      %v925 = vld [vmem:[%s903 + $0x54] sm:$0xf]
      %v926 = vld [vmem:[%s903 + $0x58] sm:$0xf]
      %v927 = vld [vmem:[%s903 + $0x5c] sm:$0xf]
      %v928 = vld [vmem:[%s903 + $0x60] sm:$0xf]
      %v929 = vld [vmem:[%s903 + $0x64] sm:$0xf]
      %v930 = vld [vmem:[%s903 + $0x68] sm:$0xf]
      %v931 = vld [vmem:[%s903 + $0x6c] sm:$0xf]
      %v932 = vld [vmem:[%s903 + $0x70] sm:$0xf]
      %v933 = vld [vmem:[%s903 + $0x74] sm:$0xf]
      %v934 = vld [vmem:[%s903 + $0x78] sm:$0xf]
      %v935 = vld [vmem:[%s903 + $0x7c] sm:$0xf]
      %v936 = vld [vmem:[%s903 + $0x80] sm:$0xf]
      %v937 = vld [vmem:[%s903 + $0x84] sm:$0xf]
      %v938 = vld [vmem:[%s903 + $0x88] sm:$0xf]
      %v939 = vld [vmem:[%s903 + $0x8c] sm:$0xf]
      %v940 = vld [vmem:[%s903 + $0x90] sm:$0xf]
      %v941 = vld [vmem:[%s903 + $0x94] sm:$0xf]
      %v942 = vld [vmem:[%s903 + $0x98] sm:$0xf]
      %v943 = vld [vmem:[%s903 + $0x9c] sm:$0xf]
      %v944 = vld [vmem:[%s903 + $0xa0] sm:$0xf]
      %v945 = vld [vmem:[%s903 + $0xa4] sm:$0xf]
      %v946 = vld [vmem:[%s903 + $0xa8] sm:$0xf]
      %v947 = vld [vmem:[%s903 + $0xac] sm:$0xf]
      %v948 = vld [vmem:[%s903 + $0xb0] sm:$0xf]
      %v949 = vld [vmem:[%s903 + $0xb4] sm:$0xf]
      %v950 = vld [vmem:[%s903 + $0xb8] sm:$0xf]
      %v951 = vld [vmem:[%s903 + $0xbc] sm:$0xf]
      %v952 = vld [vmem:[%s903 + $0xc0] sm:$0xf]
      %v953 = vld [vmem:[%s903 + $0xc4] sm:$0xf]
      %v954 = vld [vmem:[%s903 + $0xc8] sm:$0xf]
      %v955 = vld [vmem:[%s903 + $0xcc] sm:$0xf]
      %v956 = vld [vmem:[%s903 + $0xd0] sm:$0xf]
      %v957 = vld [vmem:[%s903 + $0xd4] sm:$0xf]
      %v958 = vld [vmem:[%s903 + $0xd8] sm:$0xf]
      %v959 = vld [vmem:[%s903 + $0xdc] sm:$0xf]
      %v960 = vld [vmem:[%s903 + $0xe0] sm:$0xf]
      %v961 = vld [vmem:[%s903 + $0xe4] sm:$0xf]
      %v962 = vld [vmem:[%s903 + $0xe8] sm:$0xf]
      %v963 = vld [vmem:[%s903 + $0xec] sm:$0xf]
      %v964 = vld [vmem:[%s903 + $0xf0] sm:$0xf]
      %v965 = vld [vmem:[%s903 + $0xf4] sm:$0xf]
      %v966 = vld [vmem:[%s903 + $0xf8] sm:$0xf]
      %v967 = vld [vmem:[%s903 + $0xfc] sm:$0xf]
      %v969 = vcombine.high %v902, %v902
      %v971 = vunpack.c.l.s4 1983009808
      %v972 = vunpack.c.0.s8 %v971
      %v973 = vlaneseq
      %v974 = vshrl.u32 %v973, 7
      %v975 = vsub.s32 %v972, %v974
      %v976 = vrot.slane %v902, %v975
      %v978 = vunpack.c.l.s4 1983009808
      %v979 = vunpack.c.0.s8 %v978
      %v980 = vlaneseq
      %v981 = vshrl.u32 %v980, 7
      %v982 = vsub.s32 %v979, %v981
      %v983 = vrot.slane %v969, %v982
      %v984 = vcombine.high %v976, %v976
      %v985 = vcombine.high %v983, %v983
      %v1054 = vunpack.c.l.b16 %v904
      %v1055 = vunpack.c.l.b16 %v905
      %v1056 = vunpack.c.l.b16 %v906
      %v1057 = vunpack.c.l.b16 %v907
      %v1058 = vunpack.c.l.b16 %v908
      %v1059 = vunpack.c.l.b16 %v909
      %v1060 = vunpack.c.l.b16 %v910
      %v1061 = vunpack.c.l.b16 %v911
      %v1062 = vunpack.c.l.b16 %v912
      %v1063 = vunpack.c.l.b16 %v913
      %v1064 = vunpack.c.l.b16 %v914
      %v1065 = vunpack.c.l.b16 %v915
      %v1066 = vunpack.c.l.b16 %v916
      %v1067 = vunpack.c.l.b16 %v917
      %v1068 = vunpack.c.l.b16 %v918
      %v1069 = vunpack.c.l.b16 %v919
      %v1070 = vunpack.c.l.b16 %v920
      %v1071 = vunpack.c.l.b16 %v921
      %v1072 = vunpack.c.l.b16 %v922
      %v1073 = vunpack.c.l.b16 %v923
      %v1074 = vunpack.c.l.b16 %v924
      %v1075 = vunpack.c.l.b16 %v925
      %v1076 = vunpack.c.l.b16 %v926
      %v1077 = vunpack.c.l.b16 %v927
      %v1078 = vunpack.c.l.b16 %v928
      %v1079 = vunpack.c.l.b16 %v929
      %v1080 = vunpack.c.l.b16 %v930
      %v1081 = vunpack.c.l.b16 %v931
      %v1082 = vunpack.c.l.b16 %v932
      %v1083 = vunpack.c.l.b16 %v933
      %v1084 = vunpack.c.l.b16 %v934
      %v1085 = vunpack.c.l.b16 %v935
      %v1086 = vunpack.c.l.b16 %v936
      %v1087 = vunpack.c.l.b16 %v937
      %v1088 = vunpack.c.l.b16 %v938
      %v1089 = vunpack.c.l.b16 %v939
      %v1090 = vunpack.c.l.b16 %v940
      %v1091 = vunpack.c.l.b16 %v941
      %v1092 = vunpack.c.l.b16 %v942
      %v1093 = vunpack.c.l.b16 %v943
      %v1094 = vunpack.c.l.b16 %v944
      %v1095 = vunpack.c.l.b16 %v945
      %v1096 = vunpack.c.l.b16 %v946
      %v1097 = vunpack.c.l.b16 %v947
      %v1098 = vunpack.c.l.b16 %v948
      %v1099 = vunpack.c.l.b16 %v949
      %v1100 = vunpack.c.l.b16 %v950
      %v1101 = vunpack.c.l.b16 %v951
      %v1102 = vunpack.c.l.b16 %v952
      %v1103 = vunpack.c.l.b16 %v953
      %v1104 = vunpack.c.l.b16 %v954
      %v1105 = vunpack.c.l.b16 %v955
      %v1106 = vunpack.c.l.b16 %v956
      %v1107 = vunpack.c.l.b16 %v957
      %v1108 = vunpack.c.l.b16 %v958
      %v1109 = vunpack.c.l.b16 %v959
      %v1110 = vunpack.c.l.b16 %v960
      %v1111 = vunpack.c.l.b16 %v961
      %v1112 = vunpack.c.l.b16 %v962
      %v1113 = vunpack.c.l.b16 %v963
      %v1114 = vunpack.c.l.b16 %v964
      %v1115 = vunpack.c.l.b16 %v965
      %v1116 = vunpack.c.l.b16 %v966
      %v1117 = vunpack.c.l.b16 %v967
      %v1118 = vpack.c.b16 %v1055, %v1054
      %v1119 = vpack.c.b16 %v1057, %v1056
      %v1120 = vpack.c.b16 %v1059, %v1058
      %v1121 = vpack.c.b16 %v1061, %v1060
      %v1122 = vpack.c.b16 %v1063, %v1062
      %v1123 = vpack.c.b16 %v1065, %v1064
      %v1124 = vpack.c.b16 %v1067, %v1066
      %v1125 = vpack.c.b16 %v1069, %v1068
      %v1126 = vpack.c.b16 %v1071, %v1070
      %v1127 = vpack.c.b16 %v1073, %v1072
      %v1128 = vpack.c.b16 %v1075, %v1074
      %v1129 = vpack.c.b16 %v1077, %v1076
      %v1130 = vpack.c.b16 %v1079, %v1078
      %v1131 = vpack.c.b16 %v1081, %v1080
      %v1132 = vpack.c.b16 %v1083, %v1082
      %v1133 = vpack.c.b16 %v1085, %v1084
      %v1134 = vpack.c.b16 %v1087, %v1086
      %v1135 = vpack.c.b16 %v1089, %v1088
      %v1136 = vpack.c.b16 %v1091, %v1090
      %v1137 = vpack.c.b16 %v1093, %v1092
      %v1138 = vpack.c.b16 %v1095, %v1094
      %v1139 = vpack.c.b16 %v1097, %v1096
      %v1140 = vpack.c.b16 %v1099, %v1098
      %v1141 = vpack.c.b16 %v1101, %v1100
      %v1142 = vpack.c.b16 %v1103, %v1102
      %v1143 = vpack.c.b16 %v1105, %v1104
      %v1144 = vpack.c.b16 %v1107, %v1106
      %v1145 = vpack.c.b16 %v1109, %v1108
      %v1146 = vpack.c.b16 %v1111, %v1110
      %v1147 = vpack.c.b16 %v1113, %v1112
      %v1148 = vpack.c.b16 %v1115, %v1114
      %v1149 = vpack.c.b16 %v1117, %v1116
      %1182 = vmatprep.subr.bf16.mxu0 0
      %1183 = vmatpush1.bf16.msra.mxu0 %v1125
      %1184 = vmatprep.subr.bf16.mxu0 0
      %1185 = vmatpush1.bf16.msra.mxu0 %v1124
      %1186 = vmatprep.subr.bf16.mxu0 0
      %1187 = vmatpush1.bf16.msra.mxu0 %v1123
      %1188 = vmatprep.subr.bf16.mxu0 0
      %1189 = vmatpush1.bf16.msra.mxu0 %v1122
      %1190 = vmatprep.subr.bf16.mxu0 0
      %1191 = vmatpush1.bf16.msra.mxu0 %v1121
      %1192 = vmatprep.subr.bf16.mxu0 0
      %1193 = vmatpush1.bf16.msra.mxu0 %v1120
      %1194 = vmatprep.subr.bf16.mxu0 0
      %1195 = vmatpush1.bf16.msra.mxu0 %v1119
      %1196 = vmatprep.subr.bf16.mxu0 0
      %1197 = vmatpush1.bf16.msra.mxu0 %v1118
      %1198 = vmatprep.subr.bf16.mxu0 0
      %1199 = vmatpush2.bf16.msra.mxu0 %v1133
      %1200 = vmatprep.subr.bf16.mxu0 0
      %1201 = vmatpush2.bf16.msra.mxu0 %v1132
      %1202 = vmatprep.subr.bf16.mxu0 0
      %1203 = vmatpush2.bf16.msra.mxu0 %v1131
      %1204 = vmatprep.subr.bf16.mxu0 0
      %1205 = vmatpush2.bf16.msra.mxu0 %v1130
      %1206 = vmatprep.subr.bf16.mxu0 0
      %1207 = vmatpush2.bf16.msra.mxu0 %v1129
      %1208 = vmatprep.subr.bf16.mxu0 0
      %1209 = vmatpush2.bf16.msra.mxu0 %v1128
      %1210 = vmatprep.subr.bf16.mxu0 0
      %1211 = vmatpush2.bf16.msra.mxu0 %v1127
      %1212 = vmatprep.subr.bf16.mxu0 0
      %1213 = vmatpush2.bf16.msra.mxu0 %v1126
      %1214 = vmatprep.mubr.bf16.mxu0 %v984
      %1215 = vmatmul.mubr.bf16.gmra.mxu0 %v976
      %v1216 = vpop.f32.mrf.mxu0
      %v1217 = vadd.f32 0.0, %v1216
      %v1218 = vpop.f32.mrf.mxu0
      %v1219 = vpop.f32.mrf.mxu0
      %v1220 = vpop.f32.mrf.mxu0
      %1221 = vdwg.mxu0
      %1222 = vmatprep.subr.bf16.mxu0 0
      %1223 = vmatpush1.bf16.msra.mxu0 %v1141
      %1224 = vmatprep.subr.bf16.mxu0 0
      %1225 = vmatpush1.bf16.msra.mxu0 %v1140
      %1226 = vmatprep.subr.bf16.mxu0 0
      %1227 = vmatpush1.bf16.msra.mxu0 %v1139
      %1228 = vmatprep.subr.bf16.mxu0 0
      %1229 = vmatpush1.bf16.msra.mxu0 %v1138
      %1230 = vmatprep.subr.bf16.mxu0 0
      %1231 = vmatpush1.bf16.msra.mxu0 %v1137
      %1232 = vmatprep.subr.bf16.mxu0 0
      %1233 = vmatpush1.bf16.msra.mxu0 %v1136
      %1234 = vmatprep.subr.bf16.mxu0 0
      %1235 = vmatpush1.bf16.msra.mxu0 %v1135
      %1236 = vmatprep.subr.bf16.mxu0 0
      %1237 = vmatpush1.bf16.msra.mxu0 %v1134
      %1238 = vmatprep.subr.bf16.mxu0 0
      %1239 = vmatpush2.bf16.msra.mxu0 %v1149
      %1240 = vmatprep.subr.bf16.mxu0 0
      %1241 = vmatpush2.bf16.msra.mxu0 %v1148
      %1242 = vmatprep.subr.bf16.mxu0 0
      %1243 = vmatpush2.bf16.msra.mxu0 %v1147
      %1244 = vmatprep.subr.bf16.mxu0 0
      %1245 = vmatpush2.bf16.msra.mxu0 %v1146
      %1246 = vmatprep.subr.bf16.mxu0 0
      %1247 = vmatpush2.bf16.msra.mxu0 %v1145
      %1248 = vmatprep.subr.bf16.mxu0 0
      %1249 = vmatpush2.bf16.msra.mxu0 %v1144
      %1250 = vmatprep.subr.bf16.mxu0 0
      %1251 = vmatpush2.bf16.msra.mxu0 %v1143
      %1252 = vmatprep.subr.bf16.mxu0 0
      %1253 = vmatpush2.bf16.msra.mxu0 %v1142
      %1254 = vmatprep.mubr.bf16.mxu0 %v985
      %1255 = vmatmul.mubr.bf16.gmra.mxu0 %v983
      %v1256 = vpop.f32.mrf.mxu0
      %v1257 = vadd.f32 %v1217, %v1256
      %v1258 = vpop.f32.mrf.mxu0
      %v1259 = vpop.f32.mrf.mxu0
      %v1260 = vpop.f32.mrf.mxu0
      %1261 = vdwg.mxu0
      %v1262 = vadd.f32 %v896, %v1257
      %v1263 = vld [vmem:[%s901] sm:$0xff]
      %s1264 = scalar_lea.vmem %s1, 768
      %v1265 = vld [vmem:[%s1264] sm:$0xf]
      %v1266 = vld [vmem:[%s1264 + $0x4] sm:$0xf]
      %v1267 = vld [vmem:[%s1264 + $0x8] sm:$0xf]
      %v1268 = vld [vmem:[%s1264 + $0xc] sm:$0xf]
      %v1269 = vld [vmem:[%s1264 + $0x10] sm:$0xf]
      %v1270 = vld [vmem:[%s1264 + $0x14] sm:$0xf]
      %v1271 = vld [vmem:[%s1264 + $0x18] sm:$0xf]
      %v1272 = vld [vmem:[%s1264 + $0x1c] sm:$0xf]
      %v1273 = vld [vmem:[%s1264 + $0x20] sm:$0xf]
      %v1274 = vld [vmem:[%s1264 + $0x24] sm:$0xf]
      %v1275 = vld [vmem:[%s1264 + $0x28] sm:$0xf]
      %v1276 = vld [vmem:[%s1264 + $0x2c] sm:$0xf]
      %v1277 = vld [vmem:[%s1264 + $0x30] sm:$0xf]
      %v1278 = vld [vmem:[%s1264 + $0x34] sm:$0xf]
      %v1279 = vld [vmem:[%s1264 + $0x38] sm:$0xf]
      %v1280 = vld [vmem:[%s1264 + $0x3c] sm:$0xf]
      %v1281 = vld [vmem:[%s1264 + $0x40] sm:$0xf]
      %v1282 = vld [vmem:[%s1264 + $0x44] sm:$0xf]
      %v1283 = vld [vmem:[%s1264 + $0x48] sm:$0xf]
      %v1284 = vld [vmem:[%s1264 + $0x4c] sm:$0xf]
      %v1285 = vld [vmem:[%s1264 + $0x50] sm:$0xf]
      %v1286 = vld [vmem:[%s1264 + $0x54] sm:$0xf]
      %v1287 = vld [vmem:[%s1264 + $0x58] sm:$0xf]
      %v1288 = vld [vmem:[%s1264 + $0x5c] sm:$0xf]
      %v1289 = vld [vmem:[%s1264 + $0x60] sm:$0xf]
      %v1290 = vld [vmem:[%s1264 + $0x64] sm:$0xf]
      %v1291 = vld [vmem:[%s1264 + $0x68] sm:$0xf]
      %v1292 = vld [vmem:[%s1264 + $0x6c] sm:$0xf]
      %v1293 = vld [vmem:[%s1264 + $0x70] sm:$0xf]
      %v1294 = vld [vmem:[%s1264 + $0x74] sm:$0xf]
      %v1295 = vld [vmem:[%s1264 + $0x78] sm:$0xf]
      %v1296 = vld [vmem:[%s1264 + $0x7c] sm:$0xf]
      %v1297 = vld [vmem:[%s1264 + $0x80] sm:$0xf]
      %v1298 = vld [vmem:[%s1264 + $0x84] sm:$0xf]
      %v1299 = vld [vmem:[%s1264 + $0x88] sm:$0xf]
      %v1300 = vld [vmem:[%s1264 + $0x8c] sm:$0xf]
      %v1301 = vld [vmem:[%s1264 + $0x90] sm:$0xf]
      %v1302 = vld [vmem:[%s1264 + $0x94] sm:$0xf]
      %v1303 = vld [vmem:[%s1264 + $0x98] sm:$0xf]
      %v1304 = vld [vmem:[%s1264 + $0x9c] sm:$0xf]
      %v1305 = vld [vmem:[%s1264 + $0xa0] sm:$0xf]
      %v1306 = vld [vmem:[%s1264 + $0xa4] sm:$0xf]
      %v1307 = vld [vmem:[%s1264 + $0xa8] sm:$0xf]
      %v1308 = vld [vmem:[%s1264 + $0xac] sm:$0xf]
      %v1309 = vld [vmem:[%s1264 + $0xb0] sm:$0xf]
      %v1310 = vld [vmem:[%s1264 + $0xb4] sm:$0xf]
      %v1311 = vld [vmem:[%s1264 + $0xb8] sm:$0xf]
      %v1312 = vld [vmem:[%s1264 + $0xbc] sm:$0xf]
      %v1313 = vld [vmem:[%s1264 + $0xc0] sm:$0xf]
      %v1314 = vld [vmem:[%s1264 + $0xc4] sm:$0xf]
      %v1315 = vld [vmem:[%s1264 + $0xc8] sm:$0xf]
      %v1316 = vld [vmem:[%s1264 + $0xcc] sm:$0xf]
      %v1317 = vld [vmem:[%s1264 + $0xd0] sm:$0xf]
      %v1318 = vld [vmem:[%s1264 + $0xd4] sm:$0xf]
      %v1319 = vld [vmem:[%s1264 + $0xd8] sm:$0xf]
      %v1320 = vld [vmem:[%s1264 + $0xdc] sm:$0xf]
      %v1321 = vld [vmem:[%s1264 + $0xe0] sm:$0xf]
      %v1322 = vld [vmem:[%s1264 + $0xe4] sm:$0xf]
      %v1323 = vld [vmem:[%s1264 + $0xe8] sm:$0xf]
      %v1324 = vld [vmem:[%s1264 + $0xec] sm:$0xf]
      %v1325 = vld [vmem:[%s1264 + $0xf0] sm:$0xf]
      %v1326 = vld [vmem:[%s1264 + $0xf4] sm:$0xf]
      %v1327 = vld [vmem:[%s1264 + $0xf8] sm:$0xf]
      %v1328 = vld [vmem:[%s1264 + $0xfc] sm:$0xf]
      %v1330 = vcombine.high %v1263, %v1263
      %v1332 = vunpack.c.l.s4 1983009808
      %v1333 = vunpack.c.0.s8 %v1332
      %v1334 = vlaneseq
      %v1335 = vshrl.u32 %v1334, 7
      %v1336 = vsub.s32 %v1333, %v1335
      %v1337 = vrot.slane %v1263, %v1336
      %v1339 = vunpack.c.l.s4 1983009808
      %v1340 = vunpack.c.0.s8 %v1339
      %v1341 = vlaneseq
      %v1342 = vshrl.u32 %v1341, 7
      %v1343 = vsub.s32 %v1340, %v1342
      %v1344 = vrot.slane %v1330, %v1343
      %v1345 = vcombine.high %v1337, %v1337
      %v1346 = vcombine.high %v1344, %v1344
      %v1348 = vshrl.u32 %v1337, 16
      %v1350 = vshll.u32 %v1337, 16
      %v1352 = vrot.slane %v1350, 1
      %v1353 = vor.u32 %v1348, %v1352
      %v1355 = vshrl.u32 %v1345, 16
      %v1357 = vshll.u32 %v1345, 16
      %v1359 = vrot.slane %v1357, 1
      %v1360 = vor.u32 %v1355, %v1359
      %v1362 = vshrl.u32 %v1344, 16
      %v1364 = vshll.u32 %v1344, 16
      %v1366 = vrot.slane %v1364, 1
      %v1367 = vor.u32 %v1362, %v1366
      %v1369 = vshrl.u32 %v1346, 16
      %v1371 = vshll.u32 %v1346, 16
      %v1373 = vrot.slane %v1371, 1
      %v1374 = vor.u32 %v1369, %v1373
      %v1443 = vunpack.c.l.b16 %v1265
      %v1444 = vunpack.c.l.b16 %v1266
      %v1445 = vunpack.c.l.b16 %v1267
      %v1446 = vunpack.c.l.b16 %v1268
      %v1447 = vunpack.c.l.b16 %v1269
      %v1448 = vunpack.c.l.b16 %v1270
      %v1449 = vunpack.c.l.b16 %v1271
      %v1450 = vunpack.c.l.b16 %v1272
      %v1451 = vunpack.c.l.b16 %v1273
      %v1452 = vunpack.c.l.b16 %v1274
      %v1453 = vunpack.c.l.b16 %v1275
      %v1454 = vunpack.c.l.b16 %v1276
      %v1455 = vunpack.c.l.b16 %v1277
      %v1456 = vunpack.c.l.b16 %v1278
      %v1457 = vunpack.c.l.b16 %v1279
      %v1458 = vunpack.c.l.b16 %v1280
      %v1459 = vunpack.c.l.b16 %v1281
      %v1460 = vunpack.c.l.b16 %v1282
      %v1461 = vunpack.c.l.b16 %v1283
      %v1462 = vunpack.c.l.b16 %v1284
      %v1463 = vunpack.c.l.b16 %v1285
      %v1464 = vunpack.c.l.b16 %v1286
      %v1465 = vunpack.c.l.b16 %v1287
      %v1466 = vunpack.c.l.b16 %v1288
      %v1467 = vunpack.c.l.b16 %v1289
      %v1468 = vunpack.c.l.b16 %v1290
      %v1469 = vunpack.c.l.b16 %v1291
      %v1470 = vunpack.c.l.b16 %v1292
      %v1471 = vunpack.c.l.b16 %v1293
      %v1472 = vunpack.c.l.b16 %v1294
      %v1473 = vunpack.c.l.b16 %v1295
      %v1474 = vunpack.c.l.b16 %v1296
      %v1475 = vunpack.c.l.b16 %v1297
      %v1476 = vunpack.c.l.b16 %v1298
      %v1477 = vunpack.c.l.b16 %v1299
      %v1478 = vunpack.c.l.b16 %v1300
      %v1479 = vunpack.c.l.b16 %v1301
      %v1480 = vunpack.c.l.b16 %v1302
      %v1481 = vunpack.c.l.b16 %v1303
      %v1482 = vunpack.c.l.b16 %v1304
      %v1483 = vunpack.c.l.b16 %v1305
      %v1484 = vunpack.c.l.b16 %v1306
      %v1485 = vunpack.c.l.b16 %v1307
      %v1486 = vunpack.c.l.b16 %v1308
      %v1487 = vunpack.c.l.b16 %v1309
      %v1488 = vunpack.c.l.b16 %v1310
      %v1489 = vunpack.c.l.b16 %v1311
      %v1490 = vunpack.c.l.b16 %v1312
      %v1491 = vunpack.c.l.b16 %v1313
      %v1492 = vunpack.c.l.b16 %v1314
      %v1493 = vunpack.c.l.b16 %v1315
      %v1494 = vunpack.c.l.b16 %v1316
      %v1495 = vunpack.c.l.b16 %v1317
      %v1496 = vunpack.c.l.b16 %v1318
      %v1497 = vunpack.c.l.b16 %v1319
      %v1498 = vunpack.c.l.b16 %v1320
      %v1499 = vunpack.c.l.b16 %v1321
      %v1500 = vunpack.c.l.b16 %v1322
      %v1501 = vunpack.c.l.b16 %v1323
      %v1502 = vunpack.c.l.b16 %v1324
      %v1503 = vunpack.c.l.b16 %v1325
      %v1504 = vunpack.c.l.b16 %v1326
      %v1505 = vunpack.c.l.b16 %v1327
      %v1506 = vunpack.c.l.b16 %v1328
      %v1507 = vpack.c.b16 %v1444, %v1443
      %v1508 = vpack.c.b16 %v1446, %v1445
      %v1509 = vpack.c.b16 %v1448, %v1447
      %v1510 = vpack.c.b16 %v1450, %v1449
      %v1511 = vpack.c.b16 %v1452, %v1451
      %v1512 = vpack.c.b16 %v1454, %v1453
      %v1513 = vpack.c.b16 %v1456, %v1455
      %v1514 = vpack.c.b16 %v1458, %v1457
      %v1515 = vpack.c.b16 %v1460, %v1459
      %v1516 = vpack.c.b16 %v1462, %v1461
      %v1517 = vpack.c.b16 %v1464, %v1463
      %v1518 = vpack.c.b16 %v1466, %v1465
      %v1519 = vpack.c.b16 %v1468, %v1467
      %v1520 = vpack.c.b16 %v1470, %v1469
      %v1521 = vpack.c.b16 %v1472, %v1471
      %v1522 = vpack.c.b16 %v1474, %v1473
      %v1523 = vpack.c.b16 %v1476, %v1475
      %v1524 = vpack.c.b16 %v1478, %v1477
      %v1525 = vpack.c.b16 %v1480, %v1479
      %v1526 = vpack.c.b16 %v1482, %v1481
      %v1527 = vpack.c.b16 %v1484, %v1483
      %v1528 = vpack.c.b16 %v1486, %v1485
      %v1529 = vpack.c.b16 %v1488, %v1487
      %v1530 = vpack.c.b16 %v1490, %v1489
      %v1531 = vpack.c.b16 %v1492, %v1491
      %v1532 = vpack.c.b16 %v1494, %v1493
      %v1533 = vpack.c.b16 %v1496, %v1495
      %v1534 = vpack.c.b16 %v1498, %v1497
      %v1535 = vpack.c.b16 %v1500, %v1499
      %v1536 = vpack.c.b16 %v1502, %v1501
      %v1537 = vpack.c.b16 %v1504, %v1503
      %v1538 = vpack.c.b16 %v1506, %v1505
      %1571 = vmatprep.subr.bf16.mxu0 0
      %1572 = vmatpush1.bf16.msra.mxu0 %v1514
      %1573 = vmatprep.subr.bf16.mxu0 0
      %1574 = vmatpush1.bf16.msra.mxu0 %v1513
      %1575 = vmatprep.subr.bf16.mxu0 0
      %1576 = vmatpush1.bf16.msra.mxu0 %v1512
      %1577 = vmatprep.subr.bf16.mxu0 0
      %1578 = vmatpush1.bf16.msra.mxu0 %v1511
      %1579 = vmatprep.subr.bf16.mxu0 0
      %1580 = vmatpush1.bf16.msra.mxu0 %v1510
      %1581 = vmatprep.subr.bf16.mxu0 0
      %1582 = vmatpush1.bf16.msra.mxu0 %v1509
      %1583 = vmatprep.subr.bf16.mxu0 0
      %1584 = vmatpush1.bf16.msra.mxu0 %v1508
      %1585 = vmatprep.subr.bf16.mxu0 0
      %1586 = vmatpush1.bf16.msra.mxu0 %v1507
      %1587 = vmatprep.subr.bf16.mxu0 0
      %1588 = vmatpush2.bf16.msra.mxu0 %v1522
      %1589 = vmatprep.subr.bf16.mxu0 0
      %1590 = vmatpush2.bf16.msra.mxu0 %v1521
      %1591 = vmatprep.subr.bf16.mxu0 0
      %1592 = vmatpush2.bf16.msra.mxu0 %v1520
      %1593 = vmatprep.subr.bf16.mxu0 0
      %1594 = vmatpush2.bf16.msra.mxu0 %v1519
      %1595 = vmatprep.subr.bf16.mxu0 0
      %1596 = vmatpush2.bf16.msra.mxu0 %v1518
      %1597 = vmatprep.subr.bf16.mxu0 0
      %1598 = vmatpush2.bf16.msra.mxu0 %v1517
      %1599 = vmatprep.subr.bf16.mxu0 0
      %1600 = vmatpush2.bf16.msra.mxu0 %v1516
      %1601 = vmatprep.subr.bf16.mxu0 0
      %1602 = vmatpush2.bf16.msra.mxu0 %v1515
      %1603 = vmatprep.mubr.bf16.mxu0 %v1360
      %1604 = vmatmul.mubr.bf16.gmra.mxu0 %v1353
      %v1605 = vpop.f32.mrf.mxu0
      %v1606 = vadd.f32 0.0, %v1605
      %v1607 = vpop.f32.mrf.mxu0
      %v1608 = vpop.f32.mrf.mxu0
      %v1609 = vpop.f32.mrf.mxu0
      %1610 = vdwg.mxu0
      %1611 = vmatprep.subr.bf16.mxu0 0
      %1612 = vmatpush1.bf16.msra.mxu0 %v1530
      %1613 = vmatprep.subr.bf16.mxu0 0
      %1614 = vmatpush1.bf16.msra.mxu0 %v1529
      %1615 = vmatprep.subr.bf16.mxu0 0
      %1616 = vmatpush1.bf16.msra.mxu0 %v1528
      %1617 = vmatprep.subr.bf16.mxu0 0
      %1618 = vmatpush1.bf16.msra.mxu0 %v1527
      %1619 = vmatprep.subr.bf16.mxu0 0
      %1620 = vmatpush1.bf16.msra.mxu0 %v1526
      %1621 = vmatprep.subr.bf16.mxu0 0
      %1622 = vmatpush1.bf16.msra.mxu0 %v1525
      %1623 = vmatprep.subr.bf16.mxu0 0
      %1624 = vmatpush1.bf16.msra.mxu0 %v1524
      %1625 = vmatprep.subr.bf16.mxu0 0
      %1626 = vmatpush1.bf16.msra.mxu0 %v1523
      %1627 = vmatprep.subr.bf16.mxu0 0
      %1628 = vmatpush2.bf16.msra.mxu0 %v1538
      %1629 = vmatprep.subr.bf16.mxu0 0
      %1630 = vmatpush2.bf16.msra.mxu0 %v1537
      %1631 = vmatprep.subr.bf16.mxu0 0
      %1632 = vmatpush2.bf16.msra.mxu0 %v1536
      %1633 = vmatprep.subr.bf16.mxu0 0
      %1634 = vmatpush2.bf16.msra.mxu0 %v1535
      %1635 = vmatprep.subr.bf16.mxu0 0
      %1636 = vmatpush2.bf16.msra.mxu0 %v1534
      %1637 = vmatprep.subr.bf16.mxu0 0
      %1638 = vmatpush2.bf16.msra.mxu0 %v1533
      %1639 = vmatprep.subr.bf16.mxu0 0
      %1640 = vmatpush2.bf16.msra.mxu0 %v1532
      %1641 = vmatprep.subr.bf16.mxu0 0
      %1642 = vmatpush2.bf16.msra.mxu0 %v1531
      %1643 = vmatprep.mubr.bf16.mxu0 %v1374
      %1644 = vmatmul.mubr.bf16.gmra.mxu0 %v1367
      %v1645 = vpop.f32.mrf.mxu0
      %v1646 = vadd.f32 %v1606, %v1645
      %v1647 = vpop.f32.mrf.mxu0
      %v1648 = vpop.f32.mrf.mxu0
      %v1649 = vpop.f32.mrf.mxu0
      %1650 = vdwg.mxu0
      %v1651 = vadd.f32 %v1262, %v1646
      %v1653 = vlaneseq
      %v1654 = vshrl.u32 %v1653, 7
      %v1655 = vsub.s32 0, %v1654
      %v1656 = vrot.slane %v172, %v1655
      %v1658 = vadd.f32 %v1651, %v1656
      %v1659 = vmax.f32 %v1658, 0.0
      %v1660 = vpack.c.bf16 %v1659, %v1659
      %vm1661 = vcmask 1041408
      %vm1662 = vsmask.f32 1280
      %vm1663 = vmand %vm1661, %vm1662
      %v1664 = vld [vmem:[%s170] sm:$0x3]
      %v1665 = vsel %vm1663, %v1660, %v1664
      %1666 = vst [vmem:[%s170] sm:$0x3] %v1665
      %v1667 = vld [vmem:[%s901] sm:$0xff]
      %v1668 = vld [vmem:[%s1] sm:$0xf]
      %v1669 = vld [vmem:[%s1 + $0x4] sm:$0xf]
      %v1670 = vld [vmem:[%s1 + $0x8] sm:$0xf]
      %v1671 = vld [vmem:[%s1 + $0xc] sm:$0xf]
      %v1672 = vld [vmem:[%s1 + $0x10] sm:$0xf]
      %v1673 = vld [vmem:[%s1 + $0x14] sm:$0xf]
      %v1674 = vld [vmem:[%s1 + $0x18] sm:$0xf]
      %v1675 = vld [vmem:[%s1 + $0x1c] sm:$0xf]
      %v1676 = vld [vmem:[%s1 + $0x20] sm:$0xf]
      %v1677 = vld [vmem:[%s1 + $0x24] sm:$0xf]
      %v1678 = vld [vmem:[%s1 + $0x28] sm:$0xf]
      %v1679 = vld [vmem:[%s1 + $0x2c] sm:$0xf]
      %v1680 = vld [vmem:[%s1 + $0x30] sm:$0xf]
      %v1681 = vld [vmem:[%s1 + $0x34] sm:$0xf]
      %v1682 = vld [vmem:[%s1 + $0x38] sm:$0xf]
      %v1683 = vld [vmem:[%s1 + $0x3c] sm:$0xf]
      %v1684 = vld [vmem:[%s1 + $0x40] sm:$0xf]
      %v1685 = vld [vmem:[%s1 + $0x44] sm:$0xf]
      %v1686 = vld [vmem:[%s1 + $0x48] sm:$0xf]
      %v1687 = vld [vmem:[%s1 + $0x4c] sm:$0xf]
      %v1688 = vld [vmem:[%s1 + $0x50] sm:$0xf]
      %v1689 = vld [vmem:[%s1 + $0x54] sm:$0xf]
      %v1690 = vld [vmem:[%s1 + $0x58] sm:$0xf]
      %v1691 = vld [vmem:[%s1 + $0x5c] sm:$0xf]
      %v1692 = vld [vmem:[%s1 + $0x60] sm:$0xf]
      %v1693 = vld [vmem:[%s1 + $0x64] sm:$0xf]
      %v1694 = vld [vmem:[%s1 + $0x68] sm:$0xf]
      %v1695 = vld [vmem:[%s1 + $0x6c] sm:$0xf]
      %v1696 = vld [vmem:[%s1 + $0x70] sm:$0xf]
      %v1697 = vld [vmem:[%s1 + $0x74] sm:$0xf]
      %v1698 = vld [vmem:[%s1 + $0x78] sm:$0xf]
      %v1699 = vld [vmem:[%s1 + $0x7c] sm:$0xf]
      %v1700 = vld [vmem:[%s1 + $0x80] sm:$0xf]
      %v1701 = vld [vmem:[%s1 + $0x84] sm:$0xf]
      %v1702 = vld [vmem:[%s1 + $0x88] sm:$0xf]
      %v1703 = vld [vmem:[%s1 + $0x8c] sm:$0xf]
      %v1704 = vld [vmem:[%s1 + $0x90] sm:$0xf]
      %v1705 = vld [vmem:[%s1 + $0x94] sm:$0xf]
      %v1706 = vld [vmem:[%s1 + $0x98] sm:$0xf]
      %v1707 = vld [vmem:[%s1 + $0x9c] sm:$0xf]
      %v1708 = vld [vmem:[%s1 + $0xa0] sm:$0xf]
      %v1709 = vld [vmem:[%s1 + $0xa4] sm:$0xf]
      %v1710 = vld [vmem:[%s1 + $0xa8] sm:$0xf]
      %v1711 = vld [vmem:[%s1 + $0xac] sm:$0xf]
      %v1712 = vld [vmem:[%s1 + $0xb0] sm:$0xf]
      %v1713 = vld [vmem:[%s1 + $0xb4] sm:$0xf]
      %v1714 = vld [vmem:[%s1 + $0xb8] sm:$0xf]
      %v1715 = vld [vmem:[%s1 + $0xbc] sm:$0xf]
      %v1716 = vld [vmem:[%s1 + $0xc0] sm:$0xf]
      %v1717 = vld [vmem:[%s1 + $0xc4] sm:$0xf]
      %v1718 = vld [vmem:[%s1 + $0xc8] sm:$0xf]
      %v1719 = vld [vmem:[%s1 + $0xcc] sm:$0xf]
      %v1720 = vld [vmem:[%s1 + $0xd0] sm:$0xf]
      %v1721 = vld [vmem:[%s1 + $0xd4] sm:$0xf]
      %v1722 = vld [vmem:[%s1 + $0xd8] sm:$0xf]
      %v1723 = vld [vmem:[%s1 + $0xdc] sm:$0xf]
      %v1724 = vld [vmem:[%s1 + $0xe0] sm:$0xf]
      %v1725 = vld [vmem:[%s1 + $0xe4] sm:$0xf]
      %v1726 = vld [vmem:[%s1 + $0xe8] sm:$0xf]
      %v1727 = vld [vmem:[%s1 + $0xec] sm:$0xf]
      %v1728 = vld [vmem:[%s1 + $0xf0] sm:$0xf]
      %v1729 = vld [vmem:[%s1 + $0xf4] sm:$0xf]
      %v1730 = vld [vmem:[%s1 + $0xf8] sm:$0xf]
      %v1731 = vld [vmem:[%s1 + $0xfc] sm:$0xf]
      %v1732 = vld [vmem:[%s238] sm:$0xf]
      %v1733 = vld [vmem:[%s238 + $0x4] sm:$0xf]
      %v1734 = vld [vmem:[%s238 + $0x8] sm:$0xf]
      %v1735 = vld [vmem:[%s238 + $0xc] sm:$0xf]
      %v1736 = vld [vmem:[%s238 + $0x10] sm:$0xf]
      %v1737 = vld [vmem:[%s238 + $0x14] sm:$0xf]
      %v1738 = vld [vmem:[%s238 + $0x18] sm:$0xf]
      %v1739 = vld [vmem:[%s238 + $0x1c] sm:$0xf]
      %v1740 = vld [vmem:[%s238 + $0x20] sm:$0xf]
      %v1741 = vld [vmem:[%s238 + $0x24] sm:$0xf]
      %v1742 = vld [vmem:[%s238 + $0x28] sm:$0xf]
      %v1743 = vld [vmem:[%s238 + $0x2c] sm:$0xf]
      %v1744 = vld [vmem:[%s238 + $0x30] sm:$0xf]
      %v1745 = vld [vmem:[%s238 + $0x34] sm:$0xf]
      %v1746 = vld [vmem:[%s238 + $0x38] sm:$0xf]
      %v1747 = vld [vmem:[%s238 + $0x3c] sm:$0xf]
      %v1748 = vld [vmem:[%s238 + $0x40] sm:$0xf]
      %v1749 = vld [vmem:[%s238 + $0x44] sm:$0xf]
      %v1750 = vld [vmem:[%s238 + $0x48] sm:$0xf]
      %v1751 = vld [vmem:[%s238 + $0x4c] sm:$0xf]
      %v1752 = vld [vmem:[%s238 + $0x50] sm:$0xf]
      %v1753 = vld [vmem:[%s238 + $0x54] sm:$0xf]
      %v1754 = vld [vmem:[%s238 + $0x58] sm:$0xf]
      %v1755 = vld [vmem:[%s238 + $0x5c] sm:$0xf]
      %v1756 = vld [vmem:[%s238 + $0x60] sm:$0xf]
      %v1757 = vld [vmem:[%s238 + $0x64] sm:$0xf]
      %v1758 = vld [vmem:[%s238 + $0x68] sm:$0xf]
      %v1759 = vld [vmem:[%s238 + $0x6c] sm:$0xf]
      %v1760 = vld [vmem:[%s238 + $0x70] sm:$0xf]
      %v1761 = vld [vmem:[%s238 + $0x74] sm:$0xf]
      %v1762 = vld [vmem:[%s238 + $0x78] sm:$0xf]
      %v1763 = vld [vmem:[%s238 + $0x7c] sm:$0xf]
      %v1764 = vld [vmem:[%s238 + $0x80] sm:$0xf]
      %v1765 = vld [vmem:[%s238 + $0x84] sm:$0xf]
      %v1766 = vld [vmem:[%s238 + $0x88] sm:$0xf]
      %v1767 = vld [vmem:[%s238 + $0x8c] sm:$0xf]
      %v1768 = vld [vmem:[%s238 + $0x90] sm:$0xf]
      %v1769 = vld [vmem:[%s238 + $0x94] sm:$0xf]
      %v1770 = vld [vmem:[%s238 + $0x98] sm:$0xf]
      %v1771 = vld [vmem:[%s238 + $0x9c] sm:$0xf]
      %v1772 = vld [vmem:[%s238 + $0xa0] sm:$0xf]
      %v1773 = vld [vmem:[%s238 + $0xa4] sm:$0xf]
      %v1774 = vld [vmem:[%s238 + $0xa8] sm:$0xf]
      %v1775 = vld [vmem:[%s238 + $0xac] sm:$0xf]
      %v1776 = vld [vmem:[%s238 + $0xb0] sm:$0xf]
      %v1777 = vld [vmem:[%s238 + $0xb4] sm:$0xf]
      %v1778 = vld [vmem:[%s238 + $0xb8] sm:$0xf]
      %v1779 = vld [vmem:[%s238 + $0xbc] sm:$0xf]
      %v1780 = vld [vmem:[%s238 + $0xc0] sm:$0xf]
      %v1781 = vld [vmem:[%s238 + $0xc4] sm:$0xf]
      %v1782 = vld [vmem:[%s238 + $0xc8] sm:$0xf]
      %v1783 = vld [vmem:[%s238 + $0xcc] sm:$0xf]
      %v1784 = vld [vmem:[%s238 + $0xd0] sm:$0xf]
      %v1785 = vld [vmem:[%s238 + $0xd4] sm:$0xf]
      %v1786 = vld [vmem:[%s238 + $0xd8] sm:$0xf]
      %v1787 = vld [vmem:[%s238 + $0xdc] sm:$0xf]
      %v1788 = vld [vmem:[%s238 + $0xe0] sm:$0xf]
      %v1789 = vld [vmem:[%s238 + $0xe4] sm:$0xf]
      %v1790 = vld [vmem:[%s238 + $0xe8] sm:$0xf]
      %v1791 = vld [vmem:[%s238 + $0xec] sm:$0xf]
      %v1792 = vld [vmem:[%s238 + $0xf0] sm:$0xf]
      %v1793 = vld [vmem:[%s238 + $0xf4] sm:$0xf]
      %v1794 = vld [vmem:[%s238 + $0xf8] sm:$0xf]
      %v1795 = vld [vmem:[%s238 + $0xfc] sm:$0xf]
      %v1797 = vcombine.high %v1667, %v1667
      %v1799 = vunpack.c.l.s4 1983009808
      %v1800 = vunpack.c.0.s8 %v1799
      %v1801 = vlaneseq
      %v1802 = vshrl.u32 %v1801, 7
      %v1803 = vsub.s32 %v1800, %v1802
      %v1804 = vrot.slane %v1667, %v1803
      %v1806 = vunpack.c.l.s4 1983009808
      %v1807 = vunpack.c.0.s8 %v1806
      %v1808 = vlaneseq
      %v1809 = vshrl.u32 %v1808, 7
      %v1810 = vsub.s32 %v1807, %v1809
      %v1811 = vrot.slane %v1797, %v1810
      %v1812 = vcombine.high %v1804, %v1804
      %v1813 = vcombine.high %v1811, %v1811
      %v1815 = vshrl.u32 %v1804, 16
      %v1817 = vshll.u32 %v1804, 16
      %v1819 = vrot.slane %v1817, 1
      %v1820 = vor.u32 %v1815, %v1819
      %v1822 = vshrl.u32 %v1812, 16
      %v1824 = vshll.u32 %v1812, 16
      %v1826 = vrot.slane %v1824, 1
      %v1827 = vor.u32 %v1822, %v1826
      %v1829 = vshrl.u32 %v1811, 16
      %v1831 = vshll.u32 %v1811, 16
      %v1833 = vrot.slane %v1831, 1
      %v1834 = vor.u32 %v1829, %v1833
      %v1836 = vshrl.u32 %v1813, 16
      %v1838 = vshll.u32 %v1813, 16
      %v1840 = vrot.slane %v1838, 1
      %v1841 = vor.u32 %v1836, %v1840
      %v1910 = vunpack.c.l.b16 %v1732
      %v1911 = vunpack.c.l.b16 %v1733
      %v1912 = vunpack.c.l.b16 %v1734
      %v1913 = vunpack.c.l.b16 %v1735
      %v1914 = vunpack.c.l.b16 %v1736
      %v1915 = vunpack.c.l.b16 %v1737
      %v1916 = vunpack.c.l.b16 %v1738
      %v1917 = vunpack.c.l.b16 %v1739
      %v1918 = vunpack.c.l.b16 %v1740
      %v1919 = vunpack.c.l.b16 %v1741
      %v1920 = vunpack.c.l.b16 %v1742
      %v1921 = vunpack.c.l.b16 %v1743
      %v1922 = vunpack.c.l.b16 %v1744
      %v1923 = vunpack.c.l.b16 %v1745
      %v1924 = vunpack.c.l.b16 %v1746
      %v1925 = vunpack.c.l.b16 %v1747
      %v1926 = vunpack.c.l.b16 %v1748
      %v1927 = vunpack.c.l.b16 %v1749
      %v1928 = vunpack.c.l.b16 %v1750
      %v1929 = vunpack.c.l.b16 %v1751
      %v1930 = vunpack.c.l.b16 %v1752
      %v1931 = vunpack.c.l.b16 %v1753
      %v1932 = vunpack.c.l.b16 %v1754
      %v1933 = vunpack.c.l.b16 %v1755
      %v1934 = vunpack.c.l.b16 %v1756
      %v1935 = vunpack.c.l.b16 %v1757
      %v1936 = vunpack.c.l.b16 %v1758
      %v1937 = vunpack.c.l.b16 %v1759
      %v1938 = vunpack.c.l.b16 %v1760
      %v1939 = vunpack.c.l.b16 %v1761
      %v1940 = vunpack.c.l.b16 %v1762
      %v1941 = vunpack.c.l.b16 %v1763
      %v1942 = vunpack.c.l.b16 %v1764
      %v1943 = vunpack.c.l.b16 %v1765
      %v1944 = vunpack.c.l.b16 %v1766
      %v1945 = vunpack.c.l.b16 %v1767
      %v1946 = vunpack.c.l.b16 %v1768
      %v1947 = vunpack.c.l.b16 %v1769
      %v1948 = vunpack.c.l.b16 %v1770
      %v1949 = vunpack.c.l.b16 %v1771
      %v1950 = vunpack.c.l.b16 %v1772
      %v1951 = vunpack.c.l.b16 %v1773
      %v1952 = vunpack.c.l.b16 %v1774
      %v1953 = vunpack.c.l.b16 %v1775
      %v1954 = vunpack.c.l.b16 %v1776
      %v1955 = vunpack.c.l.b16 %v1777
      %v1956 = vunpack.c.l.b16 %v1778
      %v1957 = vunpack.c.l.b16 %v1779
      %v1958 = vunpack.c.l.b16 %v1780
      %v1959 = vunpack.c.l.b16 %v1781
      %v1960 = vunpack.c.l.b16 %v1782
      %v1961 = vunpack.c.l.b16 %v1783
      %v1962 = vunpack.c.l.b16 %v1784
      %v1963 = vunpack.c.l.b16 %v1785
      %v1964 = vunpack.c.l.b16 %v1786
      %v1965 = vunpack.c.l.b16 %v1787
      %v1966 = vunpack.c.l.b16 %v1788
      %v1967 = vunpack.c.l.b16 %v1789
      %v1968 = vunpack.c.l.b16 %v1790
      %v1969 = vunpack.c.l.b16 %v1791
      %v1970 = vunpack.c.l.b16 %v1792
      %v1971 = vunpack.c.l.b16 %v1793
      %v1972 = vunpack.c.l.b16 %v1794
      %v1973 = vunpack.c.l.b16 %v1795
      %v1974 = vpack.c.b16 %v1911, %v1910
      %v1975 = vpack.c.b16 %v1913, %v1912
      %v1976 = vpack.c.b16 %v1915, %v1914
      %v1977 = vpack.c.b16 %v1917, %v1916
      %v1978 = vpack.c.b16 %v1919, %v1918
      %v1979 = vpack.c.b16 %v1921, %v1920
      %v1980 = vpack.c.b16 %v1923, %v1922
      %v1981 = vpack.c.b16 %v1925, %v1924
      %v1982 = vpack.c.b16 %v1927, %v1926
      %v1983 = vpack.c.b16 %v1929, %v1928
      %v1984 = vpack.c.b16 %v1931, %v1930
      %v1985 = vpack.c.b16 %v1933, %v1932
      %v1986 = vpack.c.b16 %v1935, %v1934
      %v1987 = vpack.c.b16 %v1937, %v1936
      %v1988 = vpack.c.b16 %v1939, %v1938
      %v1989 = vpack.c.b16 %v1941, %v1940
      %v1990 = vpack.c.b16 %v1943, %v1942
      %v1991 = vpack.c.b16 %v1945, %v1944
      %v1992 = vpack.c.b16 %v1947, %v1946
      %v1993 = vpack.c.b16 %v1949, %v1948
      %v1994 = vpack.c.b16 %v1951, %v1950
      %v1995 = vpack.c.b16 %v1953, %v1952
      %v1996 = vpack.c.b16 %v1955, %v1954
      %v1997 = vpack.c.b16 %v1957, %v1956
      %v1998 = vpack.c.b16 %v1959, %v1958
      %v1999 = vpack.c.b16 %v1961, %v1960
      %v2000 = vpack.c.b16 %v1963, %v1962
      %v2001 = vpack.c.b16 %v1965, %v1964
      %v2002 = vpack.c.b16 %v1967, %v1966
      %v2003 = vpack.c.b16 %v1969, %v1968
      %v2004 = vpack.c.b16 %v1971, %v1970
      %v2005 = vpack.c.b16 %v1973, %v1972
      %2038 = vmatprep.subr.bf16.mxu0 0
      %2039 = vmatpush1.bf16.msra.mxu0 %v1981
      %2040 = vmatprep.subr.bf16.mxu0 0
      %2041 = vmatpush1.bf16.msra.mxu0 %v1980
      %2042 = vmatprep.subr.bf16.mxu0 0
      %2043 = vmatpush1.bf16.msra.mxu0 %v1979
      %2044 = vmatprep.subr.bf16.mxu0 0
      %2045 = vmatpush1.bf16.msra.mxu0 %v1978
      %2046 = vmatprep.subr.bf16.mxu0 0
      %2047 = vmatpush1.bf16.msra.mxu0 %v1977
      %2048 = vmatprep.subr.bf16.mxu0 0
      %2049 = vmatpush1.bf16.msra.mxu0 %v1976
      %2050 = vmatprep.subr.bf16.mxu0 0
      %2051 = vmatpush1.bf16.msra.mxu0 %v1975
      %2052 = vmatprep.subr.bf16.mxu0 0
      %2053 = vmatpush1.bf16.msra.mxu0 %v1974
      %2054 = vmatprep.subr.bf16.mxu0 0
      %2055 = vmatpush2.bf16.msra.mxu0 %v1989
      %2056 = vmatprep.subr.bf16.mxu0 0
      %2057 = vmatpush2.bf16.msra.mxu0 %v1988
      %2058 = vmatprep.subr.bf16.mxu0 0
      %2059 = vmatpush2.bf16.msra.mxu0 %v1987
      %2060 = vmatprep.subr.bf16.mxu0 0
      %2061 = vmatpush2.bf16.msra.mxu0 %v1986
      %2062 = vmatprep.subr.bf16.mxu0 0
      %2063 = vmatpush2.bf16.msra.mxu0 %v1985
      %2064 = vmatprep.subr.bf16.mxu0 0
      %2065 = vmatpush2.bf16.msra.mxu0 %v1984
      %2066 = vmatprep.subr.bf16.mxu0 0
      %2067 = vmatpush2.bf16.msra.mxu0 %v1983
      %2068 = vmatprep.subr.bf16.mxu0 0
      %2069 = vmatpush2.bf16.msra.mxu0 %v1982
      %2070 = vmatprep.mubr.bf16.mxu0 %v1827
      %2071 = vmatmul.mubr.bf16.gmra.mxu0 %v1820
      %v2072 = vpop.f32.mrf.mxu0
      %v2073 = vadd.f32 0.0, %v2072
      %v2074 = vpop.f32.mrf.mxu0
      %v2075 = vpop.f32.mrf.mxu0
      %v2076 = vpop.f32.mrf.mxu0
      %2077 = vdwg.mxu0
      %2078 = vmatprep.subr.bf16.mxu0 0
      %2079 = vmatpush1.bf16.msra.mxu0 %v1997
      %2080 = vmatprep.subr.bf16.mxu0 0
      %2081 = vmatpush1.bf16.msra.mxu0 %v1996
      %2082 = vmatprep.subr.bf16.mxu0 0
      %2083 = vmatpush1.bf16.msra.mxu0 %v1995
      %2084 = vmatprep.subr.bf16.mxu0 0
      %2085 = vmatpush1.bf16.msra.mxu0 %v1994
      %2086 = vmatprep.subr.bf16.mxu0 0
      %2087 = vmatpush1.bf16.msra.mxu0 %v1993
      %2088 = vmatprep.subr.bf16.mxu0 0
      %2089 = vmatpush1.bf16.msra.mxu0 %v1992
      %2090 = vmatprep.subr.bf16.mxu0 0
      %2091 = vmatpush1.bf16.msra.mxu0 %v1991
      %2092 = vmatprep.subr.bf16.mxu0 0
      %2093 = vmatpush1.bf16.msra.mxu0 %v1990
      %2094 = vmatprep.subr.bf16.mxu0 0
      %2095 = vmatpush2.bf16.msra.mxu0 %v2005
      %2096 = vmatprep.subr.bf16.mxu0 0
      %2097 = vmatpush2.bf16.msra.mxu0 %v2004
      %2098 = vmatprep.subr.bf16.mxu0 0
      %2099 = vmatpush2.bf16.msra.mxu0 %v2003
      %2100 = vmatprep.subr.bf16.mxu0 0
      %2101 = vmatpush2.bf16.msra.mxu0 %v2002
      %2102 = vmatprep.subr.bf16.mxu0 0
      %2103 = vmatpush2.bf16.msra.mxu0 %v2001
      %2104 = vmatprep.subr.bf16.mxu0 0
      %2105 = vmatpush2.bf16.msra.mxu0 %v2000
      %2106 = vmatprep.subr.bf16.mxu0 0
      %2107 = vmatpush2.bf16.msra.mxu0 %v1999
      %2108 = vmatprep.subr.bf16.mxu0 0
      %2109 = vmatpush2.bf16.msra.mxu0 %v1998
      %2110 = vmatprep.mubr.bf16.mxu0 %v1841
      %2111 = vmatmul.mubr.bf16.gmra.mxu0 %v1834
      %v2112 = vpop.f32.mrf.mxu0
      %v2113 = vadd.f32 %v2073, %v2112
      %v2114 = vpop.f32.mrf.mxu0
      %v2115 = vpop.f32.mrf.mxu0
      %v2116 = vpop.f32.mrf.mxu0
      %2117 = vdwg.mxu0
      %v2186 = vunpack.c.l.b16 %v1668
      %v2187 = vunpack.c.l.b16 %v1669
      %v2188 = vunpack.c.l.b16 %v1670
      %v2189 = vunpack.c.l.b16 %v1671
      %v2190 = vunpack.c.l.b16 %v1672
      %v2191 = vunpack.c.l.b16 %v1673
      %v2192 = vunpack.c.l.b16 %v1674
      %v2193 = vunpack.c.l.b16 %v1675
      %v2194 = vunpack.c.l.b16 %v1676
      %v2195 = vunpack.c.l.b16 %v1677
      %v2196 = vunpack.c.l.b16 %v1678
      %v2197 = vunpack.c.l.b16 %v1679
      %v2198 = vunpack.c.l.b16 %v1680
      %v2199 = vunpack.c.l.b16 %v1681
      %v2200 = vunpack.c.l.b16 %v1682
      %v2201 = vunpack.c.l.b16 %v1683
      %v2202 = vunpack.c.l.b16 %v1684
      %v2203 = vunpack.c.l.b16 %v1685
      %v2204 = vunpack.c.l.b16 %v1686
      %v2205 = vunpack.c.l.b16 %v1687
      %v2206 = vunpack.c.l.b16 %v1688
      %v2207 = vunpack.c.l.b16 %v1689
      %v2208 = vunpack.c.l.b16 %v1690
      %v2209 = vunpack.c.l.b16 %v1691
      %v2210 = vunpack.c.l.b16 %v1692
      %v2211 = vunpack.c.l.b16 %v1693
      %v2212 = vunpack.c.l.b16 %v1694
      %v2213 = vunpack.c.l.b16 %v1695
      %v2214 = vunpack.c.l.b16 %v1696
      %v2215 = vunpack.c.l.b16 %v1697
      %v2216 = vunpack.c.l.b16 %v1698
      %v2217 = vunpack.c.l.b16 %v1699
      %v2218 = vunpack.c.l.b16 %v1700
      %v2219 = vunpack.c.l.b16 %v1701
      %v2220 = vunpack.c.l.b16 %v1702
      %v2221 = vunpack.c.l.b16 %v1703
      %v2222 = vunpack.c.l.b16 %v1704
      %v2223 = vunpack.c.l.b16 %v1705
      %v2224 = vunpack.c.l.b16 %v1706
      %v2225 = vunpack.c.l.b16 %v1707
      %v2226 = vunpack.c.l.b16 %v1708
      %v2227 = vunpack.c.l.b16 %v1709
      %v2228 = vunpack.c.l.b16 %v1710
      %v2229 = vunpack.c.l.b16 %v1711
      %v2230 = vunpack.c.l.b16 %v1712
      %v2231 = vunpack.c.l.b16 %v1713
      %v2232 = vunpack.c.l.b16 %v1714
      %v2233 = vunpack.c.l.b16 %v1715
      %v2234 = vunpack.c.l.b16 %v1716
      %v2235 = vunpack.c.l.b16 %v1717
      %v2236 = vunpack.c.l.b16 %v1718
      %v2237 = vunpack.c.l.b16 %v1719
      %v2238 = vunpack.c.l.b16 %v1720
      %v2239 = vunpack.c.l.b16 %v1721
      %v2240 = vunpack.c.l.b16 %v1722
      %v2241 = vunpack.c.l.b16 %v1723
      %v2242 = vunpack.c.l.b16 %v1724
      %v2243 = vunpack.c.l.b16 %v1725
      %v2244 = vunpack.c.l.b16 %v1726
      %v2245 = vunpack.c.l.b16 %v1727
      %v2246 = vunpack.c.l.b16 %v1728
      %v2247 = vunpack.c.l.b16 %v1729
      %v2248 = vunpack.c.l.b16 %v1730
      %v2249 = vunpack.c.l.b16 %v1731
      %v2250 = vpack.c.b16 %v2187, %v2186
      %v2251 = vpack.c.b16 %v2189, %v2188
      %v2252 = vpack.c.b16 %v2191, %v2190
      %v2253 = vpack.c.b16 %v2193, %v2192
      %v2254 = vpack.c.b16 %v2195, %v2194
      %v2255 = vpack.c.b16 %v2197, %v2196
      %v2256 = vpack.c.b16 %v2199, %v2198
      %v2257 = vpack.c.b16 %v2201, %v2200
      %v2258 = vpack.c.b16 %v2203, %v2202
      %v2259 = vpack.c.b16 %v2205, %v2204
      %v2260 = vpack.c.b16 %v2207, %v2206
      %v2261 = vpack.c.b16 %v2209, %v2208
      %v2262 = vpack.c.b16 %v2211, %v2210
      %v2263 = vpack.c.b16 %v2213, %v2212
      %v2264 = vpack.c.b16 %v2215, %v2214
      %v2265 = vpack.c.b16 %v2217, %v2216
      %v2266 = vpack.c.b16 %v2219, %v2218
      %v2267 = vpack.c.b16 %v2221, %v2220
      %v2268 = vpack.c.b16 %v2223, %v2222
      %v2269 = vpack.c.b16 %v2225, %v2224
      %v2270 = vpack.c.b16 %v2227, %v2226
      %v2271 = vpack.c.b16 %v2229, %v2228
      %v2272 = vpack.c.b16 %v2231, %v2230
      %v2273 = vpack.c.b16 %v2233, %v2232
      %v2274 = vpack.c.b16 %v2235, %v2234
      %v2275 = vpack.c.b16 %v2237, %v2236
      %v2276 = vpack.c.b16 %v2239, %v2238
      %v2277 = vpack.c.b16 %v2241, %v2240
      %v2278 = vpack.c.b16 %v2243, %v2242
      %v2279 = vpack.c.b16 %v2245, %v2244
      %v2280 = vpack.c.b16 %v2247, %v2246
      %v2281 = vpack.c.b16 %v2249, %v2248
      %2314 = vmatprep.subr.bf16.mxu0 0
      %2315 = vmatpush1.bf16.msra.mxu0 %v2257
      %2316 = vmatprep.subr.bf16.mxu0 0
      %2317 = vmatpush1.bf16.msra.mxu0 %v2256
      %2318 = vmatprep.subr.bf16.mxu0 0
      %2319 = vmatpush1.bf16.msra.mxu0 %v2255
      %2320 = vmatprep.subr.bf16.mxu0 0
      %2321 = vmatpush1.bf16.msra.mxu0 %v2254
      %2322 = vmatprep.subr.bf16.mxu0 0
      %2323 = vmatpush1.bf16.msra.mxu0 %v2253
      %2324 = vmatprep.subr.bf16.mxu0 0
      %2325 = vmatpush1.bf16.msra.mxu0 %v2252
      %2326 = vmatprep.subr.bf16.mxu0 0
      %2327 = vmatpush1.bf16.msra.mxu0 %v2251
      %2328 = vmatprep.subr.bf16.mxu0 0
      %2329 = vmatpush1.bf16.msra.mxu0 %v2250
      %2330 = vmatprep.subr.bf16.mxu0 0
      %2331 = vmatpush2.bf16.msra.mxu0 %v2265
      %2332 = vmatprep.subr.bf16.mxu0 0
      %2333 = vmatpush2.bf16.msra.mxu0 %v2264
      %2334 = vmatprep.subr.bf16.mxu0 0
      %2335 = vmatpush2.bf16.msra.mxu0 %v2263
      %2336 = vmatprep.subr.bf16.mxu0 0
      %2337 = vmatpush2.bf16.msra.mxu0 %v2262
      %2338 = vmatprep.subr.bf16.mxu0 0
      %2339 = vmatpush2.bf16.msra.mxu0 %v2261
      %2340 = vmatprep.subr.bf16.mxu0 0
      %2341 = vmatpush2.bf16.msra.mxu0 %v2260
      %2342 = vmatprep.subr.bf16.mxu0 0
      %2343 = vmatpush2.bf16.msra.mxu0 %v2259
      %2344 = vmatprep.subr.bf16.mxu0 0
      %2345 = vmatpush2.bf16.msra.mxu0 %v2258
      %2346 = vmatprep.mubr.bf16.mxu0 %v1812
      %2347 = vmatmul.mubr.bf16.gmra.mxu0 %v1804
      %v2348 = vpop.f32.mrf.mxu0
      %v2349 = vadd.f32 %v2113, %v2348
      %v2350 = vpop.f32.mrf.mxu0
      %v2351 = vpop.f32.mrf.mxu0
      %v2352 = vpop.f32.mrf.mxu0
      %2353 = vdwg.mxu0
      %2354 = vmatprep.subr.bf16.mxu0 0
      %2355 = vmatpush1.bf16.msra.mxu0 %v2273
      %2356 = vmatprep.subr.bf16.mxu0 0
      %2357 = vmatpush1.bf16.msra.mxu0 %v2272
      %2358 = vmatprep.subr.bf16.mxu0 0
      %2359 = vmatpush1.bf16.msra.mxu0 %v2271
      %2360 = vmatprep.subr.bf16.mxu0 0
      %2361 = vmatpush1.bf16.msra.mxu0 %v2270
      %2362 = vmatprep.subr.bf16.mxu0 0
      %2363 = vmatpush1.bf16.msra.mxu0 %v2269
      %2364 = vmatprep.subr.bf16.mxu0 0
      %2365 = vmatpush1.bf16.msra.mxu0 %v2268
      %2366 = vmatprep.subr.bf16.mxu0 0
      %2367 = vmatpush1.bf16.msra.mxu0 %v2267
      %2368 = vmatprep.subr.bf16.mxu0 0
      %2369 = vmatpush1.bf16.msra.mxu0 %v2266
      %2370 = vmatprep.subr.bf16.mxu0 0
      %2371 = vmatpush2.bf16.msra.mxu0 %v2281
      %2372 = vmatprep.subr.bf16.mxu0 0
      %2373 = vmatpush2.bf16.msra.mxu0 %v2280
      %2374 = vmatprep.subr.bf16.mxu0 0
      %2375 = vmatpush2.bf16.msra.mxu0 %v2279
      %2376 = vmatprep.subr.bf16.mxu0 0
      %2377 = vmatpush2.bf16.msra.mxu0 %v2278
      %2378 = vmatprep.subr.bf16.mxu0 0
      %2379 = vmatpush2.bf16.msra.mxu0 %v2277
      %2380 = vmatprep.subr.bf16.mxu0 0
      %2381 = vmatpush2.bf16.msra.mxu0 %v2276
      %2382 = vmatprep.subr.bf16.mxu0 0
      %2383 = vmatpush2.bf16.msra.mxu0 %v2275
      %2384 = vmatprep.subr.bf16.mxu0 0
      %2385 = vmatpush2.bf16.msra.mxu0 %v2274
      %2386 = vmatprep.mubr.bf16.mxu0 %v1813
      %2387 = vmatmul.mubr.bf16.gmra.mxu0 %v1811
      %v2388 = vpop.f32.mrf.mxu0
      %v2389 = vadd.f32 %v2349, %v2388
      %v2390 = vpop.f32.mrf.mxu0
      %v2391 = vpop.f32.mrf.mxu0
      %v2392 = vpop.f32.mrf.mxu0
      %2393 = vdwg.mxu0
      %s2394 = scalar_lea.vmem %s165, 16
      %v2395 = vld [vmem:[%s2394] sm:$0xff]
      %v2396 = vld [vmem:[%s903] sm:$0xf]
      %v2397 = vld [vmem:[%s903 + $0x4] sm:$0xf]
      %v2398 = vld [vmem:[%s903 + $0x8] sm:$0xf]
      %v2399 = vld [vmem:[%s903 + $0xc] sm:$0xf]
      %v2400 = vld [vmem:[%s903 + $0x10] sm:$0xf]
      %v2401 = vld [vmem:[%s903 + $0x14] sm:$0xf]
      %v2402 = vld [vmem:[%s903 + $0x18] sm:$0xf]
      %v2403 = vld [vmem:[%s903 + $0x1c] sm:$0xf]
      %v2404 = vld [vmem:[%s903 + $0x20] sm:$0xf]
      %v2405 = vld [vmem:[%s903 + $0x24] sm:$0xf]
      %v2406 = vld [vmem:[%s903 + $0x28] sm:$0xf]
      %v2407 = vld [vmem:[%s903 + $0x2c] sm:$0xf]
      %v2408 = vld [vmem:[%s903 + $0x30] sm:$0xf]
      %v2409 = vld [vmem:[%s903 + $0x34] sm:$0xf]
      %v2410 = vld [vmem:[%s903 + $0x38] sm:$0xf]
      %v2411 = vld [vmem:[%s903 + $0x3c] sm:$0xf]
      %v2412 = vld [vmem:[%s903 + $0x40] sm:$0xf]
      %v2413 = vld [vmem:[%s903 + $0x44] sm:$0xf]
      %v2414 = vld [vmem:[%s903 + $0x48] sm:$0xf]
      %v2415 = vld [vmem:[%s903 + $0x4c] sm:$0xf]
      %v2416 = vld [vmem:[%s903 + $0x50] sm:$0xf]
      %v2417 = vld [vmem:[%s903 + $0x54] sm:$0xf]
      %v2418 = vld [vmem:[%s903 + $0x58] sm:$0xf]
      %v2419 = vld [vmem:[%s903 + $0x5c] sm:$0xf]
      %v2420 = vld [vmem:[%s903 + $0x60] sm:$0xf]
      %v2421 = vld [vmem:[%s903 + $0x64] sm:$0xf]
      %v2422 = vld [vmem:[%s903 + $0x68] sm:$0xf]
      %v2423 = vld [vmem:[%s903 + $0x6c] sm:$0xf]
      %v2424 = vld [vmem:[%s903 + $0x70] sm:$0xf]
      %v2425 = vld [vmem:[%s903 + $0x74] sm:$0xf]
      %v2426 = vld [vmem:[%s903 + $0x78] sm:$0xf]
      %v2427 = vld [vmem:[%s903 + $0x7c] sm:$0xf]
      %v2428 = vld [vmem:[%s903 + $0x80] sm:$0xf]
      %v2429 = vld [vmem:[%s903 + $0x84] sm:$0xf]
      %v2430 = vld [vmem:[%s903 + $0x88] sm:$0xf]
      %v2431 = vld [vmem:[%s903 + $0x8c] sm:$0xf]
      %v2432 = vld [vmem:[%s903 + $0x90] sm:$0xf]
      %v2433 = vld [vmem:[%s903 + $0x94] sm:$0xf]
      %v2434 = vld [vmem:[%s903 + $0x98] sm:$0xf]
      %v2435 = vld [vmem:[%s903 + $0x9c] sm:$0xf]
      %v2436 = vld [vmem:[%s903 + $0xa0] sm:$0xf]
      %v2437 = vld [vmem:[%s903 + $0xa4] sm:$0xf]
      %v2438 = vld [vmem:[%s903 + $0xa8] sm:$0xf]
      %v2439 = vld [vmem:[%s903 + $0xac] sm:$0xf]
      %v2440 = vld [vmem:[%s903 + $0xb0] sm:$0xf]
      %v2441 = vld [vmem:[%s903 + $0xb4] sm:$0xf]
      %v2442 = vld [vmem:[%s903 + $0xb8] sm:$0xf]
      %v2443 = vld [vmem:[%s903 + $0xbc] sm:$0xf]
      %v2444 = vld [vmem:[%s903 + $0xc0] sm:$0xf]
      %v2445 = vld [vmem:[%s903 + $0xc4] sm:$0xf]
      %v2446 = vld [vmem:[%s903 + $0xc8] sm:$0xf]
      %v2447 = vld [vmem:[%s903 + $0xcc] sm:$0xf]
      %v2448 = vld [vmem:[%s903 + $0xd0] sm:$0xf]
      %v2449 = vld [vmem:[%s903 + $0xd4] sm:$0xf]
      %v2450 = vld [vmem:[%s903 + $0xd8] sm:$0xf]
      %v2451 = vld [vmem:[%s903 + $0xdc] sm:$0xf]
      %v2452 = vld [vmem:[%s903 + $0xe0] sm:$0xf]
      %v2453 = vld [vmem:[%s903 + $0xe4] sm:$0xf]
      %v2454 = vld [vmem:[%s903 + $0xe8] sm:$0xf]
      %v2455 = vld [vmem:[%s903 + $0xec] sm:$0xf]
      %v2456 = vld [vmem:[%s903 + $0xf0] sm:$0xf]
      %v2457 = vld [vmem:[%s903 + $0xf4] sm:$0xf]
      %v2458 = vld [vmem:[%s903 + $0xf8] sm:$0xf]
      %v2459 = vld [vmem:[%s903 + $0xfc] sm:$0xf]
      %v2461 = vcombine.high %v2395, %v2395
      %v2463 = vunpack.c.l.s4 1983009808
      %v2464 = vunpack.c.0.s8 %v2463
      %v2465 = vlaneseq
      %v2466 = vshrl.u32 %v2465, 7
      %v2467 = vsub.s32 %v2464, %v2466
      %v2468 = vrot.slane %v2395, %v2467
      %v2470 = vunpack.c.l.s4 1983009808
      %v2471 = vunpack.c.0.s8 %v2470
      %v2472 = vlaneseq
      %v2473 = vshrl.u32 %v2472, 7
      %v2474 = vsub.s32 %v2471, %v2473
      %v2475 = vrot.slane %v2461, %v2474
      %v2476 = vcombine.high %v2468, %v2468
      %v2477 = vcombine.high %v2475, %v2475
      %v2546 = vunpack.c.l.b16 %v2396
      %v2547 = vunpack.c.l.b16 %v2397
      %v2548 = vunpack.c.l.b16 %v2398
      %v2549 = vunpack.c.l.b16 %v2399
      %v2550 = vunpack.c.l.b16 %v2400
      %v2551 = vunpack.c.l.b16 %v2401
      %v2552 = vunpack.c.l.b16 %v2402
      %v2553 = vunpack.c.l.b16 %v2403
      %v2554 = vunpack.c.l.b16 %v2404
      %v2555 = vunpack.c.l.b16 %v2405
      %v2556 = vunpack.c.l.b16 %v2406
      %v2557 = vunpack.c.l.b16 %v2407
      %v2558 = vunpack.c.l.b16 %v2408
      %v2559 = vunpack.c.l.b16 %v2409
      %v2560 = vunpack.c.l.b16 %v2410
      %v2561 = vunpack.c.l.b16 %v2411
      %v2562 = vunpack.c.l.b16 %v2412
      %v2563 = vunpack.c.l.b16 %v2413
      %v2564 = vunpack.c.l.b16 %v2414
      %v2565 = vunpack.c.l.b16 %v2415
      %v2566 = vunpack.c.l.b16 %v2416
      %v2567 = vunpack.c.l.b16 %v2417
      %v2568 = vunpack.c.l.b16 %v2418
      %v2569 = vunpack.c.l.b16 %v2419
      %v2570 = vunpack.c.l.b16 %v2420
      %v2571 = vunpack.c.l.b16 %v2421
      %v2572 = vunpack.c.l.b16 %v2422
      %v2573 = vunpack.c.l.b16 %v2423
      %v2574 = vunpack.c.l.b16 %v2424
      %v2575 = vunpack.c.l.b16 %v2425
      %v2576 = vunpack.c.l.b16 %v2426
      %v2577 = vunpack.c.l.b16 %v2427
      %v2578 = vunpack.c.l.b16 %v2428
      %v2579 = vunpack.c.l.b16 %v2429
      %v2580 = vunpack.c.l.b16 %v2430
      %v2581 = vunpack.c.l.b16 %v2431
      %v2582 = vunpack.c.l.b16 %v2432
      %v2583 = vunpack.c.l.b16 %v2433
      %v2584 = vunpack.c.l.b16 %v2434
      %v2585 = vunpack.c.l.b16 %v2435
      %v2586 = vunpack.c.l.b16 %v2436
      %v2587 = vunpack.c.l.b16 %v2437
      %v2588 = vunpack.c.l.b16 %v2438
      %v2589 = vunpack.c.l.b16 %v2439
      %v2590 = vunpack.c.l.b16 %v2440
      %v2591 = vunpack.c.l.b16 %v2441
      %v2592 = vunpack.c.l.b16 %v2442
      %v2593 = vunpack.c.l.b16 %v2443
      %v2594 = vunpack.c.l.b16 %v2444
      %v2595 = vunpack.c.l.b16 %v2445
      %v2596 = vunpack.c.l.b16 %v2446
      %v2597 = vunpack.c.l.b16 %v2447
      %v2598 = vunpack.c.l.b16 %v2448
      %v2599 = vunpack.c.l.b16 %v2449
      %v2600 = vunpack.c.l.b16 %v2450
      %v2601 = vunpack.c.l.b16 %v2451
      %v2602 = vunpack.c.l.b16 %v2452
      %v2603 = vunpack.c.l.b16 %v2453
      %v2604 = vunpack.c.l.b16 %v2454
      %v2605 = vunpack.c.l.b16 %v2455
      %v2606 = vunpack.c.l.b16 %v2456
      %v2607 = vunpack.c.l.b16 %v2457
      %v2608 = vunpack.c.l.b16 %v2458
      %v2609 = vunpack.c.l.b16 %v2459
      %v2610 = vpack.c.b16 %v2547, %v2546
      %v2611 = vpack.c.b16 %v2549, %v2548
      %v2612 = vpack.c.b16 %v2551, %v2550
      %v2613 = vpack.c.b16 %v2553, %v2552
      %v2614 = vpack.c.b16 %v2555, %v2554
      %v2615 = vpack.c.b16 %v2557, %v2556
      %v2616 = vpack.c.b16 %v2559, %v2558
      %v2617 = vpack.c.b16 %v2561, %v2560
      %v2618 = vpack.c.b16 %v2563, %v2562
      %v2619 = vpack.c.b16 %v2565, %v2564
      %v2620 = vpack.c.b16 %v2567, %v2566
      %v2621 = vpack.c.b16 %v2569, %v2568
      %v2622 = vpack.c.b16 %v2571, %v2570
      %v2623 = vpack.c.b16 %v2573, %v2572
      %v2624 = vpack.c.b16 %v2575, %v2574
      %v2625 = vpack.c.b16 %v2577, %v2576
      %v2626 = vpack.c.b16 %v2579, %v2578
      %v2627 = vpack.c.b16 %v2581, %v2580
      %v2628 = vpack.c.b16 %v2583, %v2582
      %v2629 = vpack.c.b16 %v2585, %v2584
      %v2630 = vpack.c.b16 %v2587, %v2586
      %v2631 = vpack.c.b16 %v2589, %v2588
      %v2632 = vpack.c.b16 %v2591, %v2590
      %v2633 = vpack.c.b16 %v2593, %v2592
      %v2634 = vpack.c.b16 %v2595, %v2594
      %v2635 = vpack.c.b16 %v2597, %v2596
      %v2636 = vpack.c.b16 %v2599, %v2598
      %v2637 = vpack.c.b16 %v2601, %v2600
      %v2638 = vpack.c.b16 %v2603, %v2602
      %v2639 = vpack.c.b16 %v2605, %v2604
      %v2640 = vpack.c.b16 %v2607, %v2606
      %v2641 = vpack.c.b16 %v2609, %v2608
      %2674 = vmatprep.subr.bf16.mxu0 0
      %2675 = vmatpush1.bf16.msra.mxu0 %v2617
      %2676 = vmatprep.subr.bf16.mxu0 0
      %2677 = vmatpush1.bf16.msra.mxu0 %v2616
      %2678 = vmatprep.subr.bf16.mxu0 0
      %2679 = vmatpush1.bf16.msra.mxu0 %v2615
      %2680 = vmatprep.subr.bf16.mxu0 0
      %2681 = vmatpush1.bf16.msra.mxu0 %v2614
      %2682 = vmatprep.subr.bf16.mxu0 0
      %2683 = vmatpush1.bf16.msra.mxu0 %v2613
      %2684 = vmatprep.subr.bf16.mxu0 0
      %2685 = vmatpush1.bf16.msra.mxu0 %v2612
      %2686 = vmatprep.subr.bf16.mxu0 0
      %2687 = vmatpush1.bf16.msra.mxu0 %v2611
      %2688 = vmatprep.subr.bf16.mxu0 0
      %2689 = vmatpush1.bf16.msra.mxu0 %v2610
      %2690 = vmatprep.subr.bf16.mxu0 0
      %2691 = vmatpush2.bf16.msra.mxu0 %v2625
      %2692 = vmatprep.subr.bf16.mxu0 0
      %2693 = vmatpush2.bf16.msra.mxu0 %v2624
      %2694 = vmatprep.subr.bf16.mxu0 0
      %2695 = vmatpush2.bf16.msra.mxu0 %v2623
      %2696 = vmatprep.subr.bf16.mxu0 0
      %2697 = vmatpush2.bf16.msra.mxu0 %v2622
      %2698 = vmatprep.subr.bf16.mxu0 0
      %2699 = vmatpush2.bf16.msra.mxu0 %v2621
      %2700 = vmatprep.subr.bf16.mxu0 0
      %2701 = vmatpush2.bf16.msra.mxu0 %v2620
      %2702 = vmatprep.subr.bf16.mxu0 0
      %2703 = vmatpush2.bf16.msra.mxu0 %v2619
      %2704 = vmatprep.subr.bf16.mxu0 0
      %2705 = vmatpush2.bf16.msra.mxu0 %v2618
      %2706 = vmatprep.mubr.bf16.mxu0 %v2476
      %2707 = vmatmul.mubr.bf16.gmra.mxu0 %v2468
      %v2708 = vpop.f32.mrf.mxu0
      %v2709 = vadd.f32 0.0, %v2708
      %v2710 = vpop.f32.mrf.mxu0
      %v2711 = vpop.f32.mrf.mxu0
      %v2712 = vpop.f32.mrf.mxu0
      %2713 = vdwg.mxu0
      %2714 = vmatprep.subr.bf16.mxu0 0
      %2715 = vmatpush1.bf16.msra.mxu0 %v2633
      %2716 = vmatprep.subr.bf16.mxu0 0
      %2717 = vmatpush1.bf16.msra.mxu0 %v2632
      %2718 = vmatprep.subr.bf16.mxu0 0
      %2719 = vmatpush1.bf16.msra.mxu0 %v2631
      %2720 = vmatprep.subr.bf16.mxu0 0
      %2721 = vmatpush1.bf16.msra.mxu0 %v2630
      %2722 = vmatprep.subr.bf16.mxu0 0
      %2723 = vmatpush1.bf16.msra.mxu0 %v2629
      %2724 = vmatprep.subr.bf16.mxu0 0
      %2725 = vmatpush1.bf16.msra.mxu0 %v2628
      %2726 = vmatprep.subr.bf16.mxu0 0
      %2727 = vmatpush1.bf16.msra.mxu0 %v2627
      %2728 = vmatprep.subr.bf16.mxu0 0
      %2729 = vmatpush1.bf16.msra.mxu0 %v2626
      %2730 = vmatprep.subr.bf16.mxu0 0
      %2731 = vmatpush2.bf16.msra.mxu0 %v2641
      %2732 = vmatprep.subr.bf16.mxu0 0
      %2733 = vmatpush2.bf16.msra.mxu0 %v2640
      %2734 = vmatprep.subr.bf16.mxu0 0
      %2735 = vmatpush2.bf16.msra.mxu0 %v2639
      %2736 = vmatprep.subr.bf16.mxu0 0
      %2737 = vmatpush2.bf16.msra.mxu0 %v2638
      %2738 = vmatprep.subr.bf16.mxu0 0
      %2739 = vmatpush2.bf16.msra.mxu0 %v2637
      %2740 = vmatprep.subr.bf16.mxu0 0
      %2741 = vmatpush2.bf16.msra.mxu0 %v2636
      %2742 = vmatprep.subr.bf16.mxu0 0
      %2743 = vmatpush2.bf16.msra.mxu0 %v2635
      %2744 = vmatprep.subr.bf16.mxu0 0
      %2745 = vmatpush2.bf16.msra.mxu0 %v2634
      %2746 = vmatprep.mubr.bf16.mxu0 %v2477
      %2747 = vmatmul.mubr.bf16.gmra.mxu0 %v2475
      %v2748 = vpop.f32.mrf.mxu0
      %v2749 = vadd.f32 %v2709, %v2748
      %v2750 = vpop.f32.mrf.mxu0
      %v2751 = vpop.f32.mrf.mxu0
      %v2752 = vpop.f32.mrf.mxu0
      %2753 = vdwg.mxu0
      %v2754 = vadd.f32 %v2389, %v2749
      %v2755 = vld [vmem:[%s2394] sm:$0xff]
      %v2756 = vld [vmem:[%s1264] sm:$0xf]
      %v2757 = vld [vmem:[%s1264 + $0x4] sm:$0xf]
      %v2758 = vld [vmem:[%s1264 + $0x8] sm:$0xf]
      %v2759 = vld [vmem:[%s1264 + $0xc] sm:$0xf]
      %v2760 = vld [vmem:[%s1264 + $0x10] sm:$0xf]
      %v2761 = vld [vmem:[%s1264 + $0x14] sm:$0xf]
      %v2762 = vld [vmem:[%s1264 + $0x18] sm:$0xf]
      %v2763 = vld [vmem:[%s1264 + $0x1c] sm:$0xf]
      %v2764 = vld [vmem:[%s1264 + $0x20] sm:$0xf]
      %v2765 = vld [vmem:[%s1264 + $0x24] sm:$0xf]
      %v2766 = vld [vmem:[%s1264 + $0x28] sm:$0xf]
      %v2767 = vld [vmem:[%s1264 + $0x2c] sm:$0xf]
      %v2768 = vld [vmem:[%s1264 + $0x30] sm:$0xf]
      %v2769 = vld [vmem:[%s1264 + $0x34] sm:$0xf]
      %v2770 = vld [vmem:[%s1264 + $0x38] sm:$0xf]
      %v2771 = vld [vmem:[%s1264 + $0x3c] sm:$0xf]
      %v2772 = vld [vmem:[%s1264 + $0x40] sm:$0xf]
      %v2773 = vld [vmem:[%s1264 + $0x44] sm:$0xf]
      %v2774 = vld [vmem:[%s1264 + $0x48] sm:$0xf]
      %v2775 = vld [vmem:[%s1264 + $0x4c] sm:$0xf]
      %v2776 = vld [vmem:[%s1264 + $0x50] sm:$0xf]
      %v2777 = vld [vmem:[%s1264 + $0x54] sm:$0xf]
      %v2778 = vld [vmem:[%s1264 + $0x58] sm:$0xf]
      %v2779 = vld [vmem:[%s1264 + $0x5c] sm:$0xf]
      %v2780 = vld [vmem:[%s1264 + $0x60] sm:$0xf]
      %v2781 = vld [vmem:[%s1264 + $0x64] sm:$0xf]
      %v2782 = vld [vmem:[%s1264 + $0x68] sm:$0xf]
      %v2783 = vld [vmem:[%s1264 + $0x6c] sm:$0xf]
      %v2784 = vld [vmem:[%s1264 + $0x70] sm:$0xf]
      %v2785 = vld [vmem:[%s1264 + $0x74] sm:$0xf]
      %v2786 = vld [vmem:[%s1264 + $0x78] sm:$0xf]
      %v2787 = vld [vmem:[%s1264 + $0x7c] sm:$0xf]
      %v2788 = vld [vmem:[%s1264 + $0x80] sm:$0xf]
      %v2789 = vld [vmem:[%s1264 + $0x84] sm:$0xf]
      %v2790 = vld [vmem:[%s1264 + $0x88] sm:$0xf]
      %v2791 = vld [vmem:[%s1264 + $0x8c] sm:$0xf]
      %v2792 = vld [vmem:[%s1264 + $0x90] sm:$0xf]
      %v2793 = vld [vmem:[%s1264 + $0x94] sm:$0xf]
      %v2794 = vld [vmem:[%s1264 + $0x98] sm:$0xf]
      %v2795 = vld [vmem:[%s1264 + $0x9c] sm:$0xf]
      %v2796 = vld [vmem:[%s1264 + $0xa0] sm:$0xf]
      %v2797 = vld [vmem:[%s1264 + $0xa4] sm:$0xf]
      %v2798 = vld [vmem:[%s1264 + $0xa8] sm:$0xf]
      %v2799 = vld [vmem:[%s1264 + $0xac] sm:$0xf]
      %v2800 = vld [vmem:[%s1264 + $0xb0] sm:$0xf]
      %v2801 = vld [vmem:[%s1264 + $0xb4] sm:$0xf]
      %v2802 = vld [vmem:[%s1264 + $0xb8] sm:$0xf]
      %v2803 = vld [vmem:[%s1264 + $0xbc] sm:$0xf]
      %v2804 = vld [vmem:[%s1264 + $0xc0] sm:$0xf]
      %v2805 = vld [vmem:[%s1264 + $0xc4] sm:$0xf]
      %v2806 = vld [vmem:[%s1264 + $0xc8] sm:$0xf]
      %v2807 = vld [vmem:[%s1264 + $0xcc] sm:$0xf]
      %v2808 = vld [vmem:[%s1264 + $0xd0] sm:$0xf]
      %v2809 = vld [vmem:[%s1264 + $0xd4] sm:$0xf]
      %v2810 = vld [vmem:[%s1264 + $0xd8] sm:$0xf]
      %v2811 = vld [vmem:[%s1264 + $0xdc] sm:$0xf]
      %v2812 = vld [vmem:[%s1264 + $0xe0] sm:$0xf]
      %v2813 = vld [vmem:[%s1264 + $0xe4] sm:$0xf]
      %v2814 = vld [vmem:[%s1264 + $0xe8] sm:$0xf]
      %v2815 = vld [vmem:[%s1264 + $0xec] sm:$0xf]
      %v2816 = vld [vmem:[%s1264 + $0xf0] sm:$0xf]
      %v2817 = vld [vmem:[%s1264 + $0xf4] sm:$0xf]
      %v2818 = vld [vmem:[%s1264 + $0xf8] sm:$0xf]
      %v2819 = vld [vmem:[%s1264 + $0xfc] sm:$0xf]
      %v2821 = vcombine.high %v2755, %v2755
      %v2823 = vunpack.c.l.s4 1983009808
      %v2824 = vunpack.c.0.s8 %v2823
      %v2825 = vlaneseq
      %v2826 = vshrl.u32 %v2825, 7
      %v2827 = vsub.s32 %v2824, %v2826
      %v2828 = vrot.slane %v2755, %v2827
      %v2830 = vunpack.c.l.s4 1983009808
      %v2831 = vunpack.c.0.s8 %v2830
      %v2832 = vlaneseq
      %v2833 = vshrl.u32 %v2832, 7
      %v2834 = vsub.s32 %v2831, %v2833
      %v2835 = vrot.slane %v2821, %v2834
      %v2836 = vcombine.high %v2828, %v2828
      %v2837 = vcombine.high %v2835, %v2835
      %v2839 = vshrl.u32 %v2828, 16
      %v2841 = vshll.u32 %v2828, 16
      %v2843 = vrot.slane %v2841, 1
      %v2844 = vor.u32 %v2839, %v2843
      %v2846 = vshrl.u32 %v2836, 16
      %v2848 = vshll.u32 %v2836, 16
      %v2850 = vrot.slane %v2848, 1
      %v2851 = vor.u32 %v2846, %v2850
      %v2853 = vshrl.u32 %v2835, 16
      %v2855 = vshll.u32 %v2835, 16
      %v2857 = vrot.slane %v2855, 1
      %v2858 = vor.u32 %v2853, %v2857
      %v2860 = vshrl.u32 %v2837, 16
      %v2862 = vshll.u32 %v2837, 16
      %v2864 = vrot.slane %v2862, 1
      %v2865 = vor.u32 %v2860, %v2864
      %v2934 = vunpack.c.l.b16 %v2756
      %v2935 = vunpack.c.l.b16 %v2757
      %v2936 = vunpack.c.l.b16 %v2758
      %v2937 = vunpack.c.l.b16 %v2759
      %v2938 = vunpack.c.l.b16 %v2760
      %v2939 = vunpack.c.l.b16 %v2761
      %v2940 = vunpack.c.l.b16 %v2762
      %v2941 = vunpack.c.l.b16 %v2763
      %v2942 = vunpack.c.l.b16 %v2764
      %v2943 = vunpack.c.l.b16 %v2765
      %v2944 = vunpack.c.l.b16 %v2766
      %v2945 = vunpack.c.l.b16 %v2767
      %v2946 = vunpack.c.l.b16 %v2768
      %v2947 = vunpack.c.l.b16 %v2769
      %v2948 = vunpack.c.l.b16 %v2770
      %v2949 = vunpack.c.l.b16 %v2771
      %v2950 = vunpack.c.l.b16 %v2772
      %v2951 = vunpack.c.l.b16 %v2773
      %v2952 = vunpack.c.l.b16 %v2774
      %v2953 = vunpack.c.l.b16 %v2775
      %v2954 = vunpack.c.l.b16 %v2776
      %v2955 = vunpack.c.l.b16 %v2777
      %v2956 = vunpack.c.l.b16 %v2778
      %v2957 = vunpack.c.l.b16 %v2779
      %v2958 = vunpack.c.l.b16 %v2780
      %v2959 = vunpack.c.l.b16 %v2781
      %v2960 = vunpack.c.l.b16 %v2782
      %v2961 = vunpack.c.l.b16 %v2783
      %v2962 = vunpack.c.l.b16 %v2784
      %v2963 = vunpack.c.l.b16 %v2785
      %v2964 = vunpack.c.l.b16 %v2786
      %v2965 = vunpack.c.l.b16 %v2787
      %v2966 = vunpack.c.l.b16 %v2788
      %v2967 = vunpack.c.l.b16 %v2789
      %v2968 = vunpack.c.l.b16 %v2790
      %v2969 = vunpack.c.l.b16 %v2791
      %v2970 = vunpack.c.l.b16 %v2792
      %v2971 = vunpack.c.l.b16 %v2793
      %v2972 = vunpack.c.l.b16 %v2794
      %v2973 = vunpack.c.l.b16 %v2795
      %v2974 = vunpack.c.l.b16 %v2796
      %v2975 = vunpack.c.l.b16 %v2797
      %v2976 = vunpack.c.l.b16 %v2798
      %v2977 = vunpack.c.l.b16 %v2799
      %v2978 = vunpack.c.l.b16 %v2800
      %v2979 = vunpack.c.l.b16 %v2801
      %v2980 = vunpack.c.l.b16 %v2802
      %v2981 = vunpack.c.l.b16 %v2803
      %v2982 = vunpack.c.l.b16 %v2804
      %v2983 = vunpack.c.l.b16 %v2805
      %v2984 = vunpack.c.l.b16 %v2806
      %v2985 = vunpack.c.l.b16 %v2807
      %v2986 = vunpack.c.l.b16 %v2808
      %v2987 = vunpack.c.l.b16 %v2809
      %v2988 = vunpack.c.l.b16 %v2810
      %v2989 = vunpack.c.l.b16 %v2811
      %v2990 = vunpack.c.l.b16 %v2812
      %v2991 = vunpack.c.l.b16 %v2813
      %v2992 = vunpack.c.l.b16 %v2814
      %v2993 = vunpack.c.l.b16 %v2815
      %v2994 = vunpack.c.l.b16 %v2816
      %v2995 = vunpack.c.l.b16 %v2817
      %v2996 = vunpack.c.l.b16 %v2818
      %v2997 = vunpack.c.l.b16 %v2819
      %v2998 = vpack.c.b16 %v2935, %v2934
      %v2999 = vpack.c.b16 %v2937, %v2936
      %v3000 = vpack.c.b16 %v2939, %v2938
      %v3001 = vpack.c.b16 %v2941, %v2940
      %v3002 = vpack.c.b16 %v2943, %v2942
      %v3003 = vpack.c.b16 %v2945, %v2944
      %v3004 = vpack.c.b16 %v2947, %v2946
      %v3005 = vpack.c.b16 %v2949, %v2948
      %v3006 = vpack.c.b16 %v2951, %v2950
      %v3007 = vpack.c.b16 %v2953, %v2952
      %v3008 = vpack.c.b16 %v2955, %v2954
      %v3009 = vpack.c.b16 %v2957, %v2956
      %v3010 = vpack.c.b16 %v2959, %v2958
      %v3011 = vpack.c.b16 %v2961, %v2960
      %v3012 = vpack.c.b16 %v2963, %v2962
      %v3013 = vpack.c.b16 %v2965, %v2964
      %v3014 = vpack.c.b16 %v2967, %v2966
      %v3015 = vpack.c.b16 %v2969, %v2968
      %v3016 = vpack.c.b16 %v2971, %v2970
      %v3017 = vpack.c.b16 %v2973, %v2972
      %v3018 = vpack.c.b16 %v2975, %v2974
      %v3019 = vpack.c.b16 %v2977, %v2976
      %v3020 = vpack.c.b16 %v2979, %v2978
      %v3021 = vpack.c.b16 %v2981, %v2980
      %v3022 = vpack.c.b16 %v2983, %v2982
      %v3023 = vpack.c.b16 %v2985, %v2984
      %v3024 = vpack.c.b16 %v2987, %v2986
      %v3025 = vpack.c.b16 %v2989, %v2988
      %v3026 = vpack.c.b16 %v2991, %v2990
      %v3027 = vpack.c.b16 %v2993, %v2992
      %v3028 = vpack.c.b16 %v2995, %v2994
      %v3029 = vpack.c.b16 %v2997, %v2996
      %3062 = vmatprep.subr.bf16.mxu0 0
      %3063 = vmatpush1.bf16.msra.mxu0 %v3005
      %3064 = vmatprep.subr.bf16.mxu0 0
      %3065 = vmatpush1.bf16.msra.mxu0 %v3004
      %3066 = vmatprep.subr.bf16.mxu0 0
      %3067 = vmatpush1.bf16.msra.mxu0 %v3003
      %3068 = vmatprep.subr.bf16.mxu0 0
      %3069 = vmatpush1.bf16.msra.mxu0 %v3002
      %3070 = vmatprep.subr.bf16.mxu0 0
      %3071 = vmatpush1.bf16.msra.mxu0 %v3001
      %3072 = vmatprep.subr.bf16.mxu0 0
      %3073 = vmatpush1.bf16.msra.mxu0 %v3000
      %3074 = vmatprep.subr.bf16.mxu0 0
      %3075 = vmatpush1.bf16.msra.mxu0 %v2999
      %3076 = vmatprep.subr.bf16.mxu0 0
      %3077 = vmatpush1.bf16.msra.mxu0 %v2998
      %3078 = vmatprep.subr.bf16.mxu0 0
      %3079 = vmatpush2.bf16.msra.mxu0 %v3013
      %3080 = vmatprep.subr.bf16.mxu0 0
      %3081 = vmatpush2.bf16.msra.mxu0 %v3012
      %3082 = vmatprep.subr.bf16.mxu0 0
      %3083 = vmatpush2.bf16.msra.mxu0 %v3011
      %3084 = vmatprep.subr.bf16.mxu0 0
      %3085 = vmatpush2.bf16.msra.mxu0 %v3010
      %3086 = vmatprep.subr.bf16.mxu0 0
      %3087 = vmatpush2.bf16.msra.mxu0 %v3009
      %3088 = vmatprep.subr.bf16.mxu0 0
      %3089 = vmatpush2.bf16.msra.mxu0 %v3008
      %3090 = vmatprep.subr.bf16.mxu0 0
      %3091 = vmatpush2.bf16.msra.mxu0 %v3007
      %3092 = vmatprep.subr.bf16.mxu0 0
      %3093 = vmatpush2.bf16.msra.mxu0 %v3006
      %3094 = vmatprep.mubr.bf16.mxu0 %v2851
      %3095 = vmatmul.mubr.bf16.gmra.mxu0 %v2844
      %v3096 = vpop.f32.mrf.mxu0
      %v3097 = vadd.f32 0.0, %v3096
      %v3098 = vpop.f32.mrf.mxu0
      %v3099 = vpop.f32.mrf.mxu0
      %v3100 = vpop.f32.mrf.mxu0
      %3101 = vdwg.mxu0
      %3102 = vmatprep.subr.bf16.mxu0 0
      %3103 = vmatpush1.bf16.msra.mxu0 %v3021
      %3104 = vmatprep.subr.bf16.mxu0 0
      %3105 = vmatpush1.bf16.msra.mxu0 %v3020
      %3106 = vmatprep.subr.bf16.mxu0 0
      %3107 = vmatpush1.bf16.msra.mxu0 %v3019
      %3108 = vmatprep.subr.bf16.mxu0 0
      %3109 = vmatpush1.bf16.msra.mxu0 %v3018
      %3110 = vmatprep.subr.bf16.mxu0 0
      %3111 = vmatpush1.bf16.msra.mxu0 %v3017
      %3112 = vmatprep.subr.bf16.mxu0 0
      %3113 = vmatpush1.bf16.msra.mxu0 %v3016
      %3114 = vmatprep.subr.bf16.mxu0 0
      %3115 = vmatpush1.bf16.msra.mxu0 %v3015
      %3116 = vmatprep.subr.bf16.mxu0 0
      %3117 = vmatpush1.bf16.msra.mxu0 %v3014
      %3118 = vmatprep.subr.bf16.mxu0 0
      %3119 = vmatpush2.bf16.msra.mxu0 %v3029
      %3120 = vmatprep.subr.bf16.mxu0 0
      %3121 = vmatpush2.bf16.msra.mxu0 %v3028
      %3122 = vmatprep.subr.bf16.mxu0 0
      %3123 = vmatpush2.bf16.msra.mxu0 %v3027
      %3124 = vmatprep.subr.bf16.mxu0 0
      %3125 = vmatpush2.bf16.msra.mxu0 %v3026
      %3126 = vmatprep.subr.bf16.mxu0 0
      %3127 = vmatpush2.bf16.msra.mxu0 %v3025
      %3128 = vmatprep.subr.bf16.mxu0 0
      %3129 = vmatpush2.bf16.msra.mxu0 %v3024
      %3130 = vmatprep.subr.bf16.mxu0 0
      %3131 = vmatpush2.bf16.msra.mxu0 %v3023
      %3132 = vmatprep.subr.bf16.mxu0 0
      %3133 = vmatpush2.bf16.msra.mxu0 %v3022
      %3134 = vmatprep.mubr.bf16.mxu0 %v2865
      %3135 = vmatmul.mubr.bf16.gmra.mxu0 %v2858
      %v3136 = vpop.f32.mrf.mxu0
      %v3137 = vadd.f32 %v3097, %v3136
      %v3138 = vpop.f32.mrf.mxu0
      %v3139 = vpop.f32.mrf.mxu0
      %v3140 = vpop.f32.mrf.mxu0
      %3141 = vdwg.mxu0
      %v3142 = vadd.f32 %v2754, %v3137
      %v3143 = vadd.f32 %v3142, %v1656
      %v3144 = vmax.f32 %v3143, 0.0
      %v3145 = vpack.c.bf16 %v3144, %v3144
      %s3146 = scalar_lea.vmem %s170, 2
      %v3147 = vld [vmem:[%s3146] sm:$0x3]
      %v3148 = vsel %vm1663, %v3145, %v3147
      %3149 = vst [vmem:[%s3146] sm:$0x3] %v3148
      %v3150 = vld [vmem:[%s2394] sm:$0xff]
      %v3151 = vld [vmem:[%s1] sm:$0xf]
      %v3152 = vld [vmem:[%s1 + $0x4] sm:$0xf]
      %v3153 = vld [vmem:[%s1 + $0x8] sm:$0xf]
      %v3154 = vld [vmem:[%s1 + $0xc] sm:$0xf]
      %v3155 = vld [vmem:[%s1 + $0x10] sm:$0xf]
      %v3156 = vld [vmem:[%s1 + $0x14] sm:$0xf]
      %v3157 = vld [vmem:[%s1 + $0x18] sm:$0xf]
      %v3158 = vld [vmem:[%s1 + $0x1c] sm:$0xf]
      %v3159 = vld [vmem:[%s1 + $0x20] sm:$0xf]
      %v3160 = vld [vmem:[%s1 + $0x24] sm:$0xf]
      %v3161 = vld [vmem:[%s1 + $0x28] sm:$0xf]
      %v3162 = vld [vmem:[%s1 + $0x2c] sm:$0xf]
      %v3163 = vld [vmem:[%s1 + $0x30] sm:$0xf]
      %v3164 = vld [vmem:[%s1 + $0x34] sm:$0xf]
      %v3165 = vld [vmem:[%s1 + $0x38] sm:$0xf]
      %v3166 = vld [vmem:[%s1 + $0x3c] sm:$0xf]
      %v3167 = vld [vmem:[%s1 + $0x40] sm:$0xf]
      %v3168 = vld [vmem:[%s1 + $0x44] sm:$0xf]
      %v3169 = vld [vmem:[%s1 + $0x48] sm:$0xf]
      %v3170 = vld [vmem:[%s1 + $0x4c] sm:$0xf]
      %v3171 = vld [vmem:[%s1 + $0x50] sm:$0xf]
      %v3172 = vld [vmem:[%s1 + $0x54] sm:$0xf]
      %v3173 = vld [vmem:[%s1 + $0x58] sm:$0xf]
      %v3174 = vld [vmem:[%s1 + $0x5c] sm:$0xf]
      %v3175 = vld [vmem:[%s1 + $0x60] sm:$0xf]
      %v3176 = vld [vmem:[%s1 + $0x64] sm:$0xf]
      %v3177 = vld [vmem:[%s1 + $0x68] sm:$0xf]
      %v3178 = vld [vmem:[%s1 + $0x6c] sm:$0xf]
      %v3179 = vld [vmem:[%s1 + $0x70] sm:$0xf]
      %v3180 = vld [vmem:[%s1 + $0x74] sm:$0xf]
      %v3181 = vld [vmem:[%s1 + $0x78] sm:$0xf]
      %v3182 = vld [vmem:[%s1 + $0x7c] sm:$0xf]
      %v3183 = vld [vmem:[%s1 + $0x80] sm:$0xf]
      %v3184 = vld [vmem:[%s1 + $0x84] sm:$0xf]
      %v3185 = vld [vmem:[%s1 + $0x88] sm:$0xf]
      %v3186 = vld [vmem:[%s1 + $0x8c] sm:$0xf]
      %v3187 = vld [vmem:[%s1 + $0x90] sm:$0xf]
      %v3188 = vld [vmem:[%s1 + $0x94] sm:$0xf]
      %v3189 = vld [vmem:[%s1 + $0x98] sm:$0xf]
      %v3190 = vld [vmem:[%s1 + $0x9c] sm:$0xf]
      %v3191 = vld [vmem:[%s1 + $0xa0] sm:$0xf]
      %v3192 = vld [vmem:[%s1 + $0xa4] sm:$0xf]
      %v3193 = vld [vmem:[%s1 + $0xa8] sm:$0xf]
      %v3194 = vld [vmem:[%s1 + $0xac] sm:$0xf]
      %v3195 = vld [vmem:[%s1 + $0xb0] sm:$0xf]
      %v3196 = vld [vmem:[%s1 + $0xb4] sm:$0xf]
      %v3197 = vld [vmem:[%s1 + $0xb8] sm:$0xf]
      %v3198 = vld [vmem:[%s1 + $0xbc] sm:$0xf]
      %v3199 = vld [vmem:[%s1 + $0xc0] sm:$0xf]
      %v3200 = vld [vmem:[%s1 + $0xc4] sm:$0xf]
      %v3201 = vld [vmem:[%s1 + $0xc8] sm:$0xf]
      %v3202 = vld [vmem:[%s1 + $0xcc] sm:$0xf]
      %v3203 = vld [vmem:[%s1 + $0xd0] sm:$0xf]
      %v3204 = vld [vmem:[%s1 + $0xd4] sm:$0xf]
      %v3205 = vld [vmem:[%s1 + $0xd8] sm:$0xf]
      %v3206 = vld [vmem:[%s1 + $0xdc] sm:$0xf]
      %v3207 = vld [vmem:[%s1 + $0xe0] sm:$0xf]
      %v3208 = vld [vmem:[%s1 + $0xe4] sm:$0xf]
      %v3209 = vld [vmem:[%s1 + $0xe8] sm:$0xf]
      %v3210 = vld [vmem:[%s1 + $0xec] sm:$0xf]
      %v3211 = vld [vmem:[%s1 + $0xf0] sm:$0xf]
      %v3212 = vld [vmem:[%s1 + $0xf4] sm:$0xf]
      %v3213 = vld [vmem:[%s1 + $0xf8] sm:$0xf]
      %v3214 = vld [vmem:[%s1 + $0xfc] sm:$0xf]
      %v3215 = vld [vmem:[%s238] sm:$0xf]
      %v3216 = vld [vmem:[%s238 + $0x4] sm:$0xf]
      %v3217 = vld [vmem:[%s238 + $0x8] sm:$0xf]
      %v3218 = vld [vmem:[%s238 + $0xc] sm:$0xf]
      %v3219 = vld [vmem:[%s238 + $0x10] sm:$0xf]
      %v3220 = vld [vmem:[%s238 + $0x14] sm:$0xf]
      %v3221 = vld [vmem:[%s238 + $0x18] sm:$0xf]
      %v3222 = vld [vmem:[%s238 + $0x1c] sm:$0xf]
      %v3223 = vld [vmem:[%s238 + $0x20] sm:$0xf]
      %v3224 = vld [vmem:[%s238 + $0x24] sm:$0xf]
      %v3225 = vld [vmem:[%s238 + $0x28] sm:$0xf]
      %v3226 = vld [vmem:[%s238 + $0x2c] sm:$0xf]
      %v3227 = vld [vmem:[%s238 + $0x30] sm:$0xf]
      %v3228 = vld [vmem:[%s238 + $0x34] sm:$0xf]
      %v3229 = vld [vmem:[%s238 + $0x38] sm:$0xf]
      %v3230 = vld [vmem:[%s238 + $0x3c] sm:$0xf]
      %v3231 = vld [vmem:[%s238 + $0x40] sm:$0xf]
      %v3232 = vld [vmem:[%s238 + $0x44] sm:$0xf]
      %v3233 = vld [vmem:[%s238 + $0x48] sm:$0xf]
      %v3234 = vld [vmem:[%s238 + $0x4c] sm:$0xf]
      %v3235 = vld [vmem:[%s238 + $0x50] sm:$0xf]
      %v3236 = vld [vmem:[%s238 + $0x54] sm:$0xf]
      %v3237 = vld [vmem:[%s238 + $0x58] sm:$0xf]
      %v3238 = vld [vmem:[%s238 + $0x5c] sm:$0xf]
      %v3239 = vld [vmem:[%s238 + $0x60] sm:$0xf]
      %v3240 = vld [vmem:[%s238 + $0x64] sm:$0xf]
      %v3241 = vld [vmem:[%s238 + $0x68] sm:$0xf]
      %v3242 = vld [vmem:[%s238 + $0x6c] sm:$0xf]
      %v3243 = vld [vmem:[%s238 + $0x70] sm:$0xf]
      %v3244 = vld [vmem:[%s238 + $0x74] sm:$0xf]
      %v3245 = vld [vmem:[%s238 + $0x78] sm:$0xf]
      %v3246 = vld [vmem:[%s238 + $0x7c] sm:$0xf]
      %v3247 = vld [vmem:[%s238 + $0x80] sm:$0xf]
      %v3248 = vld [vmem:[%s238 + $0x84] sm:$0xf]
      %v3249 = vld [vmem:[%s238 + $0x88] sm:$0xf]
      %v3250 = vld [vmem:[%s238 + $0x8c] sm:$0xf]
      %v3251 = vld [vmem:[%s238 + $0x90] sm:$0xf]
      %v3252 = vld [vmem:[%s238 + $0x94] sm:$0xf]
      %v3253 = vld [vmem:[%s238 + $0x98] sm:$0xf]
      %v3254 = vld [vmem:[%s238 + $0x9c] sm:$0xf]
      %v3255 = vld [vmem:[%s238 + $0xa0] sm:$0xf]
      %v3256 = vld [vmem:[%s238 + $0xa4] sm:$0xf]
      %v3257 = vld [vmem:[%s238 + $0xa8] sm:$0xf]
      %v3258 = vld [vmem:[%s238 + $0xac] sm:$0xf]
      %v3259 = vld [vmem:[%s238 + $0xb0] sm:$0xf]
      %v3260 = vld [vmem:[%s238 + $0xb4] sm:$0xf]
      %v3261 = vld [vmem:[%s238 + $0xb8] sm:$0xf]
      %v3262 = vld [vmem:[%s238 + $0xbc] sm:$0xf]
      %v3263 = vld [vmem:[%s238 + $0xc0] sm:$0xf]
      %v3264 = vld [vmem:[%s238 + $0xc4] sm:$0xf]
      %v3265 = vld [vmem:[%s238 + $0xc8] sm:$0xf]
      %v3266 = vld [vmem:[%s238 + $0xcc] sm:$0xf]
      %v3267 = vld [vmem:[%s238 + $0xd0] sm:$0xf]
      %v3268 = vld [vmem:[%s238 + $0xd4] sm:$0xf]
      %v3269 = vld [vmem:[%s238 + $0xd8] sm:$0xf]
      %v3270 = vld [vmem:[%s238 + $0xdc] sm:$0xf]
      %v3271 = vld [vmem:[%s238 + $0xe0] sm:$0xf]
      %v3272 = vld [vmem:[%s238 + $0xe4] sm:$0xf]
      %v3273 = vld [vmem:[%s238 + $0xe8] sm:$0xf]
      %v3274 = vld [vmem:[%s238 + $0xec] sm:$0xf]
      %v3275 = vld [vmem:[%s238 + $0xf0] sm:$0xf]
      %v3276 = vld [vmem:[%s238 + $0xf4] sm:$0xf]
      %v3277 = vld [vmem:[%s238 + $0xf8] sm:$0xf]
      %v3278 = vld [vmem:[%s238 + $0xfc] sm:$0xf]
      %v3280 = vcombine.high %v3150, %v3150
      %v3282 = vunpack.c.l.s4 1983009808
      %v3283 = vunpack.c.0.s8 %v3282
      %v3284 = vlaneseq
      %v3285 = vshrl.u32 %v3284, 7
      %v3286 = vsub.s32 %v3283, %v3285
      %v3287 = vrot.slane %v3150, %v3286
      %v3289 = vunpack.c.l.s4 1983009808
      %v3290 = vunpack.c.0.s8 %v3289
      %v3291 = vlaneseq
      %v3292 = vshrl.u32 %v3291, 7
      %v3293 = vsub.s32 %v3290, %v3292
      %v3294 = vrot.slane %v3280, %v3293
      %v3295 = vcombine.high %v3287, %v3287
      %v3296 = vcombine.high %v3294, %v3294
      %v3298 = vshrl.u32 %v3287, 16
      %v3300 = vshll.u32 %v3287, 16
      %v3302 = vrot.slane %v3300, 1
      %v3303 = vor.u32 %v3298, %v3302
      %v3305 = vshrl.u32 %v3295, 16
      %v3307 = vshll.u32 %v3295, 16
      %v3309 = vrot.slane %v3307, 1
      %v3310 = vor.u32 %v3305, %v3309
      %v3312 = vshrl.u32 %v3294, 16
      %v3314 = vshll.u32 %v3294, 16
      %v3316 = vrot.slane %v3314, 1
      %v3317 = vor.u32 %v3312, %v3316
      %v3319 = vshrl.u32 %v3296, 16
      %v3321 = vshll.u32 %v3296, 16
      %v3323 = vrot.slane %v3321, 1
      %v3324 = vor.u32 %v3319, %v3323
      %v3393 = vunpack.c.l.b16 %v3215
      %v3394 = vunpack.c.l.b16 %v3216
      %v3395 = vunpack.c.l.b16 %v3217
      %v3396 = vunpack.c.l.b16 %v3218
      %v3397 = vunpack.c.l.b16 %v3219
      %v3398 = vunpack.c.l.b16 %v3220
      %v3399 = vunpack.c.l.b16 %v3221
      %v3400 = vunpack.c.l.b16 %v3222
      %v3401 = vunpack.c.l.b16 %v3223
      %v3402 = vunpack.c.l.b16 %v3224
      %v3403 = vunpack.c.l.b16 %v3225
      %v3404 = vunpack.c.l.b16 %v3226
      %v3405 = vunpack.c.l.b16 %v3227
      %v3406 = vunpack.c.l.b16 %v3228
      %v3407 = vunpack.c.l.b16 %v3229
      %v3408 = vunpack.c.l.b16 %v3230
      %v3409 = vunpack.c.l.b16 %v3231
      %v3410 = vunpack.c.l.b16 %v3232
      %v3411 = vunpack.c.l.b16 %v3233
      %v3412 = vunpack.c.l.b16 %v3234
      %v3413 = vunpack.c.l.b16 %v3235
      %v3414 = vunpack.c.l.b16 %v3236
      %v3415 = vunpack.c.l.b16 %v3237
      %v3416 = vunpack.c.l.b16 %v3238
      %v3417 = vunpack.c.l.b16 %v3239
      %v3418 = vunpack.c.l.b16 %v3240
      %v3419 = vunpack.c.l.b16 %v3241
      %v3420 = vunpack.c.l.b16 %v3242
      %v3421 = vunpack.c.l.b16 %v3243
      %v3422 = vunpack.c.l.b16 %v3244
      %v3423 = vunpack.c.l.b16 %v3245
      %v3424 = vunpack.c.l.b16 %v3246
      %v3425 = vunpack.c.l.b16 %v3247
      %v3426 = vunpack.c.l.b16 %v3248
      %v3427 = vunpack.c.l.b16 %v3249
      %v3428 = vunpack.c.l.b16 %v3250
      %v3429 = vunpack.c.l.b16 %v3251
      %v3430 = vunpack.c.l.b16 %v3252
      %v3431 = vunpack.c.l.b16 %v3253
      %v3432 = vunpack.c.l.b16 %v3254
      %v3433 = vunpack.c.l.b16 %v3255
      %v3434 = vunpack.c.l.b16 %v3256
      %v3435 = vunpack.c.l.b16 %v3257
      %v3436 = vunpack.c.l.b16 %v3258
      %v3437 = vunpack.c.l.b16 %v3259
      %v3438 = vunpack.c.l.b16 %v3260
      %v3439 = vunpack.c.l.b16 %v3261
      %v3440 = vunpack.c.l.b16 %v3262
      %v3441 = vunpack.c.l.b16 %v3263
      %v3442 = vunpack.c.l.b16 %v3264
      %v3443 = vunpack.c.l.b16 %v3265
      %v3444 = vunpack.c.l.b16 %v3266
      %v3445 = vunpack.c.l.b16 %v3267
      %v3446 = vunpack.c.l.b16 %v3268
      %v3447 = vunpack.c.l.b16 %v3269
      %v3448 = vunpack.c.l.b16 %v3270
      %v3449 = vunpack.c.l.b16 %v3271
      %v3450 = vunpack.c.l.b16 %v3272
      %v3451 = vunpack.c.l.b16 %v3273
      %v3452 = vunpack.c.l.b16 %v3274
      %v3453 = vunpack.c.l.b16 %v3275
      %v3454 = vunpack.c.l.b16 %v3276
      %v3455 = vunpack.c.l.b16 %v3277
      %v3456 = vunpack.c.l.b16 %v3278
      %v3457 = vpack.c.b16 %v3394, %v3393
      %v3458 = vpack.c.b16 %v3396, %v3395
      %v3459 = vpack.c.b16 %v3398, %v3397
      %v3460 = vpack.c.b16 %v3400, %v3399
      %v3461 = vpack.c.b16 %v3402, %v3401
      %v3462 = vpack.c.b16 %v3404, %v3403
      %v3463 = vpack.c.b16 %v3406, %v3405
      %v3464 = vpack.c.b16 %v3408, %v3407
      %v3465 = vpack.c.b16 %v3410, %v3409
      %v3466 = vpack.c.b16 %v3412, %v3411
      %v3467 = vpack.c.b16 %v3414, %v3413
      %v3468 = vpack.c.b16 %v3416, %v3415
      %v3469 = vpack.c.b16 %v3418, %v3417
      %v3470 = vpack.c.b16 %v3420, %v3419
      %v3471 = vpack.c.b16 %v3422, %v3421
      %v3472 = vpack.c.b16 %v3424, %v3423
      %v3473 = vpack.c.b16 %v3426, %v3425
      %v3474 = vpack.c.b16 %v3428, %v3427
      %v3475 = vpack.c.b16 %v3430, %v3429
      %v3476 = vpack.c.b16 %v3432, %v3431
      %v3477 = vpack.c.b16 %v3434, %v3433
      %v3478 = vpack.c.b16 %v3436, %v3435
      %v3479 = vpack.c.b16 %v3438, %v3437
      %v3480 = vpack.c.b16 %v3440, %v3439
      %v3481 = vpack.c.b16 %v3442, %v3441
      %v3482 = vpack.c.b16 %v3444, %v3443
      %v3483 = vpack.c.b16 %v3446, %v3445
      %v3484 = vpack.c.b16 %v3448, %v3447
      %v3485 = vpack.c.b16 %v3450, %v3449
      %v3486 = vpack.c.b16 %v3452, %v3451
      %v3487 = vpack.c.b16 %v3454, %v3453
      %v3488 = vpack.c.b16 %v3456, %v3455
      %3521 = vmatprep.subr.bf16.mxu0 0
      %3522 = vmatpush1.bf16.msra.mxu0 %v3464
      %3523 = vmatprep.subr.bf16.mxu0 0
      %3524 = vmatpush1.bf16.msra.mxu0 %v3463
      %3525 = vmatprep.subr.bf16.mxu0 0
      %3526 = vmatpush1.bf16.msra.mxu0 %v3462
      %3527 = vmatprep.subr.bf16.mxu0 0
      %3528 = vmatpush1.bf16.msra.mxu0 %v3461
      %3529 = vmatprep.subr.bf16.mxu0 0
      %3530 = vmatpush1.bf16.msra.mxu0 %v3460
      %3531 = vmatprep.subr.bf16.mxu0 0
      %3532 = vmatpush1.bf16.msra.mxu0 %v3459
      %3533 = vmatprep.subr.bf16.mxu0 0
      %3534 = vmatpush1.bf16.msra.mxu0 %v3458
      %3535 = vmatprep.subr.bf16.mxu0 0
      %3536 = vmatpush1.bf16.msra.mxu0 %v3457
      %3537 = vmatprep.subr.bf16.mxu0 0
      %3538 = vmatpush2.bf16.msra.mxu0 %v3472
      %3539 = vmatprep.subr.bf16.mxu0 0
      %3540 = vmatpush2.bf16.msra.mxu0 %v3471
      %3541 = vmatprep.subr.bf16.mxu0 0
      %3542 = vmatpush2.bf16.msra.mxu0 %v3470
      %3543 = vmatprep.subr.bf16.mxu0 0
      %3544 = vmatpush2.bf16.msra.mxu0 %v3469
      %3545 = vmatprep.subr.bf16.mxu0 0
      %3546 = vmatpush2.bf16.msra.mxu0 %v3468
      %3547 = vmatprep.subr.bf16.mxu0 0
      %3548 = vmatpush2.bf16.msra.mxu0 %v3467
      %3549 = vmatprep.subr.bf16.mxu0 0
      %3550 = vmatpush2.bf16.msra.mxu0 %v3466
      %3551 = vmatprep.subr.bf16.mxu0 0
      %3552 = vmatpush2.bf16.msra.mxu0 %v3465
      %3553 = vmatprep.mubr.bf16.mxu0 %v3310
      %3554 = vmatmul.mubr.bf16.gmra.mxu0 %v3303
      %v3555 = vpop.f32.mrf.mxu0
      %v3556 = vadd.f32 0.0, %v3555
      %v3557 = vpop.f32.mrf.mxu0
      %v3558 = vpop.f32.mrf.mxu0
      %v3559 = vpop.f32.mrf.mxu0
      %3560 = vdwg.mxu0
      %3561 = vmatprep.subr.bf16.mxu0 0
      %3562 = vmatpush1.bf16.msra.mxu0 %v3480
      %3563 = vmatprep.subr.bf16.mxu0 0
      %3564 = vmatpush1.bf16.msra.mxu0 %v3479
      %3565 = vmatprep.subr.bf16.mxu0 0
      %3566 = vmatpush1.bf16.msra.mxu0 %v3478
      %3567 = vmatprep.subr.bf16.mxu0 0
      %3568 = vmatpush1.bf16.msra.mxu0 %v3477
      %3569 = vmatprep.subr.bf16.mxu0 0
      %3570 = vmatpush1.bf16.msra.mxu0 %v3476
      %3571 = vmatprep.subr.bf16.mxu0 0
      %3572 = vmatpush1.bf16.msra.mxu0 %v3475
      %3573 = vmatprep.subr.bf16.mxu0 0
      %3574 = vmatpush1.bf16.msra.mxu0 %v3474
      %3575 = vmatprep.subr.bf16.mxu0 0
      %3576 = vmatpush1.bf16.msra.mxu0 %v3473
      %3577 = vmatprep.subr.bf16.mxu0 0
      %3578 = vmatpush2.bf16.msra.mxu0 %v3488
      %3579 = vmatprep.subr.bf16.mxu0 0
      %3580 = vmatpush2.bf16.msra.mxu0 %v3487
      %3581 = vmatprep.subr.bf16.mxu0 0
      %3582 = vmatpush2.bf16.msra.mxu0 %v3486
      %3583 = vmatprep.subr.bf16.mxu0 0
      %3584 = vmatpush2.bf16.msra.mxu0 %v3485
      %3585 = vmatprep.subr.bf16.mxu0 0
      %3586 = vmatpush2.bf16.msra.mxu0 %v3484
      %3587 = vmatprep.subr.bf16.mxu0 0
      %3588 = vmatpush2.bf16.msra.mxu0 %v3483
      %3589 = vmatprep.subr.bf16.mxu0 0
      %3590 = vmatpush2.bf16.msra.mxu0 %v3482
      %3591 = vmatprep.subr.bf16.mxu0 0
      %3592 = vmatpush2.bf16.msra.mxu0 %v3481
      %3593 = vmatprep.mubr.bf16.mxu0 %v3324
      %3594 = vmatmul.mubr.bf16.gmra.mxu0 %v3317
      %v3595 = vpop.f32.mrf.mxu0
      %v3596 = vadd.f32 %v3556, %v3595
      %v3597 = vpop.f32.mrf.mxu0
      %v3598 = vpop.f32.mrf.mxu0
      %v3599 = vpop.f32.mrf.mxu0
      %3600 = vdwg.mxu0
      %v3669 = vunpack.c.l.b16 %v3151
      %v3670 = vunpack.c.l.b16 %v3152
      %v3671 = vunpack.c.l.b16 %v3153
      %v3672 = vunpack.c.l.b16 %v3154
      %v3673 = vunpack.c.l.b16 %v3155
      %v3674 = vunpack.c.l.b16 %v3156
      %v3675 = vunpack.c.l.b16 %v3157
      %v3676 = vunpack.c.l.b16 %v3158
      %v3677 = vunpack.c.l.b16 %v3159
      %v3678 = vunpack.c.l.b16 %v3160
      %v3679 = vunpack.c.l.b16 %v3161
      %v3680 = vunpack.c.l.b16 %v3162
      %v3681 = vunpack.c.l.b16 %v3163
      %v3682 = vunpack.c.l.b16 %v3164
      %v3683 = vunpack.c.l.b16 %v3165
      %v3684 = vunpack.c.l.b16 %v3166
      %v3685 = vunpack.c.l.b16 %v3167
      %v3686 = vunpack.c.l.b16 %v3168
      %v3687 = vunpack.c.l.b16 %v3169
      %v3688 = vunpack.c.l.b16 %v3170
      %v3689 = vunpack.c.l.b16 %v3171
      %v3690 = vunpack.c.l.b16 %v3172
      %v3691 = vunpack.c.l.b16 %v3173
      %v3692 = vunpack.c.l.b16 %v3174
      %v3693 = vunpack.c.l.b16 %v3175
      %v3694 = vunpack.c.l.b16 %v3176
      %v3695 = vunpack.c.l.b16 %v3177
      %v3696 = vunpack.c.l.b16 %v3178
      %v3697 = vunpack.c.l.b16 %v3179
      %v3698 = vunpack.c.l.b16 %v3180
      %v3699 = vunpack.c.l.b16 %v3181
      %v3700 = vunpack.c.l.b16 %v3182
      %v3701 = vunpack.c.l.b16 %v3183
      %v3702 = vunpack.c.l.b16 %v3184
      %v3703 = vunpack.c.l.b16 %v3185
      %v3704 = vunpack.c.l.b16 %v3186
      %v3705 = vunpack.c.l.b16 %v3187
      %v3706 = vunpack.c.l.b16 %v3188
      %v3707 = vunpack.c.l.b16 %v3189
      %v3708 = vunpack.c.l.b16 %v3190
      %v3709 = vunpack.c.l.b16 %v3191
      %v3710 = vunpack.c.l.b16 %v3192
      %v3711 = vunpack.c.l.b16 %v3193
      %v3712 = vunpack.c.l.b16 %v3194
      %v3713 = vunpack.c.l.b16 %v3195
      %v3714 = vunpack.c.l.b16 %v3196
      %v3715 = vunpack.c.l.b16 %v3197
      %v3716 = vunpack.c.l.b16 %v3198
      %v3717 = vunpack.c.l.b16 %v3199
      %v3718 = vunpack.c.l.b16 %v3200
      %v3719 = vunpack.c.l.b16 %v3201
      %v3720 = vunpack.c.l.b16 %v3202
      %v3721 = vunpack.c.l.b16 %v3203
      %v3722 = vunpack.c.l.b16 %v3204
      %v3723 = vunpack.c.l.b16 %v3205
      %v3724 = vunpack.c.l.b16 %v3206
      %v3725 = vunpack.c.l.b16 %v3207
      %v3726 = vunpack.c.l.b16 %v3208
      %v3727 = vunpack.c.l.b16 %v3209
      %v3728 = vunpack.c.l.b16 %v3210
      %v3729 = vunpack.c.l.b16 %v3211
      %v3730 = vunpack.c.l.b16 %v3212
      %v3731 = vunpack.c.l.b16 %v3213
      %v3732 = vunpack.c.l.b16 %v3214
      %v3733 = vpack.c.b16 %v3670, %v3669
      %v3734 = vpack.c.b16 %v3672, %v3671
      %v3735 = vpack.c.b16 %v3674, %v3673
      %v3736 = vpack.c.b16 %v3676, %v3675
      %v3737 = vpack.c.b16 %v3678, %v3677
      %v3738 = vpack.c.b16 %v3680, %v3679
      %v3739 = vpack.c.b16 %v3682, %v3681
      %v3740 = vpack.c.b16 %v3684, %v3683
      %v3741 = vpack.c.b16 %v3686, %v3685
      %v3742 = vpack.c.b16 %v3688, %v3687
      %v3743 = vpack.c.b16 %v3690, %v3689
      %v3744 = vpack.c.b16 %v3692, %v3691
      %v3745 = vpack.c.b16 %v3694, %v3693
      %v3746 = vpack.c.b16 %v3696, %v3695
      %v3747 = vpack.c.b16 %v3698, %v3697
      %v3748 = vpack.c.b16 %v3700, %v3699
      %v3749 = vpack.c.b16 %v3702, %v3701
      %v3750 = vpack.c.b16 %v3704, %v3703
      %v3751 = vpack.c.b16 %v3706, %v3705
      %v3752 = vpack.c.b16 %v3708, %v3707
      %v3753 = vpack.c.b16 %v3710, %v3709
      %v3754 = vpack.c.b16 %v3712, %v3711
      %v3755 = vpack.c.b16 %v3714, %v3713
      %v3756 = vpack.c.b16 %v3716, %v3715
      %v3757 = vpack.c.b16 %v3718, %v3717
      %v3758 = vpack.c.b16 %v3720, %v3719
      %v3759 = vpack.c.b16 %v3722, %v3721
      %v3760 = vpack.c.b16 %v3724, %v3723
      %v3761 = vpack.c.b16 %v3726, %v3725
      %v3762 = vpack.c.b16 %v3728, %v3727
      %v3763 = vpack.c.b16 %v3730, %v3729
      %v3764 = vpack.c.b16 %v3732, %v3731
      %3797 = vmatprep.subr.bf16.mxu0 0
      %3798 = vmatpush1.bf16.msra.mxu0 %v3740
      %3799 = vmatprep.subr.bf16.mxu0 0
      %3800 = vmatpush1.bf16.msra.mxu0 %v3739
      %3801 = vmatprep.subr.bf16.mxu0 0
      %3802 = vmatpush1.bf16.msra.mxu0 %v3738
      %3803 = vmatprep.subr.bf16.mxu0 0
      %3804 = vmatpush1.bf16.msra.mxu0 %v3737
      %3805 = vmatprep.subr.bf16.mxu0 0
      %3806 = vmatpush1.bf16.msra.mxu0 %v3736
      %3807 = vmatprep.subr.bf16.mxu0 0
      %3808 = vmatpush1.bf16.msra.mxu0 %v3735
      %3809 = vmatprep.subr.bf16.mxu0 0
      %3810 = vmatpush1.bf16.msra.mxu0 %v3734
      %3811 = vmatprep.subr.bf16.mxu0 0
      %3812 = vmatpush1.bf16.msra.mxu0 %v3733
      %3813 = vmatprep.subr.bf16.mxu0 0
      %3814 = vmatpush2.bf16.msra.mxu0 %v3748
      %3815 = vmatprep.subr.bf16.mxu0 0
      %3816 = vmatpush2.bf16.msra.mxu0 %v3747
      %3817 = vmatprep.subr.bf16.mxu0 0
      %3818 = vmatpush2.bf16.msra.mxu0 %v3746
      %3819 = vmatprep.subr.bf16.mxu0 0
      %3820 = vmatpush2.bf16.msra.mxu0 %v3745
      %3821 = vmatprep.subr.bf16.mxu0 0
      %3822 = vmatpush2.bf16.msra.mxu0 %v3744
      %3823 = vmatprep.subr.bf16.mxu0 0
      %3824 = vmatpush2.bf16.msra.mxu0 %v3743
      %3825 = vmatprep.subr.bf16.mxu0 0
      %3826 = vmatpush2.bf16.msra.mxu0 %v3742
      %3827 = vmatprep.subr.bf16.mxu0 0
      %3828 = vmatpush2.bf16.msra.mxu0 %v3741
      %3829 = vmatprep.mubr.bf16.mxu0 %v3295
      %3830 = vmatmul.mubr.bf16.gmra.mxu0 %v3287
      %v3831 = vpop.f32.mrf.mxu0
      %v3832 = vadd.f32 %v3596, %v3831
      %v3833 = vpop.f32.mrf.mxu0
      %v3834 = vpop.f32.mrf.mxu0
      %v3835 = vpop.f32.mrf.mxu0
      %3836 = vdwg.mxu0
      %3837 = vmatprep.subr.bf16.mxu0 0
      %3838 = vmatpush1.bf16.msra.mxu0 %v3756
      %3839 = vmatprep.subr.bf16.mxu0 0
      %3840 = vmatpush1.bf16.msra.mxu0 %v3755
      %3841 = vmatprep.subr.bf16.mxu0 0
      %3842 = vmatpush1.bf16.msra.mxu0 %v3754
      %3843 = vmatprep.subr.bf16.mxu0 0
      %3844 = vmatpush1.bf16.msra.mxu0 %v3753
      %3845 = vmatprep.subr.bf16.mxu0 0
      %3846 = vmatpush1.bf16.msra.mxu0 %v3752
      %3847 = vmatprep.subr.bf16.mxu0 0
      %3848 = vmatpush1.bf16.msra.mxu0 %v3751
      %3849 = vmatprep.subr.bf16.mxu0 0
      %3850 = vmatpush1.bf16.msra.mxu0 %v3750
      %3851 = vmatprep.subr.bf16.mxu0 0
      %3852 = vmatpush1.bf16.msra.mxu0 %v3749
      %3853 = vmatprep.subr.bf16.mxu0 0
      %3854 = vmatpush2.bf16.msra.mxu0 %v3764
      %3855 = vmatprep.subr.bf16.mxu0 0
      %3856 = vmatpush2.bf16.msra.mxu0 %v3763
      %3857 = vmatprep.subr.bf16.mxu0 0
      %3858 = vmatpush2.bf16.msra.mxu0 %v3762
      %3859 = vmatprep.subr.bf16.mxu0 0
      %3860 = vmatpush2.bf16.msra.mxu0 %v3761
      %3861 = vmatprep.subr.bf16.mxu0 0
      %3862 = vmatpush2.bf16.msra.mxu0 %v3760
      %3863 = vmatprep.subr.bf16.mxu0 0
      %3864 = vmatpush2.bf16.msra.mxu0 %v3759
      %3865 = vmatprep.subr.bf16.mxu0 0
      %3866 = vmatpush2.bf16.msra.mxu0 %v3758
      %3867 = vmatprep.subr.bf16.mxu0 0
      %3868 = vmatpush2.bf16.msra.mxu0 %v3757
      %3869 = vmatprep.mubr.bf16.mxu0 %v3296
      %3870 = vmatmul.mubr.bf16.gmra.mxu0 %v3294
      %v3871 = vpop.f32.mrf.mxu0
      %v3872 = vadd.f32 %v3832, %v3871
      %v3873 = vpop.f32.mrf.mxu0
      %v3874 = vpop.f32.mrf.mxu0
      %v3875 = vpop.f32.mrf.mxu0
      %3876 = vdwg.mxu0
      %s3877 = scalar_lea.vmem %s165, 24
      %v3878 = vld [vmem:[%s3877] sm:$0xff]
      %v3879 = vld [vmem:[%s903] sm:$0xf]
      %v3880 = vld [vmem:[%s903 + $0x4] sm:$0xf]
      %v3881 = vld [vmem:[%s903 + $0x8] sm:$0xf]
      %v3882 = vld [vmem:[%s903 + $0xc] sm:$0xf]
      %v3883 = vld [vmem:[%s903 + $0x10] sm:$0xf]
      %v3884 = vld [vmem:[%s903 + $0x14] sm:$0xf]
      %v3885 = vld [vmem:[%s903 + $0x18] sm:$0xf]
      %v3886 = vld [vmem:[%s903 + $0x1c] sm:$0xf]
      %v3887 = vld [vmem:[%s903 + $0x20] sm:$0xf]
      %v3888 = vld [vmem:[%s903 + $0x24] sm:$0xf]
      %v3889 = vld [vmem:[%s903 + $0x28] sm:$0xf]
      %v3890 = vld [vmem:[%s903 + $0x2c] sm:$0xf]
      %v3891 = vld [vmem:[%s903 + $0x30] sm:$0xf]
      %v3892 = vld [vmem:[%s903 + $0x34] sm:$0xf]
      %v3893 = vld [vmem:[%s903 + $0x38] sm:$0xf]
      %v3894 = vld [vmem:[%s903 + $0x3c] sm:$0xf]
      %v3895 = vld [vmem:[%s903 + $0x40] sm:$0xf]
      %v3896 = vld [vmem:[%s903 + $0x44] sm:$0xf]
      %v3897 = vld [vmem:[%s903 + $0x48] sm:$0xf]
      %v3898 = vld [vmem:[%s903 + $0x4c] sm:$0xf]
      %v3899 = vld [vmem:[%s903 + $0x50] sm:$0xf]
      %v3900 = vld [vmem:[%s903 + $0x54] sm:$0xf]
      %v3901 = vld [vmem:[%s903 + $0x58] sm:$0xf]
      %v3902 = vld [vmem:[%s903 + $0x5c] sm:$0xf]
      %v3903 = vld [vmem:[%s903 + $0x60] sm:$0xf]
      %v3904 = vld [vmem:[%s903 + $0x64] sm:$0xf]
      %v3905 = vld [vmem:[%s903 + $0x68] sm:$0xf]
      %v3906 = vld [vmem:[%s903 + $0x6c] sm:$0xf]
      %v3907 = vld [vmem:[%s903 + $0x70] sm:$0xf]
      %v3908 = vld [vmem:[%s903 + $0x74] sm:$0xf]
      %v3909 = vld [vmem:[%s903 + $0x78] sm:$0xf]
      %v3910 = vld [vmem:[%s903 + $0x7c] sm:$0xf]
      %v3911 = vld [vmem:[%s903 + $0x80] sm:$0xf]
      %v3912 = vld [vmem:[%s903 + $0x84] sm:$0xf]
      %v3913 = vld [vmem:[%s903 + $0x88] sm:$0xf]
      %v3914 = vld [vmem:[%s903 + $0x8c] sm:$0xf]
      %v3915 = vld [vmem:[%s903 + $0x90] sm:$0xf]
      %v3916 = vld [vmem:[%s903 + $0x94] sm:$0xf]
      %v3917 = vld [vmem:[%s903 + $0x98] sm:$0xf]
      %v3918 = vld [vmem:[%s903 + $0x9c] sm:$0xf]
      %v3919 = vld [vmem:[%s903 + $0xa0] sm:$0xf]
      %v3920 = vld [vmem:[%s903 + $0xa4] sm:$0xf]
      %v3921 = vld [vmem:[%s903 + $0xa8] sm:$0xf]
      %v3922 = vld [vmem:[%s903 + $0xac] sm:$0xf]
      %v3923 = vld [vmem:[%s903 + $0xb0] sm:$0xf]
      %v3924 = vld [vmem:[%s903 + $0xb4] sm:$0xf]
      %v3925 = vld [vmem:[%s903 + $0xb8] sm:$0xf]
      %v3926 = vld [vmem:[%s903 + $0xbc] sm:$0xf]
      %v3927 = vld [vmem:[%s903 + $0xc0] sm:$0xf]
      %v3928 = vld [vmem:[%s903 + $0xc4] sm:$0xf]
      %v3929 = vld [vmem:[%s903 + $0xc8] sm:$0xf]
      %v3930 = vld [vmem:[%s903 + $0xcc] sm:$0xf]
      %v3931 = vld [vmem:[%s903 + $0xd0] sm:$0xf]
      %v3932 = vld [vmem:[%s903 + $0xd4] sm:$0xf]
      %v3933 = vld [vmem:[%s903 + $0xd8] sm:$0xf]
      %v3934 = vld [vmem:[%s903 + $0xdc] sm:$0xf]
      %v3935 = vld [vmem:[%s903 + $0xe0] sm:$0xf]
      %v3936 = vld [vmem:[%s903 + $0xe4] sm:$0xf]
      %v3937 = vld [vmem:[%s903 + $0xe8] sm:$0xf]
      %v3938 = vld [vmem:[%s903 + $0xec] sm:$0xf]
      %v3939 = vld [vmem:[%s903 + $0xf0] sm:$0xf]
      %v3940 = vld [vmem:[%s903 + $0xf4] sm:$0xf]
      %v3941 = vld [vmem:[%s903 + $0xf8] sm:$0xf]
      %v3942 = vld [vmem:[%s903 + $0xfc] sm:$0xf]
      %v3944 = vcombine.high %v3878, %v3878
      %v3946 = vunpack.c.l.s4 1983009808
      %v3947 = vunpack.c.0.s8 %v3946
      %v3948 = vlaneseq
      %v3949 = vshrl.u32 %v3948, 7
      %v3950 = vsub.s32 %v3947, %v3949
      %v3951 = vrot.slane %v3878, %v3950
      %v3953 = vunpack.c.l.s4 1983009808
      %v3954 = vunpack.c.0.s8 %v3953
      %v3955 = vlaneseq
      %v3956 = vshrl.u32 %v3955, 7
      %v3957 = vsub.s32 %v3954, %v3956
      %v3958 = vrot.slane %v3944, %v3957
      %v3959 = vcombine.high %v3951, %v3951
      %v3960 = vcombine.high %v3958, %v3958
      %v4029 = vunpack.c.l.b16 %v3879
      %v4030 = vunpack.c.l.b16 %v3880
      %v4031 = vunpack.c.l.b16 %v3881
      %v4032 = vunpack.c.l.b16 %v3882
      %v4033 = vunpack.c.l.b16 %v3883
      %v4034 = vunpack.c.l.b16 %v3884
      %v4035 = vunpack.c.l.b16 %v3885
      %v4036 = vunpack.c.l.b16 %v3886
      %v4037 = vunpack.c.l.b16 %v3887
      %v4038 = vunpack.c.l.b16 %v3888
      %v4039 = vunpack.c.l.b16 %v3889
      %v4040 = vunpack.c.l.b16 %v3890
      %v4041 = vunpack.c.l.b16 %v3891
      %v4042 = vunpack.c.l.b16 %v3892
      %v4043 = vunpack.c.l.b16 %v3893
      %v4044 = vunpack.c.l.b16 %v3894
      %v4045 = vunpack.c.l.b16 %v3895
      %v4046 = vunpack.c.l.b16 %v3896
      %v4047 = vunpack.c.l.b16 %v3897
      %v4048 = vunpack.c.l.b16 %v3898
      %v4049 = vunpack.c.l.b16 %v3899
      %v4050 = vunpack.c.l.b16 %v3900
      %v4051 = vunpack.c.l.b16 %v3901
      %v4052 = vunpack.c.l.b16 %v3902
      %v4053 = vunpack.c.l.b16 %v3903
      %v4054 = vunpack.c.l.b16 %v3904
      %v4055 = vunpack.c.l.b16 %v3905
      %v4056 = vunpack.c.l.b16 %v3906
      %v4057 = vunpack.c.l.b16 %v3907
      %v4058 = vunpack.c.l.b16 %v3908
      %v4059 = vunpack.c.l.b16 %v3909
      %v4060 = vunpack.c.l.b16 %v3910
      %v4061 = vunpack.c.l.b16 %v3911
      %v4062 = vunpack.c.l.b16 %v3912
      %v4063 = vunpack.c.l.b16 %v3913
      %v4064 = vunpack.c.l.b16 %v3914
      %v4065 = vunpack.c.l.b16 %v3915
      %v4066 = vunpack.c.l.b16 %v3916
      %v4067 = vunpack.c.l.b16 %v3917
      %v4068 = vunpack.c.l.b16 %v3918
      %v4069 = vunpack.c.l.b16 %v3919
      %v4070 = vunpack.c.l.b16 %v3920
      %v4071 = vunpack.c.l.b16 %v3921
      %v4072 = vunpack.c.l.b16 %v3922
      %v4073 = vunpack.c.l.b16 %v3923
      %v4074 = vunpack.c.l.b16 %v3924
      %v4075 = vunpack.c.l.b16 %v3925
      %v4076 = vunpack.c.l.b16 %v3926
      %v4077 = vunpack.c.l.b16 %v3927
      %v4078 = vunpack.c.l.b16 %v3928
      %v4079 = vunpack.c.l.b16 %v3929
      %v4080 = vunpack.c.l.b16 %v3930
      %v4081 = vunpack.c.l.b16 %v3931
      %v4082 = vunpack.c.l.b16 %v3932
      %v4083 = vunpack.c.l.b16 %v3933
      %v4084 = vunpack.c.l.b16 %v3934
      %v4085 = vunpack.c.l.b16 %v3935
      %v4086 = vunpack.c.l.b16 %v3936
      %v4087 = vunpack.c.l.b16 %v3937
      %v4088 = vunpack.c.l.b16 %v3938
      %v4089 = vunpack.c.l.b16 %v3939
      %v4090 = vunpack.c.l.b16 %v3940
      %v4091 = vunpack.c.l.b16 %v3941
      %v4092 = vunpack.c.l.b16 %v3942
      %v4093 = vpack.c.b16 %v4030, %v4029
      %v4094 = vpack.c.b16 %v4032, %v4031
      %v4095 = vpack.c.b16 %v4034, %v4033
      %v4096 = vpack.c.b16 %v4036, %v4035
      %v4097 = vpack.c.b16 %v4038, %v4037
      %v4098 = vpack.c.b16 %v4040, %v4039
      %v4099 = vpack.c.b16 %v4042, %v4041
      %v4100 = vpack.c.b16 %v4044, %v4043
      %v4101 = vpack.c.b16 %v4046, %v4045
      %v4102 = vpack.c.b16 %v4048, %v4047
      %v4103 = vpack.c.b16 %v4050, %v4049
      %v4104 = vpack.c.b16 %v4052, %v4051
      %v4105 = vpack.c.b16 %v4054, %v4053
      %v4106 = vpack.c.b16 %v4056, %v4055
      %v4107 = vpack.c.b16 %v4058, %v4057
      %v4108 = vpack.c.b16 %v4060, %v4059
      %v4109 = vpack.c.b16 %v4062, %v4061
      %v4110 = vpack.c.b16 %v4064, %v4063
      %v4111 = vpack.c.b16 %v4066, %v4065
      %v4112 = vpack.c.b16 %v4068, %v4067
      %v4113 = vpack.c.b16 %v4070, %v4069
      %v4114 = vpack.c.b16 %v4072, %v4071
      %v4115 = vpack.c.b16 %v4074, %v4073
      %v4116 = vpack.c.b16 %v4076, %v4075
      %v4117 = vpack.c.b16 %v4078, %v4077
      %v4118 = vpack.c.b16 %v4080, %v4079
      %v4119 = vpack.c.b16 %v4082, %v4081
      %v4120 = vpack.c.b16 %v4084, %v4083
      %v4121 = vpack.c.b16 %v4086, %v4085
      %v4122 = vpack.c.b16 %v4088, %v4087
      %v4123 = vpack.c.b16 %v4090, %v4089
      %v4124 = vpack.c.b16 %v4092, %v4091
      %4157 = vmatprep.subr.bf16.mxu0 0
      %4158 = vmatpush1.bf16.msra.mxu0 %v4100
      %4159 = vmatprep.subr.bf16.mxu0 0
      %4160 = vmatpush1.bf16.msra.mxu0 %v4099
      %4161 = vmatprep.subr.bf16.mxu0 0
      %4162 = vmatpush1.bf16.msra.mxu0 %v4098
      %4163 = vmatprep.subr.bf16.mxu0 0
      %4164 = vmatpush1.bf16.msra.mxu0 %v4097
      %4165 = vmatprep.subr.bf16.mxu0 0
      %4166 = vmatpush1.bf16.msra.mxu0 %v4096
      %4167 = vmatprep.subr.bf16.mxu0 0
      %4168 = vmatpush1.bf16.msra.mxu0 %v4095
      %4169 = vmatprep.subr.bf16.mxu0 0
      %4170 = vmatpush1.bf16.msra.mxu0 %v4094
      %4171 = vmatprep.subr.bf16.mxu0 0
      %4172 = vmatpush1.bf16.msra.mxu0 %v4093
      %4173 = vmatprep.subr.bf16.mxu0 0
      %4174 = vmatpush2.bf16.msra.mxu0 %v4108
      %4175 = vmatprep.subr.bf16.mxu0 0
      %4176 = vmatpush2.bf16.msra.mxu0 %v4107
      %4177 = vmatprep.subr.bf16.mxu0 0
      %4178 = vmatpush2.bf16.msra.mxu0 %v4106
      %4179 = vmatprep.subr.bf16.mxu0 0
      %4180 = vmatpush2.bf16.msra.mxu0 %v4105
      %4181 = vmatprep.subr.bf16.mxu0 0
      %4182 = vmatpush2.bf16.msra.mxu0 %v4104
      %4183 = vmatprep.subr.bf16.mxu0 0
      %4184 = vmatpush2.bf16.msra.mxu0 %v4103
      %4185 = vmatprep.subr.bf16.mxu0 0
      %4186 = vmatpush2.bf16.msra.mxu0 %v4102
      %4187 = vmatprep.subr.bf16.mxu0 0
      %4188 = vmatpush2.bf16.msra.mxu0 %v4101
      %4189 = vmatprep.mubr.bf16.mxu0 %v3959
      %4190 = vmatmul.mubr.bf16.gmra.mxu0 %v3951
      %v4191 = vpop.f32.mrf.mxu0
      %v4192 = vadd.f32 0.0, %v4191
      %v4193 = vpop.f32.mrf.mxu0
      %v4194 = vpop.f32.mrf.mxu0
      %v4195 = vpop.f32.mrf.mxu0
      %4196 = vdwg.mxu0
      %4197 = vmatprep.subr.bf16.mxu0 0
      %4198 = vmatpush1.bf16.msra.mxu0 %v4116
      %4199 = vmatprep.subr.bf16.mxu0 0
      %4200 = vmatpush1.bf16.msra.mxu0 %v4115
      %4201 = vmatprep.subr.bf16.mxu0 0
      %4202 = vmatpush1.bf16.msra.mxu0 %v4114
      %4203 = vmatprep.subr.bf16.mxu0 0
      %4204 = vmatpush1.bf16.msra.mxu0 %v4113
      %4205 = vmatprep.subr.bf16.mxu0 0
      %4206 = vmatpush1.bf16.msra.mxu0 %v4112
      %4207 = vmatprep.subr.bf16.mxu0 0
      %4208 = vmatpush1.bf16.msra.mxu0 %v4111
      %4209 = vmatprep.subr.bf16.mxu0 0
      %4210 = vmatpush1.bf16.msra.mxu0 %v4110
      %4211 = vmatprep.subr.bf16.mxu0 0
      %4212 = vmatpush1.bf16.msra.mxu0 %v4109
      %4213 = vmatprep.subr.bf16.mxu0 0
      %4214 = vmatpush2.bf16.msra.mxu0 %v4124
      %4215 = vmatprep.subr.bf16.mxu0 0
      %4216 = vmatpush2.bf16.msra.mxu0 %v4123
      %4217 = vmatprep.subr.bf16.mxu0 0
      %4218 = vmatpush2.bf16.msra.mxu0 %v4122
      %4219 = vmatprep.subr.bf16.mxu0 0
      %4220 = vmatpush2.bf16.msra.mxu0 %v4121
      %4221 = vmatprep.subr.bf16.mxu0 0
      %4222 = vmatpush2.bf16.msra.mxu0 %v4120
      %4223 = vmatprep.subr.bf16.mxu0 0
      %4224 = vmatpush2.bf16.msra.mxu0 %v4119
      %4225 = vmatprep.subr.bf16.mxu0 0
      %4226 = vmatpush2.bf16.msra.mxu0 %v4118
      %4227 = vmatprep.subr.bf16.mxu0 0
      %4228 = vmatpush2.bf16.msra.mxu0 %v4117
      %4229 = vmatprep.mubr.bf16.mxu0 %v3960
      %4230 = vmatmul.mubr.bf16.gmra.mxu0 %v3958
      %v4231 = vpop.f32.mrf.mxu0
      %v4232 = vadd.f32 %v4192, %v4231
      %v4233 = vpop.f32.mrf.mxu0
      %v4234 = vpop.f32.mrf.mxu0
      %v4235 = vpop.f32.mrf.mxu0
      %4236 = vdwg.mxu0
      %v4237 = vadd.f32 %v3872, %v4232
      %v4238 = vld [vmem:[%s3877] sm:$0xff]
      %v4239 = vld [vmem:[%s1264] sm:$0xf]
      %v4240 = vld [vmem:[%s1264 + $0x4] sm:$0xf]
      %v4241 = vld [vmem:[%s1264 + $0x8] sm:$0xf]
      %v4242 = vld [vmem:[%s1264 + $0xc] sm:$0xf]
      %v4243 = vld [vmem:[%s1264 + $0x10] sm:$0xf]
      %v4244 = vld [vmem:[%s1264 + $0x14] sm:$0xf]
      %v4245 = vld [vmem:[%s1264 + $0x18] sm:$0xf]
      %v4246 = vld [vmem:[%s1264 + $0x1c] sm:$0xf]
      %v4247 = vld [vmem:[%s1264 + $0x20] sm:$0xf]
      %v4248 = vld [vmem:[%s1264 + $0x24] sm:$0xf]
      %v4249 = vld [vmem:[%s1264 + $0x28] sm:$0xf]
      %v4250 = vld [vmem:[%s1264 + $0x2c] sm:$0xf]
      %v4251 = vld [vmem:[%s1264 + $0x30] sm:$0xf]
      %v4252 = vld [vmem:[%s1264 + $0x34] sm:$0xf]
      %v4253 = vld [vmem:[%s1264 + $0x38] sm:$0xf]
      %v4254 = vld [vmem:[%s1264 + $0x3c] sm:$0xf]
      %v4255 = vld [vmem:[%s1264 + $0x40] sm:$0xf]
      %v4256 = vld [vmem:[%s1264 + $0x44] sm:$0xf]
      %v4257 = vld [vmem:[%s1264 + $0x48] sm:$0xf]
      %v4258 = vld [vmem:[%s1264 + $0x4c] sm:$0xf]
      %v4259 = vld [vmem:[%s1264 + $0x50] sm:$0xf]
      %v4260 = vld [vmem:[%s1264 + $0x54] sm:$0xf]
      %v4261 = vld [vmem:[%s1264 + $0x58] sm:$0xf]
      %v4262 = vld [vmem:[%s1264 + $0x5c] sm:$0xf]
      %v4263 = vld [vmem:[%s1264 + $0x60] sm:$0xf]
      %v4264 = vld [vmem:[%s1264 + $0x64] sm:$0xf]
      %v4265 = vld [vmem:[%s1264 + $0x68] sm:$0xf]
      %v4266 = vld [vmem:[%s1264 + $0x6c] sm:$0xf]
      %v4267 = vld [vmem:[%s1264 + $0x70] sm:$0xf]
      %v4268 = vld [vmem:[%s1264 + $0x74] sm:$0xf]
      %v4269 = vld [vmem:[%s1264 + $0x78] sm:$0xf]
      %v4270 = vld [vmem:[%s1264 + $0x7c] sm:$0xf]
      %v4271 = vld [vmem:[%s1264 + $0x80] sm:$0xf]
      %v4272 = vld [vmem:[%s1264 + $0x84] sm:$0xf]
      %v4273 = vld [vmem:[%s1264 + $0x88] sm:$0xf]
      %v4274 = vld [vmem:[%s1264 + $0x8c] sm:$0xf]
      %v4275 = vld [vmem:[%s1264 + $0x90] sm:$0xf]
      %v4276 = vld [vmem:[%s1264 + $0x94] sm:$0xf]
      %v4277 = vld [vmem:[%s1264 + $0x98] sm:$0xf]
      %v4278 = vld [vmem:[%s1264 + $0x9c] sm:$0xf]
      %v4279 = vld [vmem:[%s1264 + $0xa0] sm:$0xf]
      %v4280 = vld [vmem:[%s1264 + $0xa4] sm:$0xf]
      %v4281 = vld [vmem:[%s1264 + $0xa8] sm:$0xf]
      %v4282 = vld [vmem:[%s1264 + $0xac] sm:$0xf]
      %v4283 = vld [vmem:[%s1264 + $0xb0] sm:$0xf]
      %v4284 = vld [vmem:[%s1264 + $0xb4] sm:$0xf]
      %v4285 = vld [vmem:[%s1264 + $0xb8] sm:$0xf]
      %v4286 = vld [vmem:[%s1264 + $0xbc] sm:$0xf]
      %v4287 = vld [vmem:[%s1264 + $0xc0] sm:$0xf]
      %v4288 = vld [vmem:[%s1264 + $0xc4] sm:$0xf]
      %v4289 = vld [vmem:[%s1264 + $0xc8] sm:$0xf]
      %v4290 = vld [vmem:[%s1264 + $0xcc] sm:$0xf]
      %v4291 = vld [vmem:[%s1264 + $0xd0] sm:$0xf]
      %v4292 = vld [vmem:[%s1264 + $0xd4] sm:$0xf]
      %v4293 = vld [vmem:[%s1264 + $0xd8] sm:$0xf]
      %v4294 = vld [vmem:[%s1264 + $0xdc] sm:$0xf]
      %v4295 = vld [vmem:[%s1264 + $0xe0] sm:$0xf]
      %v4296 = vld [vmem:[%s1264 + $0xe4] sm:$0xf]
      %v4297 = vld [vmem:[%s1264 + $0xe8] sm:$0xf]
      %v4298 = vld [vmem:[%s1264 + $0xec] sm:$0xf]
      %v4299 = vld [vmem:[%s1264 + $0xf0] sm:$0xf]
      %v4300 = vld [vmem:[%s1264 + $0xf4] sm:$0xf]
      %v4301 = vld [vmem:[%s1264 + $0xf8] sm:$0xf]
      %v4302 = vld [vmem:[%s1264 + $0xfc] sm:$0xf]
      %v4304 = vcombine.high %v4238, %v4238
      %v4306 = vunpack.c.l.s4 1983009808
      %v4307 = vunpack.c.0.s8 %v4306
      %v4308 = vlaneseq
      %v4309 = vshrl.u32 %v4308, 7
      %v4310 = vsub.s32 %v4307, %v4309
      %v4311 = vrot.slane %v4238, %v4310
      %v4313 = vunpack.c.l.s4 1983009808
      %v4314 = vunpack.c.0.s8 %v4313
      %v4315 = vlaneseq
      %v4316 = vshrl.u32 %v4315, 7
      %v4317 = vsub.s32 %v4314, %v4316
      %v4318 = vrot.slane %v4304, %v4317
      %v4319 = vcombine.high %v4311, %v4311
      %v4320 = vcombine.high %v4318, %v4318
      %v4322 = vshrl.u32 %v4311, 16
      %v4324 = vshll.u32 %v4311, 16
      %v4326 = vrot.slane %v4324, 1
      %v4327 = vor.u32 %v4322, %v4326
      %v4329 = vshrl.u32 %v4319, 16
      %v4331 = vshll.u32 %v4319, 16
      %v4333 = vrot.slane %v4331, 1
      %v4334 = vor.u32 %v4329, %v4333
      %v4336 = vshrl.u32 %v4318, 16
      %v4338 = vshll.u32 %v4318, 16
      %v4340 = vrot.slane %v4338, 1
      %v4341 = vor.u32 %v4336, %v4340
      %v4343 = vshrl.u32 %v4320, 16
      %v4345 = vshll.u32 %v4320, 16
      %v4347 = vrot.slane %v4345, 1
      %v4348 = vor.u32 %v4343, %v4347
      %v4417 = vunpack.c.l.b16 %v4239
      %v4418 = vunpack.c.l.b16 %v4240
      %v4419 = vunpack.c.l.b16 %v4241
      %v4420 = vunpack.c.l.b16 %v4242
      %v4421 = vunpack.c.l.b16 %v4243
      %v4422 = vunpack.c.l.b16 %v4244
      %v4423 = vunpack.c.l.b16 %v4245
      %v4424 = vunpack.c.l.b16 %v4246
      %v4425 = vunpack.c.l.b16 %v4247
      %v4426 = vunpack.c.l.b16 %v4248
      %v4427 = vunpack.c.l.b16 %v4249
      %v4428 = vunpack.c.l.b16 %v4250
      %v4429 = vunpack.c.l.b16 %v4251
      %v4430 = vunpack.c.l.b16 %v4252
      %v4431 = vunpack.c.l.b16 %v4253
      %v4432 = vunpack.c.l.b16 %v4254
      %v4433 = vunpack.c.l.b16 %v4255
      %v4434 = vunpack.c.l.b16 %v4256
      %v4435 = vunpack.c.l.b16 %v4257
      %v4436 = vunpack.c.l.b16 %v4258
      %v4437 = vunpack.c.l.b16 %v4259
      %v4438 = vunpack.c.l.b16 %v4260
      %v4439 = vunpack.c.l.b16 %v4261
      %v4440 = vunpack.c.l.b16 %v4262
      %v4441 = vunpack.c.l.b16 %v4263
      %v4442 = vunpack.c.l.b16 %v4264
      %v4443 = vunpack.c.l.b16 %v4265
      %v4444 = vunpack.c.l.b16 %v4266
      %v4445 = vunpack.c.l.b16 %v4267
      %v4446 = vunpack.c.l.b16 %v4268
      %v4447 = vunpack.c.l.b16 %v4269
      %v4448 = vunpack.c.l.b16 %v4270
      %v4449 = vunpack.c.l.b16 %v4271
      %v4450 = vunpack.c.l.b16 %v4272
      %v4451 = vunpack.c.l.b16 %v4273
      %v4452 = vunpack.c.l.b16 %v4274
      %v4453 = vunpack.c.l.b16 %v4275
      %v4454 = vunpack.c.l.b16 %v4276
      %v4455 = vunpack.c.l.b16 %v4277
      %v4456 = vunpack.c.l.b16 %v4278
      %v4457 = vunpack.c.l.b16 %v4279
      %v4458 = vunpack.c.l.b16 %v4280
      %v4459 = vunpack.c.l.b16 %v4281
      %v4460 = vunpack.c.l.b16 %v4282
      %v4461 = vunpack.c.l.b16 %v4283
      %v4462 = vunpack.c.l.b16 %v4284
      %v4463 = vunpack.c.l.b16 %v4285
      %v4464 = vunpack.c.l.b16 %v4286
      %v4465 = vunpack.c.l.b16 %v4287
      %v4466 = vunpack.c.l.b16 %v4288
      %v4467 = vunpack.c.l.b16 %v4289
      %v4468 = vunpack.c.l.b16 %v4290
      %v4469 = vunpack.c.l.b16 %v4291
      %v4470 = vunpack.c.l.b16 %v4292
      %v4471 = vunpack.c.l.b16 %v4293
      %v4472 = vunpack.c.l.b16 %v4294
      %v4473 = vunpack.c.l.b16 %v4295
      %v4474 = vunpack.c.l.b16 %v4296
      %v4475 = vunpack.c.l.b16 %v4297
      %v4476 = vunpack.c.l.b16 %v4298
      %v4477 = vunpack.c.l.b16 %v4299
      %v4478 = vunpack.c.l.b16 %v4300
      %v4479 = vunpack.c.l.b16 %v4301
      %v4480 = vunpack.c.l.b16 %v4302
      %v4481 = vpack.c.b16 %v4418, %v4417
      %v4482 = vpack.c.b16 %v4420, %v4419
      %v4483 = vpack.c.b16 %v4422, %v4421
      %v4484 = vpack.c.b16 %v4424, %v4423
      %v4485 = vpack.c.b16 %v4426, %v4425
      %v4486 = vpack.c.b16 %v4428, %v4427
      %v4487 = vpack.c.b16 %v4430, %v4429
      %v4488 = vpack.c.b16 %v4432, %v4431
      %v4489 = vpack.c.b16 %v4434, %v4433
      %v4490 = vpack.c.b16 %v4436, %v4435
      %v4491 = vpack.c.b16 %v4438, %v4437
      %v4492 = vpack.c.b16 %v4440, %v4439
      %v4493 = vpack.c.b16 %v4442, %v4441
      %v4494 = vpack.c.b16 %v4444, %v4443
      %v4495 = vpack.c.b16 %v4446, %v4445
      %v4496 = vpack.c.b16 %v4448, %v4447
      %v4497 = vpack.c.b16 %v4450, %v4449
      %v4498 = vpack.c.b16 %v4452, %v4451
      %v4499 = vpack.c.b16 %v4454, %v4453
      %v4500 = vpack.c.b16 %v4456, %v4455
      %v4501 = vpack.c.b16 %v4458, %v4457
      %v4502 = vpack.c.b16 %v4460, %v4459
      %v4503 = vpack.c.b16 %v4462, %v4461
      %v4504 = vpack.c.b16 %v4464, %v4463
      %v4505 = vpack.c.b16 %v4466, %v4465
      %v4506 = vpack.c.b16 %v4468, %v4467
      %v4507 = vpack.c.b16 %v4470, %v4469
      %v4508 = vpack.c.b16 %v4472, %v4471
      %v4509 = vpack.c.b16 %v4474, %v4473
      %v4510 = vpack.c.b16 %v4476, %v4475
      %v4511 = vpack.c.b16 %v4478, %v4477
      %v4512 = vpack.c.b16 %v4480, %v4479
      %4545 = vmatprep.subr.bf16.mxu0 0
      %4546 = vmatpush1.bf16.msra.mxu0 %v4488
      %4547 = vmatprep.subr.bf16.mxu0 0
      %4548 = vmatpush1.bf16.msra.mxu0 %v4487
      %4549 = vmatprep.subr.bf16.mxu0 0
      %4550 = vmatpush1.bf16.msra.mxu0 %v4486
      %4551 = vmatprep.subr.bf16.mxu0 0
      %4552 = vmatpush1.bf16.msra.mxu0 %v4485
      %4553 = vmatprep.subr.bf16.mxu0 0
      %4554 = vmatpush1.bf16.msra.mxu0 %v4484
      %4555 = vmatprep.subr.bf16.mxu0 0
      %4556 = vmatpush1.bf16.msra.mxu0 %v4483
      %4557 = vmatprep.subr.bf16.mxu0 0
      %4558 = vmatpush1.bf16.msra.mxu0 %v4482
      %4559 = vmatprep.subr.bf16.mxu0 0
      %4560 = vmatpush1.bf16.msra.mxu0 %v4481
      %4561 = vmatprep.subr.bf16.mxu0 0
      %4562 = vmatpush2.bf16.msra.mxu0 %v4496
      %4563 = vmatprep.subr.bf16.mxu0 0
      %4564 = vmatpush2.bf16.msra.mxu0 %v4495
      %4565 = vmatprep.subr.bf16.mxu0 0
      %4566 = vmatpush2.bf16.msra.mxu0 %v4494
      %4567 = vmatprep.subr.bf16.mxu0 0
      %4568 = vmatpush2.bf16.msra.mxu0 %v4493
      %4569 = vmatprep.subr.bf16.mxu0 0
      %4570 = vmatpush2.bf16.msra.mxu0 %v4492
      %4571 = vmatprep.subr.bf16.mxu0 0
      %4572 = vmatpush2.bf16.msra.mxu0 %v4491
      %4573 = vmatprep.subr.bf16.mxu0 0
      %4574 = vmatpush2.bf16.msra.mxu0 %v4490
      %4575 = vmatprep.subr.bf16.mxu0 0
      %4576 = vmatpush2.bf16.msra.mxu0 %v4489
      %4577 = vmatprep.mubr.bf16.mxu0 %v4334
      %4578 = vmatmul.mubr.bf16.gmra.mxu0 %v4327
      %v4579 = vpop.f32.mrf.mxu0
      %v4580 = vadd.f32 0.0, %v4579
      %v4581 = vpop.f32.mrf.mxu0
      %v4582 = vpop.f32.mrf.mxu0
      %v4583 = vpop.f32.mrf.mxu0
      %4584 = vdwg.mxu0
      %4585 = vmatprep.subr.bf16.mxu0 0
      %4586 = vmatpush1.bf16.msra.mxu0 %v4504
      %4587 = vmatprep.subr.bf16.mxu0 0
      %4588 = vmatpush1.bf16.msra.mxu0 %v4503
      %4589 = vmatprep.subr.bf16.mxu0 0
      %4590 = vmatpush1.bf16.msra.mxu0 %v4502
      %4591 = vmatprep.subr.bf16.mxu0 0
      %4592 = vmatpush1.bf16.msra.mxu0 %v4501
      %4593 = vmatprep.subr.bf16.mxu0 0
      %4594 = vmatpush1.bf16.msra.mxu0 %v4500
      %4595 = vmatprep.subr.bf16.mxu0 0
      %4596 = vmatpush1.bf16.msra.mxu0 %v4499
      %4597 = vmatprep.subr.bf16.mxu0 0
      %4598 = vmatpush1.bf16.msra.mxu0 %v4498
      %4599 = vmatprep.subr.bf16.mxu0 0
      %4600 = vmatpush1.bf16.msra.mxu0 %v4497
      %4601 = vmatprep.subr.bf16.mxu0 0
      %4602 = vmatpush2.bf16.msra.mxu0 %v4512
      %4603 = vmatprep.subr.bf16.mxu0 0
      %4604 = vmatpush2.bf16.msra.mxu0 %v4511
      %4605 = vmatprep.subr.bf16.mxu0 0
      %4606 = vmatpush2.bf16.msra.mxu0 %v4510
      %4607 = vmatprep.subr.bf16.mxu0 0
      %4608 = vmatpush2.bf16.msra.mxu0 %v4509
      %4609 = vmatprep.subr.bf16.mxu0 0
      %4610 = vmatpush2.bf16.msra.mxu0 %v4508
      %4611 = vmatprep.subr.bf16.mxu0 0
      %4612 = vmatpush2.bf16.msra.mxu0 %v4507
      %4613 = vmatprep.subr.bf16.mxu0 0
      %4614 = vmatpush2.bf16.msra.mxu0 %v4506
      %4615 = vmatprep.subr.bf16.mxu0 0
      %4616 = vmatpush2.bf16.msra.mxu0 %v4505
      %4617 = vmatprep.mubr.bf16.mxu0 %v4348
      %4618 = vmatmul.mubr.bf16.gmra.mxu0 %v4341
      %v4619 = vpop.f32.mrf.mxu0
      %v4620 = vadd.f32 %v4580, %v4619
      %v4621 = vpop.f32.mrf.mxu0
      %v4622 = vpop.f32.mrf.mxu0
      %v4623 = vpop.f32.mrf.mxu0
      %4624 = vdwg.mxu0
      %v4625 = vadd.f32 %v4237, %v4620
      %v4626 = vadd.f32 %v4625, %v1656
      %v4627 = vmax.f32 %v4626, 0.0
      %v4628 = vpack.c.bf16 %v4627, %v4627
      %s4629 = scalar_lea.vmem %s170, 4
      %v4630 = vld [vmem:[%s4629] sm:$0x3]
      %v4631 = vsel %vm1663, %v4628, %v4630
      %4632 = vst [vmem:[%s4629] sm:$0x3] %v4631
      %p4633 = scmp.lt.s32.totalorder %s14, 1
      %s4634 = scalar_select %p4633, %s14, 1
      %s4635 = smul.addr %s4634, 3
      %s4636 = smul.addr %s4635, 2
      %s4637 = scalar_lea.vmem %s3, %s4636
      // Predicated region
      $region33: #{c51_forward.5} parent=31 // pred_check
        %p4638 = pneg %p100
      $region34: #{c51_forward.5} parent=31 // pred_check_branch
        %4640 = sbr.rel (%p4638) target = $region36
      $region35: #{c51_forward.5} parent=31 // pred_region
        _
      $region36: #{c51_forward.5} parent=31 // pred_fallthru
        _
    $region32: #{c51_forward.5} parent=5 // pred_fallthru
      _
    %p4641 = scmp.le.s32.totalorder 2, %s9
    // Predicated region
    $region37: #{c51_forward.5} parent=5 // pred_check
      %p4642 = pneg %p4641
    $region38: #{c51_forward.5} parent=5 // pred_check_branch
      %4644 = sbr.rel (%p4642) target = $region40
    $region39: #{c51_forward.5} parent=5 // pred_region
      %s4645 = ssub.s32 %s9, 2
      // Predicated region
      $region41: #{c51_forward.5} parent=39 // pred_check
        %p4646 = pneg %p106
      $region42: #{c51_forward.5} parent=39 // pred_check_branch
        %4648 = sbr.rel (%p4646) target = $region44
      $region43: #{c51_forward.5} parent=39 // pred_region
        %p4649 = scmp.lt.s32.totalorder %s15, 1
        %s4650 = scalar_select %p4649, %s15, 1
        %s4651 = smul.addr %s4650, 3
        %s4652 = smul.addr %s4651, 2
        %s4653 = scalar_lea.vmem %s3, %s4652
      $region44: #{c51_forward.5} parent=39 // pred_fallthru
        _
    $region40: #{c51_forward.5} parent=5 // pred_fallthru
      _
  $region6: #{c51_forward.5} parent=0 // loop_footer
    %s13 = sadd.s32 1, %s9
  $region7: #{c51_forward.5} parent=0 // loop_footer_branch
    %8 = sbr.rel target = $region3
  $region8: #{c51_forward.5} parent=0 // loop_exit
    _

</llo_original>
